<compile_context>
chip_gen: v7x
topology: tpu7x:2x2x1
jax: 0.10.0
libtpu: 0.0.40
codegen_flags: <defaults>
</compile_context>

<pallas_src>
import functools

import jax
import jax.numpy as jnp
from jax import lax
from jax.experimental import pallas as pl
from jax.experimental.pallas import tpu as pltpu


def _refine_kernel(x_ref,
                   w_in_ref, b_in_ref,
                   w_a_ref, b_a_ref,
                   w_b_ref, b_b_ref,
                   w_d1_ref, b_d1_ref,
                   w_d2_ref, b_d2_ref,
                   w_l_ref, b_l_ref,
                   out_ref,
                   buf,
                   *, H, W, C):
    """One batch element of Refine.forward (NHWC).

    x_ref   : (1, H, W, C)    input tile
    w_*_ref : prepacked weights (3x3 convs as (9*C, Cout); conv_du as (Cr, C))
    out_ref : (1, H*W, Cout)  output (reshaped / transposed to NCHW by wrapper)
    buf     : (H+2, W+2, C)   zero-bordered VMEM staging buffer (reused 4x)
    """
    Hp, Wp = H + 2, W + 2

    # ---- zero ONLY the 1-pixel border of the staging buffer -----------------
    buf[0:1, :, :] = jnp.zeros((1, Wp, C), jnp.float32)
    buf[Hp - 1:Hp, :, :] = jnp.zeros((1, Wp, C), jnp.float32)
    buf[:, 0:1, :] = jnp.zeros((Hp, 1, C), jnp.float32)
    buf[:, Wp - 1:Wp, :] = jnp.zeros((Hp, 1, C), jnp.float32)

    def stage(img_hwc):
        buf[1:1 + H, 1:1 + W, :] = img_hwc

    # ---- 3x3 conv (padding=1) as ONE matmul with K = 9*C --------------------
    def conv3x3(w_ref, b_ref):
        cols = [buf[ky:ky + H, kx:kx + W, :].reshape(H * W, C)
                for ky in range(3) for kx in range(3)]
        patches = jnp.concatenate(cols, axis=-1)                  # (H*W, 9*C)
        return jnp.dot(patches, w_ref[...],
                       preferred_element_type=jnp.float32) + b_ref[...]

    # conv_in
    stage(x_ref[0])
    h1 = conv3x3(w_in_ref, b_in_ref)                              # (H*W, C)

    # CALayer.process: conv3x3 -> ReLU -> conv3x3
    stage(h1.reshape(H, W, C))
    pa = jnp.maximum(conv3x3(w_a_ref, b_a_ref), 0.0)
    stage(pa.reshape(H, W, C))
    pb = conv3x3(w_b_ref, b_b_ref)

    # CALayer: global average pool + conv_du (1x1 -> ReLU -> 1x1 -> sigmoid).
    ypool = jnp.sum(pb, axis=0, keepdims=True) * (1.0 / (H * W))          # (1, C)
    t = jnp.maximum(
        jnp.sum(w_d1_ref[...] * ypool, axis=1, keepdims=True) + b_d1_ref[...],
        0.0)                                                               # (Cr, 1)
    logits = jnp.sum(t * w_d2_ref[...], axis=0, keepdims=True) + b_d2_ref[...]
    z = 1.0 / (1.0 + jnp.exp(-logits))                                     # (1, C)

    # CALayer output: z * pooled + its input (h1), broadcast over space.
    cal = h1 + z * ypool                                                   # (H*W, C)

    # conv_last
    stage(cal.reshape(H, W, C))
    out_ref[0] = conv3x3(w_l_ref, b_l_ref)                                 # (H*W, Cout)


def refine(x_nchw, params):
    """Pallas implementation of Refine.forward. Input/output are NCHW."""
    (w_in, b_in, w_a, b_a, w_b, b_b,
     w_du1, b_du1, w_du2, b_du2, w_last, b_last) = params

    x = jnp.transpose(x_nchw, (0, 2, 3, 1)).astype(jnp.float32)            # -> NHWC
    B, H, W, C = x.shape
    Cout = w_last.shape[-1]

    # Pre-pack 3x3 HWIO weights to (9*Cin, Cout): K order (ky, kx, cin) matches
    # the in-kernel im2col concat order.
    def pack3(w):
        return w.astype(jnp.float32).reshape(9 * w.shape[2], w.shape[3])

    args = (
        x,
        pack3(w_in), b_in.reshape(1, -1).astype(jnp.float32),
        pack3(w_a), b_a.reshape(1, -1).astype(jnp.float32),
        pack3(w_b), b_b.reshape(1, -1).astype(jnp.float32),
        w_du1.astype(jnp.float32),                       # (Cr, C)
        b_du1.reshape(-1, 1).astype(jnp.float32),        # (Cr, 1)
        w_du2.T.astype(jnp.float32),                     # (Cr, C)
        b_du2.reshape(1, -1).astype(jnp.float32),        # (1, C)
        pack3(w_last), b_last.reshape(1, -1).astype(jnp.float32),
    )

    def rep_spec(a):
        nd = a.ndim
        return pl.BlockSpec(a.shape, lambda b, nd=nd: (0,) * nd)

    kernel = functools.partial(_refine_kernel, H=H, W=W, C=C)

    out = pl.pallas_call(
        kernel,
        out_shape=jax.ShapeDtypeStruct((B, H * W, Cout), jnp.float32),
        grid=(B,),
        in_specs=[pl.BlockSpec((1, H, W, C), lambda b: (b, 0, 0, 0))]
                + [rep_spec(a) for a in args[1:]],
        out_specs=pl.BlockSpec((1, H * W, Cout), lambda b: (b, 0, 0)),
        scratch_shapes=[pltpu.VMEM((H + 2, W + 2, C), jnp.float32)],
        compiler_params=pltpu.CompilerParams(
            dimension_semantics=("parallel",)),
    )(*args)

    out = out.reshape(B, H, W, Cout)
    return jnp.transpose(out, (0, 3, 1, 2))                                # -> NCHW


# ------------------------- parameters & reference -----------------------------

def init_params(key, n_feat, out_channel, reduction=4):
    """Deterministic PyTorch-Conv2d-style uniform init."""
    cr = n_feat // reduction
    ks = jax.random.split(key, 12)

    def u(k, shape, fan_in):
        bound = 1.0 / jnp.sqrt(jnp.float32(fan_in))
        return jax.random.uniform(k, shape, jnp.float32, -bound, bound)

    w_in = u(ks[0], (3, 3, n_feat, n_feat), n_feat * 9)       # conv_in (HWIO)
    b_in = u(ks[1], (n_feat,), n_feat * 9)
    w_a = u(ks[2], (3, 3, n_feat, n_feat), n_feat * 9)        # CALayer.process[0]
    b_a = u(ks[3], (n_feat,), n_feat * 9)
    w_b = u(ks[4], (3, 3, n_feat, n_feat), n_feat * 9)        # CALayer.process[2]
    b_b = u(ks[5], (n_feat,), n_feat * 9)
    w_du1 = u(ks[6], (cr, n_feat), n_feat)                    # conv_du 1x1: C -> Cr
    b_du1 = u(ks[7], (cr,), n_feat)
    w_du2 = u(ks[8], (n_feat, cr), cr)                        # conv_du 1x1: Cr -> C
    b_du2 = u(ks[9], (n_feat,), cr)
    w_last = u(ks[10], (3, 3, n_feat, out_channel), n_feat * 9)
    b_last = u(ks[11], (out_channel,), n_feat * 9)
    return (w_in, b_in, w_a, b_a, w_b, b_b,
            w_du1, b_du1, w_du2, b_du2, w_last, b_last)


def refine_ref(x_nchw, params):
    """Pure-JAX reference (lax conv, HIGHEST precision) mirroring Refine.forward."""
    (w_in, b_in, w_a, b_a, w_b, b_b,
     w_du1, b_du1, w_du2, b_du2, w_last, b_last) = params
    x = jnp.transpose(x_nchw, (0, 2, 3, 1)).astype(jnp.float32)
    hp = lax.Precision.HIGHEST

    def conv3(h, w, b):
        y = lax.conv_general_dilated(
            h, w, window_strides=(1, 1), padding=[(1, 1), (1, 1)],
            dimension_numbers=('NHWC', 'HWIO', 'NHWC'), precision=hp)
        return y + b.reshape(1, 1, 1, -1)

    h1 = conv3(x, w_in, b_in)                                 # conv_in
    pa = jnp.maximum(conv3(h1, w_a, b_a), 0.0)                # CALayer.process
    pb = conv3(pa, w_b, b_b)
    yp = jnp.mean(pb, axis=(1, 2))                            # avg_pool -> (B, C)
    t = jnp.maximum(jnp.dot(yp, w_du1.T, precision=hp) + b_du1, 0.0)   # conv_du
    logits = jnp.dot(t, w_du2.T, precision=hp) + b_du2
    z = 1.0 / (1.0 + jnp.exp(-logits))
    cal = h1 + (z * yp)[:, None, None, :]                     # z * y + x
    out = conv3(cal, w_last, b_last)                          # conv_last
    return jnp.transpose(out, (0, 3, 1, 2))


if __name__ == "__main__":
    key = jax.random.PRNGKey(0)
    kx, kp = jax.random.split(key)

    B, n_feat, out_channel, H, W = 2, 8, 4, 16, 16

    x = jax.random.normal(kx, (B, n_feat, H, W), jnp.float32)    # NCHW like PyTorch
    params = init_params(kp, n_feat, out_channel, reduction=4)

    out = refine(x, params)
    out = jax.block_until_ready(out)

    ref = refine_ref(x, params)
    assert out.shape == (B, out_channel, H, W), out.shape
    if not bool(jnp.allclose(out, ref, atol=1e-4, rtol=1e-4)):
        raise AssertionError("Pallas output does not match JAX reference")

    print("KERNEL_OK")
</pallas_src>

<mosaic_0001>
module attributes {stable_mosaic.version = 11 : i64} {
  func.func @_refine_kernel(%arg0: i32, %arg1: memref<1x16x16x8xf32, #tpu.memory_space<vmem>>, %arg2: memref<72x8xf32, #tpu.memory_space<vmem>>, %arg3: memref<1x8xf32, #tpu.memory_space<vmem>>, %arg4: memref<72x8xf32, #tpu.memory_space<vmem>>, %arg5: memref<1x8xf32, #tpu.memory_space<vmem>>, %arg6: memref<72x8xf32, #tpu.memory_space<vmem>>, %arg7: memref<1x8xf32, #tpu.memory_space<vmem>>, %arg8: memref<2x8xf32, #tpu.memory_space<vmem>>, %arg9: memref<2x1xf32, #tpu.memory_space<vmem>>, %arg10: memref<2x8xf32, #tpu.memory_space<vmem>>, %arg11: memref<1x8xf32, #tpu.memory_space<vmem>>, %arg12: memref<72x4xf32, #tpu.memory_space<vmem>>, %arg13: memref<1x4xf32, #tpu.memory_space<vmem>>, %arg14: memref<1x256x4xf32, #tpu.memory_space<vmem>>, %arg15: memref<18x18x8xf32, #tpu.memory_space<vmem>>) attributes {dimension_semantics = [#tpu.dimension_semantics<parallel>], iteration_bounds = array<i64: 2>, scalar_prefetch = 0 : i64, scratch_operands = 1 : i64, tpu.core_type = #tpu.core_type<tc>, window_params = [{transform_indices = @transform_0, window_bounds = array<i64: 1, 16, 16, 8>}, {pipeline_mode = #tpu.pipeline_mode<synchronous>, transform_indices = @transform_1, window_bounds = array<i64: 72, 8>}, {pipeline_mode = #tpu.pipeline_mode<synchronous>, transform_indices = @transform_2, window_bounds = array<i64: 1, 8>}, {pipeline_mode = #tpu.pipeline_mode<synchronous>, transform_indices = @transform_3, window_bounds = array<i64: 72, 8>}, {pipeline_mode = #tpu.pipeline_mode<synchronous>, transform_indices = @transform_4, window_bounds = array<i64: 1, 8>}, {pipeline_mode = #tpu.pipeline_mode<synchronous>, transform_indices = @transform_5, window_bounds = array<i64: 72, 8>}, {pipeline_mode = #tpu.pipeline_mode<synchronous>, transform_indices = @transform_6, window_bounds = array<i64: 1, 8>}, {pipeline_mode = #tpu.pipeline_mode<synchronous>, transform_indices = @transform_7, window_bounds = array<i64: 2, 8>}, {pipeline_mode = #tpu.pipeline_mode<synchronous>, transform_indices = @transform_8, window_bounds = array<i64: 2, 1>}, {pipeline_mode = #tpu.pipeline_mode<synchronous>, transform_indices = @transform_9, window_bounds = array<i64: 2, 8>}, {pipeline_mode = #tpu.pipeline_mode<synchronous>, transform_indices = @transform_10, window_bounds = array<i64: 1, 8>}, {pipeline_mode = #tpu.pipeline_mode<synchronous>, transform_indices = @transform_11, window_bounds = array<i64: 72, 4>}, {pipeline_mode = #tpu.pipeline_mode<synchronous>, transform_indices = @transform_12, window_bounds = array<i64: 1, 4>}, {transform_indices = @transform_13, window_bounds = array<i64: 1, 256, 4>}]} {
    %cst = arith.constant 0.000000e+00 : f32
    %0 = vector.broadcast %cst : f32 to vector<1x18x8xf32>
    %c0 = arith.constant 0 : index
    %c0_0 = arith.constant 0 : index
    %c0_1 = arith.constant 0 : index
    %1 = vector.load %arg15[%c0, %c0_0, %c0_1] : memref<18x18x8xf32, #tpu.memory_space<vmem>>, vector<1x18x8xf32>
    tpu.vector_store %arg15[%c0, %c0_0, %c0_1], %0 {strides = array<i32>} : memref<18x18x8xf32, #tpu.memory_space<vmem>>, vector<1x18x8xf32>,
    %cst_2 = arith.constant 0.000000e+00 : f32
    %2 = vector.broadcast %cst_2 : f32 to vector<1x18x8xf32>
    %c17 = arith.constant 17 : index
    %c0_3 = arith.constant 0 : index
    %c0_4 = arith.constant 0 : index
    %3 = vector.load %arg15[%c17, %c0_3, %c0_4] : memref<18x18x8xf32, #tpu.memory_space<vmem>>, vector<1x18x8xf32>
    tpu.vector_store %arg15[%c17, %c0_3, %c0_4], %2 {strides = array<i32>} : memref<18x18x8xf32, #tpu.memory_space<vmem>>, vector<1x18x8xf32>,
    %cst_5 = arith.constant 0.000000e+00 : f32
    %4 = vector.broadcast %cst_5 : f32 to vector<18x1x8xf32>
    %c0_6 = arith.constant 0 : index
    %c0_7 = arith.constant 0 : index
    %c0_8 = arith.constant 0 : index
    %5 = vector.load %arg15[%c0_6, %c0_7, %c0_8] : memref<18x18x8xf32, #tpu.memory_space<vmem>>, vector<18x1x8xf32>
    tpu.vector_store %arg15[%c0_6, %c0_7, %c0_8], %4 {strides = array<i32>} : memref<18x18x8xf32, #tpu.memory_space<vmem>>, vector<18x1x8xf32>,
    %cst_9 = arith.constant 0.000000e+00 : f32
    %6 = vector.broadcast %cst_9 : f32 to vector<18x1x8xf32>
    %c0_10 = arith.constant 0 : index
    %c17_11 = arith.constant 17 : index
    %c0_12 = arith.constant 0 : index
    %7 = vector.load %arg15[%c0_10, %c17_11, %c0_12] : memref<18x18x8xf32, #tpu.memory_space<vmem>>, vector<18x1x8xf32>
    tpu.vector_store %arg15[%c0_10, %c17_11, %c0_12], %6 {strides = array<i32>} : memref<18x18x8xf32, #tpu.memory_space<vmem>>, vector<18x1x8xf32>,
    %c0_13 = arith.constant 0 : index
    %c0_14 = arith.constant 0 : index
    %c0_15 = arith.constant 0 : index
    %c0_16 = arith.constant 0 : index
    %8 = vector.load %arg1[%c0_13, %c0_14, %c0_15, %c0_16] : memref<1x16x16x8xf32, #tpu.memory_space<vmem>>, vector<1x16x16x8xf32>
    %9 = vector.shape_cast %8 : vector<1x16x16x8xf32> to vector<16x16x8xf32>
    %c1 = arith.constant 1 : index
    %c1_17 = arith.constant 1 : index
    %c0_18 = arith.constant 0 : index
    %10 = vector.load %arg15[%c1, %c1_17, %c0_18] : memref<18x18x8xf32, #tpu.memory_space<vmem>>, vector<16x16x8xf32>
    tpu.vector_store %arg15[%c1, %c1_17, %c0_18], %9 {strides = array<i32>} : memref<18x18x8xf32, #tpu.memory_space<vmem>>, vector<16x16x8xf32>,
    %c0_19 = arith.constant 0 : index
    %c0_20 = arith.constant 0 : index
    %c0_21 = arith.constant 0 : index
    %11 = vector.load %arg15[%c0_19, %c0_20, %c0_21] : memref<18x18x8xf32, #tpu.memory_space<vmem>>, vector<16x16x8xf32>
    %12 = vector.shape_cast %11 : vector<16x16x8xf32> to vector<256x8xf32>
    %c0_22 = arith.constant 0 : index
    %c1_23 = arith.constant 1 : index
    %c0_24 = arith.constant 0 : index
    %13 = vector.load %arg15[%c0_22, %c1_23, %c0_24] : memref<18x18x8xf32, #tpu.memory_space<vmem>>, vector<16x16x8xf32>
    %14 = vector.shape_cast %13 : vector<16x16x8xf32> to vector<256x8xf32>
    %c0_25 = arith.constant 0 : index
    %c2 = arith.constant 2 : index
    %c0_26 = arith.constant 0 : index
    %15 = vector.load %arg15[%c0_25, %c2, %c0_26] : memref<18x18x8xf32, #tpu.memory_space<vmem>>, vector<16x16x8xf32>
    %16 = vector.shape_cast %15 : vector<16x16x8xf32> to vector<256x8xf32>
    %c1_27 = arith.constant 1 : index
    %c0_28 = arith.constant 0 : index
    %c0_29 = arith.constant 0 : index
    %17 = vector.load %arg15[%c1_27, %c0_28, %c0_29] : memref<18x18x8xf32, #tpu.memory_space<vmem>>, vector<16x16x8xf32>
    %18 = vector.shape_cast %17 : vector<16x16x8xf32> to vector<256x8xf32>
    %c1_30 = arith.constant 1 : index
    %c1_31 = arith.constant 1 : index
    %c0_32 = arith.constant 0 : index
    %19 = vector.load %arg15[%c1_30, %c1_31, %c0_32] : memref<18x18x8xf32, #tpu.memory_space<vmem>>, vector<16x16x8xf32>
    %20 = vector.shape_cast %19 : vector<16x16x8xf32> to vector<256x8xf32>
    %c1_33 = arith.constant 1 : index
    %c2_34 = arith.constant 2 : index
    %c0_35 = arith.constant 0 : index
    %21 = vector.load %arg15[%c1_33, %c2_34, %c0_35] : memref<18x18x8xf32, #tpu.memory_space<vmem>>, vector<16x16x8xf32>
    %22 = vector.shape_cast %21 : vector<16x16x8xf32> to vector<256x8xf32>
    %c2_36 = arith.constant 2 : index
    %c0_37 = arith.constant 0 : index
    %c0_38 = arith.constant 0 : index
    %23 = vector.load %arg15[%c2_36, %c0_37, %c0_38] : memref<18x18x8xf32, #tpu.memory_space<vmem>>, vector<16x16x8xf32>
    %24 = vector.shape_cast %23 : vector<16x16x8xf32> to vector<256x8xf32>
    %c2_39 = arith.constant 2 : index
    %c1_40 = arith.constant 1 : index
    %c0_41 = arith.constant 0 : index
    %25 = vector.load %arg15[%c2_39, %c1_40, %c0_41] : memref<18x18x8xf32, #tpu.memory_space<vmem>>, vector<16x16x8xf32>
    %26 = vector.shape_cast %25 : vector<16x16x8xf32> to vector<256x8xf32>
    %c2_42 = arith.constant 2 : index
    %c2_43 = arith.constant 2 : index
    %c0_44 = arith.constant 0 : index
    %27 = vector.load %arg15[%c2_42, %c2_43, %c0_44] : memref<18x18x8xf32, #tpu.memory_space<vmem>>, vector<16x16x8xf32>
    %28 = vector.shape_cast %27 : vector<16x16x8xf32> to vector<256x8xf32>
    %29 = tpu.concatenate %12, %14, %16, %18, %20, %22, %24, %26, %28 in 1 : vector<256x8xf32>, vector<256x8xf32>, vector<256x8xf32>, vector<256x8xf32>, vector<256x8xf32>, vector<256x8xf32>, vector<256x8xf32>, vector<256x8xf32>, vector<256x8xf32> -> vector<256x72xf32>
    %c0_45 = arith.constant 0 : index
    %c0_46 = arith.constant 0 : index
    %30 = vector.load %arg2[%c0_45, %c0_46] : memref<72x8xf32, #tpu.memory_space<vmem>>, vector<72x8xf32>
    %cst_47 = arith.constant dense<0.000000e+00> : vector<256x8xf32>
    %31 = tpu.matmul %29, %30, %cst_47 {dimension_numbers = #tpu.dot_dimension_numbers<[1], [0], [0], [1], [0, 0, 1, 1], [], []>} : vector<256x72xf32>, vector<72x8xf32>, vector<256x8xf32> -> vector<256x8xf32>
    %c0_48 = arith.constant 0 : index
    %c0_49 = arith.constant 0 : index
    %32 = vector.load %arg3[%c0_48, %c0_49] : memref<1x8xf32, #tpu.memory_space<vmem>>, vector<1x8xf32>
    %33 = vector.broadcast %32 : vector<1x8xf32> to vector<256x8xf32>
    %34 = arith.addf %31, %33 : vector<256x8xf32>
    %35 = vector.shape_cast %34 : vector<256x8xf32> to vector<16x16x8xf32>
    %c1_50 = arith.constant 1 : index
    %c1_51 = arith.constant 1 : index
    %c0_52 = arith.constant 0 : index
    %36 = vector.load %arg15[%c1_50, %c1_51, %c0_52] : memref<18x18x8xf32, #tpu.memory_space<vmem>>, vector<16x16x8xf32>
    tpu.vector_store %arg15[%c1_50, %c1_51, %c0_52], %35 {strides = array<i32>} : memref<18x18x8xf32, #tpu.memory_space<vmem>>, vector<16x16x8xf32>,
    %c0_53 = arith.constant 0 : index
    %c0_54 = arith.constant 0 : index
    %c0_55 = arith.constant 0 : index
    %37 = vector.load %arg15[%c0_53, %c0_54, %c0_55] : memref<18x18x8xf32, #tpu.memory_space<vmem>>, vector<16x16x8xf32>
    %38 = vector.shape_cast %37 : vector<16x16x8xf32> to vector<256x8xf32>
    %c0_56 = arith.constant 0 : index
    %c1_57 = arith.constant 1 : index
    %c0_58 = arith.constant 0 : index
    %39 = vector.load %arg15[%c0_56, %c1_57, %c0_58] : memref<18x18x8xf32, #tpu.memory_space<vmem>>, vector<16x16x8xf32>
    %40 = vector.shape_cast %39 : vector<16x16x8xf32> to vector<256x8xf32>
    %c0_59 = arith.constant 0 : index
    %c2_60 = arith.constant 2 : index
    %c0_61 = arith.constant 0 : index
    %41 = vector.load %arg15[%c0_59, %c2_60, %c0_61] : memref<18x18x8xf32, #tpu.memory_space<vmem>>, vector<16x16x8xf32>
    %42 = vector.shape_cast %41 : vector<16x16x8xf32> to vector<256x8xf32>
    %c1_62 = arith.constant 1 : index
    %c0_63 = arith.constant 0 : index
    %c0_64 = arith.constant 0 : index
    %43 = vector.load %arg15[%c1_62, %c0_63, %c0_64] : memref<18x18x8xf32, #tpu.memory_space<vmem>>, vector<16x16x8xf32>
    %44 = vector.shape_cast %43 : vector<16x16x8xf32> to vector<256x8xf32>
    %c1_65 = arith.constant 1 : index
    %c1_66 = arith.constant 1 : index
    %c0_67 = arith.constant 0 : index
    %45 = vector.load %arg15[%c1_65, %c1_66, %c0_67] : memref<18x18x8xf32, #tpu.memory_space<vmem>>, vector<16x16x8xf32>
    %46 = vector.shape_cast %45 : vector<16x16x8xf32> to vector<256x8xf32>
    %c1_68 = arith.constant 1 : index
    %c2_69 = arith.constant 2 : index
    %c0_70 = arith.constant 0 : index
    %47 = vector.load %arg15[%c1_68, %c2_69, %c0_70] : memref<18x18x8xf32, #tpu.memory_space<vmem>>, vector<16x16x8xf32>
    %48 = vector.shape_cast %47 : vector<16x16x8xf32> to vector<256x8xf32>
    %c2_71 = arith.constant 2 : index
    %c0_72 = arith.constant 0 : index
    %c0_73 = arith.constant 0 : index
    %49 = vector.load %arg15[%c2_71, %c0_72, %c0_73] : memref<18x18x8xf32, #tpu.memory_space<vmem>>, vector<16x16x8xf32>
    %50 = vector.shape_cast %49 : vector<16x16x8xf32> to vector<256x8xf32>
    %c2_74 = arith.constant 2 : index
    %c1_75 = arith.constant 1 : index
    %c0_76 = arith.constant 0 : index
    %51 = vector.load %arg15[%c2_74, %c1_75, %c0_76] : memref<18x18x8xf32, #tpu.memory_space<vmem>>, vector<16x16x8xf32>
    %52 = vector.shape_cast %51 : vector<16x16x8xf32> to vector<256x8xf32>
    %c2_77 = arith.constant 2 : index
    %c2_78 = arith.constant 2 : index
    %c0_79 = arith.constant 0 : index
    %53 = vector.load %arg15[%c2_77, %c2_78, %c0_79] : memref<18x18x8xf32, #tpu.memory_space<vmem>>, vector<16x16x8xf32>
    %54 = vector.shape_cast %53 : vector<16x16x8xf32> to vector<256x8xf32>
    %55 = tpu.concatenate %38, %40, %42, %44, %46, %48, %50, %52, %54 in 1 : vector<256x8xf32>, vector<256x8xf32>, vector<256x8xf32>, vector<256x8xf32>, vector<256x8xf32>, vector<256x8xf32>, vector<256x8xf32>, vector<256x8xf32>, vector<256x8xf32> -> vector<256x72xf32>
    %c0_80 = arith.constant 0 : index
    %c0_81 = arith.constant 0 : index
    %56 = vector.load %arg4[%c0_80, %c0_81] : memref<72x8xf32, #tpu.memory_space<vmem>>, vector<72x8xf32>
    %cst_82 = arith.constant dense<0.000000e+00> : vector<256x8xf32>
    %57 = tpu.matmul %55, %56, %cst_82 {dimension_numbers = #tpu.dot_dimension_numbers<[1], [0], [0], [1], [0, 0, 1, 1], [], []>} : vector<256x72xf32>, vector<72x8xf32>, vector<256x8xf32> -> vector<256x8xf32>
    %c0_83 = arith.constant 0 : index
    %c0_84 = arith.constant 0 : index
    %58 = vector.load %arg5[%c0_83, %c0_84] : memref<1x8xf32, #tpu.memory_space<vmem>>, vector<1x8xf32>
    %59 = vector.broadcast %58 : vector<1x8xf32> to vector<256x8xf32>
    %60 = arith.addf %57, %59 : vector<256x8xf32>
    %cst_85 = arith.constant 0.000000e+00 : f32
    %61 = vector.broadcast %cst_85 : f32 to vector<256x8xf32>
    %62 = arith.maximumf %60, %61 : vector<256x8xf32>
    %63 = vector.shape_cast %62 : vector<256x8xf32> to vector<16x16x8xf32>
    %c1_86 = arith.constant 1 : index
    %c1_87 = arith.constant 1 : index
    %c0_88 = arith.constant 0 : index
    %64 = vector.load %arg15[%c1_86, %c1_87, %c0_88] : memref<18x18x8xf32, #tpu.memory_space<vmem>>, vector<16x16x8xf32>
    tpu.vector_store %arg15[%c1_86, %c1_87, %c0_88], %63 {strides = array<i32>} : memref<18x18x8xf32, #tpu.memory_space<vmem>>, vector<16x16x8xf32>,
    %c0_89 = arith.constant 0 : index
    %c0_90 = arith.constant 0 : index
    %c0_91 = arith.constant 0 : index
    %65 = vector.load %arg15[%c0_89, %c0_90, %c0_91] : memref<18x18x8xf32, #tpu.memory_space<vmem>>, vector<16x16x8xf32>
    %66 = vector.shape_cast %65 : vector<16x16x8xf32> to vector<256x8xf32>
    %c0_92 = arith.constant 0 : index
    %c1_93 = arith.constant 1 : index
    %c0_94 = arith.constant 0 : index
    %67 = vector.load %arg15[%c0_92, %c1_93, %c0_94] : memref<18x18x8xf32, #tpu.memory_space<vmem>>, vector<16x16x8xf32>
    %68 = vector.shape_cast %67 : vector<16x16x8xf32> to vector<256x8xf32>
    %c0_95 = arith.constant 0 : index
    %c2_96 = arith.constant 2 : index
    %c0_97 = arith.constant 0 : index
    %69 = vector.load %arg15[%c0_95, %c2_96, %c0_97] : memref<18x18x8xf32, #tpu.memory_space<vmem>>, vector<16x16x8xf32>
    %70 = vector.shape_cast %69 : vector<16x16x8xf32> to vector<256x8xf32>
    %c1_98 = arith.constant 1 : index
    %c0_99 = arith.constant 0 : index
    %c0_100 = arith.constant 0 : index
    %71 = vector.load %arg15[%c1_98, %c0_99, %c0_100] : memref<18x18x8xf32, #tpu.memory_space<vmem>>, vector<16x16x8xf32>
    %72 = vector.shape_cast %71 : vector<16x16x8xf32> to vector<256x8xf32>
    %c1_101 = arith.constant 1 : index
    %c1_102 = arith.constant 1 : index
    %c0_103 = arith.constant 0 : index
    %73 = vector.load %arg15[%c1_101, %c1_102, %c0_103] : memref<18x18x8xf32, #tpu.memory_space<vmem>>, vector<16x16x8xf32>
    %74 = vector.shape_cast %73 : vector<16x16x8xf32> to vector<256x8xf32>
    %c1_104 = arith.constant 1 : index
    %c2_105 = arith.constant 2 : index
    %c0_106 = arith.constant 0 : index
    %75 = vector.load %arg15[%c1_104, %c2_105, %c0_106] : memref<18x18x8xf32, #tpu.memory_space<vmem>>, vector<16x16x8xf32>
    %76 = vector.shape_cast %75 : vector<16x16x8xf32> to vector<256x8xf32>
    %c2_107 = arith.constant 2 : index
    %c0_108 = arith.constant 0 : index
    %c0_109 = arith.constant 0 : index
    %77 = vector.load %arg15[%c2_107, %c0_108, %c0_109] : memref<18x18x8xf32, #tpu.memory_space<vmem>>, vector<16x16x8xf32>
    %78 = vector.shape_cast %77 : vector<16x16x8xf32> to vector<256x8xf32>
    %c2_110 = arith.constant 2 : index
    %c1_111 = arith.constant 1 : index
    %c0_112 = arith.constant 0 : index
    %79 = vector.load %arg15[%c2_110, %c1_111, %c0_112] : memref<18x18x8xf32, #tpu.memory_space<vmem>>, vector<16x16x8xf32>
    %80 = vector.shape_cast %79 : vector<16x16x8xf32> to vector<256x8xf32>
    %c2_113 = arith.constant 2 : index
    %c2_114 = arith.constant 2 : index
    %c0_115 = arith.constant 0 : index
    %81 = vector.load %arg15[%c2_113, %c2_114, %c0_115] : memref<18x18x8xf32, #tpu.memory_space<vmem>>, vector<16x16x8xf32>
    %82 = vector.shape_cast %81 : vector<16x16x8xf32> to vector<256x8xf32>
    %83 = tpu.concatenate %66, %68, %70, %72, %74, %76, %78, %80, %82 in 1 : vector<256x8xf32>, vector<256x8xf32>, vector<256x8xf32>, vector<256x8xf32>, vector<256x8xf32>, vector<256x8xf32>, vector<256x8xf32>, vector<256x8xf32>, vector<256x8xf32> -> vector<256x72xf32>
    %c0_116 = arith.constant 0 : index
    %c0_117 = arith.constant 0 : index
    %84 = vector.load %arg6[%c0_116, %c0_117] : memref<72x8xf32, #tpu.memory_space<vmem>>, vector<72x8xf32>
    %cst_118 = arith.constant dense<0.000000e+00> : vector<256x8xf32>
    %85 = tpu.matmul %83, %84, %cst_118 {dimension_numbers = #tpu.dot_dimension_numbers<[1], [0], [0], [1], [0, 0, 1, 1], [], []>} : vector<256x72xf32>, vector<72x8xf32>, vector<256x8xf32> -> vector<256x8xf32>
    %c0_119 = arith.constant 0 : index
    %c0_120 = arith.constant 0 : index
    %86 = vector.load %arg7[%c0_119, %c0_120] : memref<1x8xf32, #tpu.memory_space<vmem>>, vector<1x8xf32>
    %87 = vector.broadcast %86 : vector<1x8xf32> to vector<256x8xf32>
    %88 = arith.addf %85, %87 : vector<256x8xf32>
    %cst_121 = arith.constant dense<0.000000e+00> : vector<8xf32>
    %89 = vector.multi_reduction <add>, %88, %cst_121 [0] : vector<256x8xf32> to vector<8xf32>
    %90 = vector.shape_cast %89 : vector<8xf32> to vector<1x8xf32>
    %cst_122 = arith.constant 3.906250e-03 : f32
    %91 = vector.broadcast %cst_122 : f32 to vector<1x8xf32>
    %92 = arith.mulf %90, %91 : vector<1x8xf32>
    %c0_123 = arith.constant 0 : index
    %c0_124 = arith.constant 0 : index
    %93 = vector.load %arg8[%c0_123, %c0_124] : memref<2x8xf32, #tpu.memory_space<vmem>>, vector<2x8xf32>
    %94 = vector.broadcast %92 : vector<1x8xf32> to vector<2x8xf32>
    %95 = arith.mulf %93, %94 : vector<2x8xf32>
    %cst_125 = arith.constant dense<0.000000e+00> : vector<2xf32>
    %96 = vector.multi_reduction <add>, %95, %cst_125 [1] : vector<2x8xf32> to vector<2xf32>
    %97 = vector.shape_cast %96 : vector<2xf32> to vector<2x1xf32>
    %c0_126 = arith.constant 0 : index
    %c0_127 = arith.constant 0 : index
    %98 = vector.load %arg9[%c0_126, %c0_127] : memref<2x1xf32, #tpu.memory_space<vmem>>, vector<2x1xf32>
    %99 = arith.addf %97, %98 : vector<2x1xf32>
    %cst_128 = arith.constant 0.000000e+00 : f32
    %100 = vector.broadcast %cst_128 : f32 to vector<2x1xf32>
    %101 = arith.maximumf %99, %100 : vector<2x1xf32>
    %c0_129 = arith.constant 0 : index
    %c0_130 = arith.constant 0 : index
    %102 = vector.load %arg10[%c0_129, %c0_130] : memref<2x8xf32, #tpu.memory_space<vmem>>, vector<2x8xf32>
    %103 = vector.broadcast %101 : vector<2x1xf32> to vector<2x8xf32>
    %104 = arith.mulf %103, %102 : vector<2x8xf32>
    %cst_131 = arith.constant dense<0.000000e+00> : vector<8xf32>
    %105 = vector.multi_reduction <add>, %104, %cst_131 [0] : vector<2x8xf32> to vector<8xf32>
    %106 = vector.shape_cast %105 : vector<8xf32> to vector<1x8xf32>
    %c0_132 = arith.constant 0 : index
    %c0_133 = arith.constant 0 : index
    %107 = vector.load %arg11[%c0_132, %c0_133] : memref<1x8xf32, #tpu.memory_space<vmem>>, vector<1x8xf32>
    %108 = arith.addf %106, %107 : vector<1x8xf32>
    %cst_134 = arith.constant 0.000000e+00 : f32
    %109 = vector.broadcast %cst_134 : f32 to vector<1x8xf32>
    %110 = arith.subf %109, %108 : vector<1x8xf32>
    %111 = math.exp %110 : vector<1x8xf32>
    %cst_135 = arith.constant 1.000000e+00 : f32
    %112 = vector.broadcast %cst_135 : f32 to vector<1x8xf32>
    %113 = arith.addf %112, %111 : vector<1x8xf32>
    %cst_136 = arith.constant 1.000000e+00 : f32
    %114 = vector.broadcast %cst_136 : f32 to vector<1x8xf32>
    %115 = arith.divf %114, %113 : vector<1x8xf32>
    %116 = arith.mulf %115, %92 : vector<1x8xf32>
    %117 = vector.broadcast %116 : vector<1x8xf32> to vector<256x8xf32>
    %118 = arith.addf %34, %117 : vector<256x8xf32>
    %119 = vector.shape_cast %118 : vector<256x8xf32> to vector<16x16x8xf32>
    %c1_137 = arith.constant 1 : index
    %c1_138 = arith.constant 1 : index
    %c0_139 = arith.constant 0 : index
    %120 = vector.load %arg15[%c1_137, %c1_138, %c0_139] : memref<18x18x8xf32, #tpu.memory_space<vmem>>, vector<16x16x8xf32>
    tpu.vector_store %arg15[%c1_137, %c1_138, %c0_139], %119 {strides = array<i32>} : memref<18x18x8xf32, #tpu.memory_space<vmem>>, vector<16x16x8xf32>,
    %c0_140 = arith.constant 0 : index
    %c0_141 = arith.constant 0 : index
    %c0_142 = arith.constant 0 : index
    %121 = vector.load %arg15[%c0_140, %c0_141, %c0_142] : memref<18x18x8xf32, #tpu.memory_space<vmem>>, vector<16x16x8xf32>
    %122 = vector.shape_cast %121 : vector<16x16x8xf32> to vector<256x8xf32>
    %c0_143 = arith.constant 0 : index
    %c1_144 = arith.constant 1 : index
    %c0_145 = arith.constant 0 : index
    %123 = vector.load %arg15[%c0_143, %c1_144, %c0_145] : memref<18x18x8xf32, #tpu.memory_space<vmem>>, vector<16x16x8xf32>
    %124 = vector.shape_cast %123 : vector<16x16x8xf32> to vector<256x8xf32>
    %c0_146 = arith.constant 0 : index
    %c2_147 = arith.constant 2 : index
    %c0_148 = arith.constant 0 : index
    %125 = vector.load %arg15[%c0_146, %c2_147, %c0_148] : memref<18x18x8xf32, #tpu.memory_space<vmem>>, vector<16x16x8xf32>
    %126 = vector.shape_cast %125 : vector<16x16x8xf32> to vector<256x8xf32>
    %c1_149 = arith.constant 1 : index
    %c0_150 = arith.constant 0 : index
    %c0_151 = arith.constant 0 : index
    %127 = vector.load %arg15[%c1_149, %c0_150, %c0_151] : memref<18x18x8xf32, #tpu.memory_space<vmem>>, vector<16x16x8xf32>
    %128 = vector.shape_cast %127 : vector<16x16x8xf32> to vector<256x8xf32>
    %c1_152 = arith.constant 1 : index
    %c1_153 = arith.constant 1 : index
    %c0_154 = arith.constant 0 : index
    %129 = vector.load %arg15[%c1_152, %c1_153, %c0_154] : memref<18x18x8xf32, #tpu.memory_space<vmem>>, vector<16x16x8xf32>
    %130 = vector.shape_cast %129 : vector<16x16x8xf32> to vector<256x8xf32>
    %c1_155 = arith.constant 1 : index
    %c2_156 = arith.constant 2 : index
    %c0_157 = arith.constant 0 : index
    %131 = vector.load %arg15[%c1_155, %c2_156, %c0_157] : memref<18x18x8xf32, #tpu.memory_space<vmem>>, vector<16x16x8xf32>
    %132 = vector.shape_cast %131 : vector<16x16x8xf32> to vector<256x8xf32>
    %c2_158 = arith.constant 2 : index
    %c0_159 = arith.constant 0 : index
    %c0_160 = arith.constant 0 : index
    %133 = vector.load %arg15[%c2_158, %c0_159, %c0_160] : memref<18x18x8xf32, #tpu.memory_space<vmem>>, vector<16x16x8xf32>
    %134 = vector.shape_cast %133 : vector<16x16x8xf32> to vector<256x8xf32>
    %c2_161 = arith.constant 2 : index
    %c1_162 = arith.constant 1 : index
    %c0_163 = arith.constant 0 : index
    %135 = vector.load %arg15[%c2_161, %c1_162, %c0_163] : memref<18x18x8xf32, #tpu.memory_space<vmem>>, vector<16x16x8xf32>
    %136 = vector.shape_cast %135 : vector<16x16x8xf32> to vector<256x8xf32>
    %c2_164 = arith.constant 2 : index
    %c2_165 = arith.constant 2 : index
    %c0_166 = arith.constant 0 : index
    %137 = vector.load %arg15[%c2_164, %c2_165, %c0_166] : memref<18x18x8xf32, #tpu.memory_space<vmem>>, vector<16x16x8xf32>
    %138 = vector.shape_cast %137 : vector<16x16x8xf32> to vector<256x8xf32>
    %139 = tpu.concatenate %122, %124, %126, %128, %130, %132, %134, %136, %138 in 1 : vector<256x8xf32>, vector<256x8xf32>, vector<256x8xf32>, vector<256x8xf32>, vector<256x8xf32>, vector<256x8xf32>, vector<256x8xf32>, vector<256x8xf32>, vector<256x8xf32> -> vector<256x72xf32>
    %c0_167 = arith.constant 0 : index
    %c0_168 = arith.constant 0 : index
    %140 = vector.load %arg12[%c0_167, %c0_168] : memref<72x4xf32, #tpu.memory_space<vmem>>, vector<72x4xf32>
    %cst_169 = arith.constant dense<0.000000e+00> : vector<256x4xf32>
    %141 = tpu.matmul %139, %140, %cst_169 {dimension_numbers = #tpu.dot_dimension_numbers<[1], [0], [0], [1], [0, 0, 1, 1], [], []>} : vector<256x72xf32>, vector<72x4xf32>, vector<256x4xf32> -> vector<256x4xf32>
    %c0_170 = arith.constant 0 : index
    %c0_171 = arith.constant 0 : index
    %142 = vector.load %arg13[%c0_170, %c0_171] : memref<1x4xf32, #tpu.memory_space<vmem>>, vector<1x4xf32>
    %143 = vector.broadcast %142 : vector<1x4xf32> to vector<256x4xf32>
    %144 = arith.addf %141, %143 : vector<256x4xf32>
    %c0_172 = arith.constant 0 : index
    %c0_173 = arith.constant 0 : index
    %c0_174 = arith.constant 0 : index
    %145 = vector.load %arg14[%c0_172, %c0_173, %c0_174] : memref<1x256x4xf32, #tpu.memory_space<vmem>>, vector<1x256x4xf32>
    %146 = vector.shape_cast %145 : vector<1x256x4xf32> to vector<256x4xf32>
    %147 = vector.shape_cast %144 : vector<256x4xf32> to vector<1x256x4xf32>
    tpu.vector_store %arg14[%c0_172, %c0_173, %c0_174], %147 {strides = array<i32>} : memref<1x256x4xf32, #tpu.memory_space<vmem>>, vector<1x256x4xf32>,
    return
  }
  func.func @transform_0(%arg0: i32) -> (i32, i32, i32, i32) {
    %c0_i32 = arith.constant 0 : i32
    %c0_i32_0 = arith.constant 0 : i32
    %c0_i32_1 = arith.constant 0 : i32
    %c0_i32_2 = arith.constant 0 : i32
    return %arg0, %c0_i32, %c0_i32_0, %c0_i32_1 : i32, i32, i32, i32
  }
  func.func @transform_1(%arg0: i32) -> (i32, i32) {
    %c0_i32 = arith.constant 0 : i32
    %c0_i32_0 = arith.constant 0 : i32
    %c0_i32_1 = arith.constant 0 : i32
    return %c0_i32, %c0_i32_0 : i32, i32
  }
  func.func @transform_2(%arg0: i32) -> (i32, i32) {
    %c0_i32 = arith.constant 0 : i32
    %c0_i32_0 = arith.constant 0 : i32
    %c0_i32_1 = arith.constant 0 : i32
    return %c0_i32, %c0_i32_0 : i32, i32
  }
  func.func @transform_3(%arg0: i32) -> (i32, i32) {
    %c0_i32 = arith.constant 0 : i32
    %c0_i32_0 = arith.constant 0 : i32
    %c0_i32_1 = arith.constant 0 : i32
    return %c0_i32, %c0_i32_0 : i32, i32
  }
  func.func @transform_4(%arg0: i32) -> (i32, i32) {
    %c0_i32 = arith.constant 0 : i32
    %c0_i32_0 = arith.constant 0 : i32
    %c0_i32_1 = arith.constant 0 : i32
    return %c0_i32, %c0_i32_0 : i32, i32
  }
  func.func @transform_5(%arg0: i32) -> (i32, i32) {
    %c0_i32 = arith.constant 0 : i32
    %c0_i32_0 = arith.constant 0 : i32
    %c0_i32_1 = arith.constant 0 : i32
    return %c0_i32, %c0_i32_0 : i32, i32
  }
  func.func @transform_6(%arg0: i32) -> (i32, i32) {
    %c0_i32 = arith.constant 0 : i32
    %c0_i32_0 = arith.constant 0 : i32
    %c0_i32_1 = arith.constant 0 : i32
    return %c0_i32, %c0_i32_0 : i32, i32
  }
  func.func @transform_7(%arg0: i32) -> (i32, i32) {
    %c0_i32 = arith.constant 0 : i32
    %c0_i32_0 = arith.constant 0 : i32
    %c0_i32_1 = arith.constant 0 : i32
    return %c0_i32, %c0_i32_0 : i32, i32
  }
  func.func @transform_8(%arg0: i32) -> (i32, i32) {
    %c0_i32 = arith.constant 0 : i32
    %c0_i32_0 = arith.constant 0 : i32
    %c0_i32_1 = arith.constant 0 : i32
    return %c0_i32, %c0_i32_0 : i32, i32
  }
  func.func @transform_9(%arg0: i32) -> (i32, i32) {
    %c0_i32 = arith.constant 0 : i32
    %c0_i32_0 = arith.constant 0 : i32
    %c0_i32_1 = arith.constant 0 : i32
    return %c0_i32, %c0_i32_0 : i32, i32
  }
  func.func @transform_10(%arg0: i32) -> (i32, i32) {
    %c0_i32 = arith.constant 0 : i32
    %c0_i32_0 = arith.constant 0 : i32
    %c0_i32_1 = arith.constant 0 : i32
    return %c0_i32, %c0_i32_0 : i32, i32
  }
  func.func @transform_11(%arg0: i32) -> (i32, i32) {
    %c0_i32 = arith.constant 0 : i32
    %c0_i32_0 = arith.constant 0 : i32
    %c0_i32_1 = arith.constant 0 : i32
    return %c0_i32, %c0_i32_0 : i32, i32
  }
  func.func @transform_12(%arg0: i32) -> (i32, i32) {
    %c0_i32 = arith.constant 0 : i32
    %c0_i32_0 = arith.constant 0 : i32
    %c0_i32_1 = arith.constant 0 : i32
    return %c0_i32, %c0_i32_0 : i32, i32
  }
  func.func @transform_13(%arg0: i32) -> (i32, i32, i32) {
    %c0_i32 = arith.constant 0 : i32
    %c0_i32_0 = arith.constant 0 : i32
    %c0_i32_1 = arith.constant 0 : i32
    return %arg0, %c0_i32, %c0_i32_0 : i32, i32, i32
  }
}

</mosaic_0001>

<llo_original>
// kernel: tpu_custom_call.1
$region0: #{tpu_custom_call.1}
  #allocation0 [shape = 'u32[]', space=smem, size = 0x4, offset = 0x4, fixed_abs, tag = 'smem constant byte address 0x4 - core index']
  #allocation1 [shape = 'u32[144,128]{1,0:T(1,128)}', space=vmem, size = 0x12000, scoped, tag = 'internal scratch']
  #allocation2 [shape = 'f32[18,18,8]{2,1,0:T(8,128)}', space=vmem, size = 0x36000, scoped, tag = 'scratch operand']
  %s0 = inlined_call_operand.vmem [shape: f32[2,16,16,8], index: 0, kind: input, shape index: {}]
  %s1 = inlined_call_operand.vmem [shape: f32[72,8], index: 1, kind: input, shape index: {}]
  %s2 = inlined_call_operand.vmem [shape: f32[1,8], index: 2, kind: input, shape index: {}]
  %s3 = inlined_call_operand.vmem [shape: f32[72,8], index: 3, kind: input, shape index: {}]
  %s4 = inlined_call_operand.vmem [shape: f32[1,8], index: 4, kind: input, shape index: {}]
  %s5 = inlined_call_operand.vmem [shape: f32[72,8], index: 5, kind: input, shape index: {}]
  %s6 = inlined_call_operand.vmem [shape: f32[1,8], index: 6, kind: input, shape index: {}]
  %s7 = inlined_call_operand.vmem [shape: f32[2,8], index: 7, kind: input, shape index: {}]
  %s8 = inlined_call_operand.vmem [shape: f32[2,1], index: 8, kind: input, shape index: {}]
  %s9 = inlined_call_operand.vmem [shape: f32[2,8], index: 9, kind: input, shape index: {}]
  %s10 = inlined_call_operand.vmem [shape: f32[1,8], index: 10, kind: input, shape index: {}]
  %s11 = inlined_call_operand.vmem [shape: f32[72,4], index: 11, kind: input, shape index: {}]
  %s12 = inlined_call_operand.vmem [shape: f32[1,4], index: 12, kind: input, shape index: {}]
  %s13 = inlined_call_operand.vmem [shape: f32[2,256,4], index: 13, kind: output, shape index: {}]
  %s14 = sld [smem:[#allocation0]]
  $region85: #{tpu_custom_call.1} parent=0
    _
  %s16 = ssub.s32 1, %s14
  %s17 = scalar_select 0, %s16, %s14
  loop: start=0, step=1, limit=4
  $region2: #{tpu_custom_call.1} parent=0 // loop_pre_header
    _
  $region3: #{tpu_custom_call.1} parent=0 // loop_header
    %s19 = sphi 0, %s23
    %p20 = scmp.ge.s32.totalorder %s19, 4
    %s29 = sphi 0, %s31
    %s32 = sphi 0, %s29
    %s33 = sphi 0, %s32
    %s49 = sphi 0, %s33
    %s53 = sphi 0, %s53
    %s55 = sphi 0, %s53
    %s56 = sphi 0, %s55
    %s70 = sphi 0, %s56
    %s74 = sphi 0, %s74
    %s76 = sphi 0, %s74
    %s77 = sphi 0, %s76
    %s91 = sphi 0, %s77
    %s95 = sphi 0, %s95
    %s97 = sphi 0, %s95
    %s98 = sphi 0, %s97
    %s112 = sphi 0, %s98
    %s116 = sphi 0, %s116
    %s118 = sphi 0, %s116
    %s119 = sphi 0, %s118
    %s133 = sphi 0, %s119
    %s137 = sphi 0, %s137
    %s139 = sphi 0, %s137
    %s140 = sphi 0, %s139
    %s154 = sphi 0, %s140
    %s158 = sphi 0, %s158
    %s160 = sphi 0, %s158
    %s161 = sphi 0, %s160
    %s175 = sphi 0, %s161
    %s179 = sphi 0, %s179
    %s181 = sphi 0, %s179
    %s182 = sphi 0, %s181
    %s196 = sphi 0, %s182
    %s200 = sphi 0, %s200
    %s202 = sphi 0, %s200
    %s203 = sphi 0, %s202
    %s217 = sphi 0, %s203
    %s221 = sphi 0, %s221
    %s223 = sphi 0, %s221
    %s224 = sphi 0, %s223
    %s238 = sphi 0, %s224
    %s242 = sphi 0, %s242
    %s244 = sphi 0, %s242
    %s245 = sphi 0, %s244
    %s259 = sphi 0, %s245
    %s263 = sphi 0, %s263
    %s265 = sphi 0, %s263
    %s266 = sphi 0, %s265
    %s280 = sphi 0, %s266
    %s284 = sphi 0, %s284
    %s286 = sphi 0, %s284
    %s287 = sphi 0, %s286
    %s301 = sphi 0, %s287
    %s307 = sphi 0, %s309
    %s310 = sphi 0, %s307
    %s311 = sphi 0, %s310
    %s327 = sphi 0, %s311
  $region4: #{tpu_custom_call.1} parent=0 // loop_header_branch
    %22 = sbr.rel (%p20) target = $region8
  $region5: #{tpu_custom_call.1} parent=0 // loop_body
    %s24 = ssub.s32 %s19, 1
    %s25 = ssub.s32 %s19, 2
    %s26 = sadd.s32 %s19, 1
    %s27 = ssub.s32 %s19, %s26
    %p28 = scmp.eq.s32.totalorder %s27, 0
    %s30 = sadd.s32 %s29, 1
    %s31 = scalar_select %p28, %s29, %s30
    %p34 = pneg %p28
    %p35 = scmp.eq.s32.totalorder %s19, 1
    %p36 = por %p34, %p35
    %p37 = scmp.ne.s32.totalorder %s29, %s32
    %p38 = scmp.eq.s32.totalorder %s19, 0
    %p39 = por %p37, %p38
    %p40 = scmp.ne.s32.totalorder %s29, %s32
    %p41 = scmp.eq.s32.totalorder %s24, 1
    %p42 = por %p40, %p41
    %p43 = scmp.ne.s32.totalorder %s32, %s33
    %p44 = scmp.eq.s32.totalorder %s24, 0
    %p45 = por %p43, %p44
    %p46 = scmp.ne.s32.totalorder %s32, %s33
    %p47 = scmp.eq.s32.totalorder %s25, 1
    %p48 = por %p46, %p47
    %p50 = scmp.ne.s32.totalorder %s33, %s49
    %p51 = scmp.eq.s32.totalorder %s25, 0
    %p52 = por %p50, %p51
    %s54 = sadd.s32 %s53, 1
    %p57 = scmp.eq.s32.totalorder %s19, 1
    %p58 = scmp.ne.s32.totalorder %s53, %s55
    %p59 = scmp.eq.s32.totalorder %s19, 0
    %p60 = por %p58, %p59
    %p61 = scmp.ne.s32.totalorder %s53, %s55
    %p62 = scmp.eq.s32.totalorder %s24, 1
    %p63 = por %p61, %p62
    %p64 = scmp.ne.s32.totalorder %s55, %s56
    %p65 = scmp.eq.s32.totalorder %s24, 0
    %p66 = por %p64, %p65
    %p67 = scmp.ne.s32.totalorder %s55, %s56
    %p68 = scmp.eq.s32.totalorder %s25, 1
    %p69 = por %p67, %p68
    %p71 = scmp.ne.s32.totalorder %s56, %s70
    %p72 = scmp.eq.s32.totalorder %s25, 0
    %p73 = por %p71, %p72
    %s75 = sadd.s32 %s74, 1
    %p78 = scmp.eq.s32.totalorder %s19, 1
    %p79 = scmp.ne.s32.totalorder %s74, %s76
    %p80 = scmp.eq.s32.totalorder %s19, 0
    %p81 = por %p79, %p80
    %p82 = scmp.ne.s32.totalorder %s74, %s76
    %p83 = scmp.eq.s32.totalorder %s24, 1
    %p84 = por %p82, %p83
    %p85 = scmp.ne.s32.totalorder %s76, %s77
    %p86 = scmp.eq.s32.totalorder %s24, 0
    %p87 = por %p85, %p86
    %p88 = scmp.ne.s32.totalorder %s76, %s77
    %p89 = scmp.eq.s32.totalorder %s25, 1
    %p90 = por %p88, %p89
    %p92 = scmp.ne.s32.totalorder %s77, %s91
    %p93 = scmp.eq.s32.totalorder %s25, 0
    %p94 = por %p92, %p93
    %s96 = sadd.s32 %s95, 1
    %p99 = scmp.eq.s32.totalorder %s19, 1
    %p100 = scmp.ne.s32.totalorder %s95, %s97
    %p101 = scmp.eq.s32.totalorder %s19, 0
    %p102 = por %p100, %p101
    %p103 = scmp.ne.s32.totalorder %s95, %s97
    %p104 = scmp.eq.s32.totalorder %s24, 1
    %p105 = por %p103, %p104
    %p106 = scmp.ne.s32.totalorder %s97, %s98
    %p107 = scmp.eq.s32.totalorder %s24, 0
    %p108 = por %p106, %p107
    %p109 = scmp.ne.s32.totalorder %s97, %s98
    %p110 = scmp.eq.s32.totalorder %s25, 1
    %p111 = por %p109, %p110
    %p113 = scmp.ne.s32.totalorder %s98, %s112
    %p114 = scmp.eq.s32.totalorder %s25, 0
    %p115 = por %p113, %p114
    %s117 = sadd.s32 %s116, 1
    %p120 = scmp.eq.s32.totalorder %s19, 1
    %p121 = scmp.ne.s32.totalorder %s116, %s118
    %p122 = scmp.eq.s32.totalorder %s19, 0
    %p123 = por %p121, %p122
    %p124 = scmp.ne.s32.totalorder %s116, %s118
    %p125 = scmp.eq.s32.totalorder %s24, 1
    %p126 = por %p124, %p125
    %p127 = scmp.ne.s32.totalorder %s118, %s119
    %p128 = scmp.eq.s32.totalorder %s24, 0
    %p129 = por %p127, %p128
    %p130 = scmp.ne.s32.totalorder %s118, %s119
    %p131 = scmp.eq.s32.totalorder %s25, 1
    %p132 = por %p130, %p131
    %p134 = scmp.ne.s32.totalorder %s119, %s133
    %p135 = scmp.eq.s32.totalorder %s25, 0
    %p136 = por %p134, %p135
    %s138 = sadd.s32 %s137, 1
    %p141 = scmp.eq.s32.totalorder %s19, 1
    %p142 = scmp.ne.s32.totalorder %s137, %s139
    %p143 = scmp.eq.s32.totalorder %s19, 0
    %p144 = por %p142, %p143
    %p145 = scmp.ne.s32.totalorder %s137, %s139
    %p146 = scmp.eq.s32.totalorder %s24, 1
    %p147 = por %p145, %p146
    %p148 = scmp.ne.s32.totalorder %s139, %s140
    %p149 = scmp.eq.s32.totalorder %s24, 0
    %p150 = por %p148, %p149
    %p151 = scmp.ne.s32.totalorder %s139, %s140
    %p152 = scmp.eq.s32.totalorder %s25, 1
    %p153 = por %p151, %p152
    %p155 = scmp.ne.s32.totalorder %s140, %s154
    %p156 = scmp.eq.s32.totalorder %s25, 0
    %p157 = por %p155, %p156
    %s159 = sadd.s32 %s158, 1
    %p162 = scmp.eq.s32.totalorder %s19, 1
    %p163 = scmp.ne.s32.totalorder %s158, %s160
    %p164 = scmp.eq.s32.totalorder %s19, 0
    %p165 = por %p163, %p164
    %p166 = scmp.ne.s32.totalorder %s158, %s160
    %p167 = scmp.eq.s32.totalorder %s24, 1
    %p168 = por %p166, %p167
    %p169 = scmp.ne.s32.totalorder %s160, %s161
    %p170 = scmp.eq.s32.totalorder %s24, 0
    %p171 = por %p169, %p170
    %p172 = scmp.ne.s32.totalorder %s160, %s161
    %p173 = scmp.eq.s32.totalorder %s25, 1
    %p174 = por %p172, %p173
    %p176 = scmp.ne.s32.totalorder %s161, %s175
    %p177 = scmp.eq.s32.totalorder %s25, 0
    %p178 = por %p176, %p177
    %s180 = sadd.s32 %s179, 1
    %p183 = scmp.eq.s32.totalorder %s19, 1
    %p184 = scmp.ne.s32.totalorder %s179, %s181
    %p185 = scmp.eq.s32.totalorder %s19, 0
    %p186 = por %p184, %p185
    %p187 = scmp.ne.s32.totalorder %s179, %s181
    %p188 = scmp.eq.s32.totalorder %s24, 1
    %p189 = por %p187, %p188
    %p190 = scmp.ne.s32.totalorder %s181, %s182
    %p191 = scmp.eq.s32.totalorder %s24, 0
    %p192 = por %p190, %p191
    %p193 = scmp.ne.s32.totalorder %s181, %s182
    %p194 = scmp.eq.s32.totalorder %s25, 1
    %p195 = por %p193, %p194
    %p197 = scmp.ne.s32.totalorder %s182, %s196
    %p198 = scmp.eq.s32.totalorder %s25, 0
    %p199 = por %p197, %p198
    %s201 = sadd.s32 %s200, 1
    %p204 = scmp.eq.s32.totalorder %s19, 1
    %p205 = scmp.ne.s32.totalorder %s200, %s202
    %p206 = scmp.eq.s32.totalorder %s19, 0
    %p207 = por %p205, %p206
    %p208 = scmp.ne.s32.totalorder %s200, %s202
    %p209 = scmp.eq.s32.totalorder %s24, 1
    %p210 = por %p208, %p209
    %p211 = scmp.ne.s32.totalorder %s202, %s203
    %p212 = scmp.eq.s32.totalorder %s24, 0
    %p213 = por %p211, %p212
    %p214 = scmp.ne.s32.totalorder %s202, %s203
    %p215 = scmp.eq.s32.totalorder %s25, 1
    %p216 = por %p214, %p215
    %p218 = scmp.ne.s32.totalorder %s203, %s217
    %p219 = scmp.eq.s32.totalorder %s25, 0
    %p220 = por %p218, %p219
    %s222 = sadd.s32 %s221, 1
    %p225 = scmp.eq.s32.totalorder %s19, 1
    %p226 = scmp.ne.s32.totalorder %s221, %s223
    %p227 = scmp.eq.s32.totalorder %s19, 0
    %p228 = por %p226, %p227
    %p229 = scmp.ne.s32.totalorder %s221, %s223
    %p230 = scmp.eq.s32.totalorder %s24, 1
    %p231 = por %p229, %p230
    %p232 = scmp.ne.s32.totalorder %s223, %s224
    %p233 = scmp.eq.s32.totalorder %s24, 0
    %p234 = por %p232, %p233
    %p235 = scmp.ne.s32.totalorder %s223, %s224
    %p236 = scmp.eq.s32.totalorder %s25, 1
    %p237 = por %p235, %p236
    %p239 = scmp.ne.s32.totalorder %s224, %s238
    %p240 = scmp.eq.s32.totalorder %s25, 0
    %p241 = por %p239, %p240
    %s243 = sadd.s32 %s242, 1
    %p246 = scmp.eq.s32.totalorder %s19, 1
    %p247 = scmp.ne.s32.totalorder %s242, %s244
    %p248 = scmp.eq.s32.totalorder %s19, 0
    %p249 = por %p247, %p248
    %p250 = scmp.ne.s32.totalorder %s242, %s244
    %p251 = scmp.eq.s32.totalorder %s24, 1
    %p252 = por %p250, %p251
    %p253 = scmp.ne.s32.totalorder %s244, %s245
    %p254 = scmp.eq.s32.totalorder %s24, 0
    %p255 = por %p253, %p254
    %p256 = scmp.ne.s32.totalorder %s244, %s245
    %p257 = scmp.eq.s32.totalorder %s25, 1
    %p258 = por %p256, %p257
    %p260 = scmp.ne.s32.totalorder %s245, %s259
    %p261 = scmp.eq.s32.totalorder %s25, 0
    %p262 = por %p260, %p261
    %s264 = sadd.s32 %s263, 1
    %p267 = scmp.eq.s32.totalorder %s19, 1
    %p268 = scmp.ne.s32.totalorder %s263, %s265
    %p269 = scmp.eq.s32.totalorder %s19, 0
    %p270 = por %p268, %p269
    %p271 = scmp.ne.s32.totalorder %s263, %s265
    %p272 = scmp.eq.s32.totalorder %s24, 1
    %p273 = por %p271, %p272
    %p274 = scmp.ne.s32.totalorder %s265, %s266
    %p275 = scmp.eq.s32.totalorder %s24, 0
    %p276 = por %p274, %p275
    %p277 = scmp.ne.s32.totalorder %s265, %s266
    %p278 = scmp.eq.s32.totalorder %s25, 1
    %p279 = por %p277, %p278
    %p281 = scmp.ne.s32.totalorder %s266, %s280
    %p282 = scmp.eq.s32.totalorder %s25, 0
    %p283 = por %p281, %p282
    %s285 = sadd.s32 %s284, 1
    %p288 = scmp.eq.s32.totalorder %s19, 1
    %p289 = scmp.ne.s32.totalorder %s284, %s286
    %p290 = scmp.eq.s32.totalorder %s19, 0
    %p291 = por %p289, %p290
    %p292 = scmp.ne.s32.totalorder %s284, %s286
    %p293 = scmp.eq.s32.totalorder %s24, 1
    %p294 = por %p292, %p293
    %p295 = scmp.ne.s32.totalorder %s286, %s287
    %p296 = scmp.eq.s32.totalorder %s24, 0
    %p297 = por %p295, %p296
    %p298 = scmp.ne.s32.totalorder %s286, %s287
    %p299 = scmp.eq.s32.totalorder %s25, 1
    %p300 = por %p298, %p299
    %p302 = scmp.ne.s32.totalorder %s287, %s301
    %p303 = scmp.eq.s32.totalorder %s25, 0
    %p304 = por %p302, %p303
    %s305 = ssub.s32 %s19, %s26
    %p306 = scmp.eq.s32.totalorder %s305, 0
    %s308 = sadd.s32 %s307, 1
    %s309 = scalar_select %p306, %s307, %s308
    %p312 = pneg %p306
    %p313 = scmp.eq.s32.totalorder %s19, 1
    %p314 = por %p312, %p313
    %p315 = scmp.ne.s32.totalorder %s307, %s310
    %p316 = scmp.eq.s32.totalorder %s19, 0
    %p317 = por %p315, %p316
    %p318 = scmp.ne.s32.totalorder %s307, %s310
    %p319 = scmp.eq.s32.totalorder %s24, 1
    %p320 = por %p318, %p319
    %p321 = scmp.ne.s32.totalorder %s310, %s311
    %p322 = scmp.eq.s32.totalorder %s24, 0
    %p323 = por %p321, %p322
    %p324 = scmp.ne.s32.totalorder %s310, %s311
    %p325 = scmp.eq.s32.totalorder %s25, 1
    %p326 = por %p324, %p325
    %p328 = scmp.ne.s32.totalorder %s311, %s327
    %p329 = scmp.eq.s32.totalorder %s25, 0
    %p330 = por %p328, %p329
    %p331 = scmp.le.s32.totalorder 1, %s19
    %p332 = scmp.lt.s32.totalorder %s19, 3
    %p333 = pnand %p331, %p332
    %p334 = pneg %p333
    // Predicated region
    $region9: #{tpu_custom_call.1} parent=5 // pred_check
      _
    $region10: #{tpu_custom_call.1} parent=5 // pred_check_branch
      %336 = sbr.rel (%p333) target = $region12
    $region11: #{tpu_custom_call.1} parent=5 // pred_region
      %s337 = ssub.s32 %s19, 1
      // Predicated region
      $region13: #{tpu_custom_call.1} parent=11 // pred_check
        %p338 = pneg %p66
      $region14: #{tpu_custom_call.1} parent=11 // pred_check_branch
        %340 = sbr.rel (%p338) target = $region16
      $region15: #{tpu_custom_call.1} parent=11 // pred_region
        _
      $region16: #{tpu_custom_call.1} parent=11 // pred_fallthru
        _
      // Predicated region
      $region17: #{tpu_custom_call.1} parent=11 // pred_check
        %p341 = pneg %p87
      $region18: #{tpu_custom_call.1} parent=11 // pred_check_branch
        %343 = sbr.rel (%p341) target = $region20
      $region19: #{tpu_custom_call.1} parent=11 // pred_region
        _
      $region20: #{tpu_custom_call.1} parent=11 // pred_fallthru
        _
      // Predicated region
      $region21: #{tpu_custom_call.1} parent=11 // pred_check
        %p344 = pneg %p108
      $region22: #{tpu_custom_call.1} parent=11 // pred_check_branch
        %346 = sbr.rel (%p344) target = $region24
      $region23: #{tpu_custom_call.1} parent=11 // pred_region
        _
      $region24: #{tpu_custom_call.1} parent=11 // pred_fallthru
        _
      // Predicated region
      $region25: #{tpu_custom_call.1} parent=11 // pred_check
        %p347 = pneg %p129
      $region26: #{tpu_custom_call.1} parent=11 // pred_check_branch
        %349 = sbr.rel (%p347) target = $region28
      $region27: #{tpu_custom_call.1} parent=11 // pred_region
        _
      $region28: #{tpu_custom_call.1} parent=11 // pred_fallthru
        _
      // Predicated region
      $region29: #{tpu_custom_call.1} parent=11 // pred_check
        %p350 = pneg %p150
      $region30: #{tpu_custom_call.1} parent=11 // pred_check_branch
        %352 = sbr.rel (%p350) target = $region32
      $region31: #{tpu_custom_call.1} parent=11 // pred_region
        _
      $region32: #{tpu_custom_call.1} parent=11 // pred_fallthru
        _
      // Predicated region
      $region33: #{tpu_custom_call.1} parent=11 // pred_check
        %p353 = pneg %p171
      $region34: #{tpu_custom_call.1} parent=11 // pred_check_branch
        %355 = sbr.rel (%p353) target = $region36
      $region35: #{tpu_custom_call.1} parent=11 // pred_region
        _
      $region36: #{tpu_custom_call.1} parent=11 // pred_fallthru
        _
      // Predicated region
      $region37: #{tpu_custom_call.1} parent=11 // pred_check
        %p356 = pneg %p192
      $region38: #{tpu_custom_call.1} parent=11 // pred_check_branch
        %358 = sbr.rel (%p356) target = $region40
      $region39: #{tpu_custom_call.1} parent=11 // pred_region
        _
      $region40: #{tpu_custom_call.1} parent=11 // pred_fallthru
        _
      // Predicated region
      $region41: #{tpu_custom_call.1} parent=11 // pred_check
        %p359 = pneg %p213
      $region42: #{tpu_custom_call.1} parent=11 // pred_check_branch
        %361 = sbr.rel (%p359) target = $region44
      $region43: #{tpu_custom_call.1} parent=11 // pred_region
        _
      $region44: #{tpu_custom_call.1} parent=11 // pred_fallthru
        _
      // Predicated region
      $region45: #{tpu_custom_call.1} parent=11 // pred_check
        %p362 = pneg %p234
      $region46: #{tpu_custom_call.1} parent=11 // pred_check_branch
        %364 = sbr.rel (%p362) target = $region48
      $region47: #{tpu_custom_call.1} parent=11 // pred_region
        _
      $region48: #{tpu_custom_call.1} parent=11 // pred_fallthru
        _
      // Predicated region
      $region49: #{tpu_custom_call.1} parent=11 // pred_check
        %p365 = pneg %p255
      $region50: #{tpu_custom_call.1} parent=11 // pred_check_branch
        %367 = sbr.rel (%p365) target = $region52
      $region51: #{tpu_custom_call.1} parent=11 // pred_region
        _
      $region52: #{tpu_custom_call.1} parent=11 // pred_fallthru
        _
      // Predicated region
      $region53: #{tpu_custom_call.1} parent=11 // pred_check
        %p368 = pneg %p276
      $region54: #{tpu_custom_call.1} parent=11 // pred_check_branch
        %370 = sbr.rel (%p368) target = $region56
      $region55: #{tpu_custom_call.1} parent=11 // pred_region
        _
      $region56: #{tpu_custom_call.1} parent=11 // pred_fallthru
        _
      // Predicated region
      $region57: #{tpu_custom_call.1} parent=11 // pred_check
        %p371 = pneg %p297
      $region58: #{tpu_custom_call.1} parent=11 // pred_check_branch
        %373 = sbr.rel (%p371) target = $region60
      $region59: #{tpu_custom_call.1} parent=11 // pred_region
        _
      $region60: #{tpu_custom_call.1} parent=11 // pred_fallthru
        _
    $region12: #{tpu_custom_call.1} parent=5 // pred_fallthru
      _
    %p374 = scmp.lt.s32.totalorder %s19, 2
    // Predicated region
    $region61: #{tpu_custom_call.1} parent=5 // pred_check
      %p375 = pneg %p374
    $region62: #{tpu_custom_call.1} parent=5 // pred_check_branch
      %377 = sbr.rel (%p375) target = $region64
    $region63: #{tpu_custom_call.1} parent=5 // pred_region
      // Predicated region
      $region65: #{tpu_custom_call.1} parent=63 // pred_check
        %p378 = pneg %p39
      $region66: #{tpu_custom_call.1} parent=63 // pred_check_branch
        %380 = sbr.rel (%p378) target = $region68
      $region67: #{tpu_custom_call.1} parent=63 // pred_region
        %p381 = scmp.lt.s32.totalorder %s19, 1
        %s382 = scalar_select %p381, %s19, 1
        %s383 = smul.addr %s382, 32
        %s384 = smul.addr %s383, 8
        %s385 = scalar_lea.vmem %s0, %s384
      $region68: #{tpu_custom_call.1} parent=63 // pred_fallthru
        _
    $region64: #{tpu_custom_call.1} parent=5 // pred_fallthru
      _
    %p386 = scmp.le.s32.totalorder 1, %s19
    %p387 = scmp.lt.s32.totalorder %s19, 3
    %p388 = pnand %p386, %p387
    %p389 = pneg %p388
    // Predicated region
    $region69: #{tpu_custom_call.1} parent=5 // pred_check
      _
    $region70: #{tpu_custom_call.1} parent=5 // pred_check_branch
      %391 = sbr.rel (%p388) target = $region72
    $region71: #{tpu_custom_call.1} parent=5 // pred_region
      %s392 = ssub.s32 %s19, 1
      %p393 = scmp.lt.s32.totalorder %s24, 1
      %s394 = scalar_select %p393, %s24, 1
      %s395 = smul.addr %s394, 32
      %s396 = smul.addr %s395, 8
      %s397 = scalar_lea.vmem %s0, %s396
      %p398 = pneg %p45
      %p399 = pneg %p42
      %p400 = pneg %p66
      %p401 = pneg %p63
      %p402 = pneg %p87
      %p403 = pneg %p84
      %p404 = pneg %p108
      %p405 = pneg %p105
      %p406 = pneg %p129
      %p407 = pneg %p126
      %p408 = pneg %p150
      %p409 = pneg %p147
      %p410 = pneg %p171
      %p411 = pneg %p168
      %p412 = pneg %p192
      %p413 = pneg %p189
      %p414 = pneg %p213
      %p415 = pneg %p210
      %p416 = pneg %p234
      %p417 = pneg %p231
      %p418 = pneg %p255
      %p419 = pneg %p252
      %p420 = pneg %p276
      %p421 = pneg %p273
      %p422 = pneg %p297
      %p423 = pneg %p294
      %p424 = pneg %p323
      %p425 = pneg %p320
      %p426 = scmp.lt.s32.totalorder %s24, 1
      %s427 = scalar_select %p426, %s24, 1
      %s428 = smul.addr %s427, 32
      %s429 = smul.addr %s428, 8
      %s430 = scalar_lea.vmem %s13, %s429
      %p431 = scmp.lt.s32.totalorder %s24, 1
      %s432 = scalar_select %p431, %s24, 1
      %s433 = smul.addr %s432, 32
      %s434 = smul.addr %s433, 8
      %s435 = scalar_lea.vmem %s0, %s434
      %p436 = scmp.lt.s32.totalorder %s24, 1
      %s437 = scalar_select %p436, %s24, 1
      %s438 = smul.addr %s437, 32
      %s439 = smul.addr %s438, 8
      %s440 = scalar_lea.vmem %s13, %s439
      %vm441 = vcmask 64512
      %442 = vst.msk [vmem:[#allocation2] sm:$0xff] %vm441, 0.0
      %443 = vst.msk [vmem:[#allocation2 + $0x8] sm:$0xff] %vm441, 0.0
      %vm444 = vcmask 58368
      %445 = vst.msk [vmem:[#allocation2 + $0x10] sm:$0x3] %vm444, 0.0
      %s446 = scalar_lea.vmem [#allocation2], 408
      %447 = vst.msk [vmem:[%s446] sm:$0xff] %vm441, 0.0
      %448 = vst.msk [vmem:[%s446 + $0x8] sm:$0xff] %vm441, 0.0
      %449 = vst.msk [vmem:[%s446 + $0x10] sm:$0x3] %vm444, 0.0
      %vm450 = vcmask 57344
      %451 = vst.msk [vmem:[#allocation2] sm:$0x1] %vm450, 0.0
      %452 = vst.msk [vmem:[#allocation2 + $0x18] sm:$0x1] %vm450, 0.0
      %453 = vst.msk [vmem:[#allocation2 + $0x30] sm:$0x1] %vm450, 0.0
      %454 = vst.msk [vmem:[#allocation2 + $0x48] sm:$0x1] %vm450, 0.0
      %455 = vst.msk [vmem:[#allocation2 + $0x60] sm:$0x1] %vm450, 0.0
      %456 = vst.msk [vmem:[#allocation2 + $0x78] sm:$0x1] %vm450, 0.0
      %457 = vst.msk [vmem:[#allocation2 + $0x90] sm:$0x1] %vm450, 0.0
      %458 = vst.msk [vmem:[#allocation2 + $0xa8] sm:$0x1] %vm450, 0.0
      %459 = vst.msk [vmem:[#allocation2 + $0xc0] sm:$0x1] %vm450, 0.0
      %460 = vst.msk [vmem:[#allocation2 + $0xd8] sm:$0x1] %vm450, 0.0
      %461 = vst.msk [vmem:[#allocation2 + $0xf0] sm:$0x1] %vm450, 0.0
      %462 = vst.msk [vmem:[#allocation2 + $0x108] sm:$0x1] %vm450, 0.0
      %463 = vst.msk [vmem:[#allocation2 + $0x120] sm:$0x1] %vm450, 0.0
      %464 = vst.msk [vmem:[#allocation2 + $0x138] sm:$0x1] %vm450, 0.0
      %465 = vst.msk [vmem:[#allocation2 + $0x150] sm:$0x1] %vm450, 0.0
      %466 = vst.msk [vmem:[#allocation2 + $0x168] sm:$0x1] %vm450, 0.0
      %467 = vst.msk [vmem:[#allocation2 + $0x180] sm:$0x1] %vm450, 0.0
      %468 = vst.msk [vmem:[#allocation2 + $0x198] sm:$0x1] %vm450, 0.0
      %469 = vst.msk [vmem:[#allocation2 + $0x11] sm:$0x1] %vm450, 0.0
      %470 = vst.msk [vmem:[#allocation2 + $0x29] sm:$0x1] %vm450, 0.0
      %471 = vst.msk [vmem:[#allocation2 + $0x41] sm:$0x1] %vm450, 0.0
      %472 = vst.msk [vmem:[#allocation2 + $0x59] sm:$0x1] %vm450, 0.0
      %473 = vst.msk [vmem:[#allocation2 + $0x71] sm:$0x1] %vm450, 0.0
      %474 = vst.msk [vmem:[#allocation2 + $0x89] sm:$0x1] %vm450, 0.0
      %475 = vst.msk [vmem:[#allocation2 + $0xa1] sm:$0x1] %vm450, 0.0
      %476 = vst.msk [vmem:[#allocation2 + $0xb9] sm:$0x1] %vm450, 0.0
      %477 = vst.msk [vmem:[#allocation2 + $0xd1] sm:$0x1] %vm450, 0.0
      %478 = vst.msk [vmem:[#allocation2 + $0xe9] sm:$0x1] %vm450, 0.0
      %479 = vst.msk [vmem:[#allocation2 + $0x101] sm:$0x1] %vm450, 0.0
      %480 = vst.msk [vmem:[#allocation2 + $0x119] sm:$0x1] %vm450, 0.0
      %481 = vst.msk [vmem:[#allocation2 + $0x131] sm:$0x1] %vm450, 0.0
      %482 = vst.msk [vmem:[#allocation2 + $0x149] sm:$0x1] %vm450, 0.0
      %483 = vst.msk [vmem:[#allocation2 + $0x161] sm:$0x1] %vm450, 0.0
      %484 = vst.msk [vmem:[#allocation2 + $0x179] sm:$0x1] %vm450, 0.0
      %485 = vst.msk [vmem:[#allocation2 + $0x191] sm:$0x1] %vm450, 0.0
      %486 = vst.msk [vmem:[#allocation2 + $0x1a9] sm:$0x1] %vm450, 0.0
      %v487 = vld [vmem:[%s435] sm:$0xff]
      %v488 = vld [vmem:[%s435 + $0x8] sm:$0xff]
      %v489 = vld [vmem:[%s435 + $0x10] sm:$0xff]
      %v490 = vld [vmem:[%s435 + $0x18] sm:$0xff]
      %v491 = vld [vmem:[%s435 + $0x20] sm:$0xff]
      %v492 = vld [vmem:[%s435 + $0x28] sm:$0xff]
      %v493 = vld [vmem:[%s435 + $0x30] sm:$0xff]
      %v494 = vld [vmem:[%s435 + $0x38] sm:$0xff]
      %v495 = vld [vmem:[%s435 + $0x40] sm:$0xff]
      %v496 = vld [vmem:[%s435 + $0x48] sm:$0xff]
      %v497 = vld [vmem:[%s435 + $0x50] sm:$0xff]
      %v498 = vld [vmem:[%s435 + $0x58] sm:$0xff]
      %v499 = vld [vmem:[%s435 + $0x60] sm:$0xff]
      %v500 = vld [vmem:[%s435 + $0x68] sm:$0xff]
      %v501 = vld [vmem:[%s435 + $0x70] sm:$0xff]
      %v502 = vld [vmem:[%s435 + $0x78] sm:$0xff]
      %v503 = vld [vmem:[%s435 + $0x80] sm:$0xff]
      %v504 = vld [vmem:[%s435 + $0x88] sm:$0xff]
      %v505 = vld [vmem:[%s435 + $0x90] sm:$0xff]
      %v506 = vld [vmem:[%s435 + $0x98] sm:$0xff]
      %v507 = vld [vmem:[%s435 + $0xa0] sm:$0xff]
      %v508 = vld [vmem:[%s435 + $0xa8] sm:$0xff]
      %v509 = vld [vmem:[%s435 + $0xb0] sm:$0xff]
      %v510 = vld [vmem:[%s435 + $0xb8] sm:$0xff]
      %v511 = vld [vmem:[%s435 + $0xc0] sm:$0xff]
      %v512 = vld [vmem:[%s435 + $0xc8] sm:$0xff]
      %v513 = vld [vmem:[%s435 + $0xd0] sm:$0xff]
      %v514 = vld [vmem:[%s435 + $0xd8] sm:$0xff]
      %v515 = vld [vmem:[%s435 + $0xe0] sm:$0xff]
      %v516 = vld [vmem:[%s435 + $0xe8] sm:$0xff]
      %v517 = vld [vmem:[%s435 + $0xf0] sm:$0xff]
      %v518 = vld [vmem:[%s435 + $0xf8] sm:$0xff]
      %s519 = scalar_lea.vmem [#allocation2], 24
      %520 = vst.msk [vmem:[%s519 + $0x1] sm:$0xff] %vm441, %v487
      %521 = vst.msk [vmem:[%s519 + $0x9] sm:$0xff] %vm441, %v488
      %522 = vst.msk [vmem:[%s519 + $0x19] sm:$0xff] %vm441, %v489
      %523 = vst.msk [vmem:[%s519 + $0x21] sm:$0xff] %vm441, %v490
      %524 = vst.msk [vmem:[%s519 + $0x31] sm:$0xff] %vm441, %v491
      %525 = vst.msk [vmem:[%s519 + $0x39] sm:$0xff] %vm441, %v492
      %526 = vst.msk [vmem:[%s519 + $0x49] sm:$0xff] %vm441, %v493
      %527 = vst.msk [vmem:[%s519 + $0x51] sm:$0xff] %vm441, %v494
      %528 = vst.msk [vmem:[%s519 + $0x61] sm:$0xff] %vm441, %v495
      %529 = vst.msk [vmem:[%s519 + $0x69] sm:$0xff] %vm441, %v496
      %530 = vst.msk [vmem:[%s519 + $0x79] sm:$0xff] %vm441, %v497
      %531 = vst.msk [vmem:[%s519 + $0x81] sm:$0xff] %vm441, %v498
      %532 = vst.msk [vmem:[%s519 + $0x91] sm:$0xff] %vm441, %v499
      %533 = vst.msk [vmem:[%s519 + $0x99] sm:$0xff] %vm441, %v500
      %534 = vst.msk [vmem:[%s519 + $0xa9] sm:$0xff] %vm441, %v501
      %535 = vst.msk [vmem:[%s519 + $0xb1] sm:$0xff] %vm441, %v502
      %536 = vst.msk [vmem:[%s519 + $0xc1] sm:$0xff] %vm441, %v503
      %537 = vst.msk [vmem:[%s519 + $0xc9] sm:$0xff] %vm441, %v504
      %538 = vst.msk [vmem:[%s519 + $0xd9] sm:$0xff] %vm441, %v505
      %539 = vst.msk [vmem:[%s519 + $0xe1] sm:$0xff] %vm441, %v506
      %540 = vst.msk [vmem:[%s519 + $0xf1] sm:$0xff] %vm441, %v507
      %541 = vst.msk [vmem:[%s519 + $0xf9] sm:$0xff] %vm441, %v508
      %542 = vst.msk [vmem:[%s519 + $0x109] sm:$0xff] %vm441, %v509
      %543 = vst.msk [vmem:[%s519 + $0x111] sm:$0xff] %vm441, %v510
      %544 = vst.msk [vmem:[%s519 + $0x121] sm:$0xff] %vm441, %v511
      %545 = vst.msk [vmem:[%s519 + $0x129] sm:$0xff] %vm441, %v512
      %546 = vst.msk [vmem:[%s519 + $0x139] sm:$0xff] %vm441, %v513
      %547 = vst.msk [vmem:[%s519 + $0x141] sm:$0xff] %vm441, %v514
      %548 = vst.msk [vmem:[%s519 + $0x151] sm:$0xff] %vm441, %v515
      %549 = vst.msk [vmem:[%s519 + $0x159] sm:$0xff] %vm441, %v516
      %550 = vst.msk [vmem:[%s519 + $0x169] sm:$0xff] %vm441, %v517
      %551 = vst.msk [vmem:[%s519 + $0x171] sm:$0xff] %vm441, %v518
      %v552 = vld [vmem:[#allocation2] sm:$0xff]
      %v553 = vld [vmem:[#allocation2 + $0x8] sm:$0xff]
      %v554 = vld [vmem:[#allocation2 + $0x18] sm:$0xff]
      %v555 = vld [vmem:[#allocation2 + $0x20] sm:$0xff]
      %v556 = vld [vmem:[#allocation2 + $0x30] sm:$0xff]
      %v557 = vld [vmem:[#allocation2 + $0x38] sm:$0xff]
      %v558 = vld [vmem:[#allocation2 + $0x48] sm:$0xff]
      %v559 = vld [vmem:[#allocation2 + $0x50] sm:$0xff]
      %v560 = vld [vmem:[#allocation2 + $0x60] sm:$0xff]
      %v561 = vld [vmem:[#allocation2 + $0x68] sm:$0xff]
      %v562 = vld [vmem:[#allocation2 + $0x78] sm:$0xff]
      %v563 = vld [vmem:[#allocation2 + $0x80] sm:$0xff]
      %v564 = vld [vmem:[#allocation2 + $0x90] sm:$0xff]
      %v565 = vld [vmem:[#allocation2 + $0x98] sm:$0xff]
      %v566 = vld [vmem:[#allocation2 + $0xa8] sm:$0xff]
      %v567 = vld [vmem:[#allocation2 + $0xb0] sm:$0xff]
      %v568 = vld [vmem:[#allocation2 + $0xc0] sm:$0xff]
      %v569 = vld [vmem:[#allocation2 + $0xc8] sm:$0xff]
      %v570 = vld [vmem:[#allocation2 + $0xd8] sm:$0xff]
      %v571 = vld [vmem:[#allocation2 + $0xe0] sm:$0xff]
      %v572 = vld [vmem:[#allocation2 + $0xf0] sm:$0xff]
      %v573 = vld [vmem:[#allocation2 + $0xf8] sm:$0xff]
      %v574 = vld [vmem:[#allocation2 + $0x108] sm:$0xff]
      %v575 = vld [vmem:[#allocation2 + $0x110] sm:$0xff]
      %v576 = vld [vmem:[#allocation2 + $0x120] sm:$0xff]
      %v577 = vld [vmem:[#allocation2 + $0x128] sm:$0xff]
      %v578 = vld [vmem:[#allocation2 + $0x138] sm:$0xff]
      %v579 = vld [vmem:[#allocation2 + $0x140] sm:$0xff]
      %v580 = vld [vmem:[#allocation2 + $0x150] sm:$0xff]
      %v581 = vld [vmem:[#allocation2 + $0x158] sm:$0xff]
      %v582 = vld [vmem:[#allocation2 + $0x168] sm:$0xff]
      %v583 = vld [vmem:[#allocation2 + $0x170] sm:$0xff]
      %v584 = vld [vmem:[#allocation2 + $0x1] sm:$0xff]
      %v585 = vld [vmem:[#allocation2 + $0x9] sm:$0xff]
      %v586 = vld [vmem:[#allocation2 + $0x19] sm:$0xff]
      %v587 = vld [vmem:[#allocation2 + $0x21] sm:$0xff]
      %v588 = vld [vmem:[#allocation2 + $0x31] sm:$0xff]
      %v589 = vld [vmem:[#allocation2 + $0x39] sm:$0xff]
      %v590 = vld [vmem:[#allocation2 + $0x49] sm:$0xff]
      %v591 = vld [vmem:[#allocation2 + $0x51] sm:$0xff]
      %v592 = vld [vmem:[#allocation2 + $0x61] sm:$0xff]
      %v593 = vld [vmem:[#allocation2 + $0x69] sm:$0xff]
      %v594 = vld [vmem:[#allocation2 + $0x79] sm:$0xff]
      %v595 = vld [vmem:[#allocation2 + $0x81] sm:$0xff]
      %v596 = vld [vmem:[#allocation2 + $0x91] sm:$0xff]
      %v597 = vld [vmem:[#allocation2 + $0x99] sm:$0xff]
      %v598 = vld [vmem:[#allocation2 + $0xa9] sm:$0xff]
      %v599 = vld [vmem:[#allocation2 + $0xb1] sm:$0xff]
      %v600 = vld [vmem:[#allocation2 + $0xc1] sm:$0xff]
      %v601 = vld [vmem:[#allocation2 + $0xc9] sm:$0xff]
      %v602 = vld [vmem:[#allocation2 + $0xd9] sm:$0xff]
      %v603 = vld [vmem:[#allocation2 + $0xe1] sm:$0xff]
      %v604 = vld [vmem:[#allocation2 + $0xf1] sm:$0xff]
      %v605 = vld [vmem:[#allocation2 + $0xf9] sm:$0xff]
      %v606 = vld [vmem:[#allocation2 + $0x109] sm:$0xff]
      %v607 = vld [vmem:[#allocation2 + $0x111] sm:$0xff]
      %v608 = vld [vmem:[#allocation2 + $0x121] sm:$0xff]
      %v609 = vld [vmem:[#allocation2 + $0x129] sm:$0xff]
      %v610 = vld [vmem:[#allocation2 + $0x139] sm:$0xff]
      %v611 = vld [vmem:[#allocation2 + $0x141] sm:$0xff]
      %v612 = vld [vmem:[#allocation2 + $0x151] sm:$0xff]
      %v613 = vld [vmem:[#allocation2 + $0x159] sm:$0xff]
      %v614 = vld [vmem:[#allocation2 + $0x169] sm:$0xff]
      %v615 = vld [vmem:[#allocation2 + $0x171] sm:$0xff]
      %v616 = vld [vmem:[#allocation2 + $0x2] sm:$0xff]
      %v617 = vld [vmem:[#allocation2 + $0xa] sm:$0xff]
      %v618 = vld [vmem:[#allocation2 + $0x1a] sm:$0xff]
      %v619 = vld [vmem:[#allocation2 + $0x22] sm:$0xff]
      %v620 = vld [vmem:[#allocation2 + $0x32] sm:$0xff]
      %v621 = vld [vmem:[#allocation2 + $0x3a] sm:$0xff]
      %v622 = vld [vmem:[#allocation2 + $0x4a] sm:$0xff]
      %v623 = vld [vmem:[#allocation2 + $0x52] sm:$0xff]
      %v624 = vld [vmem:[#allocation2 + $0x62] sm:$0xff]
      %v625 = vld [vmem:[#allocation2 + $0x6a] sm:$0xff]
      %v626 = vld [vmem:[#allocation2 + $0x7a] sm:$0xff]
      %v627 = vld [vmem:[#allocation2 + $0x82] sm:$0xff]
      %v628 = vld [vmem:[#allocation2 + $0x92] sm:$0xff]
      %v629 = vld [vmem:[#allocation2 + $0x9a] sm:$0xff]
      %v630 = vld [vmem:[#allocation2 + $0xaa] sm:$0xff]
      %v631 = vld [vmem:[#allocation2 + $0xb2] sm:$0xff]
      %v632 = vld [vmem:[#allocation2 + $0xc2] sm:$0xff]
      %v633 = vld [vmem:[#allocation2 + $0xca] sm:$0xff]
      %v634 = vld [vmem:[#allocation2 + $0xda] sm:$0xff]
      %v635 = vld [vmem:[#allocation2 + $0xe2] sm:$0xff]
      %v636 = vld [vmem:[#allocation2 + $0xf2] sm:$0xff]
      %v637 = vld [vmem:[#allocation2 + $0xfa] sm:$0xff]
      %v638 = vld [vmem:[#allocation2 + $0x10a] sm:$0xff]
      %v639 = vld [vmem:[#allocation2 + $0x112] sm:$0xff]
      %v640 = vld [vmem:[#allocation2 + $0x122] sm:$0xff]
      %v641 = vld [vmem:[#allocation2 + $0x12a] sm:$0xff]
      %v642 = vld [vmem:[#allocation2 + $0x13a] sm:$0xff]
      %v643 = vld [vmem:[#allocation2 + $0x142] sm:$0xff]
      %v644 = vld [vmem:[#allocation2 + $0x152] sm:$0xff]
      %v645 = vld [vmem:[#allocation2 + $0x15a] sm:$0xff]
      %v646 = vld [vmem:[#allocation2 + $0x16a] sm:$0xff]
      %v647 = vld [vmem:[#allocation2 + $0x172] sm:$0xff]
      %v648 = vld [vmem:[%s519] sm:$0xff]
      %v649 = vld [vmem:[%s519 + $0x8] sm:$0xff]
      %v650 = vld [vmem:[%s519 + $0x18] sm:$0xff]
      %v651 = vld [vmem:[%s519 + $0x20] sm:$0xff]
      %v652 = vld [vmem:[%s519 + $0x30] sm:$0xff]
      %v653 = vld [vmem:[%s519 + $0x38] sm:$0xff]
      %v654 = vld [vmem:[%s519 + $0x48] sm:$0xff]
      %v655 = vld [vmem:[%s519 + $0x50] sm:$0xff]
      %v656 = vld [vmem:[%s519 + $0x60] sm:$0xff]
      %v657 = vld [vmem:[%s519 + $0x68] sm:$0xff]
      %v658 = vld [vmem:[%s519 + $0x78] sm:$0xff]
      %v659 = vld [vmem:[%s519 + $0x80] sm:$0xff]
      %v660 = vld [vmem:[%s519 + $0x90] sm:$0xff]
      %v661 = vld [vmem:[%s519 + $0x98] sm:$0xff]
      %v662 = vld [vmem:[%s519 + $0xa8] sm:$0xff]
      %v663 = vld [vmem:[%s519 + $0xb0] sm:$0xff]
      %v664 = vld [vmem:[%s519 + $0xc0] sm:$0xff]
      %v665 = vld [vmem:[%s519 + $0xc8] sm:$0xff]
      %v666 = vld [vmem:[%s519 + $0xd8] sm:$0xff]
      %v667 = vld [vmem:[%s519 + $0xe0] sm:$0xff]
      %v668 = vld [vmem:[%s519 + $0xf0] sm:$0xff]
      %v669 = vld [vmem:[%s519 + $0xf8] sm:$0xff]
      %v670 = vld [vmem:[%s519 + $0x108] sm:$0xff]
      %v671 = vld [vmem:[%s519 + $0x110] sm:$0xff]
      %v672 = vld [vmem:[%s519 + $0x120] sm:$0xff]
      %v673 = vld [vmem:[%s519 + $0x128] sm:$0xff]
      %v674 = vld [vmem:[%s519 + $0x138] sm:$0xff]
      %v675 = vld [vmem:[%s519 + $0x140] sm:$0xff]
      %v676 = vld [vmem:[%s519 + $0x150] sm:$0xff]
      %v677 = vld [vmem:[%s519 + $0x158] sm:$0xff]
      %v678 = vld [vmem:[%s519 + $0x168] sm:$0xff]
      %v679 = vld [vmem:[%s519 + $0x170] sm:$0xff]
      %v680 = vld [vmem:[%s519 + $0x1] sm:$0xff]
      %v681 = vld [vmem:[%s519 + $0x9] sm:$0xff]
      %v682 = vld [vmem:[%s519 + $0x19] sm:$0xff]
      %v683 = vld [vmem:[%s519 + $0x21] sm:$0xff]
      %v684 = vld [vmem:[%s519 + $0x31] sm:$0xff]
      %v685 = vld [vmem:[%s519 + $0x39] sm:$0xff]
      %v686 = vld [vmem:[%s519 + $0x49] sm:$0xff]
      %v687 = vld [vmem:[%s519 + $0x51] sm:$0xff]
      %v688 = vld [vmem:[%s519 + $0x61] sm:$0xff]
      %v689 = vld [vmem:[%s519 + $0x69] sm:$0xff]
      %v690 = vld [vmem:[%s519 + $0x79] sm:$0xff]
      %v691 = vld [vmem:[%s519 + $0x81] sm:$0xff]
      %v692 = vld [vmem:[%s519 + $0x91] sm:$0xff]
      %v693 = vld [vmem:[%s519 + $0x99] sm:$0xff]
      %v694 = vld [vmem:[%s519 + $0xa9] sm:$0xff]
      %v695 = vld [vmem:[%s519 + $0xb1] sm:$0xff]
      %v696 = vld [vmem:[%s519 + $0xc1] sm:$0xff]
      %v697 = vld [vmem:[%s519 + $0xc9] sm:$0xff]
      %v698 = vld [vmem:[%s519 + $0xd9] sm:$0xff]
      %v699 = vld [vmem:[%s519 + $0xe1] sm:$0xff]
      %v700 = vld [vmem:[%s519 + $0xf1] sm:$0xff]
      %v701 = vld [vmem:[%s519 + $0xf9] sm:$0xff]
      %v702 = vld [vmem:[%s519 + $0x109] sm:$0xff]
      %v703 = vld [vmem:[%s519 + $0x111] sm:$0xff]
      %v704 = vld [vmem:[%s519 + $0x121] sm:$0xff]
      %v705 = vld [vmem:[%s519 + $0x129] sm:$0xff]
      %v706 = vld [vmem:[%s519 + $0x139] sm:$0xff]
      %v707 = vld [vmem:[%s519 + $0x141] sm:$0xff]
      %v708 = vld [vmem:[%s519 + $0x151] sm:$0xff]
      %v709 = vld [vmem:[%s519 + $0x159] sm:$0xff]
      %v710 = vld [vmem:[%s519 + $0x169] sm:$0xff]
      %v711 = vld [vmem:[%s519 + $0x171] sm:$0xff]
      %v712 = vld [vmem:[%s519 + $0x2] sm:$0xff]
      %v713 = vld [vmem:[%s519 + $0xa] sm:$0xff]
      %v714 = vld [vmem:[%s519 + $0x1a] sm:$0xff]
      %v715 = vld [vmem:[%s519 + $0x22] sm:$0xff]
      %v716 = vld [vmem:[%s519 + $0x32] sm:$0xff]
      %v717 = vld [vmem:[%s519 + $0x3a] sm:$0xff]
      %v718 = vld [vmem:[%s519 + $0x4a] sm:$0xff]
      %v719 = vld [vmem:[%s519 + $0x52] sm:$0xff]
      %v720 = vld [vmem:[%s519 + $0x62] sm:$0xff]
      %v721 = vld [vmem:[%s519 + $0x6a] sm:$0xff]
      %v722 = vld [vmem:[%s519 + $0x7a] sm:$0xff]
      %v723 = vld [vmem:[%s519 + $0x82] sm:$0xff]
      %v724 = vld [vmem:[%s519 + $0x92] sm:$0xff]
      %v725 = vld [vmem:[%s519 + $0x9a] sm:$0xff]
      %v726 = vld [vmem:[%s519 + $0xaa] sm:$0xff]
      %v727 = vld [vmem:[%s519 + $0xb2] sm:$0xff]
      %v728 = vld [vmem:[%s519 + $0xc2] sm:$0xff]
      %v729 = vld [vmem:[%s519 + $0xca] sm:$0xff]
      %v730 = vld [vmem:[%s519 + $0xda] sm:$0xff]
      %v731 = vld [vmem:[%s519 + $0xe2] sm:$0xff]
      %v732 = vld [vmem:[%s519 + $0xf2] sm:$0xff]
      %v733 = vld [vmem:[%s519 + $0xfa] sm:$0xff]
      %v734 = vld [vmem:[%s519 + $0x10a] sm:$0xff]
      %v735 = vld [vmem:[%s519 + $0x112] sm:$0xff]
      %v736 = vld [vmem:[%s519 + $0x122] sm:$0xff]
      %v737 = vld [vmem:[%s519 + $0x12a] sm:$0xff]
      %v738 = vld [vmem:[%s519 + $0x13a] sm:$0xff]
      %v739 = vld [vmem:[%s519 + $0x142] sm:$0xff]
      %v740 = vld [vmem:[%s519 + $0x152] sm:$0xff]
      %v741 = vld [vmem:[%s519 + $0x15a] sm:$0xff]
      %v742 = vld [vmem:[%s519 + $0x16a] sm:$0xff]
      %v743 = vld [vmem:[%s519 + $0x172] sm:$0xff]
      %s744 = scalar_lea.vmem [#allocation2], 48
      %v745 = vld [vmem:[%s744] sm:$0xff]
      %v746 = vld [vmem:[%s744 + $0x8] sm:$0xff]
      %v747 = vld [vmem:[%s744 + $0x18] sm:$0xff]
      %v748 = vld [vmem:[%s744 + $0x20] sm:$0xff]
      %v749 = vld [vmem:[%s744 + $0x30] sm:$0xff]
      %v750 = vld [vmem:[%s744 + $0x38] sm:$0xff]
      %v751 = vld [vmem:[%s744 + $0x48] sm:$0xff]
      %v752 = vld [vmem:[%s744 + $0x50] sm:$0xff]
      %v753 = vld [vmem:[%s744 + $0x60] sm:$0xff]
      %v754 = vld [vmem:[%s744 + $0x68] sm:$0xff]
      %v755 = vld [vmem:[%s744 + $0x78] sm:$0xff]
      %v756 = vld [vmem:[%s744 + $0x80] sm:$0xff]
      %v757 = vld [vmem:[%s744 + $0x90] sm:$0xff]
      %v758 = vld [vmem:[%s744 + $0x98] sm:$0xff]
      %v759 = vld [vmem:[%s744 + $0xa8] sm:$0xff]
      %v760 = vld [vmem:[%s744 + $0xb0] sm:$0xff]
      %v761 = vld [vmem:[%s744 + $0xc0] sm:$0xff]
      %v762 = vld [vmem:[%s744 + $0xc8] sm:$0xff]
      %v763 = vld [vmem:[%s744 + $0xd8] sm:$0xff]
      %v764 = vld [vmem:[%s744 + $0xe0] sm:$0xff]
      %v765 = vld [vmem:[%s744 + $0xf0] sm:$0xff]
      %v766 = vld [vmem:[%s744 + $0xf8] sm:$0xff]
      %v767 = vld [vmem:[%s744 + $0x108] sm:$0xff]
      %v768 = vld [vmem:[%s744 + $0x110] sm:$0xff]
      %v769 = vld [vmem:[%s744 + $0x120] sm:$0xff]
      %v770 = vld [vmem:[%s744 + $0x128] sm:$0xff]
      %v771 = vld [vmem:[%s744 + $0x138] sm:$0xff]
      %v772 = vld [vmem:[%s744 + $0x140] sm:$0xff]
      %v773 = vld [vmem:[%s744 + $0x150] sm:$0xff]
      %v774 = vld [vmem:[%s744 + $0x158] sm:$0xff]
      %v775 = vld [vmem:[%s744 + $0x168] sm:$0xff]
      %v776 = vld [vmem:[%s744 + $0x170] sm:$0xff]
      %v777 = vld [vmem:[%s744 + $0x1] sm:$0xff]
      %v778 = vld [vmem:[%s744 + $0x9] sm:$0xff]
      %v779 = vld [vmem:[%s744 + $0x19] sm:$0xff]
      %v780 = vld [vmem:[%s744 + $0x21] sm:$0xff]
      %v781 = vld [vmem:[%s744 + $0x31] sm:$0xff]
      %v782 = vld [vmem:[%s744 + $0x39] sm:$0xff]
      %v783 = vld [vmem:[%s744 + $0x49] sm:$0xff]
      %v784 = vld [vmem:[%s744 + $0x51] sm:$0xff]
      %v785 = vld [vmem:[%s744 + $0x61] sm:$0xff]
      %v786 = vld [vmem:[%s744 + $0x69] sm:$0xff]
      %v787 = vld [vmem:[%s744 + $0x79] sm:$0xff]
      %v788 = vld [vmem:[%s744 + $0x81] sm:$0xff]
      %v789 = vld [vmem:[%s744 + $0x91] sm:$0xff]
      %v790 = vld [vmem:[%s744 + $0x99] sm:$0xff]
      %v791 = vld [vmem:[%s744 + $0xa9] sm:$0xff]
      %v792 = vld [vmem:[%s744 + $0xb1] sm:$0xff]
      %v793 = vld [vmem:[%s744 + $0xc1] sm:$0xff]
      %v794 = vld [vmem:[%s744 + $0xc9] sm:$0xff]
      %v795 = vld [vmem:[%s744 + $0xd9] sm:$0xff]
      %v796 = vld [vmem:[%s744 + $0xe1] sm:$0xff]
      %v797 = vld [vmem:[%s744 + $0xf1] sm:$0xff]
      %v798 = vld [vmem:[%s744 + $0xf9] sm:$0xff]
      %v799 = vld [vmem:[%s744 + $0x109] sm:$0xff]
      %v800 = vld [vmem:[%s744 + $0x111] sm:$0xff]
      %v801 = vld [vmem:[%s744 + $0x121] sm:$0xff]
      %v802 = vld [vmem:[%s744 + $0x129] sm:$0xff]
      %v803 = vld [vmem:[%s744 + $0x139] sm:$0xff]
      %v804 = vld [vmem:[%s744 + $0x141] sm:$0xff]
      %v805 = vld [vmem:[%s744 + $0x151] sm:$0xff]
      %v806 = vld [vmem:[%s744 + $0x159] sm:$0xff]
      %v807 = vld [vmem:[%s744 + $0x169] sm:$0xff]
      %v808 = vld [vmem:[%s744 + $0x171] sm:$0xff]
      %v809 = vld [vmem:[%s744 + $0x2] sm:$0xff]
      %v810 = vld [vmem:[%s744 + $0xa] sm:$0xff]
      %v811 = vld [vmem:[%s744 + $0x1a] sm:$0xff]
      %v812 = vld [vmem:[%s744 + $0x22] sm:$0xff]
      %v813 = vld [vmem:[%s744 + $0x32] sm:$0xff]
      %v814 = vld [vmem:[%s744 + $0x3a] sm:$0xff]
      %v815 = vld [vmem:[%s744 + $0x4a] sm:$0xff]
      %v816 = vld [vmem:[%s744 + $0x52] sm:$0xff]
      %v817 = vld [vmem:[%s744 + $0x62] sm:$0xff]
      %v818 = vld [vmem:[%s744 + $0x6a] sm:$0xff]
      %v819 = vld [vmem:[%s744 + $0x7a] sm:$0xff]
      %v820 = vld [vmem:[%s744 + $0x82] sm:$0xff]
      %v821 = vld [vmem:[%s744 + $0x92] sm:$0xff]
      %v822 = vld [vmem:[%s744 + $0x9a] sm:$0xff]
      %v823 = vld [vmem:[%s744 + $0xaa] sm:$0xff]
      %v824 = vld [vmem:[%s744 + $0xb2] sm:$0xff]
      %v825 = vld [vmem:[%s744 + $0xc2] sm:$0xff]
      %v826 = vld [vmem:[%s744 + $0xca] sm:$0xff]
      %v827 = vld [vmem:[%s744 + $0xda] sm:$0xff]
      %v828 = vld [vmem:[%s744 + $0xe2] sm:$0xff]
      %v829 = vld [vmem:[%s744 + $0xf2] sm:$0xff]
      %v830 = vld [vmem:[%s744 + $0xfa] sm:$0xff]
      %v831 = vld [vmem:[%s744 + $0x10a] sm:$0xff]
      %v832 = vld [vmem:[%s744 + $0x112] sm:$0xff]
      %v833 = vld [vmem:[%s744 + $0x122] sm:$0xff]
      %v834 = vld [vmem:[%s744 + $0x12a] sm:$0xff]
      %v835 = vld [vmem:[%s744 + $0x13a] sm:$0xff]
      %v836 = vld [vmem:[%s744 + $0x142] sm:$0xff]
      %v837 = vld [vmem:[%s744 + $0x152] sm:$0xff]
      %v838 = vld [vmem:[%s744 + $0x15a] sm:$0xff]
      %v839 = vld [vmem:[%s744 + $0x16a] sm:$0xff]
      %v840 = vld [vmem:[%s744 + $0x172] sm:$0xff]
      %873 = vrot.lane.b32.xlu0 %v584, 8
      %v874 = vpop.permute.xlu0 %873
      %875 = vrot.lane.b32.xlu0 %v585, 8
      %v876 = vpop.permute.xlu0 %875
      %877 = vrot.lane.b32.xlu0 %v586, 8
      %v878 = vpop.permute.xlu0 %877
      %879 = vrot.lane.b32.xlu0 %v587, 8
      %v880 = vpop.permute.xlu0 %879
      %881 = vrot.lane.b32.xlu0 %v588, 8
      %v882 = vpop.permute.xlu0 %881
      %883 = vrot.lane.b32.xlu0 %v589, 8
      %v884 = vpop.permute.xlu0 %883
      %885 = vrot.lane.b32.xlu0 %v590, 8
      %v886 = vpop.permute.xlu0 %885
      %887 = vrot.lane.b32.xlu0 %v591, 8
      %v888 = vpop.permute.xlu0 %887
      %889 = vrot.lane.b32.xlu0 %v592, 8
      %v890 = vpop.permute.xlu0 %889
      %891 = vrot.lane.b32.xlu0 %v593, 8
      %v892 = vpop.permute.xlu0 %891
      %893 = vrot.lane.b32.xlu0 %v594, 8
      %v894 = vpop.permute.xlu0 %893
      %895 = vrot.lane.b32.xlu0 %v595, 8
      %v896 = vpop.permute.xlu0 %895
      %897 = vrot.lane.b32.xlu0 %v596, 8
      %v898 = vpop.permute.xlu0 %897
      %899 = vrot.lane.b32.xlu0 %v597, 8
      %v900 = vpop.permute.xlu0 %899
      %901 = vrot.lane.b32.xlu0 %v598, 8
      %v902 = vpop.permute.xlu0 %901
      %903 = vrot.lane.b32.xlu0 %v599, 8
      %v904 = vpop.permute.xlu0 %903
      %905 = vrot.lane.b32.xlu0 %v600, 8
      %v906 = vpop.permute.xlu0 %905
      %907 = vrot.lane.b32.xlu0 %v601, 8
      %v908 = vpop.permute.xlu0 %907
      %909 = vrot.lane.b32.xlu0 %v602, 8
      %v910 = vpop.permute.xlu0 %909
      %911 = vrot.lane.b32.xlu0 %v603, 8
      %v912 = vpop.permute.xlu0 %911
      %913 = vrot.lane.b32.xlu0 %v604, 8
      %v914 = vpop.permute.xlu0 %913
      %915 = vrot.lane.b32.xlu0 %v605, 8
      %v916 = vpop.permute.xlu0 %915
      %917 = vrot.lane.b32.xlu0 %v606, 8
      %v918 = vpop.permute.xlu0 %917
      %919 = vrot.lane.b32.xlu0 %v607, 8
      %v920 = vpop.permute.xlu0 %919
      %921 = vrot.lane.b32.xlu0 %v608, 8
      %v922 = vpop.permute.xlu0 %921
      %923 = vrot.lane.b32.xlu0 %v609, 8
      %v924 = vpop.permute.xlu0 %923
      %925 = vrot.lane.b32.xlu0 %v610, 8
      %v926 = vpop.permute.xlu0 %925
      %927 = vrot.lane.b32.xlu0 %v611, 8
      %v928 = vpop.permute.xlu0 %927
      %929 = vrot.lane.b32.xlu0 %v612, 8
      %v930 = vpop.permute.xlu0 %929
      %931 = vrot.lane.b32.xlu0 %v613, 8
      %v932 = vpop.permute.xlu0 %931
      %933 = vrot.lane.b32.xlu0 %v614, 8
      %v934 = vpop.permute.xlu0 %933
      %935 = vrot.lane.b32.xlu0 %v615, 8
      %v936 = vpop.permute.xlu0 %935
      %1001 = vrot.lane.b32.xlu0 %v616, 16
      %v1002 = vpop.permute.xlu0 %1001
      %1003 = vrot.lane.b32.xlu0 %v617, 16
      %v1004 = vpop.permute.xlu0 %1003
      %1005 = vrot.lane.b32.xlu0 %v618, 16
      %v1006 = vpop.permute.xlu0 %1005
      %1007 = vrot.lane.b32.xlu0 %v619, 16
      %v1008 = vpop.permute.xlu0 %1007
      %1009 = vrot.lane.b32.xlu0 %v620, 16
      %v1010 = vpop.permute.xlu0 %1009
      %1011 = vrot.lane.b32.xlu0 %v621, 16
      %v1012 = vpop.permute.xlu0 %1011
      %1013 = vrot.lane.b32.xlu0 %v622, 16
      %v1014 = vpop.permute.xlu0 %1013
      %1015 = vrot.lane.b32.xlu0 %v623, 16
      %v1016 = vpop.permute.xlu0 %1015
      %1017 = vrot.lane.b32.xlu0 %v624, 16
      %v1018 = vpop.permute.xlu0 %1017
      %1019 = vrot.lane.b32.xlu0 %v625, 16
      %v1020 = vpop.permute.xlu0 %1019
      %1021 = vrot.lane.b32.xlu0 %v626, 16
      %v1022 = vpop.permute.xlu0 %1021
      %1023 = vrot.lane.b32.xlu0 %v627, 16
      %v1024 = vpop.permute.xlu0 %1023
      %1025 = vrot.lane.b32.xlu0 %v628, 16
      %v1026 = vpop.permute.xlu0 %1025
      %1027 = vrot.lane.b32.xlu0 %v629, 16
      %v1028 = vpop.permute.xlu0 %1027
      %1029 = vrot.lane.b32.xlu0 %v630, 16
      %v1030 = vpop.permute.xlu0 %1029
      %1031 = vrot.lane.b32.xlu0 %v631, 16
      %v1032 = vpop.permute.xlu0 %1031
      %1033 = vrot.lane.b32.xlu0 %v632, 16
      %v1034 = vpop.permute.xlu0 %1033
      %1035 = vrot.lane.b32.xlu0 %v633, 16
      %v1036 = vpop.permute.xlu0 %1035
      %1037 = vrot.lane.b32.xlu0 %v634, 16
      %v1038 = vpop.permute.xlu0 %1037
      %1039 = vrot.lane.b32.xlu0 %v635, 16
      %v1040 = vpop.permute.xlu0 %1039
      %1041 = vrot.lane.b32.xlu0 %v636, 16
      %v1042 = vpop.permute.xlu0 %1041
      %1043 = vrot.lane.b32.xlu0 %v637, 16
      %v1044 = vpop.permute.xlu0 %1043
      %1045 = vrot.lane.b32.xlu0 %v638, 16
      %v1046 = vpop.permute.xlu0 %1045
      %1047 = vrot.lane.b32.xlu0 %v639, 16
      %v1048 = vpop.permute.xlu0 %1047
      %1049 = vrot.lane.b32.xlu0 %v640, 16
      %v1050 = vpop.permute.xlu0 %1049
      %1051 = vrot.lane.b32.xlu0 %v641, 16
      %v1052 = vpop.permute.xlu0 %1051
      %1053 = vrot.lane.b32.xlu0 %v642, 16
      %v1054 = vpop.permute.xlu0 %1053
      %1055 = vrot.lane.b32.xlu0 %v643, 16
      %v1056 = vpop.permute.xlu0 %1055
      %1057 = vrot.lane.b32.xlu0 %v644, 16
      %v1058 = vpop.permute.xlu0 %1057
      %1059 = vrot.lane.b32.xlu0 %v645, 16
      %v1060 = vpop.permute.xlu0 %1059
      %1061 = vrot.lane.b32.xlu0 %v646, 16
      %v1062 = vpop.permute.xlu0 %1061
      %1063 = vrot.lane.b32.xlu0 %v647, 16
      %v1064 = vpop.permute.xlu0 %1063
      %1129 = vrot.lane.b32.xlu0 %v648, 24
      %v1130 = vpop.permute.xlu0 %1129
      %1131 = vrot.lane.b32.xlu0 %v649, 24
      %v1132 = vpop.permute.xlu0 %1131
      %1133 = vrot.lane.b32.xlu0 %v650, 24
      %v1134 = vpop.permute.xlu0 %1133
      %1135 = vrot.lane.b32.xlu0 %v651, 24
      %v1136 = vpop.permute.xlu0 %1135
      %1137 = vrot.lane.b32.xlu0 %v652, 24
      %v1138 = vpop.permute.xlu0 %1137
      %1139 = vrot.lane.b32.xlu0 %v653, 24
      %v1140 = vpop.permute.xlu0 %1139
      %1141 = vrot.lane.b32.xlu0 %v654, 24
      %v1142 = vpop.permute.xlu0 %1141
      %1143 = vrot.lane.b32.xlu0 %v655, 24
      %v1144 = vpop.permute.xlu0 %1143
      %1145 = vrot.lane.b32.xlu0 %v656, 24
      %v1146 = vpop.permute.xlu0 %1145
      %1147 = vrot.lane.b32.xlu0 %v657, 24
      %v1148 = vpop.permute.xlu0 %1147
      %1149 = vrot.lane.b32.xlu0 %v658, 24
      %v1150 = vpop.permute.xlu0 %1149
      %1151 = vrot.lane.b32.xlu0 %v659, 24
      %v1152 = vpop.permute.xlu0 %1151
      %1153 = vrot.lane.b32.xlu0 %v660, 24
      %v1154 = vpop.permute.xlu0 %1153
      %1155 = vrot.lane.b32.xlu0 %v661, 24
      %v1156 = vpop.permute.xlu0 %1155
      %1157 = vrot.lane.b32.xlu0 %v662, 24
      %v1158 = vpop.permute.xlu0 %1157
      %1159 = vrot.lane.b32.xlu0 %v663, 24
      %v1160 = vpop.permute.xlu0 %1159
      %1161 = vrot.lane.b32.xlu0 %v664, 24
      %v1162 = vpop.permute.xlu0 %1161
      %1163 = vrot.lane.b32.xlu0 %v665, 24
      %v1164 = vpop.permute.xlu0 %1163
      %1165 = vrot.lane.b32.xlu0 %v666, 24
      %v1166 = vpop.permute.xlu0 %1165
      %1167 = vrot.lane.b32.xlu0 %v667, 24
      %v1168 = vpop.permute.xlu0 %1167
      %1169 = vrot.lane.b32.xlu0 %v668, 24
      %v1170 = vpop.permute.xlu0 %1169
      %1171 = vrot.lane.b32.xlu0 %v669, 24
      %v1172 = vpop.permute.xlu0 %1171
      %1173 = vrot.lane.b32.xlu0 %v670, 24
      %v1174 = vpop.permute.xlu0 %1173
      %1175 = vrot.lane.b32.xlu0 %v671, 24
      %v1176 = vpop.permute.xlu0 %1175
      %1177 = vrot.lane.b32.xlu0 %v672, 24
      %v1178 = vpop.permute.xlu0 %1177
      %1179 = vrot.lane.b32.xlu0 %v673, 24
      %v1180 = vpop.permute.xlu0 %1179
      %1181 = vrot.lane.b32.xlu0 %v674, 24
      %v1182 = vpop.permute.xlu0 %1181
      %1183 = vrot.lane.b32.xlu0 %v675, 24
      %v1184 = vpop.permute.xlu0 %1183
      %1185 = vrot.lane.b32.xlu0 %v676, 24
      %v1186 = vpop.permute.xlu0 %1185
      %1187 = vrot.lane.b32.xlu0 %v677, 24
      %v1188 = vpop.permute.xlu0 %1187
      %1189 = vrot.lane.b32.xlu0 %v678, 24
      %v1190 = vpop.permute.xlu0 %1189
      %1191 = vrot.lane.b32.xlu0 %v679, 24
      %v1192 = vpop.permute.xlu0 %1191
      %1257 = vrot.lane.b32.xlu0 %v680, 32
      %v1258 = vpop.permute.xlu0 %1257
      %1259 = vrot.lane.b32.xlu0 %v681, 32
      %v1260 = vpop.permute.xlu0 %1259
      %1261 = vrot.lane.b32.xlu0 %v682, 32
      %v1262 = vpop.permute.xlu0 %1261
      %1263 = vrot.lane.b32.xlu0 %v683, 32
      %v1264 = vpop.permute.xlu0 %1263
      %1265 = vrot.lane.b32.xlu0 %v684, 32
      %v1266 = vpop.permute.xlu0 %1265
      %1267 = vrot.lane.b32.xlu0 %v685, 32
      %v1268 = vpop.permute.xlu0 %1267
      %1269 = vrot.lane.b32.xlu0 %v686, 32
      %v1270 = vpop.permute.xlu0 %1269
      %1271 = vrot.lane.b32.xlu0 %v687, 32
      %v1272 = vpop.permute.xlu0 %1271
      %1273 = vrot.lane.b32.xlu0 %v688, 32
      %v1274 = vpop.permute.xlu0 %1273
      %1275 = vrot.lane.b32.xlu0 %v689, 32
      %v1276 = vpop.permute.xlu0 %1275
      %1277 = vrot.lane.b32.xlu0 %v690, 32
      %v1278 = vpop.permute.xlu0 %1277
      %1279 = vrot.lane.b32.xlu0 %v691, 32
      %v1280 = vpop.permute.xlu0 %1279
      %1281 = vrot.lane.b32.xlu0 %v692, 32
      %v1282 = vpop.permute.xlu0 %1281
      %1283 = vrot.lane.b32.xlu0 %v693, 32
      %v1284 = vpop.permute.xlu0 %1283
      %1285 = vrot.lane.b32.xlu0 %v694, 32
      %v1286 = vpop.permute.xlu0 %1285
      %1287 = vrot.lane.b32.xlu0 %v695, 32
      %v1288 = vpop.permute.xlu0 %1287
      %1289 = vrot.lane.b32.xlu0 %v696, 32
      %v1290 = vpop.permute.xlu0 %1289
      %1291 = vrot.lane.b32.xlu0 %v697, 32
      %v1292 = vpop.permute.xlu0 %1291
      %1293 = vrot.lane.b32.xlu0 %v698, 32
      %v1294 = vpop.permute.xlu0 %1293
      %1295 = vrot.lane.b32.xlu0 %v699, 32
      %v1296 = vpop.permute.xlu0 %1295
      %1297 = vrot.lane.b32.xlu0 %v700, 32
      %v1298 = vpop.permute.xlu0 %1297
      %1299 = vrot.lane.b32.xlu0 %v701, 32
      %v1300 = vpop.permute.xlu0 %1299
      %1301 = vrot.lane.b32.xlu0 %v702, 32
      %v1302 = vpop.permute.xlu0 %1301
      %1303 = vrot.lane.b32.xlu0 %v703, 32
      %v1304 = vpop.permute.xlu0 %1303
      %1305 = vrot.lane.b32.xlu0 %v704, 32
      %v1306 = vpop.permute.xlu0 %1305
      %1307 = vrot.lane.b32.xlu0 %v705, 32
      %v1308 = vpop.permute.xlu0 %1307
      %1309 = vrot.lane.b32.xlu0 %v706, 32
      %v1310 = vpop.permute.xlu0 %1309
      %1311 = vrot.lane.b32.xlu0 %v707, 32
      %v1312 = vpop.permute.xlu0 %1311
      %1313 = vrot.lane.b32.xlu0 %v708, 32
      %v1314 = vpop.permute.xlu0 %1313
      %1315 = vrot.lane.b32.xlu0 %v709, 32
      %v1316 = vpop.permute.xlu0 %1315
      %1317 = vrot.lane.b32.xlu0 %v710, 32
      %v1318 = vpop.permute.xlu0 %1317
      %1319 = vrot.lane.b32.xlu0 %v711, 32
      %v1320 = vpop.permute.xlu0 %1319
      %1385 = vrot.lane.b32.xlu0 %v712, 40
      %v1386 = vpop.permute.xlu0 %1385
      %1387 = vrot.lane.b32.xlu0 %v713, 40
      %v1388 = vpop.permute.xlu0 %1387
      %1389 = vrot.lane.b32.xlu0 %v714, 40
      %v1390 = vpop.permute.xlu0 %1389
      %1391 = vrot.lane.b32.xlu0 %v715, 40
      %v1392 = vpop.permute.xlu0 %1391
      %1393 = vrot.lane.b32.xlu0 %v716, 40
      %v1394 = vpop.permute.xlu0 %1393
      %1395 = vrot.lane.b32.xlu0 %v717, 40
      %v1396 = vpop.permute.xlu0 %1395
      %1397 = vrot.lane.b32.xlu0 %v718, 40
      %v1398 = vpop.permute.xlu0 %1397
      %1399 = vrot.lane.b32.xlu0 %v719, 40
      %v1400 = vpop.permute.xlu0 %1399
      %1401 = vrot.lane.b32.xlu0 %v720, 40
      %v1402 = vpop.permute.xlu0 %1401
      %1403 = vrot.lane.b32.xlu0 %v721, 40
      %v1404 = vpop.permute.xlu0 %1403
      %1405 = vrot.lane.b32.xlu0 %v722, 40
      %v1406 = vpop.permute.xlu0 %1405
      %1407 = vrot.lane.b32.xlu0 %v723, 40
      %v1408 = vpop.permute.xlu0 %1407
      %1409 = vrot.lane.b32.xlu0 %v724, 40
      %v1410 = vpop.permute.xlu0 %1409
      %1411 = vrot.lane.b32.xlu0 %v725, 40
      %v1412 = vpop.permute.xlu0 %1411
      %1413 = vrot.lane.b32.xlu0 %v726, 40
      %v1414 = vpop.permute.xlu0 %1413
      %1415 = vrot.lane.b32.xlu0 %v727, 40
      %v1416 = vpop.permute.xlu0 %1415
      %1417 = vrot.lane.b32.xlu0 %v728, 40
      %v1418 = vpop.permute.xlu0 %1417
      %1419 = vrot.lane.b32.xlu0 %v729, 40
      %v1420 = vpop.permute.xlu0 %1419
      %1421 = vrot.lane.b32.xlu0 %v730, 40
      %v1422 = vpop.permute.xlu0 %1421
      %1423 = vrot.lane.b32.xlu0 %v731, 40
      %v1424 = vpop.permute.xlu0 %1423
      %1425 = vrot.lane.b32.xlu0 %v732, 40
      %v1426 = vpop.permute.xlu0 %1425
      %1427 = vrot.lane.b32.xlu0 %v733, 40
      %v1428 = vpop.permute.xlu0 %1427
      %1429 = vrot.lane.b32.xlu0 %v734, 40
      %v1430 = vpop.permute.xlu0 %1429
      %1431 = vrot.lane.b32.xlu0 %v735, 40
      %v1432 = vpop.permute.xlu0 %1431
      %1433 = vrot.lane.b32.xlu0 %v736, 40
      %v1434 = vpop.permute.xlu0 %1433
      %1435 = vrot.lane.b32.xlu0 %v737, 40
      %v1436 = vpop.permute.xlu0 %1435
      %1437 = vrot.lane.b32.xlu0 %v738, 40
      %v1438 = vpop.permute.xlu0 %1437
      %1439 = vrot.lane.b32.xlu0 %v739, 40
      %v1440 = vpop.permute.xlu0 %1439
      %1441 = vrot.lane.b32.xlu0 %v740, 40
      %v1442 = vpop.permute.xlu0 %1441
      %1443 = vrot.lane.b32.xlu0 %v741, 40
      %v1444 = vpop.permute.xlu0 %1443
      %1445 = vrot.lane.b32.xlu0 %v742, 40
      %v1446 = vpop.permute.xlu0 %1445
      %1447 = vrot.lane.b32.xlu0 %v743, 40
      %v1448 = vpop.permute.xlu0 %1447
      %1513 = vrot.lane.b32.xlu0 %v745, 48
      %v1514 = vpop.permute.xlu0 %1513
      %1515 = vrot.lane.b32.xlu0 %v746, 48
      %v1516 = vpop.permute.xlu0 %1515
      %1517 = vrot.lane.b32.xlu0 %v747, 48
      %v1518 = vpop.permute.xlu0 %1517
      %1519 = vrot.lane.b32.xlu0 %v748, 48
      %v1520 = vpop.permute.xlu0 %1519
      %1521 = vrot.lane.b32.xlu0 %v749, 48
      %v1522 = vpop.permute.xlu0 %1521
      %1523 = vrot.lane.b32.xlu0 %v750, 48
      %v1524 = vpop.permute.xlu0 %1523
      %1525 = vrot.lane.b32.xlu0 %v751, 48
      %v1526 = vpop.permute.xlu0 %1525
      %1527 = vrot.lane.b32.xlu0 %v752, 48
      %v1528 = vpop.permute.xlu0 %1527
      %1529 = vrot.lane.b32.xlu0 %v753, 48
      %v1530 = vpop.permute.xlu0 %1529
      %1531 = vrot.lane.b32.xlu0 %v754, 48
      %v1532 = vpop.permute.xlu0 %1531
      %1533 = vrot.lane.b32.xlu0 %v755, 48
      %v1534 = vpop.permute.xlu0 %1533
      %1535 = vrot.lane.b32.xlu0 %v756, 48
      %v1536 = vpop.permute.xlu0 %1535
      %1537 = vrot.lane.b32.xlu0 %v757, 48
      %v1538 = vpop.permute.xlu0 %1537
      %1539 = vrot.lane.b32.xlu0 %v758, 48
      %v1540 = vpop.permute.xlu0 %1539
      %1541 = vrot.lane.b32.xlu0 %v759, 48
      %v1542 = vpop.permute.xlu0 %1541
      %1543 = vrot.lane.b32.xlu0 %v760, 48
      %v1544 = vpop.permute.xlu0 %1543
      %1545 = vrot.lane.b32.xlu0 %v761, 48
      %v1546 = vpop.permute.xlu0 %1545
      %1547 = vrot.lane.b32.xlu0 %v762, 48
      %v1548 = vpop.permute.xlu0 %1547
      %1549 = vrot.lane.b32.xlu0 %v763, 48
      %v1550 = vpop.permute.xlu0 %1549
      %1551 = vrot.lane.b32.xlu0 %v764, 48
      %v1552 = vpop.permute.xlu0 %1551
      %1553 = vrot.lane.b32.xlu0 %v765, 48
      %v1554 = vpop.permute.xlu0 %1553
      %1555 = vrot.lane.b32.xlu0 %v766, 48
      %v1556 = vpop.permute.xlu0 %1555
      %1557 = vrot.lane.b32.xlu0 %v767, 48
      %v1558 = vpop.permute.xlu0 %1557
      %1559 = vrot.lane.b32.xlu0 %v768, 48
      %v1560 = vpop.permute.xlu0 %1559
      %1561 = vrot.lane.b32.xlu0 %v769, 48
      %v1562 = vpop.permute.xlu0 %1561
      %1563 = vrot.lane.b32.xlu0 %v770, 48
      %v1564 = vpop.permute.xlu0 %1563
      %1565 = vrot.lane.b32.xlu0 %v771, 48
      %v1566 = vpop.permute.xlu0 %1565
      %1567 = vrot.lane.b32.xlu0 %v772, 48
      %v1568 = vpop.permute.xlu0 %1567
      %1569 = vrot.lane.b32.xlu0 %v773, 48
      %v1570 = vpop.permute.xlu0 %1569
      %1571 = vrot.lane.b32.xlu0 %v774, 48
      %v1572 = vpop.permute.xlu0 %1571
      %1573 = vrot.lane.b32.xlu0 %v775, 48
      %v1574 = vpop.permute.xlu0 %1573
      %1575 = vrot.lane.b32.xlu0 %v776, 48
      %v1576 = vpop.permute.xlu0 %1575
      %1641 = vrot.lane.b32.xlu0 %v777, 56
      %v1642 = vpop.permute.xlu0 %1641
      %1643 = vrot.lane.b32.xlu0 %v778, 56
      %v1644 = vpop.permute.xlu0 %1643
      %1645 = vrot.lane.b32.xlu0 %v779, 56
      %v1646 = vpop.permute.xlu0 %1645
      %1647 = vrot.lane.b32.xlu0 %v780, 56
      %v1648 = vpop.permute.xlu0 %1647
      %1649 = vrot.lane.b32.xlu0 %v781, 56
      %v1650 = vpop.permute.xlu0 %1649
      %1651 = vrot.lane.b32.xlu0 %v782, 56
      %v1652 = vpop.permute.xlu0 %1651
      %1653 = vrot.lane.b32.xlu0 %v783, 56
      %v1654 = vpop.permute.xlu0 %1653
      %1655 = vrot.lane.b32.xlu0 %v784, 56
      %v1656 = vpop.permute.xlu0 %1655
      %1657 = vrot.lane.b32.xlu0 %v785, 56
      %v1658 = vpop.permute.xlu0 %1657
      %1659 = vrot.lane.b32.xlu0 %v786, 56
      %v1660 = vpop.permute.xlu0 %1659
      %1661 = vrot.lane.b32.xlu0 %v787, 56
      %v1662 = vpop.permute.xlu0 %1661
      %1663 = vrot.lane.b32.xlu0 %v788, 56
      %v1664 = vpop.permute.xlu0 %1663
      %1665 = vrot.lane.b32.xlu0 %v789, 56
      %v1666 = vpop.permute.xlu0 %1665
      %1667 = vrot.lane.b32.xlu0 %v790, 56
      %v1668 = vpop.permute.xlu0 %1667
      %1669 = vrot.lane.b32.xlu0 %v791, 56
      %v1670 = vpop.permute.xlu0 %1669
      %1671 = vrot.lane.b32.xlu0 %v792, 56
      %v1672 = vpop.permute.xlu0 %1671
      %1673 = vrot.lane.b32.xlu0 %v793, 56
      %v1674 = vpop.permute.xlu0 %1673
      %1675 = vrot.lane.b32.xlu0 %v794, 56
      %v1676 = vpop.permute.xlu0 %1675
      %1677 = vrot.lane.b32.xlu0 %v795, 56
      %v1678 = vpop.permute.xlu0 %1677
      %1679 = vrot.lane.b32.xlu0 %v796, 56
      %v1680 = vpop.permute.xlu0 %1679
      %1681 = vrot.lane.b32.xlu0 %v797, 56
      %v1682 = vpop.permute.xlu0 %1681
      %1683 = vrot.lane.b32.xlu0 %v798, 56
      %v1684 = vpop.permute.xlu0 %1683
      %1685 = vrot.lane.b32.xlu0 %v799, 56
      %v1686 = vpop.permute.xlu0 %1685
      %1687 = vrot.lane.b32.xlu0 %v800, 56
      %v1688 = vpop.permute.xlu0 %1687
      %1689 = vrot.lane.b32.xlu0 %v801, 56
      %v1690 = vpop.permute.xlu0 %1689
      %1691 = vrot.lane.b32.xlu0 %v802, 56
      %v1692 = vpop.permute.xlu0 %1691
      %1693 = vrot.lane.b32.xlu0 %v803, 56
      %v1694 = vpop.permute.xlu0 %1693
      %1695 = vrot.lane.b32.xlu0 %v804, 56
      %v1696 = vpop.permute.xlu0 %1695
      %1697 = vrot.lane.b32.xlu0 %v805, 56
      %v1698 = vpop.permute.xlu0 %1697
      %1699 = vrot.lane.b32.xlu0 %v806, 56
      %v1700 = vpop.permute.xlu0 %1699
      %1701 = vrot.lane.b32.xlu0 %v807, 56
      %v1702 = vpop.permute.xlu0 %1701
      %1703 = vrot.lane.b32.xlu0 %v808, 56
      %v1704 = vpop.permute.xlu0 %1703
      %1769 = vrot.lane.b32.xlu0 %v809, 64
      %v1770 = vpop.permute.xlu0 %1769
      %1771 = vrot.lane.b32.xlu0 %v810, 64
      %v1772 = vpop.permute.xlu0 %1771
      %1773 = vrot.lane.b32.xlu0 %v811, 64
      %v1774 = vpop.permute.xlu0 %1773
      %1775 = vrot.lane.b32.xlu0 %v812, 64
      %v1776 = vpop.permute.xlu0 %1775
      %1777 = vrot.lane.b32.xlu0 %v813, 64
      %v1778 = vpop.permute.xlu0 %1777
      %1779 = vrot.lane.b32.xlu0 %v814, 64
      %v1780 = vpop.permute.xlu0 %1779
      %1781 = vrot.lane.b32.xlu0 %v815, 64
      %v1782 = vpop.permute.xlu0 %1781
      %1783 = vrot.lane.b32.xlu0 %v816, 64
      %v1784 = vpop.permute.xlu0 %1783
      %1785 = vrot.lane.b32.xlu0 %v817, 64
      %v1786 = vpop.permute.xlu0 %1785
      %1787 = vrot.lane.b32.xlu0 %v818, 64
      %v1788 = vpop.permute.xlu0 %1787
      %1789 = vrot.lane.b32.xlu0 %v819, 64
      %v1790 = vpop.permute.xlu0 %1789
      %1791 = vrot.lane.b32.xlu0 %v820, 64
      %v1792 = vpop.permute.xlu0 %1791
      %1793 = vrot.lane.b32.xlu0 %v821, 64
      %v1794 = vpop.permute.xlu0 %1793
      %1795 = vrot.lane.b32.xlu0 %v822, 64
      %v1796 = vpop.permute.xlu0 %1795
      %1797 = vrot.lane.b32.xlu0 %v823, 64
      %v1798 = vpop.permute.xlu0 %1797
      %1799 = vrot.lane.b32.xlu0 %v824, 64
      %v1800 = vpop.permute.xlu0 %1799
      %1801 = vrot.lane.b32.xlu0 %v825, 64
      %v1802 = vpop.permute.xlu0 %1801
      %1803 = vrot.lane.b32.xlu0 %v826, 64
      %v1804 = vpop.permute.xlu0 %1803
      %1805 = vrot.lane.b32.xlu0 %v827, 64
      %v1806 = vpop.permute.xlu0 %1805
      %1807 = vrot.lane.b32.xlu0 %v828, 64
      %v1808 = vpop.permute.xlu0 %1807
      %1809 = vrot.lane.b32.xlu0 %v829, 64
      %v1810 = vpop.permute.xlu0 %1809
      %1811 = vrot.lane.b32.xlu0 %v830, 64
      %v1812 = vpop.permute.xlu0 %1811
      %1813 = vrot.lane.b32.xlu0 %v831, 64
      %v1814 = vpop.permute.xlu0 %1813
      %1815 = vrot.lane.b32.xlu0 %v832, 64
      %v1816 = vpop.permute.xlu0 %1815
      %1817 = vrot.lane.b32.xlu0 %v833, 64
      %v1818 = vpop.permute.xlu0 %1817
      %1819 = vrot.lane.b32.xlu0 %v834, 64
      %v1820 = vpop.permute.xlu0 %1819
      %1821 = vrot.lane.b32.xlu0 %v835, 64
      %v1822 = vpop.permute.xlu0 %1821
      %1823 = vrot.lane.b32.xlu0 %v836, 64
      %v1824 = vpop.permute.xlu0 %1823
      %1825 = vrot.lane.b32.xlu0 %v837, 64
      %v1826 = vpop.permute.xlu0 %1825
      %1827 = vrot.lane.b32.xlu0 %v838, 64
      %v1828 = vpop.permute.xlu0 %1827
      %1829 = vrot.lane.b32.xlu0 %v839, 64
      %v1830 = vpop.permute.xlu0 %1829
      %1831 = vrot.lane.b32.xlu0 %v840, 64
      %v1832 = vpop.permute.xlu0 %1831
      %v1865 = vsel %vm441, %v552, %v874
      %v1866 = vsel %vm441, %v553, %v876
      %v1867 = vsel %vm441, %v554, %v878
      %v1868 = vsel %vm441, %v555, %v880
      %v1869 = vsel %vm441, %v556, %v882
      %v1870 = vsel %vm441, %v557, %v884
      %v1871 = vsel %vm441, %v558, %v886
      %v1872 = vsel %vm441, %v559, %v888
      %v1873 = vsel %vm441, %v560, %v890
      %v1874 = vsel %vm441, %v561, %v892
      %v1875 = vsel %vm441, %v562, %v894
      %v1876 = vsel %vm441, %v563, %v896
      %v1877 = vsel %vm441, %v564, %v898
      %v1878 = vsel %vm441, %v565, %v900
      %v1879 = vsel %vm441, %v566, %v902
      %v1880 = vsel %vm441, %v567, %v904
      %v1881 = vsel %vm441, %v568, %v906
      %v1882 = vsel %vm441, %v569, %v908
      %v1883 = vsel %vm441, %v570, %v910
      %v1884 = vsel %vm441, %v571, %v912
      %v1885 = vsel %vm441, %v572, %v914
      %v1886 = vsel %vm441, %v573, %v916
      %v1887 = vsel %vm441, %v574, %v918
      %v1888 = vsel %vm441, %v575, %v920
      %v1889 = vsel %vm441, %v576, %v922
      %v1890 = vsel %vm441, %v577, %v924
      %v1891 = vsel %vm441, %v578, %v926
      %v1892 = vsel %vm441, %v579, %v928
      %v1893 = vsel %vm441, %v580, %v930
      %v1894 = vsel %vm441, %v581, %v932
      %v1895 = vsel %vm441, %v582, %v934
      %v1896 = vsel %vm441, %v583, %v936
      %vm1897 = vcmask 130048
      %v1898 = vsel %vm1897, %v1865, %v1002
      %v1899 = vsel %vm1897, %v1866, %v1004
      %v1900 = vsel %vm1897, %v1867, %v1006
      %v1901 = vsel %vm1897, %v1868, %v1008
      %v1902 = vsel %vm1897, %v1869, %v1010
      %v1903 = vsel %vm1897, %v1870, %v1012
      %v1904 = vsel %vm1897, %v1871, %v1014
      %v1905 = vsel %vm1897, %v1872, %v1016
      %v1906 = vsel %vm1897, %v1873, %v1018
      %v1907 = vsel %vm1897, %v1874, %v1020
      %v1908 = vsel %vm1897, %v1875, %v1022
      %v1909 = vsel %vm1897, %v1876, %v1024
      %v1910 = vsel %vm1897, %v1877, %v1026
      %v1911 = vsel %vm1897, %v1878, %v1028
      %v1912 = vsel %vm1897, %v1879, %v1030
      %v1913 = vsel %vm1897, %v1880, %v1032
      %v1914 = vsel %vm1897, %v1881, %v1034
      %v1915 = vsel %vm1897, %v1882, %v1036
      %v1916 = vsel %vm1897, %v1883, %v1038
      %v1917 = vsel %vm1897, %v1884, %v1040
      %v1918 = vsel %vm1897, %v1885, %v1042
      %v1919 = vsel %vm1897, %v1886, %v1044
      %v1920 = vsel %vm1897, %v1887, %v1046
      %v1921 = vsel %vm1897, %v1888, %v1048
      %v1922 = vsel %vm1897, %v1889, %v1050
      %v1923 = vsel %vm1897, %v1890, %v1052
      %v1924 = vsel %vm1897, %v1891, %v1054
      %v1925 = vsel %vm1897, %v1892, %v1056
      %v1926 = vsel %vm1897, %v1893, %v1058
      %v1927 = vsel %vm1897, %v1894, %v1060
      %v1928 = vsel %vm1897, %v1895, %v1062
      %v1929 = vsel %vm1897, %v1896, %v1064
      %vm1930 = vcmask 195584
      %v1931 = vsel %vm1930, %v1898, %v1130
      %v1932 = vsel %vm1930, %v1899, %v1132
      %v1933 = vsel %vm1930, %v1900, %v1134
      %v1934 = vsel %vm1930, %v1901, %v1136
      %v1935 = vsel %vm1930, %v1902, %v1138
      %v1936 = vsel %vm1930, %v1903, %v1140
      %v1937 = vsel %vm1930, %v1904, %v1142
      %v1938 = vsel %vm1930, %v1905, %v1144
      %v1939 = vsel %vm1930, %v1906, %v1146
      %v1940 = vsel %vm1930, %v1907, %v1148
      %v1941 = vsel %vm1930, %v1908, %v1150
      %v1942 = vsel %vm1930, %v1909, %v1152
      %v1943 = vsel %vm1930, %v1910, %v1154
      %v1944 = vsel %vm1930, %v1911, %v1156
      %v1945 = vsel %vm1930, %v1912, %v1158
      %v1946 = vsel %vm1930, %v1913, %v1160
      %v1947 = vsel %vm1930, %v1914, %v1162
      %v1948 = vsel %vm1930, %v1915, %v1164
      %v1949 = vsel %vm1930, %v1916, %v1166
      %v1950 = vsel %vm1930, %v1917, %v1168
      %v1951 = vsel %vm1930, %v1918, %v1170
      %v1952 = vsel %vm1930, %v1919, %v1172
      %v1953 = vsel %vm1930, %v1920, %v1174
      %v1954 = vsel %vm1930, %v1921, %v1176
      %v1955 = vsel %vm1930, %v1922, %v1178
      %v1956 = vsel %vm1930, %v1923, %v1180
      %v1957 = vsel %vm1930, %v1924, %v1182
      %v1958 = vsel %vm1930, %v1925, %v1184
      %v1959 = vsel %vm1930, %v1926, %v1186
      %v1960 = vsel %vm1930, %v1927, %v1188
      %v1961 = vsel %vm1930, %v1928, %v1190
      %v1962 = vsel %vm1930, %v1929, %v1192
      %vm1963 = vcmask 261120
      %v1964 = vsel %vm1963, %v1931, %v1258
      %v1965 = vsel %vm1963, %v1932, %v1260
      %v1966 = vsel %vm1963, %v1933, %v1262
      %v1967 = vsel %vm1963, %v1934, %v1264
      %v1968 = vsel %vm1963, %v1935, %v1266
      %v1969 = vsel %vm1963, %v1936, %v1268
      %v1970 = vsel %vm1963, %v1937, %v1270
      %v1971 = vsel %vm1963, %v1938, %v1272
      %v1972 = vsel %vm1963, %v1939, %v1274
      %v1973 = vsel %vm1963, %v1940, %v1276
      %v1974 = vsel %vm1963, %v1941, %v1278
      %v1975 = vsel %vm1963, %v1942, %v1280
      %v1976 = vsel %vm1963, %v1943, %v1282
      %v1977 = vsel %vm1963, %v1944, %v1284
      %v1978 = vsel %vm1963, %v1945, %v1286
      %v1979 = vsel %vm1963, %v1946, %v1288
      %v1980 = vsel %vm1963, %v1947, %v1290
      %v1981 = vsel %vm1963, %v1948, %v1292
      %v1982 = vsel %vm1963, %v1949, %v1294
      %v1983 = vsel %vm1963, %v1950, %v1296
      %v1984 = vsel %vm1963, %v1951, %v1298
      %v1985 = vsel %vm1963, %v1952, %v1300
      %v1986 = vsel %vm1963, %v1953, %v1302
      %v1987 = vsel %vm1963, %v1954, %v1304
      %v1988 = vsel %vm1963, %v1955, %v1306
      %v1989 = vsel %vm1963, %v1956, %v1308
      %v1990 = vsel %vm1963, %v1957, %v1310
      %v1991 = vsel %vm1963, %v1958, %v1312
      %v1992 = vsel %vm1963, %v1959, %v1314
      %v1993 = vsel %vm1963, %v1960, %v1316
      %v1994 = vsel %vm1963, %v1961, %v1318
      %v1995 = vsel %vm1963, %v1962, %v1320
      %vm1996 = vcmask 326656
      %v1997 = vsel %vm1996, %v1964, %v1386
      %v1998 = vsel %vm1996, %v1965, %v1388
      %v1999 = vsel %vm1996, %v1966, %v1390
      %v2000 = vsel %vm1996, %v1967, %v1392
      %v2001 = vsel %vm1996, %v1968, %v1394
      %v2002 = vsel %vm1996, %v1969, %v1396
      %v2003 = vsel %vm1996, %v1970, %v1398
      %v2004 = vsel %vm1996, %v1971, %v1400
      %v2005 = vsel %vm1996, %v1972, %v1402
      %v2006 = vsel %vm1996, %v1973, %v1404
      %v2007 = vsel %vm1996, %v1974, %v1406
      %v2008 = vsel %vm1996, %v1975, %v1408
      %v2009 = vsel %vm1996, %v1976, %v1410
      %v2010 = vsel %vm1996, %v1977, %v1412
      %v2011 = vsel %vm1996, %v1978, %v1414
      %v2012 = vsel %vm1996, %v1979, %v1416
      %v2013 = vsel %vm1996, %v1980, %v1418
      %v2014 = vsel %vm1996, %v1981, %v1420
      %v2015 = vsel %vm1996, %v1982, %v1422
      %v2016 = vsel %vm1996, %v1983, %v1424
      %v2017 = vsel %vm1996, %v1984, %v1426
      %v2018 = vsel %vm1996, %v1985, %v1428
      %v2019 = vsel %vm1996, %v1986, %v1430
      %v2020 = vsel %vm1996, %v1987, %v1432
      %v2021 = vsel %vm1996, %v1988, %v1434
      %v2022 = vsel %vm1996, %v1989, %v1436
      %v2023 = vsel %vm1996, %v1990, %v1438
      %v2024 = vsel %vm1996, %v1991, %v1440
      %v2025 = vsel %vm1996, %v1992, %v1442
      %v2026 = vsel %vm1996, %v1993, %v1444
      %v2027 = vsel %vm1996, %v1994, %v1446
      %v2028 = vsel %vm1996, %v1995, %v1448
      %vm2029 = vcmask 392192
      %v2030 = vsel %vm2029, %v1997, %v1514
      %v2031 = vsel %vm2029, %v1998, %v1516
      %v2032 = vsel %vm2029, %v1999, %v1518
      %v2033 = vsel %vm2029, %v2000, %v1520
      %v2034 = vsel %vm2029, %v2001, %v1522
      %v2035 = vsel %vm2029, %v2002, %v1524
      %v2036 = vsel %vm2029, %v2003, %v1526
      %v2037 = vsel %vm2029, %v2004, %v1528
      %v2038 = vsel %vm2029, %v2005, %v1530
      %v2039 = vsel %vm2029, %v2006, %v1532
      %v2040 = vsel %vm2029, %v2007, %v1534
      %v2041 = vsel %vm2029, %v2008, %v1536
      %v2042 = vsel %vm2029, %v2009, %v1538
      %v2043 = vsel %vm2029, %v2010, %v1540
      %v2044 = vsel %vm2029, %v2011, %v1542
      %v2045 = vsel %vm2029, %v2012, %v1544
      %v2046 = vsel %vm2029, %v2013, %v1546
      %v2047 = vsel %vm2029, %v2014, %v1548
      %v2048 = vsel %vm2029, %v2015, %v1550
      %v2049 = vsel %vm2029, %v2016, %v1552
      %v2050 = vsel %vm2029, %v2017, %v1554
      %v2051 = vsel %vm2029, %v2018, %v1556
      %v2052 = vsel %vm2029, %v2019, %v1558
      %v2053 = vsel %vm2029, %v2020, %v1560
      %v2054 = vsel %vm2029, %v2021, %v1562
      %v2055 = vsel %vm2029, %v2022, %v1564
      %v2056 = vsel %vm2029, %v2023, %v1566
      %v2057 = vsel %vm2029, %v2024, %v1568
      %v2058 = vsel %vm2029, %v2025, %v1570
      %v2059 = vsel %vm2029, %v2026, %v1572
      %v2060 = vsel %vm2029, %v2027, %v1574
      %v2061 = vsel %vm2029, %v2028, %v1576
      %vm2062 = vcmask 457728
      %v2063 = vsel %vm2062, %v2030, %v1642
      %v2064 = vsel %vm2062, %v2031, %v1644
      %v2065 = vsel %vm2062, %v2032, %v1646
      %v2066 = vsel %vm2062, %v2033, %v1648
      %v2067 = vsel %vm2062, %v2034, %v1650
      %v2068 = vsel %vm2062, %v2035, %v1652
      %v2069 = vsel %vm2062, %v2036, %v1654
      %v2070 = vsel %vm2062, %v2037, %v1656
      %v2071 = vsel %vm2062, %v2038, %v1658
      %v2072 = vsel %vm2062, %v2039, %v1660
      %v2073 = vsel %vm2062, %v2040, %v1662
      %v2074 = vsel %vm2062, %v2041, %v1664
      %v2075 = vsel %vm2062, %v2042, %v1666
      %v2076 = vsel %vm2062, %v2043, %v1668
      %v2077 = vsel %vm2062, %v2044, %v1670
      %v2078 = vsel %vm2062, %v2045, %v1672
      %v2079 = vsel %vm2062, %v2046, %v1674
      %v2080 = vsel %vm2062, %v2047, %v1676
      %v2081 = vsel %vm2062, %v2048, %v1678
      %v2082 = vsel %vm2062, %v2049, %v1680
      %v2083 = vsel %vm2062, %v2050, %v1682
      %v2084 = vsel %vm2062, %v2051, %v1684
      %v2085 = vsel %vm2062, %v2052, %v1686
      %v2086 = vsel %vm2062, %v2053, %v1688
      %v2087 = vsel %vm2062, %v2054, %v1690
      %v2088 = vsel %vm2062, %v2055, %v1692
      %v2089 = vsel %vm2062, %v2056, %v1694
      %v2090 = vsel %vm2062, %v2057, %v1696
      %v2091 = vsel %vm2062, %v2058, %v1698
      %v2092 = vsel %vm2062, %v2059, %v1700
      %v2093 = vsel %vm2062, %v2060, %v1702
      %v2094 = vsel %vm2062, %v2061, %v1704
      %vm2095 = vcmask 523264
      %v2096 = vsel %vm2095, %v2063, %v1770
      %v2097 = vsel %vm2095, %v2064, %v1772
      %v2098 = vsel %vm2095, %v2065, %v1774
      %v2099 = vsel %vm2095, %v2066, %v1776
      %v2100 = vsel %vm2095, %v2067, %v1778
      %v2101 = vsel %vm2095, %v2068, %v1780
      %v2102 = vsel %vm2095, %v2069, %v1782
      %v2103 = vsel %vm2095, %v2070, %v1784
      %v2104 = vsel %vm2095, %v2071, %v1786
      %v2105 = vsel %vm2095, %v2072, %v1788
      %v2106 = vsel %vm2095, %v2073, %v1790
      %v2107 = vsel %vm2095, %v2074, %v1792
      %v2108 = vsel %vm2095, %v2075, %v1794
      %v2109 = vsel %vm2095, %v2076, %v1796
      %v2110 = vsel %vm2095, %v2077, %v1798
      %v2111 = vsel %vm2095, %v2078, %v1800
      %v2112 = vsel %vm2095, %v2079, %v1802
      %v2113 = vsel %vm2095, %v2080, %v1804
      %v2114 = vsel %vm2095, %v2081, %v1806
      %v2115 = vsel %vm2095, %v2082, %v1808
      %v2116 = vsel %vm2095, %v2083, %v1810
      %v2117 = vsel %vm2095, %v2084, %v1812
      %v2118 = vsel %vm2095, %v2085, %v1814
      %v2119 = vsel %vm2095, %v2086, %v1816
      %v2120 = vsel %vm2095, %v2087, %v1818
      %v2121 = vsel %vm2095, %v2088, %v1820
      %v2122 = vsel %vm2095, %v2089, %v1822
      %v2123 = vsel %vm2095, %v2090, %v1824
      %v2124 = vsel %vm2095, %v2091, %v1826
      %v2125 = vsel %vm2095, %v2092, %v1828
      %v2126 = vsel %vm2095, %v2093, %v1830
      %v2127 = vsel %vm2095, %v2094, %v1832
      %v2128 = vld [vmem:[%s1] sm:$0xff]
      %v2129 = vld [vmem:[%s1 + $0x8] sm:$0xff]
      %v2130 = vld [vmem:[%s1 + $0x10] sm:$0xff]
      %v2131 = vld [vmem:[%s1 + $0x18] sm:$0xff]
      %v2132 = vld [vmem:[%s1 + $0x20] sm:$0xff]
      %v2133 = vld [vmem:[%s1 + $0x28] sm:$0xff]
      %v2134 = vld [vmem:[%s1 + $0x30] sm:$0xff]
      %v2135 = vld [vmem:[%s1 + $0x38] sm:$0xff]
      %v2136 = vld [vmem:[%s1 + $0x40] sm:$0xff]
      %v2137 = vld [vmem:[%s2] sm:$0x1]
      %v2139 = vlaneseq
      %v2140 = vshrl.u32 %v2139, 7
      %v2141 = vsub.s32 0, %v2140
      %v2142 = vrot.slane %v2137, %v2141
      %vm2144 = vcmask 588800
      %v2146 = vsel %vm2144, %v2096, 0
      %v2149 = vsel %vm2144, %v2097, 0
      %v2152 = vsel %vm2144, %v2098, 0
      %v2155 = vsel %vm2144, %v2099, 0
      %v2158 = vsel %vm2144, %v2100, 0
      %v2161 = vsel %vm2144, %v2101, 0
      %v2164 = vsel %vm2144, %v2102, 0
      %v2167 = vsel %vm2144, %v2103, 0
      %v2170 = vsel %vm2144, %v2104, 0
      %v2173 = vsel %vm2144, %v2105, 0
      %v2176 = vsel %vm2144, %v2106, 0
      %v2179 = vsel %vm2144, %v2107, 0
      %v2182 = vsel %vm2144, %v2108, 0
      %v2185 = vsel %vm2144, %v2109, 0
      %v2188 = vsel %vm2144, %v2110, 0
      %v2191 = vsel %vm2144, %v2111, 0
      %v2194 = vsel %vm2144, %v2112, 0
      %v2197 = vsel %vm2144, %v2113, 0
      %v2200 = vsel %vm2144, %v2114, 0
      %v2203 = vsel %vm2144, %v2115, 0
      %v2206 = vsel %vm2144, %v2116, 0
      %v2209 = vsel %vm2144, %v2117, 0
      %v2212 = vsel %vm2144, %v2118, 0
      %v2215 = vsel %vm2144, %v2119, 0
      %v2218 = vsel %vm2144, %v2120, 0
      %v2221 = vsel %vm2144, %v2121, 0
      %v2224 = vsel %vm2144, %v2122, 0
      %v2227 = vsel %vm2144, %v2123, 0
      %v2230 = vsel %vm2144, %v2124, 0
      %v2233 = vsel %vm2144, %v2125, 0
      %v2236 = vsel %vm2144, %v2126, 0
      %v2239 = vsel %vm2144, %v2127, 0
      %2241 = vmatprep.subr.mxu0 0.0
      %2242 = vmatpush1.msra.mxu0 %v2128
      %2243 = vmatprep.subr.mxu0 0.0
      %2244 = vmatpush1.msra.mxu0 %v2129
      %2245 = vmatprep.subr.mxu0 0.0
      %2246 = vmatpush1.msra.mxu0 %v2130
      %2247 = vmatprep.subr.mxu0 0.0
      %2248 = vmatpush1.msra.mxu0 %v2131
      %2249 = vmatprep.subr.mxu0 0.0
      %2250 = vmatpush1.msra.mxu0 %v2132
      %2251 = vmatprep.subr.mxu0 0.0
      %2252 = vmatpush1.msra.mxu0 %v2133
      %2253 = vmatprep.subr.mxu0 0.0
      %2254 = vmatpush1.msra.mxu0 %v2134
      %2255 = vmatprep.subr.mxu0 0.0
      %2256 = vmatpush1.msra.mxu0 %v2135
      %2257 = vmatprep.subr.mxu0 0.0
      %2258 = vmatpush1.msra.mxu0 %v2136
      %2259 = vmatprep.subr.mxu0 0.0
      %2260 = vmatpush1.msra.mxu0 0.0
      %2261 = vmatprep.subr.mxu0 0.0
      %2262 = vmatpush1.msra.mxu0 0.0
      %2263 = vmatprep.subr.mxu0 0.0
      %2264 = vmatpush1.msra.mxu0 0.0
      %2265 = vmatprep.subr.mxu0 0.0
      %2266 = vmatpush1.msra.mxu0 0.0
      %2267 = vmatprep.subr.mxu0 0.0
      %2268 = vmatpush1.msra.mxu0 0.0
      %2269 = vmatprep.subr.mxu0 0.0
      %2270 = vmatpush1.msra.mxu0 0.0
      %2271 = vmatprep.subr.mxu0 0.0
      %2272 = vmatpush1.msra.mxu0 0.0
      %2273 = vmatprep.subr.mxu0 0.0
      %2274 = vmatpush1.msra.mxu0 0.0
      %2275 = vmatprep.subr.mxu0 0.0
      %2276 = vmatpush1.msra.mxu0 0.0
      %2277 = vmatprep.subr.mxu0 0.0
      %2278 = vmatpush1.msra.mxu0 0.0
      %2279 = vmatprep.subr.mxu0 0.0
      %2280 = vmatpush1.msra.mxu0 0.0
      %2281 = vmatprep.subr.mxu0 0.0
      %2282 = vmatpush1.msra.mxu0 0.0
      %2283 = vmatprep.subr.mxu0 0.0
      %2284 = vmatpush1.msra.mxu0 0.0
      %2285 = vmatprep.subr.mxu0 0.0
      %2286 = vmatpush1.msra.mxu0 0.0
      %2287 = vmatprep.subr.mxu0 0.0
      %2288 = vmatpush1.msra.mxu0 0.0
      %2289 = vmatprep.subr.mxu0 0.0
      %2290 = vmatpush1.msra.mxu0 0.0
      %2291 = vmatprep.subr.mxu0 0.0
      %2292 = vmatpush1.msra.mxu0 0.0
      %2293 = vmatprep.subr.mxu0 0.0
      %2294 = vmatpush1.msra.mxu0 0.0
      %2295 = vmatprep.subr.mxu0 0.0
      %2296 = vmatpush1.msra.mxu0 0.0
      %2297 = vmatprep.subr.mxu0 0.0
      %2298 = vmatpush1.msra.mxu0 0.0
      %2299 = vmatprep.subr.mxu0 0.0
      %2300 = vmatpush1.msra.mxu0 0.0
      %2301 = vmatprep.subr.mxu0 0.0
      %2302 = vmatpush1.msra.mxu0 0.0
      %2303 = vmatprep.subr.mxu0 0.0
      %2304 = vmatpush1.msra.mxu0 0.0
      %2305 = vmatprep.mubr.f32.mxu0 0.0
      %2306 = vmatmul.mubr.f32.gmra.mrb[0].mxu0 %v2146
      %v2307 = vpop.f32.mrb[0].mxu0
      %v2308 = vadd.f32 %v2142, %v2307
      %v2309 = vpop.f32.mrb[0].mxu0
      %2310 = vmatprep.mubr.f32.mxu0 0.0
      %2311 = vmatmul.mubr.f32.gmra.mrb[0].mxu0 %v2149
      %v2312 = vpop.f32.mrb[0].mxu0
      %v2313 = vadd.f32 %v2142, %v2312
      %v2314 = vpop.f32.mrb[0].mxu0
      %2315 = vmatprep.mubr.f32.mxu0 0.0
      %2316 = vmatmul.mubr.f32.gmra.mrb[0].mxu0 %v2152
      %v2317 = vpop.f32.mrb[0].mxu0
      %v2318 = vadd.f32 %v2142, %v2317
      %v2319 = vpop.f32.mrb[0].mxu0
      %2320 = vmatprep.mubr.f32.mxu0 0.0
      %2321 = vmatmul.mubr.f32.gmra.mrb[0].mxu0 %v2155
      %v2322 = vpop.f32.mrb[0].mxu0
      %v2323 = vadd.f32 %v2142, %v2322
      %v2324 = vpop.f32.mrb[0].mxu0
      %2325 = vmatprep.mubr.f32.mxu0 0.0
      %2326 = vmatmul.mubr.f32.gmra.mrb[0].mxu0 %v2158
      %v2327 = vpop.f32.mrb[0].mxu0
      %v2328 = vadd.f32 %v2142, %v2327
      %v2329 = vpop.f32.mrb[0].mxu0
      %2330 = vmatprep.mubr.f32.mxu0 0.0
      %2331 = vmatmul.mubr.f32.gmra.mrb[0].mxu0 %v2161
      %v2332 = vpop.f32.mrb[0].mxu0
      %v2333 = vadd.f32 %v2142, %v2332
      %v2334 = vpop.f32.mrb[0].mxu0
      %2335 = vmatprep.mubr.f32.mxu0 0.0
      %2336 = vmatmul.mubr.f32.gmra.mrb[0].mxu0 %v2164
      %v2337 = vpop.f32.mrb[0].mxu0
      %v2338 = vadd.f32 %v2142, %v2337
      %v2339 = vpop.f32.mrb[0].mxu0
      %2340 = vmatprep.mubr.f32.mxu0 0.0
      %2341 = vmatmul.mubr.f32.gmra.mrb[0].mxu0 %v2167
      %v2342 = vpop.f32.mrb[0].mxu0
      %v2343 = vadd.f32 %v2142, %v2342
      %v2344 = vpop.f32.mrb[0].mxu0
      %2345 = vmatprep.mubr.f32.mxu0 0.0
      %2346 = vmatmul.mubr.f32.gmra.mrb[0].mxu0 %v2170
      %v2347 = vpop.f32.mrb[0].mxu0
      %v2348 = vadd.f32 %v2142, %v2347
      %v2349 = vpop.f32.mrb[0].mxu0
      %2350 = vmatprep.mubr.f32.mxu0 0.0
      %2351 = vmatmul.mubr.f32.gmra.mrb[0].mxu0 %v2173
      %v2352 = vpop.f32.mrb[0].mxu0
      %v2353 = vadd.f32 %v2142, %v2352
      %v2354 = vpop.f32.mrb[0].mxu0
      %2355 = vmatprep.mubr.f32.mxu0 0.0
      %2356 = vmatmul.mubr.f32.gmra.mrb[0].mxu0 %v2176
      %v2357 = vpop.f32.mrb[0].mxu0
      %v2358 = vadd.f32 %v2142, %v2357
      %v2359 = vpop.f32.mrb[0].mxu0
      %2360 = vmatprep.mubr.f32.mxu0 0.0
      %2361 = vmatmul.mubr.f32.gmra.mrb[0].mxu0 %v2179
      %v2362 = vpop.f32.mrb[0].mxu0
      %v2363 = vadd.f32 %v2142, %v2362
      %v2364 = vpop.f32.mrb[0].mxu0
      %2365 = vmatprep.mubr.f32.mxu0 0.0
      %2366 = vmatmul.mubr.f32.gmra.mrb[0].mxu0 %v2182
      %v2367 = vpop.f32.mrb[0].mxu0
      %v2368 = vadd.f32 %v2142, %v2367
      %v2369 = vpop.f32.mrb[0].mxu0
      %2370 = vmatprep.mubr.f32.mxu0 0.0
      %2371 = vmatmul.mubr.f32.gmra.mrb[0].mxu0 %v2185
      %v2372 = vpop.f32.mrb[0].mxu0
      %v2373 = vadd.f32 %v2142, %v2372
      %v2374 = vpop.f32.mrb[0].mxu0
      %2375 = vmatprep.mubr.f32.mxu0 0.0
      %2376 = vmatmul.mubr.f32.gmra.mrb[0].mxu0 %v2188
      %v2377 = vpop.f32.mrb[0].mxu0
      %v2378 = vadd.f32 %v2142, %v2377
      %v2379 = vpop.f32.mrb[0].mxu0
      %2380 = vmatprep.mubr.f32.mxu0 0.0
      %2381 = vmatmul.mubr.f32.gmra.mrb[0].mxu0 %v2191
      %v2382 = vpop.f32.mrb[0].mxu0
      %v2383 = vadd.f32 %v2142, %v2382
      %v2384 = vpop.f32.mrb[0].mxu0
      %2385 = vmatprep.mubr.f32.mxu0 0.0
      %2386 = vmatmul.mubr.f32.gmra.mrb[0].mxu0 %v2194
      %v2387 = vpop.f32.mrb[0].mxu0
      %v2388 = vadd.f32 %v2142, %v2387
      %v2389 = vpop.f32.mrb[0].mxu0
      %2390 = vmatprep.mubr.f32.mxu0 0.0
      %2391 = vmatmul.mubr.f32.gmra.mrb[0].mxu0 %v2197
      %v2392 = vpop.f32.mrb[0].mxu0
      %v2393 = vadd.f32 %v2142, %v2392
      %v2394 = vpop.f32.mrb[0].mxu0
      %2395 = vmatprep.mubr.f32.mxu0 0.0
      %2396 = vmatmul.mubr.f32.gmra.mrb[0].mxu0 %v2200
      %v2397 = vpop.f32.mrb[0].mxu0
      %v2398 = vadd.f32 %v2142, %v2397
      %v2399 = vpop.f32.mrb[0].mxu0
      %2400 = vmatprep.mubr.f32.mxu0 0.0
      %2401 = vmatmul.mubr.f32.gmra.mrb[0].mxu0 %v2203
      %v2402 = vpop.f32.mrb[0].mxu0
      %v2403 = vadd.f32 %v2142, %v2402
      %v2404 = vpop.f32.mrb[0].mxu0
      %2405 = vmatprep.mubr.f32.mxu0 0.0
      %2406 = vmatmul.mubr.f32.gmra.mrb[0].mxu0 %v2206
      %v2407 = vpop.f32.mrb[0].mxu0
      %v2408 = vadd.f32 %v2142, %v2407
      %v2409 = vpop.f32.mrb[0].mxu0
      %2410 = vmatprep.mubr.f32.mxu0 0.0
      %2411 = vmatmul.mubr.f32.gmra.mrb[0].mxu0 %v2209
      %v2412 = vpop.f32.mrb[0].mxu0
      %v2413 = vadd.f32 %v2142, %v2412
      %v2414 = vpop.f32.mrb[0].mxu0
      %2415 = vmatprep.mubr.f32.mxu0 0.0
      %2416 = vmatmul.mubr.f32.gmra.mrb[0].mxu0 %v2212
      %v2417 = vpop.f32.mrb[0].mxu0
      %v2418 = vadd.f32 %v2142, %v2417
      %v2419 = vpop.f32.mrb[0].mxu0
      %2420 = vmatprep.mubr.f32.mxu0 0.0
      %2421 = vmatmul.mubr.f32.gmra.mrb[0].mxu0 %v2215
      %v2422 = vpop.f32.mrb[0].mxu0
      %v2423 = vadd.f32 %v2142, %v2422
      %v2424 = vpop.f32.mrb[0].mxu0
      %2425 = vmatprep.mubr.f32.mxu0 0.0
      %2426 = vmatmul.mubr.f32.gmra.mrb[0].mxu0 %v2218
      %v2427 = vpop.f32.mrb[0].mxu0
      %v2428 = vadd.f32 %v2142, %v2427
      %v2429 = vpop.f32.mrb[0].mxu0
      %2430 = vmatprep.mubr.f32.mxu0 0.0
      %2431 = vmatmul.mubr.f32.gmra.mrb[0].mxu0 %v2221
      %v2432 = vpop.f32.mrb[0].mxu0
      %v2433 = vadd.f32 %v2142, %v2432
      %v2434 = vpop.f32.mrb[0].mxu0
      %2435 = vmatprep.mubr.f32.mxu0 0.0
      %2436 = vmatmul.mubr.f32.gmra.mrb[0].mxu0 %v2224
      %v2437 = vpop.f32.mrb[0].mxu0
      %v2438 = vadd.f32 %v2142, %v2437
      %v2439 = vpop.f32.mrb[0].mxu0
      %2440 = vmatprep.mubr.f32.mxu0 0.0
      %2441 = vmatmul.mubr.f32.gmra.mrb[0].mxu0 %v2227
      %v2442 = vpop.f32.mrb[0].mxu0
      %v2443 = vadd.f32 %v2142, %v2442
      %v2444 = vpop.f32.mrb[0].mxu0
      %2445 = vmatprep.mubr.f32.mxu0 0.0
      %2446 = vmatmul.mubr.f32.gmra.mrb[0].mxu0 %v2230
      %v2447 = vpop.f32.mrb[0].mxu0
      %v2448 = vadd.f32 %v2142, %v2447
      %v2449 = vpop.f32.mrb[0].mxu0
      %2450 = vmatprep.mubr.f32.mxu0 0.0
      %2451 = vmatmul.mubr.f32.gmra.mrb[0].mxu0 %v2233
      %v2452 = vpop.f32.mrb[0].mxu0
      %v2453 = vadd.f32 %v2142, %v2452
      %v2454 = vpop.f32.mrb[0].mxu0
      %2455 = vmatprep.mubr.f32.mxu0 0.0
      %2456 = vmatmul.mubr.f32.gmra.mrb[0].mxu0 %v2236
      %v2457 = vpop.f32.mrb[0].mxu0
      %v2458 = vadd.f32 %v2142, %v2457
      %v2459 = vpop.f32.mrb[0].mxu0
      %2460 = vmatprep.mubr.f32.mxu0 0.0
      %2461 = vmatmul.mubr.f32.gmra.mrb[0].mxu0 %v2239
      %v2462 = vpop.f32.mrb[0].mxu0
      %v2463 = vadd.f32 %v2142, %v2462
      %v2464 = vpop.f32.mrb[0].mxu0
      %2465 = vdwg.mxu0
      %2466 = vst.msk [vmem:[%s519 + $0x1] sm:$0xff] %vm441, %v2308
      %2467 = vst.msk [vmem:[%s519 + $0x9] sm:$0xff] %vm441, %v2313
      %2468 = vst.msk [vmem:[%s519 + $0x19] sm:$0xff] %vm441, %v2318
      %2469 = vst.msk [vmem:[%s519 + $0x21] sm:$0xff] %vm441, %v2323
      %2470 = vst.msk [vmem:[%s519 + $0x31] sm:$0xff] %vm441, %v2328
      %2471 = vst.msk [vmem:[%s519 + $0x39] sm:$0xff] %vm441, %v2333
      %2472 = vst.msk [vmem:[%s519 + $0x49] sm:$0xff] %vm441, %v2338
      %2473 = vst.msk [vmem:[%s519 + $0x51] sm:$0xff] %vm441, %v2343
      %2474 = vst.msk [vmem:[%s519 + $0x61] sm:$0xff] %vm441, %v2348
      %2475 = vst.msk [vmem:[%s519 + $0x69] sm:$0xff] %vm441, %v2353
      %2476 = vst.msk [vmem:[%s519 + $0x79] sm:$0xff] %vm441, %v2358
      %2477 = vst.msk [vmem:[%s519 + $0x81] sm:$0xff] %vm441, %v2363
      %2478 = vst.msk [vmem:[%s519 + $0x91] sm:$0xff] %vm441, %v2368
      %2479 = vst.msk [vmem:[%s519 + $0x99] sm:$0xff] %vm441, %v2373
      %2480 = vst.msk [vmem:[%s519 + $0xa9] sm:$0xff] %vm441, %v2378
      %2481 = vst.msk [vmem:[%s519 + $0xb1] sm:$0xff] %vm441, %v2383
      %2482 = vst.msk [vmem:[%s519 + $0xc1] sm:$0xff] %vm441, %v2388
      %2483 = vst.msk [vmem:[%s519 + $0xc9] sm:$0xff] %vm441, %v2393
      %2484 = vst.msk [vmem:[%s519 + $0xd9] sm:$0xff] %vm441, %v2398
      %2485 = vst.msk [vmem:[%s519 + $0xe1] sm:$0xff] %vm441, %v2403
      %2486 = vst.msk [vmem:[%s519 + $0xf1] sm:$0xff] %vm441, %v2408
      %2487 = vst.msk [vmem:[%s519 + $0xf9] sm:$0xff] %vm441, %v2413
      %2488 = vst.msk [vmem:[%s519 + $0x109] sm:$0xff] %vm441, %v2418
      %2489 = vst.msk [vmem:[%s519 + $0x111] sm:$0xff] %vm441, %v2423
      %2490 = vst.msk [vmem:[%s519 + $0x121] sm:$0xff] %vm441, %v2428
      %2491 = vst.msk [vmem:[%s519 + $0x129] sm:$0xff] %vm441, %v2433
      %2492 = vst.msk [vmem:[%s519 + $0x139] sm:$0xff] %vm441, %v2438
      %2493 = vst.msk [vmem:[%s519 + $0x141] sm:$0xff] %vm441, %v2443
      %2494 = vst.msk [vmem:[%s519 + $0x151] sm:$0xff] %vm441, %v2448
      %2495 = vst.msk [vmem:[%s519 + $0x159] sm:$0xff] %vm441, %v2453
      %2496 = vst.msk [vmem:[%s519 + $0x169] sm:$0xff] %vm441, %v2458
      %2497 = vst.msk [vmem:[%s519 + $0x171] sm:$0xff] %vm441, %v2463
      %v2498 = vld [vmem:[#allocation2] sm:$0xff]
      %v2499 = vld [vmem:[#allocation2 + $0x8] sm:$0xff]
      %v2500 = vld [vmem:[#allocation2 + $0x18] sm:$0xff]
      %v2501 = vld [vmem:[#allocation2 + $0x20] sm:$0xff]
      %v2502 = vld [vmem:[#allocation2 + $0x30] sm:$0xff]
      %v2503 = vld [vmem:[#allocation2 + $0x38] sm:$0xff]
      %v2504 = vld [vmem:[#allocation2 + $0x48] sm:$0xff]
      %v2505 = vld [vmem:[#allocation2 + $0x50] sm:$0xff]
      %v2506 = vld [vmem:[#allocation2 + $0x60] sm:$0xff]
      %v2507 = vld [vmem:[#allocation2 + $0x68] sm:$0xff]
      %v2508 = vld [vmem:[#allocation2 + $0x78] sm:$0xff]
      %v2509 = vld [vmem:[#allocation2 + $0x80] sm:$0xff]
      %v2510 = vld [vmem:[#allocation2 + $0x90] sm:$0xff]
      %v2511 = vld [vmem:[#allocation2 + $0x98] sm:$0xff]
      %v2512 = vld [vmem:[#allocation2 + $0xa8] sm:$0xff]
      %v2513 = vld [vmem:[#allocation2 + $0xb0] sm:$0xff]
      %v2514 = vld [vmem:[#allocation2 + $0xc0] sm:$0xff]
      %v2515 = vld [vmem:[#allocation2 + $0xc8] sm:$0xff]
      %v2516 = vld [vmem:[#allocation2 + $0xd8] sm:$0xff]
      %v2517 = vld [vmem:[#allocation2 + $0xe0] sm:$0xff]
      %v2518 = vld [vmem:[#allocation2 + $0xf0] sm:$0xff]
      %v2519 = vld [vmem:[#allocation2 + $0xf8] sm:$0xff]
      %v2520 = vld [vmem:[#allocation2 + $0x108] sm:$0xff]
      %v2521 = vld [vmem:[#allocation2 + $0x110] sm:$0xff]
      %v2522 = vld [vmem:[#allocation2 + $0x120] sm:$0xff]
      %v2523 = vld [vmem:[#allocation2 + $0x128] sm:$0xff]
      %v2524 = vld [vmem:[#allocation2 + $0x138] sm:$0xff]
      %v2525 = vld [vmem:[#allocation2 + $0x140] sm:$0xff]
      %v2526 = vld [vmem:[#allocation2 + $0x150] sm:$0xff]
      %v2527 = vld [vmem:[#allocation2 + $0x158] sm:$0xff]
      %v2528 = vld [vmem:[#allocation2 + $0x168] sm:$0xff]
      %v2529 = vld [vmem:[#allocation2 + $0x170] sm:$0xff]
      %v2530 = vld [vmem:[#allocation2 + $0x1] sm:$0xff]
      %v2531 = vld [vmem:[#allocation2 + $0x9] sm:$0xff]
      %v2532 = vld [vmem:[#allocation2 + $0x19] sm:$0xff]
      %v2533 = vld [vmem:[#allocation2 + $0x21] sm:$0xff]
      %v2534 = vld [vmem:[#allocation2 + $0x31] sm:$0xff]
      %v2535 = vld [vmem:[#allocation2 + $0x39] sm:$0xff]
      %v2536 = vld [vmem:[#allocation2 + $0x49] sm:$0xff]
      %v2537 = vld [vmem:[#allocation2 + $0x51] sm:$0xff]
      %v2538 = vld [vmem:[#allocation2 + $0x61] sm:$0xff]
      %v2539 = vld [vmem:[#allocation2 + $0x69] sm:$0xff]
      %v2540 = vld [vmem:[#allocation2 + $0x79] sm:$0xff]
      %v2541 = vld [vmem:[#allocation2 + $0x81] sm:$0xff]
      %v2542 = vld [vmem:[#allocation2 + $0x91] sm:$0xff]
      %v2543 = vld [vmem:[#allocation2 + $0x99] sm:$0xff]
      %v2544 = vld [vmem:[#allocation2 + $0xa9] sm:$0xff]
      %v2545 = vld [vmem:[#allocation2 + $0xb1] sm:$0xff]
      %v2546 = vld [vmem:[#allocation2 + $0xc1] sm:$0xff]
      %v2547 = vld [vmem:[#allocation2 + $0xc9] sm:$0xff]
      %v2548 = vld [vmem:[#allocation2 + $0xd9] sm:$0xff]
      %v2549 = vld [vmem:[#allocation2 + $0xe1] sm:$0xff]
      %v2550 = vld [vmem:[#allocation2 + $0xf1] sm:$0xff]
      %v2551 = vld [vmem:[#allocation2 + $0xf9] sm:$0xff]
      %v2552 = vld [vmem:[#allocation2 + $0x109] sm:$0xff]
      %v2553 = vld [vmem:[#allocation2 + $0x111] sm:$0xff]
      %v2554 = vld [vmem:[#allocation2 + $0x121] sm:$0xff]
      %v2555 = vld [vmem:[#allocation2 + $0x129] sm:$0xff]
      %v2556 = vld [vmem:[#allocation2 + $0x139] sm:$0xff]
      %v2557 = vld [vmem:[#allocation2 + $0x141] sm:$0xff]
      %v2558 = vld [vmem:[#allocation2 + $0x151] sm:$0xff]
      %v2559 = vld [vmem:[#allocation2 + $0x159] sm:$0xff]
      %v2560 = vld [vmem:[#allocation2 + $0x169] sm:$0xff]
      %v2561 = vld [vmem:[#allocation2 + $0x171] sm:$0xff]
      %v2562 = vld [vmem:[#allocation2 + $0x2] sm:$0xff]
      %v2563 = vld [vmem:[#allocation2 + $0xa] sm:$0xff]
      %v2564 = vld [vmem:[#allocation2 + $0x1a] sm:$0xff]
      %v2565 = vld [vmem:[#allocation2 + $0x22] sm:$0xff]
      %v2566 = vld [vmem:[#allocation2 + $0x32] sm:$0xff]
      %v2567 = vld [vmem:[#allocation2 + $0x3a] sm:$0xff]
      %v2568 = vld [vmem:[#allocation2 + $0x4a] sm:$0xff]
      %v2569 = vld [vmem:[#allocation2 + $0x52] sm:$0xff]
      %v2570 = vld [vmem:[#allocation2 + $0x62] sm:$0xff]
      %v2571 = vld [vmem:[#allocation2 + $0x6a] sm:$0xff]
      %v2572 = vld [vmem:[#allocation2 + $0x7a] sm:$0xff]
      %v2573 = vld [vmem:[#allocation2 + $0x82] sm:$0xff]
      %v2574 = vld [vmem:[#allocation2 + $0x92] sm:$0xff]
      %v2575 = vld [vmem:[#allocation2 + $0x9a] sm:$0xff]
      %v2576 = vld [vmem:[#allocation2 + $0xaa] sm:$0xff]
      %v2577 = vld [vmem:[#allocation2 + $0xb2] sm:$0xff]
      %v2578 = vld [vmem:[#allocation2 + $0xc2] sm:$0xff]
      %v2579 = vld [vmem:[#allocation2 + $0xca] sm:$0xff]
      %v2580 = vld [vmem:[#allocation2 + $0xda] sm:$0xff]
      %v2581 = vld [vmem:[#allocation2 + $0xe2] sm:$0xff]
      %v2582 = vld [vmem:[#allocation2 + $0xf2] sm:$0xff]
      %v2583 = vld [vmem:[#allocation2 + $0xfa] sm:$0xff]
      %v2584 = vld [vmem:[#allocation2 + $0x10a] sm:$0xff]
      %v2585 = vld [vmem:[#allocation2 + $0x112] sm:$0xff]
      %v2586 = vld [vmem:[#allocation2 + $0x122] sm:$0xff]
      %v2587 = vld [vmem:[#allocation2 + $0x12a] sm:$0xff]
      %v2588 = vld [vmem:[#allocation2 + $0x13a] sm:$0xff]
      %v2589 = vld [vmem:[#allocation2 + $0x142] sm:$0xff]
      %v2590 = vld [vmem:[#allocation2 + $0x152] sm:$0xff]
      %v2591 = vld [vmem:[#allocation2 + $0x15a] sm:$0xff]
      %v2592 = vld [vmem:[#allocation2 + $0x16a] sm:$0xff]
      %v2593 = vld [vmem:[#allocation2 + $0x172] sm:$0xff]
      %v2594 = vld [vmem:[%s519] sm:$0xff]
      %v2595 = vld [vmem:[%s519 + $0x8] sm:$0xff]
      %v2596 = vld [vmem:[%s519 + $0x18] sm:$0xff]
      %v2597 = vld [vmem:[%s519 + $0x20] sm:$0xff]
      %v2598 = vld [vmem:[%s519 + $0x30] sm:$0xff]
      %v2599 = vld [vmem:[%s519 + $0x38] sm:$0xff]
      %v2600 = vld [vmem:[%s519 + $0x48] sm:$0xff]
      %v2601 = vld [vmem:[%s519 + $0x50] sm:$0xff]
      %v2602 = vld [vmem:[%s519 + $0x60] sm:$0xff]
      %v2603 = vld [vmem:[%s519 + $0x68] sm:$0xff]
      %v2604 = vld [vmem:[%s519 + $0x78] sm:$0xff]
      %v2605 = vld [vmem:[%s519 + $0x80] sm:$0xff]
      %v2606 = vld [vmem:[%s519 + $0x90] sm:$0xff]
      %v2607 = vld [vmem:[%s519 + $0x98] sm:$0xff]
      %v2608 = vld [vmem:[%s519 + $0xa8] sm:$0xff]
      %v2609 = vld [vmem:[%s519 + $0xb0] sm:$0xff]
      %v2610 = vld [vmem:[%s519 + $0xc0] sm:$0xff]
      %v2611 = vld [vmem:[%s519 + $0xc8] sm:$0xff]
      %v2612 = vld [vmem:[%s519 + $0xd8] sm:$0xff]
      %v2613 = vld [vmem:[%s519 + $0xe0] sm:$0xff]
      %v2614 = vld [vmem:[%s519 + $0xf0] sm:$0xff]
      %v2615 = vld [vmem:[%s519 + $0xf8] sm:$0xff]
      %v2616 = vld [vmem:[%s519 + $0x108] sm:$0xff]
      %v2617 = vld [vmem:[%s519 + $0x110] sm:$0xff]
      %v2618 = vld [vmem:[%s519 + $0x120] sm:$0xff]
      %v2619 = vld [vmem:[%s519 + $0x128] sm:$0xff]
      %v2620 = vld [vmem:[%s519 + $0x138] sm:$0xff]
      %v2621 = vld [vmem:[%s519 + $0x140] sm:$0xff]
      %v2622 = vld [vmem:[%s519 + $0x150] sm:$0xff]
      %v2623 = vld [vmem:[%s519 + $0x158] sm:$0xff]
      %v2624 = vld [vmem:[%s519 + $0x168] sm:$0xff]
      %v2625 = vld [vmem:[%s519 + $0x170] sm:$0xff]
      %v2626 = vld [vmem:[%s519 + $0x1] sm:$0xff]
      %v2627 = vld [vmem:[%s519 + $0x9] sm:$0xff]
      %v2628 = vld [vmem:[%s519 + $0x19] sm:$0xff]
      %v2629 = vld [vmem:[%s519 + $0x21] sm:$0xff]
      %v2630 = vld [vmem:[%s519 + $0x31] sm:$0xff]
      %v2631 = vld [vmem:[%s519 + $0x39] sm:$0xff]
      %v2632 = vld [vmem:[%s519 + $0x49] sm:$0xff]
      %v2633 = vld [vmem:[%s519 + $0x51] sm:$0xff]
      %v2634 = vld [vmem:[%s519 + $0x61] sm:$0xff]
      %v2635 = vld [vmem:[%s519 + $0x69] sm:$0xff]
      %v2636 = vld [vmem:[%s519 + $0x79] sm:$0xff]
      %v2637 = vld [vmem:[%s519 + $0x81] sm:$0xff]
      %v2638 = vld [vmem:[%s519 + $0x91] sm:$0xff]
      %v2639 = vld [vmem:[%s519 + $0x99] sm:$0xff]
      %v2640 = vld [vmem:[%s519 + $0xa9] sm:$0xff]
      %v2641 = vld [vmem:[%s519 + $0xb1] sm:$0xff]
      %v2642 = vld [vmem:[%s519 + $0xc1] sm:$0xff]
      %v2643 = vld [vmem:[%s519 + $0xc9] sm:$0xff]
      %v2644 = vld [vmem:[%s519 + $0xd9] sm:$0xff]
      %v2645 = vld [vmem:[%s519 + $0xe1] sm:$0xff]
      %v2646 = vld [vmem:[%s519 + $0xf1] sm:$0xff]
      %v2647 = vld [vmem:[%s519 + $0xf9] sm:$0xff]
      %v2648 = vld [vmem:[%s519 + $0x109] sm:$0xff]
      %v2649 = vld [vmem:[%s519 + $0x111] sm:$0xff]
      %v2650 = vld [vmem:[%s519 + $0x121] sm:$0xff]
      %v2651 = vld [vmem:[%s519 + $0x129] sm:$0xff]
      %v2652 = vld [vmem:[%s519 + $0x139] sm:$0xff]
      %v2653 = vld [vmem:[%s519 + $0x141] sm:$0xff]
      %v2654 = vld [vmem:[%s519 + $0x151] sm:$0xff]
      %v2655 = vld [vmem:[%s519 + $0x159] sm:$0xff]
      %v2656 = vld [vmem:[%s519 + $0x169] sm:$0xff]
      %v2657 = vld [vmem:[%s519 + $0x171] sm:$0xff]
      %v2658 = vld [vmem:[%s519 + $0x2] sm:$0xff]
      %v2659 = vld [vmem:[%s519 + $0xa] sm:$0xff]
      %v2660 = vld [vmem:[%s519 + $0x1a] sm:$0xff]
      %v2661 = vld [vmem:[%s519 + $0x22] sm:$0xff]
      %v2662 = vld [vmem:[%s519 + $0x32] sm:$0xff]
      %v2663 = vld [vmem:[%s519 + $0x3a] sm:$0xff]
      %v2664 = vld [vmem:[%s519 + $0x4a] sm:$0xff]
      %v2665 = vld [vmem:[%s519 + $0x52] sm:$0xff]
      %v2666 = vld [vmem:[%s519 + $0x62] sm:$0xff]
      %v2667 = vld [vmem:[%s519 + $0x6a] sm:$0xff]
      %v2668 = vld [vmem:[%s519 + $0x7a] sm:$0xff]
      %v2669 = vld [vmem:[%s519 + $0x82] sm:$0xff]
      %v2670 = vld [vmem:[%s519 + $0x92] sm:$0xff]
      %v2671 = vld [vmem:[%s519 + $0x9a] sm:$0xff]
      %v2672 = vld [vmem:[%s519 + $0xaa] sm:$0xff]
      %v2673 = vld [vmem:[%s519 + $0xb2] sm:$0xff]
      %v2674 = vld [vmem:[%s519 + $0xc2] sm:$0xff]
      %v2675 = vld [vmem:[%s519 + $0xca] sm:$0xff]
      %v2676 = vld [vmem:[%s519 + $0xda] sm:$0xff]
      %v2677 = vld [vmem:[%s519 + $0xe2] sm:$0xff]
      %v2678 = vld [vmem:[%s519 + $0xf2] sm:$0xff]
      %v2679 = vld [vmem:[%s519 + $0xfa] sm:$0xff]
      %v2680 = vld [vmem:[%s519 + $0x10a] sm:$0xff]
      %v2681 = vld [vmem:[%s519 + $0x112] sm:$0xff]
      %v2682 = vld [vmem:[%s519 + $0x122] sm:$0xff]
      %v2683 = vld [vmem:[%s519 + $0x12a] sm:$0xff]
      %v2684 = vld [vmem:[%s519 + $0x13a] sm:$0xff]
      %v2685 = vld [vmem:[%s519 + $0x142] sm:$0xff]
      %v2686 = vld [vmem:[%s519 + $0x152] sm:$0xff]
      %v2687 = vld [vmem:[%s519 + $0x15a] sm:$0xff]
      %v2688 = vld [vmem:[%s519 + $0x16a] sm:$0xff]
      %v2689 = vld [vmem:[%s519 + $0x172] sm:$0xff]
      %v2690 = vld [vmem:[%s744] sm:$0xff]
      %v2691 = vld [vmem:[%s744 + $0x8] sm:$0xff]
      %v2692 = vld [vmem:[%s744 + $0x18] sm:$0xff]
      %v2693 = vld [vmem:[%s744 + $0x20] sm:$0xff]
      %v2694 = vld [vmem:[%s744 + $0x30] sm:$0xff]
      %v2695 = vld [vmem:[%s744 + $0x38] sm:$0xff]
      %v2696 = vld [vmem:[%s744 + $0x48] sm:$0xff]
      %v2697 = vld [vmem:[%s744 + $0x50] sm:$0xff]
      %v2698 = vld [vmem:[%s744 + $0x60] sm:$0xff]
      %v2699 = vld [vmem:[%s744 + $0x68] sm:$0xff]
      %v2700 = vld [vmem:[%s744 + $0x78] sm:$0xff]
      %v2701 = vld [vmem:[%s744 + $0x80] sm:$0xff]
      %v2702 = vld [vmem:[%s744 + $0x90] sm:$0xff]
      %v2703 = vld [vmem:[%s744 + $0x98] sm:$0xff]
      %v2704 = vld [vmem:[%s744 + $0xa8] sm:$0xff]
      %v2705 = vld [vmem:[%s744 + $0xb0] sm:$0xff]
      %v2706 = vld [vmem:[%s744 + $0xc0] sm:$0xff]
      %v2707 = vld [vmem:[%s744 + $0xc8] sm:$0xff]
      %v2708 = vld [vmem:[%s744 + $0xd8] sm:$0xff]
      %v2709 = vld [vmem:[%s744 + $0xe0] sm:$0xff]
      %v2710 = vld [vmem:[%s744 + $0xf0] sm:$0xff]
      %v2711 = vld [vmem:[%s744 + $0xf8] sm:$0xff]
      %v2712 = vld [vmem:[%s744 + $0x108] sm:$0xff]
      %v2713 = vld [vmem:[%s744 + $0x110] sm:$0xff]
      %v2714 = vld [vmem:[%s744 + $0x120] sm:$0xff]
      %v2715 = vld [vmem:[%s744 + $0x128] sm:$0xff]
      %v2716 = vld [vmem:[%s744 + $0x138] sm:$0xff]
      %v2717 = vld [vmem:[%s744 + $0x140] sm:$0xff]
      %v2718 = vld [vmem:[%s744 + $0x150] sm:$0xff]
      %v2719 = vld [vmem:[%s744 + $0x158] sm:$0xff]
      %v2720 = vld [vmem:[%s744 + $0x168] sm:$0xff]
      %v2721 = vld [vmem:[%s744 + $0x170] sm:$0xff]
      %v2722 = vld [vmem:[%s744 + $0x1] sm:$0xff]
      %v2723 = vld [vmem:[%s744 + $0x9] sm:$0xff]
      %v2724 = vld [vmem:[%s744 + $0x19] sm:$0xff]
      %v2725 = vld [vmem:[%s744 + $0x21] sm:$0xff]
      %v2726 = vld [vmem:[%s744 + $0x31] sm:$0xff]
      %v2727 = vld [vmem:[%s744 + $0x39] sm:$0xff]
      %v2728 = vld [vmem:[%s744 + $0x49] sm:$0xff]
      %v2729 = vld [vmem:[%s744 + $0x51] sm:$0xff]
      %v2730 = vld [vmem:[%s744 + $0x61] sm:$0xff]
      %v2731 = vld [vmem:[%s744 + $0x69] sm:$0xff]
      %v2732 = vld [vmem:[%s744 + $0x79] sm:$0xff]
      %v2733 = vld [vmem:[%s744 + $0x81] sm:$0xff]
      %v2734 = vld [vmem:[%s744 + $0x91] sm:$0xff]
      %v2735 = vld [vmem:[%s744 + $0x99] sm:$0xff]
      %v2736 = vld [vmem:[%s744 + $0xa9] sm:$0xff]
      %v2737 = vld [vmem:[%s744 + $0xb1] sm:$0xff]
      %v2738 = vld [vmem:[%s744 + $0xc1] sm:$0xff]
      %v2739 = vld [vmem:[%s744 + $0xc9] sm:$0xff]
      %v2740 = vld [vmem:[%s744 + $0xd9] sm:$0xff]
      %v2741 = vld [vmem:[%s744 + $0xe1] sm:$0xff]
      %v2742 = vld [vmem:[%s744 + $0xf1] sm:$0xff]
      %v2743 = vld [vmem:[%s744 + $0xf9] sm:$0xff]
      %v2744 = vld [vmem:[%s744 + $0x109] sm:$0xff]
      %v2745 = vld [vmem:[%s744 + $0x111] sm:$0xff]
      %v2746 = vld [vmem:[%s744 + $0x121] sm:$0xff]
      %v2747 = vld [vmem:[%s744 + $0x129] sm:$0xff]
      %v2748 = vld [vmem:[%s744 + $0x139] sm:$0xff]
      %v2749 = vld [vmem:[%s744 + $0x141] sm:$0xff]
      %v2750 = vld [vmem:[%s744 + $0x151] sm:$0xff]
      %v2751 = vld [vmem:[%s744 + $0x159] sm:$0xff]
      %v2752 = vld [vmem:[%s744 + $0x169] sm:$0xff]
      %v2753 = vld [vmem:[%s744 + $0x171] sm:$0xff]
      %v2754 = vld [vmem:[%s744 + $0x2] sm:$0xff]
      %v2755 = vld [vmem:[%s744 + $0xa] sm:$0xff]
      %v2756 = vld [vmem:[%s744 + $0x1a] sm:$0xff]
      %v2757 = vld [vmem:[%s744 + $0x22] sm:$0xff]
      %v2758 = vld [vmem:[%s744 + $0x32] sm:$0xff]
      %v2759 = vld [vmem:[%s744 + $0x3a] sm:$0xff]
      %v2760 = vld [vmem:[%s744 + $0x4a] sm:$0xff]
      %v2761 = vld [vmem:[%s744 + $0x52] sm:$0xff]
      %v2762 = vld [vmem:[%s744 + $0x62] sm:$0xff]
      %v2763 = vld [vmem:[%s744 + $0x6a] sm:$0xff]
      %v2764 = vld [vmem:[%s744 + $0x7a] sm:$0xff]
      %v2765 = vld [vmem:[%s744 + $0x82] sm:$0xff]
      %v2766 = vld [vmem:[%s744 + $0x92] sm:$0xff]
      %v2767 = vld [vmem:[%s744 + $0x9a] sm:$0xff]
      %v2768 = vld [vmem:[%s744 + $0xaa] sm:$0xff]
      %v2769 = vld [vmem:[%s744 + $0xb2] sm:$0xff]
      %v2770 = vld [vmem:[%s744 + $0xc2] sm:$0xff]
      %v2771 = vld [vmem:[%s744 + $0xca] sm:$0xff]
      %v2772 = vld [vmem:[%s744 + $0xda] sm:$0xff]
      %v2773 = vld [vmem:[%s744 + $0xe2] sm:$0xff]
      %v2774 = vld [vmem:[%s744 + $0xf2] sm:$0xff]
      %v2775 = vld [vmem:[%s744 + $0xfa] sm:$0xff]
      %v2776 = vld [vmem:[%s744 + $0x10a] sm:$0xff]
      %v2777 = vld [vmem:[%s744 + $0x112] sm:$0xff]
      %v2778 = vld [vmem:[%s744 + $0x122] sm:$0xff]
      %v2779 = vld [vmem:[%s744 + $0x12a] sm:$0xff]
      %v2780 = vld [vmem:[%s744 + $0x13a] sm:$0xff]
      %v2781 = vld [vmem:[%s744 + $0x142] sm:$0xff]
      %v2782 = vld [vmem:[%s744 + $0x152] sm:$0xff]
      %v2783 = vld [vmem:[%s744 + $0x15a] sm:$0xff]
      %v2784 = vld [vmem:[%s744 + $0x16a] sm:$0xff]
      %v2785 = vld [vmem:[%s744 + $0x172] sm:$0xff]
      %2818 = vrot.lane.b32.xlu0 %v2530, 8
      %v2819 = vpop.permute.xlu0 %2818
      %2820 = vrot.lane.b32.xlu0 %v2531, 8
      %v2821 = vpop.permute.xlu0 %2820
      %2822 = vrot.lane.b32.xlu0 %v2532, 8
      %v2823 = vpop.permute.xlu0 %2822
      %2824 = vrot.lane.b32.xlu0 %v2533, 8
      %v2825 = vpop.permute.xlu0 %2824
      %2826 = vrot.lane.b32.xlu0 %v2534, 8
      %v2827 = vpop.permute.xlu0 %2826
      %2828 = vrot.lane.b32.xlu0 %v2535, 8
      %v2829 = vpop.permute.xlu0 %2828
      %2830 = vrot.lane.b32.xlu0 %v2536, 8
      %v2831 = vpop.permute.xlu0 %2830
      %2832 = vrot.lane.b32.xlu0 %v2537, 8
      %v2833 = vpop.permute.xlu0 %2832
      %2834 = vrot.lane.b32.xlu0 %v2538, 8
      %v2835 = vpop.permute.xlu0 %2834
      %2836 = vrot.lane.b32.xlu0 %v2539, 8
      %v2837 = vpop.permute.xlu0 %2836
      %2838 = vrot.lane.b32.xlu0 %v2540, 8
      %v2839 = vpop.permute.xlu0 %2838
      %2840 = vrot.lane.b32.xlu0 %v2541, 8
      %v2841 = vpop.permute.xlu0 %2840
      %2842 = vrot.lane.b32.xlu0 %v2542, 8
      %v2843 = vpop.permute.xlu0 %2842
      %2844 = vrot.lane.b32.xlu0 %v2543, 8
      %v2845 = vpop.permute.xlu0 %2844
      %2846 = vrot.lane.b32.xlu0 %v2544, 8
      %v2847 = vpop.permute.xlu0 %2846
      %2848 = vrot.lane.b32.xlu0 %v2545, 8
      %v2849 = vpop.permute.xlu0 %2848
      %2850 = vrot.lane.b32.xlu0 %v2546, 8
      %v2851 = vpop.permute.xlu0 %2850
      %2852 = vrot.lane.b32.xlu0 %v2547, 8
      %v2853 = vpop.permute.xlu0 %2852
      %2854 = vrot.lane.b32.xlu0 %v2548, 8
      %v2855 = vpop.permute.xlu0 %2854
      %2856 = vrot.lane.b32.xlu0 %v2549, 8
      %v2857 = vpop.permute.xlu0 %2856
      %2858 = vrot.lane.b32.xlu0 %v2550, 8
      %v2859 = vpop.permute.xlu0 %2858
      %2860 = vrot.lane.b32.xlu0 %v2551, 8
      %v2861 = vpop.permute.xlu0 %2860
      %2862 = vrot.lane.b32.xlu0 %v2552, 8
      %v2863 = vpop.permute.xlu0 %2862
      %2864 = vrot.lane.b32.xlu0 %v2553, 8
      %v2865 = vpop.permute.xlu0 %2864
      %2866 = vrot.lane.b32.xlu0 %v2554, 8
      %v2867 = vpop.permute.xlu0 %2866
      %2868 = vrot.lane.b32.xlu0 %v2555, 8
      %v2869 = vpop.permute.xlu0 %2868
      %2870 = vrot.lane.b32.xlu0 %v2556, 8
      %v2871 = vpop.permute.xlu0 %2870
      %2872 = vrot.lane.b32.xlu0 %v2557, 8
      %v2873 = vpop.permute.xlu0 %2872
      %2874 = vrot.lane.b32.xlu0 %v2558, 8
      %v2875 = vpop.permute.xlu0 %2874
      %2876 = vrot.lane.b32.xlu0 %v2559, 8
      %v2877 = vpop.permute.xlu0 %2876
      %2878 = vrot.lane.b32.xlu0 %v2560, 8
      %v2879 = vpop.permute.xlu0 %2878
      %2880 = vrot.lane.b32.xlu0 %v2561, 8
      %v2881 = vpop.permute.xlu0 %2880
      %2946 = vrot.lane.b32.xlu0 %v2562, 16
      %v2947 = vpop.permute.xlu0 %2946
      %2948 = vrot.lane.b32.xlu0 %v2563, 16
      %v2949 = vpop.permute.xlu0 %2948
      %2950 = vrot.lane.b32.xlu0 %v2564, 16
      %v2951 = vpop.permute.xlu0 %2950
      %2952 = vrot.lane.b32.xlu0 %v2565, 16
      %v2953 = vpop.permute.xlu0 %2952
      %2954 = vrot.lane.b32.xlu0 %v2566, 16
      %v2955 = vpop.permute.xlu0 %2954
      %2956 = vrot.lane.b32.xlu0 %v2567, 16
      %v2957 = vpop.permute.xlu0 %2956
      %2958 = vrot.lane.b32.xlu0 %v2568, 16
      %v2959 = vpop.permute.xlu0 %2958
      %2960 = vrot.lane.b32.xlu0 %v2569, 16
      %v2961 = vpop.permute.xlu0 %2960
      %2962 = vrot.lane.b32.xlu0 %v2570, 16
      %v2963 = vpop.permute.xlu0 %2962
      %2964 = vrot.lane.b32.xlu0 %v2571, 16
      %v2965 = vpop.permute.xlu0 %2964
      %2966 = vrot.lane.b32.xlu0 %v2572, 16
      %v2967 = vpop.permute.xlu0 %2966
      %2968 = vrot.lane.b32.xlu0 %v2573, 16
      %v2969 = vpop.permute.xlu0 %2968
      %2970 = vrot.lane.b32.xlu0 %v2574, 16
      %v2971 = vpop.permute.xlu0 %2970
      %2972 = vrot.lane.b32.xlu0 %v2575, 16
      %v2973 = vpop.permute.xlu0 %2972
      %2974 = vrot.lane.b32.xlu0 %v2576, 16
      %v2975 = vpop.permute.xlu0 %2974
      %2976 = vrot.lane.b32.xlu0 %v2577, 16
      %v2977 = vpop.permute.xlu0 %2976
      %2978 = vrot.lane.b32.xlu0 %v2578, 16
      %v2979 = vpop.permute.xlu0 %2978
      %2980 = vrot.lane.b32.xlu0 %v2579, 16
      %v2981 = vpop.permute.xlu0 %2980
      %2982 = vrot.lane.b32.xlu0 %v2580, 16
      %v2983 = vpop.permute.xlu0 %2982
      %2984 = vrot.lane.b32.xlu0 %v2581, 16
      %v2985 = vpop.permute.xlu0 %2984
      %2986 = vrot.lane.b32.xlu0 %v2582, 16
      %v2987 = vpop.permute.xlu0 %2986
      %2988 = vrot.lane.b32.xlu0 %v2583, 16
      %v2989 = vpop.permute.xlu0 %2988
      %2990 = vrot.lane.b32.xlu0 %v2584, 16
      %v2991 = vpop.permute.xlu0 %2990
      %2992 = vrot.lane.b32.xlu0 %v2585, 16
      %v2993 = vpop.permute.xlu0 %2992
      %2994 = vrot.lane.b32.xlu0 %v2586, 16
      %v2995 = vpop.permute.xlu0 %2994
      %2996 = vrot.lane.b32.xlu0 %v2587, 16
      %v2997 = vpop.permute.xlu0 %2996
      %2998 = vrot.lane.b32.xlu0 %v2588, 16
      %v2999 = vpop.permute.xlu0 %2998
      %3000 = vrot.lane.b32.xlu0 %v2589, 16
      %v3001 = vpop.permute.xlu0 %3000
      %3002 = vrot.lane.b32.xlu0 %v2590, 16
      %v3003 = vpop.permute.xlu0 %3002
      %3004 = vrot.lane.b32.xlu0 %v2591, 16
      %v3005 = vpop.permute.xlu0 %3004
      %3006 = vrot.lane.b32.xlu0 %v2592, 16
      %v3007 = vpop.permute.xlu0 %3006
      %3008 = vrot.lane.b32.xlu0 %v2593, 16
      %v3009 = vpop.permute.xlu0 %3008
      %3074 = vrot.lane.b32.xlu0 %v2594, 24
      %v3075 = vpop.permute.xlu0 %3074
      %3076 = vrot.lane.b32.xlu0 %v2595, 24
      %v3077 = vpop.permute.xlu0 %3076
      %3078 = vrot.lane.b32.xlu0 %v2596, 24
      %v3079 = vpop.permute.xlu0 %3078
      %3080 = vrot.lane.b32.xlu0 %v2597, 24
      %v3081 = vpop.permute.xlu0 %3080
      %3082 = vrot.lane.b32.xlu0 %v2598, 24
      %v3083 = vpop.permute.xlu0 %3082
      %3084 = vrot.lane.b32.xlu0 %v2599, 24
      %v3085 = vpop.permute.xlu0 %3084
      %3086 = vrot.lane.b32.xlu0 %v2600, 24
      %v3087 = vpop.permute.xlu0 %3086
      %3088 = vrot.lane.b32.xlu0 %v2601, 24
      %v3089 = vpop.permute.xlu0 %3088
      %3090 = vrot.lane.b32.xlu0 %v2602, 24
      %v3091 = vpop.permute.xlu0 %3090
      %3092 = vrot.lane.b32.xlu0 %v2603, 24
      %v3093 = vpop.permute.xlu0 %3092
      %3094 = vrot.lane.b32.xlu0 %v2604, 24
      %v3095 = vpop.permute.xlu0 %3094
      %3096 = vrot.lane.b32.xlu0 %v2605, 24
      %v3097 = vpop.permute.xlu0 %3096
      %3098 = vrot.lane.b32.xlu0 %v2606, 24
      %v3099 = vpop.permute.xlu0 %3098
      %3100 = vrot.lane.b32.xlu0 %v2607, 24
      %v3101 = vpop.permute.xlu0 %3100
      %3102 = vrot.lane.b32.xlu0 %v2608, 24
      %v3103 = vpop.permute.xlu0 %3102
      %3104 = vrot.lane.b32.xlu0 %v2609, 24
      %v3105 = vpop.permute.xlu0 %3104
      %3106 = vrot.lane.b32.xlu0 %v2610, 24
      %v3107 = vpop.permute.xlu0 %3106
      %3108 = vrot.lane.b32.xlu0 %v2611, 24
      %v3109 = vpop.permute.xlu0 %3108
      %3110 = vrot.lane.b32.xlu0 %v2612, 24
      %v3111 = vpop.permute.xlu0 %3110
      %3112 = vrot.lane.b32.xlu0 %v2613, 24
      %v3113 = vpop.permute.xlu0 %3112
      %3114 = vrot.lane.b32.xlu0 %v2614, 24
      %v3115 = vpop.permute.xlu0 %3114
      %3116 = vrot.lane.b32.xlu0 %v2615, 24
      %v3117 = vpop.permute.xlu0 %3116
      %3118 = vrot.lane.b32.xlu0 %v2616, 24
      %v3119 = vpop.permute.xlu0 %3118
      %3120 = vrot.lane.b32.xlu0 %v2617, 24
      %v3121 = vpop.permute.xlu0 %3120
      %3122 = vrot.lane.b32.xlu0 %v2618, 24
      %v3123 = vpop.permute.xlu0 %3122
      %3124 = vrot.lane.b32.xlu0 %v2619, 24
      %v3125 = vpop.permute.xlu0 %3124
      %3126 = vrot.lane.b32.xlu0 %v2620, 24
      %v3127 = vpop.permute.xlu0 %3126
      %3128 = vrot.lane.b32.xlu0 %v2621, 24
      %v3129 = vpop.permute.xlu0 %3128
      %3130 = vrot.lane.b32.xlu0 %v2622, 24
      %v3131 = vpop.permute.xlu0 %3130
      %3132 = vrot.lane.b32.xlu0 %v2623, 24
      %v3133 = vpop.permute.xlu0 %3132
      %3134 = vrot.lane.b32.xlu0 %v2624, 24
      %v3135 = vpop.permute.xlu0 %3134
      %3136 = vrot.lane.b32.xlu0 %v2625, 24
      %v3137 = vpop.permute.xlu0 %3136
      %3202 = vrot.lane.b32.xlu0 %v2626, 32
      %v3203 = vpop.permute.xlu0 %3202
      %3204 = vrot.lane.b32.xlu0 %v2627, 32
      %v3205 = vpop.permute.xlu0 %3204
      %3206 = vrot.lane.b32.xlu0 %v2628, 32
      %v3207 = vpop.permute.xlu0 %3206
      %3208 = vrot.lane.b32.xlu0 %v2629, 32
      %v3209 = vpop.permute.xlu0 %3208
      %3210 = vrot.lane.b32.xlu0 %v2630, 32
      %v3211 = vpop.permute.xlu0 %3210
      %3212 = vrot.lane.b32.xlu0 %v2631, 32
      %v3213 = vpop.permute.xlu0 %3212
      %3214 = vrot.lane.b32.xlu0 %v2632, 32
      %v3215 = vpop.permute.xlu0 %3214
      %3216 = vrot.lane.b32.xlu0 %v2633, 32
      %v3217 = vpop.permute.xlu0 %3216
      %3218 = vrot.lane.b32.xlu0 %v2634, 32
      %v3219 = vpop.permute.xlu0 %3218
      %3220 = vrot.lane.b32.xlu0 %v2635, 32
      %v3221 = vpop.permute.xlu0 %3220
      %3222 = vrot.lane.b32.xlu0 %v2636, 32
      %v3223 = vpop.permute.xlu0 %3222
      %3224 = vrot.lane.b32.xlu0 %v2637, 32
      %v3225 = vpop.permute.xlu0 %3224
      %3226 = vrot.lane.b32.xlu0 %v2638, 32
      %v3227 = vpop.permute.xlu0 %3226
      %3228 = vrot.lane.b32.xlu0 %v2639, 32
      %v3229 = vpop.permute.xlu0 %3228
      %3230 = vrot.lane.b32.xlu0 %v2640, 32
      %v3231 = vpop.permute.xlu0 %3230
      %3232 = vrot.lane.b32.xlu0 %v2641, 32
      %v3233 = vpop.permute.xlu0 %3232
      %3234 = vrot.lane.b32.xlu0 %v2642, 32
      %v3235 = vpop.permute.xlu0 %3234
      %3236 = vrot.lane.b32.xlu0 %v2643, 32
      %v3237 = vpop.permute.xlu0 %3236
      %3238 = vrot.lane.b32.xlu0 %v2644, 32
      %v3239 = vpop.permute.xlu0 %3238
      %3240 = vrot.lane.b32.xlu0 %v2645, 32
      %v3241 = vpop.permute.xlu0 %3240
      %3242 = vrot.lane.b32.xlu0 %v2646, 32
      %v3243 = vpop.permute.xlu0 %3242
      %3244 = vrot.lane.b32.xlu0 %v2647, 32
      %v3245 = vpop.permute.xlu0 %3244
      %3246 = vrot.lane.b32.xlu0 %v2648, 32
      %v3247 = vpop.permute.xlu0 %3246
      %3248 = vrot.lane.b32.xlu0 %v2649, 32
      %v3249 = vpop.permute.xlu0 %3248
      %3250 = vrot.lane.b32.xlu0 %v2650, 32
      %v3251 = vpop.permute.xlu0 %3250
      %3252 = vrot.lane.b32.xlu0 %v2651, 32
      %v3253 = vpop.permute.xlu0 %3252
      %3254 = vrot.lane.b32.xlu0 %v2652, 32
      %v3255 = vpop.permute.xlu0 %3254
      %3256 = vrot.lane.b32.xlu0 %v2653, 32
      %v3257 = vpop.permute.xlu0 %3256
      %3258 = vrot.lane.b32.xlu0 %v2654, 32
      %v3259 = vpop.permute.xlu0 %3258
      %3260 = vrot.lane.b32.xlu0 %v2655, 32
      %v3261 = vpop.permute.xlu0 %3260
      %3262 = vrot.lane.b32.xlu0 %v2656, 32
      %v3263 = vpop.permute.xlu0 %3262
      %3264 = vrot.lane.b32.xlu0 %v2657, 32
      %v3265 = vpop.permute.xlu0 %3264
      %3330 = vrot.lane.b32.xlu0 %v2658, 40
      %v3331 = vpop.permute.xlu0 %3330
      %3332 = vrot.lane.b32.xlu0 %v2659, 40
      %v3333 = vpop.permute.xlu0 %3332
      %3334 = vrot.lane.b32.xlu0 %v2660, 40
      %v3335 = vpop.permute.xlu0 %3334
      %3336 = vrot.lane.b32.xlu0 %v2661, 40
      %v3337 = vpop.permute.xlu0 %3336
      %3338 = vrot.lane.b32.xlu0 %v2662, 40
      %v3339 = vpop.permute.xlu0 %3338
      %3340 = vrot.lane.b32.xlu0 %v2663, 40
      %v3341 = vpop.permute.xlu0 %3340
      %3342 = vrot.lane.b32.xlu0 %v2664, 40
      %v3343 = vpop.permute.xlu0 %3342
      %3344 = vrot.lane.b32.xlu0 %v2665, 40
      %v3345 = vpop.permute.xlu0 %3344
      %3346 = vrot.lane.b32.xlu0 %v2666, 40
      %v3347 = vpop.permute.xlu0 %3346
      %3348 = vrot.lane.b32.xlu0 %v2667, 40
      %v3349 = vpop.permute.xlu0 %3348
      %3350 = vrot.lane.b32.xlu0 %v2668, 40
      %v3351 = vpop.permute.xlu0 %3350
      %3352 = vrot.lane.b32.xlu0 %v2669, 40
      %v3353 = vpop.permute.xlu0 %3352
      %3354 = vrot.lane.b32.xlu0 %v2670, 40
      %v3355 = vpop.permute.xlu0 %3354
      %3356 = vrot.lane.b32.xlu0 %v2671, 40
      %v3357 = vpop.permute.xlu0 %3356
      %3358 = vrot.lane.b32.xlu0 %v2672, 40
      %v3359 = vpop.permute.xlu0 %3358
      %3360 = vrot.lane.b32.xlu0 %v2673, 40
      %v3361 = vpop.permute.xlu0 %3360
      %3362 = vrot.lane.b32.xlu0 %v2674, 40
      %v3363 = vpop.permute.xlu0 %3362
      %3364 = vrot.lane.b32.xlu0 %v2675, 40
      %v3365 = vpop.permute.xlu0 %3364
      %3366 = vrot.lane.b32.xlu0 %v2676, 40
      %v3367 = vpop.permute.xlu0 %3366
      %3368 = vrot.lane.b32.xlu0 %v2677, 40
      %v3369 = vpop.permute.xlu0 %3368
      %3370 = vrot.lane.b32.xlu0 %v2678, 40
      %v3371 = vpop.permute.xlu0 %3370
      %3372 = vrot.lane.b32.xlu0 %v2679, 40
      %v3373 = vpop.permute.xlu0 %3372
      %3374 = vrot.lane.b32.xlu0 %v2680, 40
      %v3375 = vpop.permute.xlu0 %3374
      %3376 = vrot.lane.b32.xlu0 %v2681, 40
      %v3377 = vpop.permute.xlu0 %3376
      %3378 = vrot.lane.b32.xlu0 %v2682, 40
      %v3379 = vpop.permute.xlu0 %3378
      %3380 = vrot.lane.b32.xlu0 %v2683, 40
      %v3381 = vpop.permute.xlu0 %3380
      %3382 = vrot.lane.b32.xlu0 %v2684, 40
      %v3383 = vpop.permute.xlu0 %3382
      %3384 = vrot.lane.b32.xlu0 %v2685, 40
      %v3385 = vpop.permute.xlu0 %3384
      %3386 = vrot.lane.b32.xlu0 %v2686, 40
      %v3387 = vpop.permute.xlu0 %3386
      %3388 = vrot.lane.b32.xlu0 %v2687, 40
      %v3389 = vpop.permute.xlu0 %3388
      %3390 = vrot.lane.b32.xlu0 %v2688, 40
      %v3391 = vpop.permute.xlu0 %3390
      %3392 = vrot.lane.b32.xlu0 %v2689, 40
      %v3393 = vpop.permute.xlu0 %3392
      %3458 = vrot.lane.b32.xlu0 %v2690, 48
      %v3459 = vpop.permute.xlu0 %3458
      %3460 = vrot.lane.b32.xlu0 %v2691, 48
      %v3461 = vpop.permute.xlu0 %3460
      %3462 = vrot.lane.b32.xlu0 %v2692, 48
      %v3463 = vpop.permute.xlu0 %3462
      %3464 = vrot.lane.b32.xlu0 %v2693, 48
      %v3465 = vpop.permute.xlu0 %3464
      %3466 = vrot.lane.b32.xlu0 %v2694, 48
      %v3467 = vpop.permute.xlu0 %3466
      %3468 = vrot.lane.b32.xlu0 %v2695, 48
      %v3469 = vpop.permute.xlu0 %3468
      %3470 = vrot.lane.b32.xlu0 %v2696, 48
      %v3471 = vpop.permute.xlu0 %3470
      %3472 = vrot.lane.b32.xlu0 %v2697, 48
      %v3473 = vpop.permute.xlu0 %3472
      %3474 = vrot.lane.b32.xlu0 %v2698, 48
      %v3475 = vpop.permute.xlu0 %3474
      %3476 = vrot.lane.b32.xlu0 %v2699, 48
      %v3477 = vpop.permute.xlu0 %3476
      %3478 = vrot.lane.b32.xlu0 %v2700, 48
      %v3479 = vpop.permute.xlu0 %3478
      %3480 = vrot.lane.b32.xlu0 %v2701, 48
      %v3481 = vpop.permute.xlu0 %3480
      %3482 = vrot.lane.b32.xlu0 %v2702, 48
      %v3483 = vpop.permute.xlu0 %3482
      %3484 = vrot.lane.b32.xlu0 %v2703, 48
      %v3485 = vpop.permute.xlu0 %3484
      %3486 = vrot.lane.b32.xlu0 %v2704, 48
      %v3487 = vpop.permute.xlu0 %3486
      %3488 = vrot.lane.b32.xlu0 %v2705, 48
      %v3489 = vpop.permute.xlu0 %3488
      %3490 = vrot.lane.b32.xlu0 %v2706, 48
      %v3491 = vpop.permute.xlu0 %3490
      %3492 = vrot.lane.b32.xlu0 %v2707, 48
      %v3493 = vpop.permute.xlu0 %3492
      %3494 = vrot.lane.b32.xlu0 %v2708, 48
      %v3495 = vpop.permute.xlu0 %3494
      %3496 = vrot.lane.b32.xlu0 %v2709, 48
      %v3497 = vpop.permute.xlu0 %3496
      %3498 = vrot.lane.b32.xlu0 %v2710, 48
      %v3499 = vpop.permute.xlu0 %3498
      %3500 = vrot.lane.b32.xlu0 %v2711, 48
      %v3501 = vpop.permute.xlu0 %3500
      %3502 = vrot.lane.b32.xlu0 %v2712, 48
      %v3503 = vpop.permute.xlu0 %3502
      %3504 = vrot.lane.b32.xlu0 %v2713, 48
      %v3505 = vpop.permute.xlu0 %3504
      %3506 = vrot.lane.b32.xlu0 %v2714, 48
      %v3507 = vpop.permute.xlu0 %3506
      %3508 = vrot.lane.b32.xlu0 %v2715, 48
      %v3509 = vpop.permute.xlu0 %3508
      %3510 = vrot.lane.b32.xlu0 %v2716, 48
      %v3511 = vpop.permute.xlu0 %3510
      %3512 = vrot.lane.b32.xlu0 %v2717, 48
      %v3513 = vpop.permute.xlu0 %3512
      %3514 = vrot.lane.b32.xlu0 %v2718, 48
      %v3515 = vpop.permute.xlu0 %3514
      %3516 = vrot.lane.b32.xlu0 %v2719, 48
      %v3517 = vpop.permute.xlu0 %3516
      %3518 = vrot.lane.b32.xlu0 %v2720, 48
      %v3519 = vpop.permute.xlu0 %3518
      %3520 = vrot.lane.b32.xlu0 %v2721, 48
      %v3521 = vpop.permute.xlu0 %3520
      %3586 = vrot.lane.b32.xlu0 %v2722, 56
      %v3587 = vpop.permute.xlu0 %3586
      %3588 = vrot.lane.b32.xlu0 %v2723, 56
      %v3589 = vpop.permute.xlu0 %3588
      %3590 = vrot.lane.b32.xlu0 %v2724, 56
      %v3591 = vpop.permute.xlu0 %3590
      %3592 = vrot.lane.b32.xlu0 %v2725, 56
      %v3593 = vpop.permute.xlu0 %3592
      %3594 = vrot.lane.b32.xlu0 %v2726, 56
      %v3595 = vpop.permute.xlu0 %3594
      %3596 = vrot.lane.b32.xlu0 %v2727, 56
      %v3597 = vpop.permute.xlu0 %3596
      %3598 = vrot.lane.b32.xlu0 %v2728, 56
      %v3599 = vpop.permute.xlu0 %3598
      %3600 = vrot.lane.b32.xlu0 %v2729, 56
      %v3601 = vpop.permute.xlu0 %3600
      %3602 = vrot.lane.b32.xlu0 %v2730, 56
      %v3603 = vpop.permute.xlu0 %3602
      %3604 = vrot.lane.b32.xlu0 %v2731, 56
      %v3605 = vpop.permute.xlu0 %3604
      %3606 = vrot.lane.b32.xlu0 %v2732, 56
      %v3607 = vpop.permute.xlu0 %3606
      %3608 = vrot.lane.b32.xlu0 %v2733, 56
      %v3609 = vpop.permute.xlu0 %3608
      %3610 = vrot.lane.b32.xlu0 %v2734, 56
      %v3611 = vpop.permute.xlu0 %3610
      %3612 = vrot.lane.b32.xlu0 %v2735, 56
      %v3613 = vpop.permute.xlu0 %3612
      %3614 = vrot.lane.b32.xlu0 %v2736, 56
      %v3615 = vpop.permute.xlu0 %3614
      %3616 = vrot.lane.b32.xlu0 %v2737, 56
      %v3617 = vpop.permute.xlu0 %3616
      %3618 = vrot.lane.b32.xlu0 %v2738, 56
      %v3619 = vpop.permute.xlu0 %3618
      %3620 = vrot.lane.b32.xlu0 %v2739, 56
      %v3621 = vpop.permute.xlu0 %3620
      %3622 = vrot.lane.b32.xlu0 %v2740, 56
      %v3623 = vpop.permute.xlu0 %3622
      %3624 = vrot.lane.b32.xlu0 %v2741, 56
      %v3625 = vpop.permute.xlu0 %3624
      %3626 = vrot.lane.b32.xlu0 %v2742, 56
      %v3627 = vpop.permute.xlu0 %3626
      %3628 = vrot.lane.b32.xlu0 %v2743, 56
      %v3629 = vpop.permute.xlu0 %3628
      %3630 = vrot.lane.b32.xlu0 %v2744, 56
      %v3631 = vpop.permute.xlu0 %3630
      %3632 = vrot.lane.b32.xlu0 %v2745, 56
      %v3633 = vpop.permute.xlu0 %3632
      %3634 = vrot.lane.b32.xlu0 %v2746, 56
      %v3635 = vpop.permute.xlu0 %3634
      %3636 = vrot.lane.b32.xlu0 %v2747, 56
      %v3637 = vpop.permute.xlu0 %3636
      %3638 = vrot.lane.b32.xlu0 %v2748, 56
      %v3639 = vpop.permute.xlu0 %3638
      %3640 = vrot.lane.b32.xlu0 %v2749, 56
      %v3641 = vpop.permute.xlu0 %3640
      %3642 = vrot.lane.b32.xlu0 %v2750, 56
      %v3643 = vpop.permute.xlu0 %3642
      %3644 = vrot.lane.b32.xlu0 %v2751, 56
      %v3645 = vpop.permute.xlu0 %3644
      %3646 = vrot.lane.b32.xlu0 %v2752, 56
      %v3647 = vpop.permute.xlu0 %3646
      %3648 = vrot.lane.b32.xlu0 %v2753, 56
      %v3649 = vpop.permute.xlu0 %3648
      %3714 = vrot.lane.b32.xlu0 %v2754, 64
      %v3715 = vpop.permute.xlu0 %3714
      %3716 = vrot.lane.b32.xlu0 %v2755, 64
      %v3717 = vpop.permute.xlu0 %3716
      %3718 = vrot.lane.b32.xlu0 %v2756, 64
      %v3719 = vpop.permute.xlu0 %3718
      %3720 = vrot.lane.b32.xlu0 %v2757, 64
      %v3721 = vpop.permute.xlu0 %3720
      %3722 = vrot.lane.b32.xlu0 %v2758, 64
      %v3723 = vpop.permute.xlu0 %3722
      %3724 = vrot.lane.b32.xlu0 %v2759, 64
      %v3725 = vpop.permute.xlu0 %3724
      %3726 = vrot.lane.b32.xlu0 %v2760, 64
      %v3727 = vpop.permute.xlu0 %3726
      %3728 = vrot.lane.b32.xlu0 %v2761, 64
      %v3729 = vpop.permute.xlu0 %3728
      %3730 = vrot.lane.b32.xlu0 %v2762, 64
      %v3731 = vpop.permute.xlu0 %3730
      %3732 = vrot.lane.b32.xlu0 %v2763, 64
      %v3733 = vpop.permute.xlu0 %3732
      %3734 = vrot.lane.b32.xlu0 %v2764, 64
      %v3735 = vpop.permute.xlu0 %3734
      %3736 = vrot.lane.b32.xlu0 %v2765, 64
      %v3737 = vpop.permute.xlu0 %3736
      %3738 = vrot.lane.b32.xlu0 %v2766, 64
      %v3739 = vpop.permute.xlu0 %3738
      %3740 = vrot.lane.b32.xlu0 %v2767, 64
      %v3741 = vpop.permute.xlu0 %3740
      %3742 = vrot.lane.b32.xlu0 %v2768, 64
      %v3743 = vpop.permute.xlu0 %3742
      %3744 = vrot.lane.b32.xlu0 %v2769, 64
      %v3745 = vpop.permute.xlu0 %3744
      %3746 = vrot.lane.b32.xlu0 %v2770, 64
      %v3747 = vpop.permute.xlu0 %3746
      %3748 = vrot.lane.b32.xlu0 %v2771, 64
      %v3749 = vpop.permute.xlu0 %3748
      %3750 = vrot.lane.b32.xlu0 %v2772, 64
      %v3751 = vpop.permute.xlu0 %3750
      %3752 = vrot.lane.b32.xlu0 %v2773, 64
      %v3753 = vpop.permute.xlu0 %3752
      %3754 = vrot.lane.b32.xlu0 %v2774, 64
      %v3755 = vpop.permute.xlu0 %3754
      %3756 = vrot.lane.b32.xlu0 %v2775, 64
      %v3757 = vpop.permute.xlu0 %3756
      %3758 = vrot.lane.b32.xlu0 %v2776, 64
      %v3759 = vpop.permute.xlu0 %3758
      %3760 = vrot.lane.b32.xlu0 %v2777, 64
      %v3761 = vpop.permute.xlu0 %3760
      %3762 = vrot.lane.b32.xlu0 %v2778, 64
      %v3763 = vpop.permute.xlu0 %3762
      %3764 = vrot.lane.b32.xlu0 %v2779, 64
      %v3765 = vpop.permute.xlu0 %3764
      %3766 = vrot.lane.b32.xlu0 %v2780, 64
      %v3767 = vpop.permute.xlu0 %3766
      %3768 = vrot.lane.b32.xlu0 %v2781, 64
      %v3769 = vpop.permute.xlu0 %3768
      %3770 = vrot.lane.b32.xlu0 %v2782, 64
      %v3771 = vpop.permute.xlu0 %3770
      %3772 = vrot.lane.b32.xlu0 %v2783, 64
      %v3773 = vpop.permute.xlu0 %3772
      %3774 = vrot.lane.b32.xlu0 %v2784, 64
      %v3775 = vpop.permute.xlu0 %3774
      %3776 = vrot.lane.b32.xlu0 %v2785, 64
      %v3777 = vpop.permute.xlu0 %3776
      %v3810 = vsel %vm441, %v2498, %v2819
      %v3811 = vsel %vm441, %v2499, %v2821
      %v3812 = vsel %vm441, %v2500, %v2823
      %v3813 = vsel %vm441, %v2501, %v2825
      %v3814 = vsel %vm441, %v2502, %v2827
      %v3815 = vsel %vm441, %v2503, %v2829
      %v3816 = vsel %vm441, %v2504, %v2831
      %v3817 = vsel %vm441, %v2505, %v2833
      %v3818 = vsel %vm441, %v2506, %v2835
      %v3819 = vsel %vm441, %v2507, %v2837
      %v3820 = vsel %vm441, %v2508, %v2839
      %v3821 = vsel %vm441, %v2509, %v2841
      %v3822 = vsel %vm441, %v2510, %v2843
      %v3823 = vsel %vm441, %v2511, %v2845
      %v3824 = vsel %vm441, %v2512, %v2847
      %v3825 = vsel %vm441, %v2513, %v2849
      %v3826 = vsel %vm441, %v2514, %v2851
      %v3827 = vsel %vm441, %v2515, %v2853
      %v3828 = vsel %vm441, %v2516, %v2855
      %v3829 = vsel %vm441, %v2517, %v2857
      %v3830 = vsel %vm441, %v2518, %v2859
      %v3831 = vsel %vm441, %v2519, %v2861
      %v3832 = vsel %vm441, %v2520, %v2863
      %v3833 = vsel %vm441, %v2521, %v2865
      %v3834 = vsel %vm441, %v2522, %v2867
      %v3835 = vsel %vm441, %v2523, %v2869
      %v3836 = vsel %vm441, %v2524, %v2871
      %v3837 = vsel %vm441, %v2525, %v2873
      %v3838 = vsel %vm441, %v2526, %v2875
      %v3839 = vsel %vm441, %v2527, %v2877
      %v3840 = vsel %vm441, %v2528, %v2879
      %v3841 = vsel %vm441, %v2529, %v2881
      %v3842 = vsel %vm1897, %v3810, %v2947
      %v3843 = vsel %vm1897, %v3811, %v2949
      %v3844 = vsel %vm1897, %v3812, %v2951
      %v3845 = vsel %vm1897, %v3813, %v2953
      %v3846 = vsel %vm1897, %v3814, %v2955
      %v3847 = vsel %vm1897, %v3815, %v2957
      %v3848 = vsel %vm1897, %v3816, %v2959
      %v3849 = vsel %vm1897, %v3817, %v2961
      %v3850 = vsel %vm1897, %v3818, %v2963
      %v3851 = vsel %vm1897, %v3819, %v2965
      %v3852 = vsel %vm1897, %v3820, %v2967
      %v3853 = vsel %vm1897, %v3821, %v2969
      %v3854 = vsel %vm1897, %v3822, %v2971
      %v3855 = vsel %vm1897, %v3823, %v2973
      %v3856 = vsel %vm1897, %v3824, %v2975
      %v3857 = vsel %vm1897, %v3825, %v2977
      %v3858 = vsel %vm1897, %v3826, %v2979
      %v3859 = vsel %vm1897, %v3827, %v2981
      %v3860 = vsel %vm1897, %v3828, %v2983
      %v3861 = vsel %vm1897, %v3829, %v2985
      %v3862 = vsel %vm1897, %v3830, %v2987
      %v3863 = vsel %vm1897, %v3831, %v2989
      %v3864 = vsel %vm1897, %v3832, %v2991
      %v3865 = vsel %vm1897, %v3833, %v2993
      %v3866 = vsel %vm1897, %v3834, %v2995
      %v3867 = vsel %vm1897, %v3835, %v2997
      %v3868 = vsel %vm1897, %v3836, %v2999
      %v3869 = vsel %vm1897, %v3837, %v3001
      %v3870 = vsel %vm1897, %v3838, %v3003
      %v3871 = vsel %vm1897, %v3839, %v3005
      %v3872 = vsel %vm1897, %v3840, %v3007
      %v3873 = vsel %vm1897, %v3841, %v3009
      %v3874 = vsel %vm1930, %v3842, %v3075
      %v3875 = vsel %vm1930, %v3843, %v3077
      %v3876 = vsel %vm1930, %v3844, %v3079
      %v3877 = vsel %vm1930, %v3845, %v3081
      %v3878 = vsel %vm1930, %v3846, %v3083
      %v3879 = vsel %vm1930, %v3847, %v3085
      %v3880 = vsel %vm1930, %v3848, %v3087
      %v3881 = vsel %vm1930, %v3849, %v3089
      %v3882 = vsel %vm1930, %v3850, %v3091
      %v3883 = vsel %vm1930, %v3851, %v3093
      %v3884 = vsel %vm1930, %v3852, %v3095
      %v3885 = vsel %vm1930, %v3853, %v3097
      %v3886 = vsel %vm1930, %v3854, %v3099
      %v3887 = vsel %vm1930, %v3855, %v3101
      %v3888 = vsel %vm1930, %v3856, %v3103
      %v3889 = vsel %vm1930, %v3857, %v3105
      %v3890 = vsel %vm1930, %v3858, %v3107
      %v3891 = vsel %vm1930, %v3859, %v3109
      %v3892 = vsel %vm1930, %v3860, %v3111
      %v3893 = vsel %vm1930, %v3861, %v3113
      %v3894 = vsel %vm1930, %v3862, %v3115
      %v3895 = vsel %vm1930, %v3863, %v3117
      %v3896 = vsel %vm1930, %v3864, %v3119
      %v3897 = vsel %vm1930, %v3865, %v3121
      %v3898 = vsel %vm1930, %v3866, %v3123
      %v3899 = vsel %vm1930, %v3867, %v3125
      %v3900 = vsel %vm1930, %v3868, %v3127
      %v3901 = vsel %vm1930, %v3869, %v3129
      %v3902 = vsel %vm1930, %v3870, %v3131
      %v3903 = vsel %vm1930, %v3871, %v3133
      %v3904 = vsel %vm1930, %v3872, %v3135
      %v3905 = vsel %vm1930, %v3873, %v3137
      %v3906 = vsel %vm1963, %v3874, %v3203
      %v3907 = vsel %vm1963, %v3875, %v3205
      %v3908 = vsel %vm1963, %v3876, %v3207
      %v3909 = vsel %vm1963, %v3877, %v3209
      %v3910 = vsel %vm1963, %v3878, %v3211
      %v3911 = vsel %vm1963, %v3879, %v3213
      %v3912 = vsel %vm1963, %v3880, %v3215
      %v3913 = vsel %vm1963, %v3881, %v3217
      %v3914 = vsel %vm1963, %v3882, %v3219
      %v3915 = vsel %vm1963, %v3883, %v3221
      %v3916 = vsel %vm1963, %v3884, %v3223
      %v3917 = vsel %vm1963, %v3885, %v3225
      %v3918 = vsel %vm1963, %v3886, %v3227
      %v3919 = vsel %vm1963, %v3887, %v3229
      %v3920 = vsel %vm1963, %v3888, %v3231
      %v3921 = vsel %vm1963, %v3889, %v3233
      %v3922 = vsel %vm1963, %v3890, %v3235
      %v3923 = vsel %vm1963, %v3891, %v3237
      %v3924 = vsel %vm1963, %v3892, %v3239
      %v3925 = vsel %vm1963, %v3893, %v3241
      %v3926 = vsel %vm1963, %v3894, %v3243
      %v3927 = vsel %vm1963, %v3895, %v3245
      %v3928 = vsel %vm1963, %v3896, %v3247
      %v3929 = vsel %vm1963, %v3897, %v3249
      %v3930 = vsel %vm1963, %v3898, %v3251
      %v3931 = vsel %vm1963, %v3899, %v3253
      %v3932 = vsel %vm1963, %v3900, %v3255
      %v3933 = vsel %vm1963, %v3901, %v3257
      %v3934 = vsel %vm1963, %v3902, %v3259
      %v3935 = vsel %vm1963, %v3903, %v3261
      %v3936 = vsel %vm1963, %v3904, %v3263
      %v3937 = vsel %vm1963, %v3905, %v3265
      %v3938 = vsel %vm1996, %v3906, %v3331
      %v3939 = vsel %vm1996, %v3907, %v3333
      %v3940 = vsel %vm1996, %v3908, %v3335
      %v3941 = vsel %vm1996, %v3909, %v3337
      %v3942 = vsel %vm1996, %v3910, %v3339
      %v3943 = vsel %vm1996, %v3911, %v3341
      %v3944 = vsel %vm1996, %v3912, %v3343
      %v3945 = vsel %vm1996, %v3913, %v3345
      %v3946 = vsel %vm1996, %v3914, %v3347
      %v3947 = vsel %vm1996, %v3915, %v3349
      %v3948 = vsel %vm1996, %v3916, %v3351
      %v3949 = vsel %vm1996, %v3917, %v3353
      %v3950 = vsel %vm1996, %v3918, %v3355
      %v3951 = vsel %vm1996, %v3919, %v3357
      %v3952 = vsel %vm1996, %v3920, %v3359
      %v3953 = vsel %vm1996, %v3921, %v3361
      %v3954 = vsel %vm1996, %v3922, %v3363
      %v3955 = vsel %vm1996, %v3923, %v3365
      %v3956 = vsel %vm1996, %v3924, %v3367
      %v3957 = vsel %vm1996, %v3925, %v3369
      %v3958 = vsel %vm1996, %v3926, %v3371
      %v3959 = vsel %vm1996, %v3927, %v3373
      %v3960 = vsel %vm1996, %v3928, %v3375
      %v3961 = vsel %vm1996, %v3929, %v3377
      %v3962 = vsel %vm1996, %v3930, %v3379
      %v3963 = vsel %vm1996, %v3931, %v3381
      %v3964 = vsel %vm1996, %v3932, %v3383
      %v3965 = vsel %vm1996, %v3933, %v3385
      %v3966 = vsel %vm1996, %v3934, %v3387
      %v3967 = vsel %vm1996, %v3935, %v3389
      %v3968 = vsel %vm1996, %v3936, %v3391
      %v3969 = vsel %vm1996, %v3937, %v3393
      %v3970 = vsel %vm2029, %v3938, %v3459
      %v3971 = vsel %vm2029, %v3939, %v3461
      %v3972 = vsel %vm2029, %v3940, %v3463
      %v3973 = vsel %vm2029, %v3941, %v3465
      %v3974 = vsel %vm2029, %v3942, %v3467
      %v3975 = vsel %vm2029, %v3943, %v3469
      %v3976 = vsel %vm2029, %v3944, %v3471
      %v3977 = vsel %vm2029, %v3945, %v3473
      %v3978 = vsel %vm2029, %v3946, %v3475
      %v3979 = vsel %vm2029, %v3947, %v3477
      %v3980 = vsel %vm2029, %v3948, %v3479
      %v3981 = vsel %vm2029, %v3949, %v3481
      %v3982 = vsel %vm2029, %v3950, %v3483
      %v3983 = vsel %vm2029, %v3951, %v3485
      %v3984 = vsel %vm2029, %v3952, %v3487
      %v3985 = vsel %vm2029, %v3953, %v3489
      %v3986 = vsel %vm2029, %v3954, %v3491
      %v3987 = vsel %vm2029, %v3955, %v3493
      %v3988 = vsel %vm2029, %v3956, %v3495
      %v3989 = vsel %vm2029, %v3957, %v3497
      %v3990 = vsel %vm2029, %v3958, %v3499
      %v3991 = vsel %vm2029, %v3959, %v3501
      %v3992 = vsel %vm2029, %v3960, %v3503
      %v3993 = vsel %vm2029, %v3961, %v3505
      %v3994 = vsel %vm2029, %v3962, %v3507
      %v3995 = vsel %vm2029, %v3963, %v3509
      %v3996 = vsel %vm2029, %v3964, %v3511
      %v3997 = vsel %vm2029, %v3965, %v3513
      %v3998 = vsel %vm2029, %v3966, %v3515
      %v3999 = vsel %vm2029, %v3967, %v3517
      %v4000 = vsel %vm2029, %v3968, %v3519
      %v4001 = vsel %vm2029, %v3969, %v3521
      %v4002 = vsel %vm2062, %v3970, %v3587
      %v4003 = vsel %vm2062, %v3971, %v3589
      %v4004 = vsel %vm2062, %v3972, %v3591
      %v4005 = vsel %vm2062, %v3973, %v3593
      %v4006 = vsel %vm2062, %v3974, %v3595
      %v4007 = vsel %vm2062, %v3975, %v3597
      %v4008 = vsel %vm2062, %v3976, %v3599
      %v4009 = vsel %vm2062, %v3977, %v3601
      %v4010 = vsel %vm2062, %v3978, %v3603
      %v4011 = vsel %vm2062, %v3979, %v3605
      %v4012 = vsel %vm2062, %v3980, %v3607
      %v4013 = vsel %vm2062, %v3981, %v3609
      %v4014 = vsel %vm2062, %v3982, %v3611
      %v4015 = vsel %vm2062, %v3983, %v3613
      %v4016 = vsel %vm2062, %v3984, %v3615
      %v4017 = vsel %vm2062, %v3985, %v3617
      %v4018 = vsel %vm2062, %v3986, %v3619
      %v4019 = vsel %vm2062, %v3987, %v3621
      %v4020 = vsel %vm2062, %v3988, %v3623
      %v4021 = vsel %vm2062, %v3989, %v3625
      %v4022 = vsel %vm2062, %v3990, %v3627
      %v4023 = vsel %vm2062, %v3991, %v3629
      %v4024 = vsel %vm2062, %v3992, %v3631
      %v4025 = vsel %vm2062, %v3993, %v3633
      %v4026 = vsel %vm2062, %v3994, %v3635
      %v4027 = vsel %vm2062, %v3995, %v3637
      %v4028 = vsel %vm2062, %v3996, %v3639
      %v4029 = vsel %vm2062, %v3997, %v3641
      %v4030 = vsel %vm2062, %v3998, %v3643
      %v4031 = vsel %vm2062, %v3999, %v3645
      %v4032 = vsel %vm2062, %v4000, %v3647
      %v4033 = vsel %vm2062, %v4001, %v3649
      %v4034 = vsel %vm2095, %v4002, %v3715
      %v4035 = vsel %vm2095, %v4003, %v3717
      %v4036 = vsel %vm2095, %v4004, %v3719
      %v4037 = vsel %vm2095, %v4005, %v3721
      %v4038 = vsel %vm2095, %v4006, %v3723
      %v4039 = vsel %vm2095, %v4007, %v3725
      %v4040 = vsel %vm2095, %v4008, %v3727
      %v4041 = vsel %vm2095, %v4009, %v3729
      %v4042 = vsel %vm2095, %v4010, %v3731
      %v4043 = vsel %vm2095, %v4011, %v3733
      %v4044 = vsel %vm2095, %v4012, %v3735
      %v4045 = vsel %vm2095, %v4013, %v3737
      %v4046 = vsel %vm2095, %v4014, %v3739
      %v4047 = vsel %vm2095, %v4015, %v3741
      %v4048 = vsel %vm2095, %v4016, %v3743
      %v4049 = vsel %vm2095, %v4017, %v3745
      %v4050 = vsel %vm2095, %v4018, %v3747
      %v4051 = vsel %vm2095, %v4019, %v3749
      %v4052 = vsel %vm2095, %v4020, %v3751
      %v4053 = vsel %vm2095, %v4021, %v3753
      %v4054 = vsel %vm2095, %v4022, %v3755
      %v4055 = vsel %vm2095, %v4023, %v3757
      %v4056 = vsel %vm2095, %v4024, %v3759
      %v4057 = vsel %vm2095, %v4025, %v3761
      %v4058 = vsel %vm2095, %v4026, %v3763
      %v4059 = vsel %vm2095, %v4027, %v3765
      %v4060 = vsel %vm2095, %v4028, %v3767
      %v4061 = vsel %vm2095, %v4029, %v3769
      %v4062 = vsel %vm2095, %v4030, %v3771
      %v4063 = vsel %vm2095, %v4031, %v3773
      %v4064 = vsel %vm2095, %v4032, %v3775
      %v4065 = vsel %vm2095, %v4033, %v3777
      %v4066 = vld [vmem:[%s3] sm:$0xff]
      %v4067 = vld [vmem:[%s3 + $0x8] sm:$0xff]
      %v4068 = vld [vmem:[%s3 + $0x10] sm:$0xff]
      %v4069 = vld [vmem:[%s3 + $0x18] sm:$0xff]
      %v4070 = vld [vmem:[%s3 + $0x20] sm:$0xff]
      %v4071 = vld [vmem:[%s3 + $0x28] sm:$0xff]
      %v4072 = vld [vmem:[%s3 + $0x30] sm:$0xff]
      %v4073 = vld [vmem:[%s3 + $0x38] sm:$0xff]
      %v4074 = vld [vmem:[%s3 + $0x40] sm:$0xff]
      %v4075 = vld [vmem:[%s4] sm:$0x1]
      %v4077 = vlaneseq
      %v4078 = vshrl.u32 %v4077, 7
      %v4079 = vsub.s32 0, %v4078
      %v4080 = vrot.slane %v4075, %v4079
      %v4083 = vsel %vm2144, %v4034, 0
      %v4086 = vsel %vm2144, %v4035, 0
      %v4089 = vsel %vm2144, %v4036, 0
      %v4092 = vsel %vm2144, %v4037, 0
      %v4095 = vsel %vm2144, %v4038, 0
      %v4098 = vsel %vm2144, %v4039, 0
      %v4101 = vsel %vm2144, %v4040, 0
      %v4104 = vsel %vm2144, %v4041, 0
      %v4107 = vsel %vm2144, %v4042, 0
      %v4110 = vsel %vm2144, %v4043, 0
      %v4113 = vsel %vm2144, %v4044, 0
      %v4116 = vsel %vm2144, %v4045, 0
      %v4119 = vsel %vm2144, %v4046, 0
      %v4122 = vsel %vm2144, %v4047, 0
      %v4125 = vsel %vm2144, %v4048, 0
      %v4128 = vsel %vm2144, %v4049, 0
      %v4131 = vsel %vm2144, %v4050, 0
      %v4134 = vsel %vm2144, %v4051, 0
      %v4137 = vsel %vm2144, %v4052, 0
      %v4140 = vsel %vm2144, %v4053, 0
      %v4143 = vsel %vm2144, %v4054, 0
      %v4146 = vsel %vm2144, %v4055, 0
      %v4149 = vsel %vm2144, %v4056, 0
      %v4152 = vsel %vm2144, %v4057, 0
      %v4155 = vsel %vm2144, %v4058, 0
      %v4158 = vsel %vm2144, %v4059, 0
      %v4161 = vsel %vm2144, %v4060, 0
      %v4164 = vsel %vm2144, %v4061, 0
      %v4167 = vsel %vm2144, %v4062, 0
      %v4170 = vsel %vm2144, %v4063, 0
      %v4173 = vsel %vm2144, %v4064, 0
      %v4176 = vsel %vm2144, %v4065, 0
      %4178 = vmatprep.subr.mxu0 0.0
      %4179 = vmatpush1.msra.mxu0 %v4066
      %4180 = vmatprep.subr.mxu0 0.0
      %4181 = vmatpush1.msra.mxu0 %v4067
      %4182 = vmatprep.subr.mxu0 0.0
      %4183 = vmatpush1.msra.mxu0 %v4068
      %4184 = vmatprep.subr.mxu0 0.0
      %4185 = vmatpush1.msra.mxu0 %v4069
      %4186 = vmatprep.subr.mxu0 0.0
      %4187 = vmatpush1.msra.mxu0 %v4070
      %4188 = vmatprep.subr.mxu0 0.0
      %4189 = vmatpush1.msra.mxu0 %v4071
      %4190 = vmatprep.subr.mxu0 0.0
      %4191 = vmatpush1.msra.mxu0 %v4072
      %4192 = vmatprep.subr.mxu0 0.0
      %4193 = vmatpush1.msra.mxu0 %v4073
      %4194 = vmatprep.subr.mxu0 0.0
      %4195 = vmatpush1.msra.mxu0 %v4074
      %4196 = vmatprep.subr.mxu0 0.0
      %4197 = vmatpush1.msra.mxu0 0.0
      %4198 = vmatprep.subr.mxu0 0.0
      %4199 = vmatpush1.msra.mxu0 0.0
      %4200 = vmatprep.subr.mxu0 0.0
      %4201 = vmatpush1.msra.mxu0 0.0
      %4202 = vmatprep.subr.mxu0 0.0
      %4203 = vmatpush1.msra.mxu0 0.0
      %4204 = vmatprep.subr.mxu0 0.0
      %4205 = vmatpush1.msra.mxu0 0.0
      %4206 = vmatprep.subr.mxu0 0.0
      %4207 = vmatpush1.msra.mxu0 0.0
      %4208 = vmatprep.subr.mxu0 0.0
      %4209 = vmatpush1.msra.mxu0 0.0
      %4210 = vmatprep.subr.mxu0 0.0
      %4211 = vmatpush1.msra.mxu0 0.0
      %4212 = vmatprep.subr.mxu0 0.0
      %4213 = vmatpush1.msra.mxu0 0.0
      %4214 = vmatprep.subr.mxu0 0.0
      %4215 = vmatpush1.msra.mxu0 0.0
      %4216 = vmatprep.subr.mxu0 0.0
      %4217 = vmatpush1.msra.mxu0 0.0
      %4218 = vmatprep.subr.mxu0 0.0
      %4219 = vmatpush1.msra.mxu0 0.0
      %4220 = vmatprep.subr.mxu0 0.0
      %4221 = vmatpush1.msra.mxu0 0.0
      %4222 = vmatprep.subr.mxu0 0.0
      %4223 = vmatpush1.msra.mxu0 0.0
      %4224 = vmatprep.subr.mxu0 0.0
      %4225 = vmatpush1.msra.mxu0 0.0
      %4226 = vmatprep.subr.mxu0 0.0
      %4227 = vmatpush1.msra.mxu0 0.0
      %4228 = vmatprep.subr.mxu0 0.0
      %4229 = vmatpush1.msra.mxu0 0.0
      %4230 = vmatprep.subr.mxu0 0.0
      %4231 = vmatpush1.msra.mxu0 0.0
      %4232 = vmatprep.subr.mxu0 0.0
      %4233 = vmatpush1.msra.mxu0 0.0
      %4234 = vmatprep.subr.mxu0 0.0
      %4235 = vmatpush1.msra.mxu0 0.0
      %4236 = vmatprep.subr.mxu0 0.0
      %4237 = vmatpush1.msra.mxu0 0.0
      %4238 = vmatprep.subr.mxu0 0.0
      %4239 = vmatpush1.msra.mxu0 0.0
      %4240 = vmatprep.subr.mxu0 0.0
      %4241 = vmatpush1.msra.mxu0 0.0
      %4242 = vmatprep.mubr.f32.mxu0 0.0
      %4243 = vmatmul.mubr.f32.gmra.mrb[0].mxu0 %v4083
      %v4244 = vpop.f32.mrb[0].mxu0
      %v4245 = vadd.f32 %v4080, %v4244
      %v4246 = vpop.f32.mrb[0].mxu0
      %4247 = vmatprep.mubr.f32.mxu0 0.0
      %4248 = vmatmul.mubr.f32.gmra.mrb[0].mxu0 %v4086
      %v4249 = vpop.f32.mrb[0].mxu0
      %v4250 = vadd.f32 %v4080, %v4249
      %v4251 = vpop.f32.mrb[0].mxu0
      %4252 = vmatprep.mubr.f32.mxu0 0.0
      %4253 = vmatmul.mubr.f32.gmra.mrb[0].mxu0 %v4089
      %v4254 = vpop.f32.mrb[0].mxu0
      %v4255 = vadd.f32 %v4080, %v4254
      %v4256 = vpop.f32.mrb[0].mxu0
      %4257 = vmatprep.mubr.f32.mxu0 0.0
      %4258 = vmatmul.mubr.f32.gmra.mrb[0].mxu0 %v4092
      %v4259 = vpop.f32.mrb[0].mxu0
      %v4260 = vadd.f32 %v4080, %v4259
      %v4261 = vpop.f32.mrb[0].mxu0
      %4262 = vmatprep.mubr.f32.mxu0 0.0
      %4263 = vmatmul.mubr.f32.gmra.mrb[0].mxu0 %v4095
      %v4264 = vpop.f32.mrb[0].mxu0
      %v4265 = vadd.f32 %v4080, %v4264
      %v4266 = vpop.f32.mrb[0].mxu0
      %4267 = vmatprep.mubr.f32.mxu0 0.0
      %4268 = vmatmul.mubr.f32.gmra.mrb[0].mxu0 %v4098
      %v4269 = vpop.f32.mrb[0].mxu0
      %v4270 = vadd.f32 %v4080, %v4269
      %v4271 = vpop.f32.mrb[0].mxu0
      %4272 = vmatprep.mubr.f32.mxu0 0.0
      %4273 = vmatmul.mubr.f32.gmra.mrb[0].mxu0 %v4101
      %v4274 = vpop.f32.mrb[0].mxu0
      %v4275 = vadd.f32 %v4080, %v4274
      %v4276 = vpop.f32.mrb[0].mxu0
      %4277 = vmatprep.mubr.f32.mxu0 0.0
      %4278 = vmatmul.mubr.f32.gmra.mrb[0].mxu0 %v4104
      %v4279 = vpop.f32.mrb[0].mxu0
      %v4280 = vadd.f32 %v4080, %v4279
      %v4281 = vpop.f32.mrb[0].mxu0
      %4282 = vmatprep.mubr.f32.mxu0 0.0
      %4283 = vmatmul.mubr.f32.gmra.mrb[0].mxu0 %v4107
      %v4284 = vpop.f32.mrb[0].mxu0
      %v4285 = vadd.f32 %v4080, %v4284
      %v4286 = vpop.f32.mrb[0].mxu0
      %4287 = vmatprep.mubr.f32.mxu0 0.0
      %4288 = vmatmul.mubr.f32.gmra.mrb[0].mxu0 %v4110
      %v4289 = vpop.f32.mrb[0].mxu0
      %v4290 = vadd.f32 %v4080, %v4289
      %v4291 = vpop.f32.mrb[0].mxu0
      %4292 = vmatprep.mubr.f32.mxu0 0.0
      %4293 = vmatmul.mubr.f32.gmra.mrb[0].mxu0 %v4113
      %v4294 = vpop.f32.mrb[0].mxu0
      %v4295 = vadd.f32 %v4080, %v4294
      %v4296 = vpop.f32.mrb[0].mxu0
      %4297 = vmatprep.mubr.f32.mxu0 0.0
      %4298 = vmatmul.mubr.f32.gmra.mrb[0].mxu0 %v4116
      %v4299 = vpop.f32.mrb[0].mxu0
      %v4300 = vadd.f32 %v4080, %v4299
      %v4301 = vpop.f32.mrb[0].mxu0
      %4302 = vmatprep.mubr.f32.mxu0 0.0
      %4303 = vmatmul.mubr.f32.gmra.mrb[0].mxu0 %v4119
      %v4304 = vpop.f32.mrb[0].mxu0
      %v4305 = vadd.f32 %v4080, %v4304
      %v4306 = vpop.f32.mrb[0].mxu0
      %4307 = vmatprep.mubr.f32.mxu0 0.0
      %4308 = vmatmul.mubr.f32.gmra.mrb[0].mxu0 %v4122
      %v4309 = vpop.f32.mrb[0].mxu0
      %v4310 = vadd.f32 %v4080, %v4309
      %v4311 = vpop.f32.mrb[0].mxu0
      %4312 = vmatprep.mubr.f32.mxu0 0.0
      %4313 = vmatmul.mubr.f32.gmra.mrb[0].mxu0 %v4125
      %v4314 = vpop.f32.mrb[0].mxu0
      %v4315 = vadd.f32 %v4080, %v4314
      %v4316 = vpop.f32.mrb[0].mxu0
      %4317 = vmatprep.mubr.f32.mxu0 0.0
      %4318 = vmatmul.mubr.f32.gmra.mrb[0].mxu0 %v4128
      %v4319 = vpop.f32.mrb[0].mxu0
      %v4320 = vadd.f32 %v4080, %v4319
      %v4321 = vpop.f32.mrb[0].mxu0
      %4322 = vmatprep.mubr.f32.mxu0 0.0
      %4323 = vmatmul.mubr.f32.gmra.mrb[0].mxu0 %v4131
      %v4324 = vpop.f32.mrb[0].mxu0
      %v4325 = vadd.f32 %v4080, %v4324
      %v4326 = vpop.f32.mrb[0].mxu0
      %4327 = vmatprep.mubr.f32.mxu0 0.0
      %4328 = vmatmul.mubr.f32.gmra.mrb[0].mxu0 %v4134
      %v4329 = vpop.f32.mrb[0].mxu0
      %v4330 = vadd.f32 %v4080, %v4329
      %v4331 = vpop.f32.mrb[0].mxu0
      %4332 = vmatprep.mubr.f32.mxu0 0.0
      %4333 = vmatmul.mubr.f32.gmra.mrb[0].mxu0 %v4137
      %v4334 = vpop.f32.mrb[0].mxu0
      %v4335 = vadd.f32 %v4080, %v4334
      %v4336 = vpop.f32.mrb[0].mxu0
      %4337 = vmatprep.mubr.f32.mxu0 0.0
      %4338 = vmatmul.mubr.f32.gmra.mrb[0].mxu0 %v4140
      %v4339 = vpop.f32.mrb[0].mxu0
      %v4340 = vadd.f32 %v4080, %v4339
      %v4341 = vpop.f32.mrb[0].mxu0
      %4342 = vmatprep.mubr.f32.mxu0 0.0
      %4343 = vmatmul.mubr.f32.gmra.mrb[0].mxu0 %v4143
      %v4344 = vpop.f32.mrb[0].mxu0
      %v4345 = vadd.f32 %v4080, %v4344
      %v4346 = vpop.f32.mrb[0].mxu0
      %4347 = vmatprep.mubr.f32.mxu0 0.0
      %4348 = vmatmul.mubr.f32.gmra.mrb[0].mxu0 %v4146
      %v4349 = vpop.f32.mrb[0].mxu0
      %v4350 = vadd.f32 %v4080, %v4349
      %v4351 = vpop.f32.mrb[0].mxu0
      %4352 = vmatprep.mubr.f32.mxu0 0.0
      %4353 = vmatmul.mubr.f32.gmra.mrb[0].mxu0 %v4149
      %v4354 = vpop.f32.mrb[0].mxu0
      %v4355 = vadd.f32 %v4080, %v4354
      %v4356 = vpop.f32.mrb[0].mxu0
      %4357 = vmatprep.mubr.f32.mxu0 0.0
      %4358 = vmatmul.mubr.f32.gmra.mrb[0].mxu0 %v4152
      %v4359 = vpop.f32.mrb[0].mxu0
      %v4360 = vadd.f32 %v4080, %v4359
      %v4361 = vpop.f32.mrb[0].mxu0
      %4362 = vmatprep.mubr.f32.mxu0 0.0
      %4363 = vmatmul.mubr.f32.gmra.mrb[0].mxu0 %v4155
      %v4364 = vpop.f32.mrb[0].mxu0
      %v4365 = vadd.f32 %v4080, %v4364
      %v4366 = vpop.f32.mrb[0].mxu0
      %4367 = vmatprep.mubr.f32.mxu0 0.0
      %4368 = vmatmul.mubr.f32.gmra.mrb[0].mxu0 %v4158
      %v4369 = vpop.f32.mrb[0].mxu0
      %v4370 = vadd.f32 %v4080, %v4369
      %v4371 = vpop.f32.mrb[0].mxu0
      %4372 = vmatprep.mubr.f32.mxu0 0.0
      %4373 = vmatmul.mubr.f32.gmra.mrb[0].mxu0 %v4161
      %v4374 = vpop.f32.mrb[0].mxu0
      %v4375 = vadd.f32 %v4080, %v4374
      %v4376 = vpop.f32.mrb[0].mxu0
      %4377 = vmatprep.mubr.f32.mxu0 0.0
      %4378 = vmatmul.mubr.f32.gmra.mrb[0].mxu0 %v4164
      %v4379 = vpop.f32.mrb[0].mxu0
      %v4380 = vadd.f32 %v4080, %v4379
      %v4381 = vpop.f32.mrb[0].mxu0
      %4382 = vmatprep.mubr.f32.mxu0 0.0
      %4383 = vmatmul.mubr.f32.gmra.mrb[0].mxu0 %v4167
      %v4384 = vpop.f32.mrb[0].mxu0
      %v4385 = vadd.f32 %v4080, %v4384
      %v4386 = vpop.f32.mrb[0].mxu0
      %4387 = vmatprep.mubr.f32.mxu0 0.0
      %4388 = vmatmul.mubr.f32.gmra.mrb[0].mxu0 %v4170
      %v4389 = vpop.f32.mrb[0].mxu0
      %v4390 = vadd.f32 %v4080, %v4389
      %v4391 = vpop.f32.mrb[0].mxu0
      %4392 = vmatprep.mubr.f32.mxu0 0.0
      %4393 = vmatmul.mubr.f32.gmra.mrb[0].mxu0 %v4173
      %v4394 = vpop.f32.mrb[0].mxu0
      %v4395 = vadd.f32 %v4080, %v4394
      %v4396 = vpop.f32.mrb[0].mxu0
      %4397 = vmatprep.mubr.f32.mxu0 0.0
      %4398 = vmatmul.mubr.f32.gmra.mrb[0].mxu0 %v4176
      %v4399 = vpop.f32.mrb[0].mxu0
      %v4400 = vadd.f32 %v4080, %v4399
      %v4401 = vpop.f32.mrb[0].mxu0
      %4402 = vdwg.mxu0
      %v4403 = vmax.f32 %v4245, 0.0
      %v4404 = vmax.f32 %v4250, 0.0
      %v4405 = vmax.f32 %v4255, 0.0
      %v4406 = vmax.f32 %v4260, 0.0
      %v4407 = vmax.f32 %v4265, 0.0
      %v4408 = vmax.f32 %v4270, 0.0
      %v4409 = vmax.f32 %v4275, 0.0
      %v4410 = vmax.f32 %v4280, 0.0
      %v4411 = vmax.f32 %v4285, 0.0
      %v4412 = vmax.f32 %v4290, 0.0
      %v4413 = vmax.f32 %v4295, 0.0
      %v4414 = vmax.f32 %v4300, 0.0
      %v4415 = vmax.f32 %v4305, 0.0
      %v4416 = vmax.f32 %v4310, 0.0
      %v4417 = vmax.f32 %v4315, 0.0
      %v4418 = vmax.f32 %v4320, 0.0
      %v4419 = vmax.f32 %v4325, 0.0
      %v4420 = vmax.f32 %v4330, 0.0
      %v4421 = vmax.f32 %v4335, 0.0
      %v4422 = vmax.f32 %v4340, 0.0
      %v4423 = vmax.f32 %v4345, 0.0
      %v4424 = vmax.f32 %v4350, 0.0
      %v4425 = vmax.f32 %v4355, 0.0
      %v4426 = vmax.f32 %v4360, 0.0
      %v4427 = vmax.f32 %v4365, 0.0
      %v4428 = vmax.f32 %v4370, 0.0
      %v4429 = vmax.f32 %v4375, 0.0
      %v4430 = vmax.f32 %v4380, 0.0
      %v4431 = vmax.f32 %v4385, 0.0
      %v4432 = vmax.f32 %v4390, 0.0
      %v4433 = vmax.f32 %v4395, 0.0
      %v4434 = vmax.f32 %v4400, 0.0
      %4435 = vst.msk [vmem:[%s519 + $0x1] sm:$0xff] %vm441, %v4403
      %4436 = vst.msk [vmem:[%s519 + $0x9] sm:$0xff] %vm441, %v4404
      %4437 = vst.msk [vmem:[%s519 + $0x19] sm:$0xff] %vm441, %v4405
      %4438 = vst.msk [vmem:[%s519 + $0x21] sm:$0xff] %vm441, %v4406
      %4439 = vst.msk [vmem:[%s519 + $0x31] sm:$0xff] %vm441, %v4407
      %4440 = vst.msk [vmem:[%s519 + $0x39] sm:$0xff] %vm441, %v4408
      %4441 = vst.msk [vmem:[%s519 + $0x49] sm:$0xff] %vm441, %v4409
      %4442 = vst.msk [vmem:[%s519 + $0x51] sm:$0xff] %vm441, %v4410
      %4443 = vst.msk [vmem:[%s519 + $0x61] sm:$0xff] %vm441, %v4411
      %4444 = vst.msk [vmem:[%s519 + $0x69] sm:$0xff] %vm441, %v4412
      %4445 = vst.msk [vmem:[%s519 + $0x79] sm:$0xff] %vm441, %v4413
      %4446 = vst.msk [vmem:[%s519 + $0x81] sm:$0xff] %vm441, %v4414
      %4447 = vst.msk [vmem:[%s519 + $0x91] sm:$0xff] %vm441, %v4415
      %4448 = vst.msk [vmem:[%s519 + $0x99] sm:$0xff] %vm441, %v4416
      %4449 = vst.msk [vmem:[%s519 + $0xa9] sm:$0xff] %vm441, %v4417
      %4450 = vst.msk [vmem:[%s519 + $0xb1] sm:$0xff] %vm441, %v4418
      %4451 = vst.msk [vmem:[%s519 + $0xc1] sm:$0xff] %vm441, %v4419
      %4452 = vst.msk [vmem:[%s519 + $0xc9] sm:$0xff] %vm441, %v4420
      %4453 = vst.msk [vmem:[%s519 + $0xd9] sm:$0xff] %vm441, %v4421
      %4454 = vst.msk [vmem:[%s519 + $0xe1] sm:$0xff] %vm441, %v4422
      %4455 = vst.msk [vmem:[%s519 + $0xf1] sm:$0xff] %vm441, %v4423
      %4456 = vst.msk [vmem:[%s519 + $0xf9] sm:$0xff] %vm441, %v4424
      %4457 = vst.msk [vmem:[%s519 + $0x109] sm:$0xff] %vm441, %v4425
      %4458 = vst.msk [vmem:[%s519 + $0x111] sm:$0xff] %vm441, %v4426
      %4459 = vst.msk [vmem:[%s519 + $0x121] sm:$0xff] %vm441, %v4427
      %4460 = vst.msk [vmem:[%s519 + $0x129] sm:$0xff] %vm441, %v4428
      %4461 = vst.msk [vmem:[%s519 + $0x139] sm:$0xff] %vm441, %v4429
      %4462 = vst.msk [vmem:[%s519 + $0x141] sm:$0xff] %vm441, %v4430
      %4463 = vst.msk [vmem:[%s519 + $0x151] sm:$0xff] %vm441, %v4431
      %4464 = vst.msk [vmem:[%s519 + $0x159] sm:$0xff] %vm441, %v4432
      %4465 = vst.msk [vmem:[%s519 + $0x169] sm:$0xff] %vm441, %v4433
      %4466 = vst.msk [vmem:[%s519 + $0x171] sm:$0xff] %vm441, %v4434
      %v4467 = vld [vmem:[#allocation2] sm:$0xff]
      %v4468 = vld [vmem:[#allocation2 + $0x8] sm:$0xff]
      %v4469 = vld [vmem:[#allocation2 + $0x18] sm:$0xff]
      %v4470 = vld [vmem:[#allocation2 + $0x20] sm:$0xff]
      %v4471 = vld [vmem:[#allocation2 + $0x30] sm:$0xff]
      %v4472 = vld [vmem:[#allocation2 + $0x38] sm:$0xff]
      %v4473 = vld [vmem:[#allocation2 + $0x48] sm:$0xff]
      %v4474 = vld [vmem:[#allocation2 + $0x50] sm:$0xff]
      %v4475 = vld [vmem:[#allocation2 + $0x60] sm:$0xff]
      %v4476 = vld [vmem:[#allocation2 + $0x68] sm:$0xff]
      %v4477 = vld [vmem:[#allocation2 + $0x78] sm:$0xff]
      %v4478 = vld [vmem:[#allocation2 + $0x80] sm:$0xff]
      %v4479 = vld [vmem:[#allocation2 + $0x90] sm:$0xff]
      %v4480 = vld [vmem:[#allocation2 + $0x98] sm:$0xff]
      %v4481 = vld [vmem:[#allocation2 + $0xa8] sm:$0xff]
      %v4482 = vld [vmem:[#allocation2 + $0xb0] sm:$0xff]
      %v4483 = vld [vmem:[#allocation2 + $0xc0] sm:$0xff]
      %v4484 = vld [vmem:[#allocation2 + $0xc8] sm:$0xff]
      %v4485 = vld [vmem:[#allocation2 + $0xd8] sm:$0xff]
      %v4486 = vld [vmem:[#allocation2 + $0xe0] sm:$0xff]
      %v4487 = vld [vmem:[#allocation2 + $0xf0] sm:$0xff]
      %v4488 = vld [vmem:[#allocation2 + $0xf8] sm:$0xff]
      %v4489 = vld [vmem:[#allocation2 + $0x108] sm:$0xff]
      %v4490 = vld [vmem:[#allocation2 + $0x110] sm:$0xff]
      %v4491 = vld [vmem:[#allocation2 + $0x120] sm:$0xff]
      %v4492 = vld [vmem:[#allocation2 + $0x128] sm:$0xff]
      %v4493 = vld [vmem:[#allocation2 + $0x138] sm:$0xff]
      %v4494 = vld [vmem:[#allocation2 + $0x140] sm:$0xff]
      %v4495 = vld [vmem:[#allocation2 + $0x150] sm:$0xff]
      %v4496 = vld [vmem:[#allocation2 + $0x158] sm:$0xff]
      %v4497 = vld [vmem:[#allocation2 + $0x168] sm:$0xff]
      %v4498 = vld [vmem:[#allocation2 + $0x170] sm:$0xff]
      %v4499 = vld [vmem:[#allocation2 + $0x1] sm:$0xff]
      %v4500 = vld [vmem:[#allocation2 + $0x9] sm:$0xff]
      %v4501 = vld [vmem:[#allocation2 + $0x19] sm:$0xff]
      %v4502 = vld [vmem:[#allocation2 + $0x21] sm:$0xff]
      %v4503 = vld [vmem:[#allocation2 + $0x31] sm:$0xff]
      %v4504 = vld [vmem:[#allocation2 + $0x39] sm:$0xff]
      %v4505 = vld [vmem:[#allocation2 + $0x49] sm:$0xff]
      %v4506 = vld [vmem:[#allocation2 + $0x51] sm:$0xff]
      %v4507 = vld [vmem:[#allocation2 + $0x61] sm:$0xff]
      %v4508 = vld [vmem:[#allocation2 + $0x69] sm:$0xff]
      %v4509 = vld [vmem:[#allocation2 + $0x79] sm:$0xff]
      %v4510 = vld [vmem:[#allocation2 + $0x81] sm:$0xff]
      %v4511 = vld [vmem:[#allocation2 + $0x91] sm:$0xff]
      %v4512 = vld [vmem:[#allocation2 + $0x99] sm:$0xff]
      %v4513 = vld [vmem:[#allocation2 + $0xa9] sm:$0xff]
      %v4514 = vld [vmem:[#allocation2 + $0xb1] sm:$0xff]
      %v4515 = vld [vmem:[#allocation2 + $0xc1] sm:$0xff]
      %v4516 = vld [vmem:[#allocation2 + $0xc9] sm:$0xff]
      %v4517 = vld [vmem:[#allocation2 + $0xd9] sm:$0xff]
      %v4518 = vld [vmem:[#allocation2 + $0xe1] sm:$0xff]
      %v4519 = vld [vmem:[#allocation2 + $0xf1] sm:$0xff]
      %v4520 = vld [vmem:[#allocation2 + $0xf9] sm:$0xff]
      %v4521 = vld [vmem:[#allocation2 + $0x109] sm:$0xff]
      %v4522 = vld [vmem:[#allocation2 + $0x111] sm:$0xff]
      %v4523 = vld [vmem:[#allocation2 + $0x121] sm:$0xff]
      %v4524 = vld [vmem:[#allocation2 + $0x129] sm:$0xff]
      %v4525 = vld [vmem:[#allocation2 + $0x139] sm:$0xff]
      %v4526 = vld [vmem:[#allocation2 + $0x141] sm:$0xff]
      %v4527 = vld [vmem:[#allocation2 + $0x151] sm:$0xff]
      %v4528 = vld [vmem:[#allocation2 + $0x159] sm:$0xff]
      %v4529 = vld [vmem:[#allocation2 + $0x169] sm:$0xff]
      %v4530 = vld [vmem:[#allocation2 + $0x171] sm:$0xff]
      %v4531 = vld [vmem:[#allocation2 + $0x2] sm:$0xff]
      %v4532 = vld [vmem:[#allocation2 + $0xa] sm:$0xff]
      %v4533 = vld [vmem:[#allocation2 + $0x1a] sm:$0xff]
      %v4534 = vld [vmem:[#allocation2 + $0x22] sm:$0xff]
      %v4535 = vld [vmem:[#allocation2 + $0x32] sm:$0xff]
      %v4536 = vld [vmem:[#allocation2 + $0x3a] sm:$0xff]
      %v4537 = vld [vmem:[#allocation2 + $0x4a] sm:$0xff]
      %v4538 = vld [vmem:[#allocation2 + $0x52] sm:$0xff]
      %v4539 = vld [vmem:[#allocation2 + $0x62] sm:$0xff]
      %v4540 = vld [vmem:[#allocation2 + $0x6a] sm:$0xff]
      %v4541 = vld [vmem:[#allocation2 + $0x7a] sm:$0xff]
      %v4542 = vld [vmem:[#allocation2 + $0x82] sm:$0xff]
      %v4543 = vld [vmem:[#allocation2 + $0x92] sm:$0xff]
      %v4544 = vld [vmem:[#allocation2 + $0x9a] sm:$0xff]
      %v4545 = vld [vmem:[#allocation2 + $0xaa] sm:$0xff]
      %v4546 = vld [vmem:[#allocation2 + $0xb2] sm:$0xff]
      %v4547 = vld [vmem:[#allocation2 + $0xc2] sm:$0xff]
      %v4548 = vld [vmem:[#allocation2 + $0xca] sm:$0xff]
      %v4549 = vld [vmem:[#allocation2 + $0xda] sm:$0xff]
      %v4550 = vld [vmem:[#allocation2 + $0xe2] sm:$0xff]
      %v4551 = vld [vmem:[#allocation2 + $0xf2] sm:$0xff]
      %v4552 = vld [vmem:[#allocation2 + $0xfa] sm:$0xff]
      %v4553 = vld [vmem:[#allocation2 + $0x10a] sm:$0xff]
      %v4554 = vld [vmem:[#allocation2 + $0x112] sm:$0xff]
      %v4555 = vld [vmem:[#allocation2 + $0x122] sm:$0xff]
      %v4556 = vld [vmem:[#allocation2 + $0x12a] sm:$0xff]
      %v4557 = vld [vmem:[#allocation2 + $0x13a] sm:$0xff]
      %v4558 = vld [vmem:[#allocation2 + $0x142] sm:$0xff]
      %v4559 = vld [vmem:[#allocation2 + $0x152] sm:$0xff]
      %v4560 = vld [vmem:[#allocation2 + $0x15a] sm:$0xff]
      %v4561 = vld [vmem:[#allocation2 + $0x16a] sm:$0xff]
      %v4562 = vld [vmem:[#allocation2 + $0x172] sm:$0xff]
      %v4563 = vld [vmem:[%s519] sm:$0xff]
      %v4564 = vld [vmem:[%s519 + $0x8] sm:$0xff]
      %v4565 = vld [vmem:[%s519 + $0x18] sm:$0xff]
      %v4566 = vld [vmem:[%s519 + $0x20] sm:$0xff]
      %v4567 = vld [vmem:[%s519 + $0x30] sm:$0xff]
      %v4568 = vld [vmem:[%s519 + $0x38] sm:$0xff]
      %v4569 = vld [vmem:[%s519 + $0x48] sm:$0xff]
      %v4570 = vld [vmem:[%s519 + $0x50] sm:$0xff]
      %v4571 = vld [vmem:[%s519 + $0x60] sm:$0xff]
      %v4572 = vld [vmem:[%s519 + $0x68] sm:$0xff]
      %v4573 = vld [vmem:[%s519 + $0x78] sm:$0xff]
      %v4574 = vld [vmem:[%s519 + $0x80] sm:$0xff]
      %v4575 = vld [vmem:[%s519 + $0x90] sm:$0xff]
      %v4576 = vld [vmem:[%s519 + $0x98] sm:$0xff]
      %v4577 = vld [vmem:[%s519 + $0xa8] sm:$0xff]
      %v4578 = vld [vmem:[%s519 + $0xb0] sm:$0xff]
      %v4579 = vld [vmem:[%s519 + $0xc0] sm:$0xff]
      %v4580 = vld [vmem:[%s519 + $0xc8] sm:$0xff]
      %v4581 = vld [vmem:[%s519 + $0xd8] sm:$0xff]
      %v4582 = vld [vmem:[%s519 + $0xe0] sm:$0xff]
      %v4583 = vld [vmem:[%s519 + $0xf0] sm:$0xff]
      %v4584 = vld [vmem:[%s519 + $0xf8] sm:$0xff]
      %v4585 = vld [vmem:[%s519 + $0x108] sm:$0xff]
      %v4586 = vld [vmem:[%s519 + $0x110] sm:$0xff]
      %v4587 = vld [vmem:[%s519 + $0x120] sm:$0xff]
      %v4588 = vld [vmem:[%s519 + $0x128] sm:$0xff]
      %v4589 = vld [vmem:[%s519 + $0x138] sm:$0xff]
      %v4590 = vld [vmem:[%s519 + $0x140] sm:$0xff]
      %v4591 = vld [vmem:[%s519 + $0x150] sm:$0xff]
      %v4592 = vld [vmem:[%s519 + $0x158] sm:$0xff]
      %v4593 = vld [vmem:[%s519 + $0x168] sm:$0xff]
      %v4594 = vld [vmem:[%s519 + $0x170] sm:$0xff]
      %v4595 = vld [vmem:[%s519 + $0x1] sm:$0xff]
      %v4596 = vld [vmem:[%s519 + $0x9] sm:$0xff]
      %v4597 = vld [vmem:[%s519 + $0x19] sm:$0xff]
      %v4598 = vld [vmem:[%s519 + $0x21] sm:$0xff]
      %v4599 = vld [vmem:[%s519 + $0x31] sm:$0xff]
      %v4600 = vld [vmem:[%s519 + $0x39] sm:$0xff]
      %v4601 = vld [vmem:[%s519 + $0x49] sm:$0xff]
      %v4602 = vld [vmem:[%s519 + $0x51] sm:$0xff]
      %v4603 = vld [vmem:[%s519 + $0x61] sm:$0xff]
      %v4604 = vld [vmem:[%s519 + $0x69] sm:$0xff]
      %v4605 = vld [vmem:[%s519 + $0x79] sm:$0xff]
      %v4606 = vld [vmem:[%s519 + $0x81] sm:$0xff]
      %v4607 = vld [vmem:[%s519 + $0x91] sm:$0xff]
      %v4608 = vld [vmem:[%s519 + $0x99] sm:$0xff]
      %v4609 = vld [vmem:[%s519 + $0xa9] sm:$0xff]
      %v4610 = vld [vmem:[%s519 + $0xb1] sm:$0xff]
      %v4611 = vld [vmem:[%s519 + $0xc1] sm:$0xff]
      %v4612 = vld [vmem:[%s519 + $0xc9] sm:$0xff]
      %v4613 = vld [vmem:[%s519 + $0xd9] sm:$0xff]
      %v4614 = vld [vmem:[%s519 + $0xe1] sm:$0xff]
      %v4615 = vld [vmem:[%s519 + $0xf1] sm:$0xff]
      %v4616 = vld [vmem:[%s519 + $0xf9] sm:$0xff]
      %v4617 = vld [vmem:[%s519 + $0x109] sm:$0xff]
      %v4618 = vld [vmem:[%s519 + $0x111] sm:$0xff]
      %v4619 = vld [vmem:[%s519 + $0x121] sm:$0xff]
      %v4620 = vld [vmem:[%s519 + $0x129] sm:$0xff]
      %v4621 = vld [vmem:[%s519 + $0x139] sm:$0xff]
      %v4622 = vld [vmem:[%s519 + $0x141] sm:$0xff]
      %v4623 = vld [vmem:[%s519 + $0x151] sm:$0xff]
      %v4624 = vld [vmem:[%s519 + $0x159] sm:$0xff]
      %v4625 = vld [vmem:[%s519 + $0x169] sm:$0xff]
      %v4626 = vld [vmem:[%s519 + $0x171] sm:$0xff]
      %v4627 = vld [vmem:[%s519 + $0x2] sm:$0xff]
      %v4628 = vld [vmem:[%s519 + $0xa] sm:$0xff]
      %v4629 = vld [vmem:[%s519 + $0x1a] sm:$0xff]
      %v4630 = vld [vmem:[%s519 + $0x22] sm:$0xff]
      %v4631 = vld [vmem:[%s519 + $0x32] sm:$0xff]
      %v4632 = vld [vmem:[%s519 + $0x3a] sm:$0xff]
      %v4633 = vld [vmem:[%s519 + $0x4a] sm:$0xff]
      %v4634 = vld [vmem:[%s519 + $0x52] sm:$0xff]
      %v4635 = vld [vmem:[%s519 + $0x62] sm:$0xff]
      %v4636 = vld [vmem:[%s519 + $0x6a] sm:$0xff]
      %v4637 = vld [vmem:[%s519 + $0x7a] sm:$0xff]
      %v4638 = vld [vmem:[%s519 + $0x82] sm:$0xff]
      %v4639 = vld [vmem:[%s519 + $0x92] sm:$0xff]
      %v4640 = vld [vmem:[%s519 + $0x9a] sm:$0xff]
      %v4641 = vld [vmem:[%s519 + $0xaa] sm:$0xff]
      %v4642 = vld [vmem:[%s519 + $0xb2] sm:$0xff]
      %v4643 = vld [vmem:[%s519 + $0xc2] sm:$0xff]
      %v4644 = vld [vmem:[%s519 + $0xca] sm:$0xff]
      %v4645 = vld [vmem:[%s519 + $0xda] sm:$0xff]
      %v4646 = vld [vmem:[%s519 + $0xe2] sm:$0xff]
      %v4647 = vld [vmem:[%s519 + $0xf2] sm:$0xff]
      %v4648 = vld [vmem:[%s519 + $0xfa] sm:$0xff]
      %v4649 = vld [vmem:[%s519 + $0x10a] sm:$0xff]
      %v4650 = vld [vmem:[%s519 + $0x112] sm:$0xff]
      %v4651 = vld [vmem:[%s519 + $0x122] sm:$0xff]
      %v4652 = vld [vmem:[%s519 + $0x12a] sm:$0xff]
      %v4653 = vld [vmem:[%s519 + $0x13a] sm:$0xff]
      %v4654 = vld [vmem:[%s519 + $0x142] sm:$0xff]
      %v4655 = vld [vmem:[%s519 + $0x152] sm:$0xff]
      %v4656 = vld [vmem:[%s519 + $0x15a] sm:$0xff]
      %v4657 = vld [vmem:[%s519 + $0x16a] sm:$0xff]
      %v4658 = vld [vmem:[%s519 + $0x172] sm:$0xff]
      %v4659 = vld [vmem:[%s744] sm:$0xff]
      %v4660 = vld [vmem:[%s744 + $0x8] sm:$0xff]
      %v4661 = vld [vmem:[%s744 + $0x18] sm:$0xff]
      %v4662 = vld [vmem:[%s744 + $0x20] sm:$0xff]
      %v4663 = vld [vmem:[%s744 + $0x30] sm:$0xff]
      %v4664 = vld [vmem:[%s744 + $0x38] sm:$0xff]
      %v4665 = vld [vmem:[%s744 + $0x48] sm:$0xff]
      %v4666 = vld [vmem:[%s744 + $0x50] sm:$0xff]
      %v4667 = vld [vmem:[%s744 + $0x60] sm:$0xff]
      %v4668 = vld [vmem:[%s744 + $0x68] sm:$0xff]
      %v4669 = vld [vmem:[%s744 + $0x78] sm:$0xff]
      %v4670 = vld [vmem:[%s744 + $0x80] sm:$0xff]
      %v4671 = vld [vmem:[%s744 + $0x90] sm:$0xff]
      %v4672 = vld [vmem:[%s744 + $0x98] sm:$0xff]
      %v4673 = vld [vmem:[%s744 + $0xa8] sm:$0xff]
      %v4674 = vld [vmem:[%s744 + $0xb0] sm:$0xff]
      %v4675 = vld [vmem:[%s744 + $0xc0] sm:$0xff]
      %v4676 = vld [vmem:[%s744 + $0xc8] sm:$0xff]
      %v4677 = vld [vmem:[%s744 + $0xd8] sm:$0xff]
      %v4678 = vld [vmem:[%s744 + $0xe0] sm:$0xff]
      %v4679 = vld [vmem:[%s744 + $0xf0] sm:$0xff]
      %v4680 = vld [vmem:[%s744 + $0xf8] sm:$0xff]
      %v4681 = vld [vmem:[%s744 + $0x108] sm:$0xff]
      %v4682 = vld [vmem:[%s744 + $0x110] sm:$0xff]
      %v4683 = vld [vmem:[%s744 + $0x120] sm:$0xff]
      %v4684 = vld [vmem:[%s744 + $0x128] sm:$0xff]
      %v4685 = vld [vmem:[%s744 + $0x138] sm:$0xff]
      %v4686 = vld [vmem:[%s744 + $0x140] sm:$0xff]
      %v4687 = vld [vmem:[%s744 + $0x150] sm:$0xff]
      %v4688 = vld [vmem:[%s744 + $0x158] sm:$0xff]
      %v4689 = vld [vmem:[%s744 + $0x168] sm:$0xff]
      %v4690 = vld [vmem:[%s744 + $0x170] sm:$0xff]
      %v4691 = vld [vmem:[%s744 + $0x1] sm:$0xff]
      %v4692 = vld [vmem:[%s744 + $0x9] sm:$0xff]
      %v4693 = vld [vmem:[%s744 + $0x19] sm:$0xff]
      %v4694 = vld [vmem:[%s744 + $0x21] sm:$0xff]
      %v4695 = vld [vmem:[%s744 + $0x31] sm:$0xff]
      %v4696 = vld [vmem:[%s744 + $0x39] sm:$0xff]
      %v4697 = vld [vmem:[%s744 + $0x49] sm:$0xff]
      %v4698 = vld [vmem:[%s744 + $0x51] sm:$0xff]
      %v4699 = vld [vmem:[%s744 + $0x61] sm:$0xff]
      %v4700 = vld [vmem:[%s744 + $0x69] sm:$0xff]
      %v4701 = vld [vmem:[%s744 + $0x79] sm:$0xff]
      %v4702 = vld [vmem:[%s744 + $0x81] sm:$0xff]
      %v4703 = vld [vmem:[%s744 + $0x91] sm:$0xff]
      %v4704 = vld [vmem:[%s744 + $0x99] sm:$0xff]
      %v4705 = vld [vmem:[%s744 + $0xa9] sm:$0xff]
      %v4706 = vld [vmem:[%s744 + $0xb1] sm:$0xff]
      %v4707 = vld [vmem:[%s744 + $0xc1] sm:$0xff]
      %v4708 = vld [vmem:[%s744 + $0xc9] sm:$0xff]
      %v4709 = vld [vmem:[%s744 + $0xd9] sm:$0xff]
      %v4710 = vld [vmem:[%s744 + $0xe1] sm:$0xff]
      %v4711 = vld [vmem:[%s744 + $0xf1] sm:$0xff]
      %v4712 = vld [vmem:[%s744 + $0xf9] sm:$0xff]
      %v4713 = vld [vmem:[%s744 + $0x109] sm:$0xff]
      %v4714 = vld [vmem:[%s744 + $0x111] sm:$0xff]
      %v4715 = vld [vmem:[%s744 + $0x121] sm:$0xff]
      %v4716 = vld [vmem:[%s744 + $0x129] sm:$0xff]
      %v4717 = vld [vmem:[%s744 + $0x139] sm:$0xff]
      %v4718 = vld [vmem:[%s744 + $0x141] sm:$0xff]
      %v4719 = vld [vmem:[%s744 + $0x151] sm:$0xff]
      %v4720 = vld [vmem:[%s744 + $0x159] sm:$0xff]
      %v4721 = vld [vmem:[%s744 + $0x169] sm:$0xff]
      %v4722 = vld [vmem:[%s744 + $0x171] sm:$0xff]
      %v4723 = vld [vmem:[%s744 + $0x2] sm:$0xff]
      %v4724 = vld [vmem:[%s744 + $0xa] sm:$0xff]
      %v4725 = vld [vmem:[%s744 + $0x1a] sm:$0xff]
      %v4726 = vld [vmem:[%s744 + $0x22] sm:$0xff]
      %v4727 = vld [vmem:[%s744 + $0x32] sm:$0xff]
      %v4728 = vld [vmem:[%s744 + $0x3a] sm:$0xff]
      %v4729 = vld [vmem:[%s744 + $0x4a] sm:$0xff]
      %v4730 = vld [vmem:[%s744 + $0x52] sm:$0xff]
      %v4731 = vld [vmem:[%s744 + $0x62] sm:$0xff]
      %v4732 = vld [vmem:[%s744 + $0x6a] sm:$0xff]
      %v4733 = vld [vmem:[%s744 + $0x7a] sm:$0xff]
      %v4734 = vld [vmem:[%s744 + $0x82] sm:$0xff]
      %v4735 = vld [vmem:[%s744 + $0x92] sm:$0xff]
      %v4736 = vld [vmem:[%s744 + $0x9a] sm:$0xff]
      %v4737 = vld [vmem:[%s744 + $0xaa] sm:$0xff]
      %v4738 = vld [vmem:[%s744 + $0xb2] sm:$0xff]
      %v4739 = vld [vmem:[%s744 + $0xc2] sm:$0xff]
      %v4740 = vld [vmem:[%s744 + $0xca] sm:$0xff]
      %v4741 = vld [vmem:[%s744 + $0xda] sm:$0xff]
      %v4742 = vld [vmem:[%s744 + $0xe2] sm:$0xff]
      %v4743 = vld [vmem:[%s744 + $0xf2] sm:$0xff]
      %v4744 = vld [vmem:[%s744 + $0xfa] sm:$0xff]
      %v4745 = vld [vmem:[%s744 + $0x10a] sm:$0xff]
      %v4746 = vld [vmem:[%s744 + $0x112] sm:$0xff]
      %v4747 = vld [vmem:[%s744 + $0x122] sm:$0xff]
      %v4748 = vld [vmem:[%s744 + $0x12a] sm:$0xff]
      %v4749 = vld [vmem:[%s744 + $0x13a] sm:$0xff]
      %v4750 = vld [vmem:[%s744 + $0x142] sm:$0xff]
      %v4751 = vld [vmem:[%s744 + $0x152] sm:$0xff]
      %v4752 = vld [vmem:[%s744 + $0x15a] sm:$0xff]
      %v4753 = vld [vmem:[%s744 + $0x16a] sm:$0xff]
      %v4754 = vld [vmem:[%s744 + $0x172] sm:$0xff]
      %4787 = vrot.lane.b32.xlu0 %v4499, 8
      %v4788 = vpop.permute.xlu0 %4787
      %4789 = vrot.lane.b32.xlu0 %v4500, 8
      %v4790 = vpop.permute.xlu0 %4789
      %4791 = vrot.lane.b32.xlu0 %v4501, 8
      %v4792 = vpop.permute.xlu0 %4791
      %4793 = vrot.lane.b32.xlu0 %v4502, 8
      %v4794 = vpop.permute.xlu0 %4793
      %4795 = vrot.lane.b32.xlu0 %v4503, 8
      %v4796 = vpop.permute.xlu0 %4795
      %4797 = vrot.lane.b32.xlu0 %v4504, 8
      %v4798 = vpop.permute.xlu0 %4797
      %4799 = vrot.lane.b32.xlu0 %v4505, 8
      %v4800 = vpop.permute.xlu0 %4799
      %4801 = vrot.lane.b32.xlu0 %v4506, 8
      %v4802 = vpop.permute.xlu0 %4801
      %4803 = vrot.lane.b32.xlu0 %v4507, 8
      %v4804 = vpop.permute.xlu0 %4803
      %4805 = vrot.lane.b32.xlu0 %v4508, 8
      %v4806 = vpop.permute.xlu0 %4805
      %4807 = vrot.lane.b32.xlu0 %v4509, 8
      %v4808 = vpop.permute.xlu0 %4807
      %4809 = vrot.lane.b32.xlu0 %v4510, 8
      %v4810 = vpop.permute.xlu0 %4809
      %4811 = vrot.lane.b32.xlu0 %v4511, 8
      %v4812 = vpop.permute.xlu0 %4811
      %4813 = vrot.lane.b32.xlu0 %v4512, 8
      %v4814 = vpop.permute.xlu0 %4813
      %4815 = vrot.lane.b32.xlu0 %v4513, 8
      %v4816 = vpop.permute.xlu0 %4815
      %4817 = vrot.lane.b32.xlu0 %v4514, 8
      %v4818 = vpop.permute.xlu0 %4817
      %4819 = vrot.lane.b32.xlu0 %v4515, 8
      %v4820 = vpop.permute.xlu0 %4819
      %4821 = vrot.lane.b32.xlu0 %v4516, 8
      %v4822 = vpop.permute.xlu0 %4821
      %4823 = vrot.lane.b32.xlu0 %v4517, 8
      %v4824 = vpop.permute.xlu0 %4823
      %4825 = vrot.lane.b32.xlu0 %v4518, 8
      %v4826 = vpop.permute.xlu0 %4825
      %4827 = vrot.lane.b32.xlu0 %v4519, 8
      %v4828 = vpop.permute.xlu0 %4827
      %4829 = vrot.lane.b32.xlu0 %v4520, 8
      %v4830 = vpop.permute.xlu0 %4829
      %4831 = vrot.lane.b32.xlu0 %v4521, 8
      %v4832 = vpop.permute.xlu0 %4831
      %4833 = vrot.lane.b32.xlu0 %v4522, 8
      %v4834 = vpop.permute.xlu0 %4833
      %4835 = vrot.lane.b32.xlu0 %v4523, 8
      %v4836 = vpop.permute.xlu0 %4835
      %4837 = vrot.lane.b32.xlu0 %v4524, 8
      %v4838 = vpop.permute.xlu0 %4837
      %4839 = vrot.lane.b32.xlu0 %v4525, 8
      %v4840 = vpop.permute.xlu0 %4839
      %4841 = vrot.lane.b32.xlu0 %v4526, 8
      %v4842 = vpop.permute.xlu0 %4841
      %4843 = vrot.lane.b32.xlu0 %v4527, 8
      %v4844 = vpop.permute.xlu0 %4843
      %4845 = vrot.lane.b32.xlu0 %v4528, 8
      %v4846 = vpop.permute.xlu0 %4845
      %4847 = vrot.lane.b32.xlu0 %v4529, 8
      %v4848 = vpop.permute.xlu0 %4847
      %4849 = vrot.lane.b32.xlu0 %v4530, 8
      %v4850 = vpop.permute.xlu0 %4849
      %4915 = vrot.lane.b32.xlu0 %v4531, 16
      %v4916 = vpop.permute.xlu0 %4915
      %4917 = vrot.lane.b32.xlu0 %v4532, 16
      %v4918 = vpop.permute.xlu0 %4917
      %4919 = vrot.lane.b32.xlu0 %v4533, 16
      %v4920 = vpop.permute.xlu0 %4919
      %4921 = vrot.lane.b32.xlu0 %v4534, 16
      %v4922 = vpop.permute.xlu0 %4921
      %4923 = vrot.lane.b32.xlu0 %v4535, 16
      %v4924 = vpop.permute.xlu0 %4923
      %4925 = vrot.lane.b32.xlu0 %v4536, 16
      %v4926 = vpop.permute.xlu0 %4925
      %4927 = vrot.lane.b32.xlu0 %v4537, 16
      %v4928 = vpop.permute.xlu0 %4927
      %4929 = vrot.lane.b32.xlu0 %v4538, 16
      %v4930 = vpop.permute.xlu0 %4929
      %4931 = vrot.lane.b32.xlu0 %v4539, 16
      %v4932 = vpop.permute.xlu0 %4931
      %4933 = vrot.lane.b32.xlu0 %v4540, 16
      %v4934 = vpop.permute.xlu0 %4933
      %4935 = vrot.lane.b32.xlu0 %v4541, 16
      %v4936 = vpop.permute.xlu0 %4935
      %4937 = vrot.lane.b32.xlu0 %v4542, 16
      %v4938 = vpop.permute.xlu0 %4937
      %4939 = vrot.lane.b32.xlu0 %v4543, 16
      %v4940 = vpop.permute.xlu0 %4939
      %4941 = vrot.lane.b32.xlu0 %v4544, 16
      %v4942 = vpop.permute.xlu0 %4941
      %4943 = vrot.lane.b32.xlu0 %v4545, 16
      %v4944 = vpop.permute.xlu0 %4943
      %4945 = vrot.lane.b32.xlu0 %v4546, 16
      %v4946 = vpop.permute.xlu0 %4945
      %4947 = vrot.lane.b32.xlu0 %v4547, 16
      %v4948 = vpop.permute.xlu0 %4947
      %4949 = vrot.lane.b32.xlu0 %v4548, 16
      %v4950 = vpop.permute.xlu0 %4949
      %4951 = vrot.lane.b32.xlu0 %v4549, 16
      %v4952 = vpop.permute.xlu0 %4951
      %4953 = vrot.lane.b32.xlu0 %v4550, 16
      %v4954 = vpop.permute.xlu0 %4953
      %4955 = vrot.lane.b32.xlu0 %v4551, 16
      %v4956 = vpop.permute.xlu0 %4955
      %4957 = vrot.lane.b32.xlu0 %v4552, 16
      %v4958 = vpop.permute.xlu0 %4957
      %4959 = vrot.lane.b32.xlu0 %v4553, 16
      %v4960 = vpop.permute.xlu0 %4959
      %4961 = vrot.lane.b32.xlu0 %v4554, 16
      %v4962 = vpop.permute.xlu0 %4961
      %4963 = vrot.lane.b32.xlu0 %v4555, 16
      %v4964 = vpop.permute.xlu0 %4963
      %4965 = vrot.lane.b32.xlu0 %v4556, 16
      %v4966 = vpop.permute.xlu0 %4965
      %4967 = vrot.lane.b32.xlu0 %v4557, 16
      %v4968 = vpop.permute.xlu0 %4967
      %4969 = vrot.lane.b32.xlu0 %v4558, 16
      %v4970 = vpop.permute.xlu0 %4969
      %4971 = vrot.lane.b32.xlu0 %v4559, 16
      %v4972 = vpop.permute.xlu0 %4971
      %4973 = vrot.lane.b32.xlu0 %v4560, 16
      %v4974 = vpop.permute.xlu0 %4973
      %4975 = vrot.lane.b32.xlu0 %v4561, 16
      %v4976 = vpop.permute.xlu0 %4975
      %4977 = vrot.lane.b32.xlu0 %v4562, 16
      %v4978 = vpop.permute.xlu0 %4977
      %5043 = vrot.lane.b32.xlu0 %v4563, 24
      %v5044 = vpop.permute.xlu0 %5043
      %5045 = vrot.lane.b32.xlu0 %v4564, 24
      %v5046 = vpop.permute.xlu0 %5045
      %5047 = vrot.lane.b32.xlu0 %v4565, 24
      %v5048 = vpop.permute.xlu0 %5047
      %5049 = vrot.lane.b32.xlu0 %v4566, 24
      %v5050 = vpop.permute.xlu0 %5049
      %5051 = vrot.lane.b32.xlu0 %v4567, 24
      %v5052 = vpop.permute.xlu0 %5051
      %5053 = vrot.lane.b32.xlu0 %v4568, 24
      %v5054 = vpop.permute.xlu0 %5053
      %5055 = vrot.lane.b32.xlu0 %v4569, 24
      %v5056 = vpop.permute.xlu0 %5055
      %5057 = vrot.lane.b32.xlu0 %v4570, 24
      %v5058 = vpop.permute.xlu0 %5057
      %5059 = vrot.lane.b32.xlu0 %v4571, 24
      %v5060 = vpop.permute.xlu0 %5059
      %5061 = vrot.lane.b32.xlu0 %v4572, 24
      %v5062 = vpop.permute.xlu0 %5061
      %5063 = vrot.lane.b32.xlu0 %v4573, 24
      %v5064 = vpop.permute.xlu0 %5063
      %5065 = vrot.lane.b32.xlu0 %v4574, 24
      %v5066 = vpop.permute.xlu0 %5065
      %5067 = vrot.lane.b32.xlu0 %v4575, 24
      %v5068 = vpop.permute.xlu0 %5067
      %5069 = vrot.lane.b32.xlu0 %v4576, 24
      %v5070 = vpop.permute.xlu0 %5069
      %5071 = vrot.lane.b32.xlu0 %v4577, 24
      %v5072 = vpop.permute.xlu0 %5071
      %5073 = vrot.lane.b32.xlu0 %v4578, 24
      %v5074 = vpop.permute.xlu0 %5073
      %5075 = vrot.lane.b32.xlu0 %v4579, 24
      %v5076 = vpop.permute.xlu0 %5075
      %5077 = vrot.lane.b32.xlu0 %v4580, 24
      %v5078 = vpop.permute.xlu0 %5077
      %5079 = vrot.lane.b32.xlu0 %v4581, 24
      %v5080 = vpop.permute.xlu0 %5079
      %5081 = vrot.lane.b32.xlu0 %v4582, 24
      %v5082 = vpop.permute.xlu0 %5081
      %5083 = vrot.lane.b32.xlu0 %v4583, 24
      %v5084 = vpop.permute.xlu0 %5083
      %5085 = vrot.lane.b32.xlu0 %v4584, 24
      %v5086 = vpop.permute.xlu0 %5085
      %5087 = vrot.lane.b32.xlu0 %v4585, 24
      %v5088 = vpop.permute.xlu0 %5087
      %5089 = vrot.lane.b32.xlu0 %v4586, 24
      %v5090 = vpop.permute.xlu0 %5089
      %5091 = vrot.lane.b32.xlu0 %v4587, 24
      %v5092 = vpop.permute.xlu0 %5091
      %5093 = vrot.lane.b32.xlu0 %v4588, 24
      %v5094 = vpop.permute.xlu0 %5093
      %5095 = vrot.lane.b32.xlu0 %v4589, 24
      %v5096 = vpop.permute.xlu0 %5095
      %5097 = vrot.lane.b32.xlu0 %v4590, 24
      %v5098 = vpop.permute.xlu0 %5097
      %5099 = vrot.lane.b32.xlu0 %v4591, 24
      %v5100 = vpop.permute.xlu0 %5099
      %5101 = vrot.lane.b32.xlu0 %v4592, 24
      %v5102 = vpop.permute.xlu0 %5101
      %5103 = vrot.lane.b32.xlu0 %v4593, 24
      %v5104 = vpop.permute.xlu0 %5103
      %5105 = vrot.lane.b32.xlu0 %v4594, 24
      %v5106 = vpop.permute.xlu0 %5105
      %5171 = vrot.lane.b32.xlu0 %v4595, 32
      %v5172 = vpop.permute.xlu0 %5171
      %5173 = vrot.lane.b32.xlu0 %v4596, 32
      %v5174 = vpop.permute.xlu0 %5173
      %5175 = vrot.lane.b32.xlu0 %v4597, 32
      %v5176 = vpop.permute.xlu0 %5175
      %5177 = vrot.lane.b32.xlu0 %v4598, 32
      %v5178 = vpop.permute.xlu0 %5177
      %5179 = vrot.lane.b32.xlu0 %v4599, 32
      %v5180 = vpop.permute.xlu0 %5179
      %5181 = vrot.lane.b32.xlu0 %v4600, 32
      %v5182 = vpop.permute.xlu0 %5181
      %5183 = vrot.lane.b32.xlu0 %v4601, 32
      %v5184 = vpop.permute.xlu0 %5183
      %5185 = vrot.lane.b32.xlu0 %v4602, 32
      %v5186 = vpop.permute.xlu0 %5185
      %5187 = vrot.lane.b32.xlu0 %v4603, 32
      %v5188 = vpop.permute.xlu0 %5187
      %5189 = vrot.lane.b32.xlu0 %v4604, 32
      %v5190 = vpop.permute.xlu0 %5189
      %5191 = vrot.lane.b32.xlu0 %v4605, 32
      %v5192 = vpop.permute.xlu0 %5191
      %5193 = vrot.lane.b32.xlu0 %v4606, 32
      %v5194 = vpop.permute.xlu0 %5193
      %5195 = vrot.lane.b32.xlu0 %v4607, 32
      %v5196 = vpop.permute.xlu0 %5195
      %5197 = vrot.lane.b32.xlu0 %v4608, 32
      %v5198 = vpop.permute.xlu0 %5197
      %5199 = vrot.lane.b32.xlu0 %v4609, 32
      %v5200 = vpop.permute.xlu0 %5199
      %5201 = vrot.lane.b32.xlu0 %v4610, 32
      %v5202 = vpop.permute.xlu0 %5201
      %5203 = vrot.lane.b32.xlu0 %v4611, 32
      %v5204 = vpop.permute.xlu0 %5203
      %5205 = vrot.lane.b32.xlu0 %v4612, 32
      %v5206 = vpop.permute.xlu0 %5205
      %5207 = vrot.lane.b32.xlu0 %v4613, 32
      %v5208 = vpop.permute.xlu0 %5207
      %5209 = vrot.lane.b32.xlu0 %v4614, 32
      %v5210 = vpop.permute.xlu0 %5209
      %5211 = vrot.lane.b32.xlu0 %v4615, 32
      %v5212 = vpop.permute.xlu0 %5211
      %5213 = vrot.lane.b32.xlu0 %v4616, 32
      %v5214 = vpop.permute.xlu0 %5213
      %5215 = vrot.lane.b32.xlu0 %v4617, 32
      %v5216 = vpop.permute.xlu0 %5215
      %5217 = vrot.lane.b32.xlu0 %v4618, 32
      %v5218 = vpop.permute.xlu0 %5217
      %5219 = vrot.lane.b32.xlu0 %v4619, 32
      %v5220 = vpop.permute.xlu0 %5219
      %5221 = vrot.lane.b32.xlu0 %v4620, 32
      %v5222 = vpop.permute.xlu0 %5221
      %5223 = vrot.lane.b32.xlu0 %v4621, 32
      %v5224 = vpop.permute.xlu0 %5223
      %5225 = vrot.lane.b32.xlu0 %v4622, 32
      %v5226 = vpop.permute.xlu0 %5225
      %5227 = vrot.lane.b32.xlu0 %v4623, 32
      %v5228 = vpop.permute.xlu0 %5227
      %5229 = vrot.lane.b32.xlu0 %v4624, 32
      %v5230 = vpop.permute.xlu0 %5229
      %5231 = vrot.lane.b32.xlu0 %v4625, 32
      %v5232 = vpop.permute.xlu0 %5231
      %5233 = vrot.lane.b32.xlu0 %v4626, 32
      %v5234 = vpop.permute.xlu0 %5233
      %5299 = vrot.lane.b32.xlu0 %v4627, 40
      %v5300 = vpop.permute.xlu0 %5299
      %5301 = vrot.lane.b32.xlu0 %v4628, 40
      %v5302 = vpop.permute.xlu0 %5301
      %5303 = vrot.lane.b32.xlu0 %v4629, 40
      %v5304 = vpop.permute.xlu0 %5303
      %5305 = vrot.lane.b32.xlu0 %v4630, 40
      %v5306 = vpop.permute.xlu0 %5305
      %5307 = vrot.lane.b32.xlu0 %v4631, 40
      %v5308 = vpop.permute.xlu0 %5307
      %5309 = vrot.lane.b32.xlu0 %v4632, 40
      %v5310 = vpop.permute.xlu0 %5309
      %5311 = vrot.lane.b32.xlu0 %v4633, 40
      %v5312 = vpop.permute.xlu0 %5311
      %5313 = vrot.lane.b32.xlu0 %v4634, 40
      %v5314 = vpop.permute.xlu0 %5313
      %5315 = vrot.lane.b32.xlu0 %v4635, 40
      %v5316 = vpop.permute.xlu0 %5315
      %5317 = vrot.lane.b32.xlu0 %v4636, 40
      %v5318 = vpop.permute.xlu0 %5317
      %5319 = vrot.lane.b32.xlu0 %v4637, 40
      %v5320 = vpop.permute.xlu0 %5319
      %5321 = vrot.lane.b32.xlu0 %v4638, 40
      %v5322 = vpop.permute.xlu0 %5321
      %5323 = vrot.lane.b32.xlu0 %v4639, 40
      %v5324 = vpop.permute.xlu0 %5323
      %5325 = vrot.lane.b32.xlu0 %v4640, 40
      %v5326 = vpop.permute.xlu0 %5325
      %5327 = vrot.lane.b32.xlu0 %v4641, 40
      %v5328 = vpop.permute.xlu0 %5327
      %5329 = vrot.lane.b32.xlu0 %v4642, 40
      %v5330 = vpop.permute.xlu0 %5329
      %5331 = vrot.lane.b32.xlu0 %v4643, 40
      %v5332 = vpop.permute.xlu0 %5331
      %5333 = vrot.lane.b32.xlu0 %v4644, 40
      %v5334 = vpop.permute.xlu0 %5333
      %5335 = vrot.lane.b32.xlu0 %v4645, 40
      %v5336 = vpop.permute.xlu0 %5335
      %5337 = vrot.lane.b32.xlu0 %v4646, 40
      %v5338 = vpop.permute.xlu0 %5337
      %5339 = vrot.lane.b32.xlu0 %v4647, 40
      %v5340 = vpop.permute.xlu0 %5339
      %5341 = vrot.lane.b32.xlu0 %v4648, 40
      %v5342 = vpop.permute.xlu0 %5341
      %5343 = vrot.lane.b32.xlu0 %v4649, 40
      %v5344 = vpop.permute.xlu0 %5343
      %5345 = vrot.lane.b32.xlu0 %v4650, 40
      %v5346 = vpop.permute.xlu0 %5345
      %5347 = vrot.lane.b32.xlu0 %v4651, 40
      %v5348 = vpop.permute.xlu0 %5347
      %5349 = vrot.lane.b32.xlu0 %v4652, 40
      %v5350 = vpop.permute.xlu0 %5349
      %5351 = vrot.lane.b32.xlu0 %v4653, 40
      %v5352 = vpop.permute.xlu0 %5351
      %5353 = vrot.lane.b32.xlu0 %v4654, 40
      %v5354 = vpop.permute.xlu0 %5353
      %5355 = vrot.lane.b32.xlu0 %v4655, 40
      %v5356 = vpop.permute.xlu0 %5355
      %5357 = vrot.lane.b32.xlu0 %v4656, 40
      %v5358 = vpop.permute.xlu0 %5357
      %5359 = vrot.lane.b32.xlu0 %v4657, 40
      %v5360 = vpop.permute.xlu0 %5359
      %5361 = vrot.lane.b32.xlu0 %v4658, 40
      %v5362 = vpop.permute.xlu0 %5361
      %5427 = vrot.lane.b32.xlu0 %v4659, 48
      %v5428 = vpop.permute.xlu0 %5427
      %5429 = vrot.lane.b32.xlu0 %v4660, 48
      %v5430 = vpop.permute.xlu0 %5429
      %5431 = vrot.lane.b32.xlu0 %v4661, 48
      %v5432 = vpop.permute.xlu0 %5431
      %5433 = vrot.lane.b32.xlu0 %v4662, 48
      %v5434 = vpop.permute.xlu0 %5433
      %5435 = vrot.lane.b32.xlu0 %v4663, 48
      %v5436 = vpop.permute.xlu0 %5435
      %5437 = vrot.lane.b32.xlu0 %v4664, 48
      %v5438 = vpop.permute.xlu0 %5437
      %5439 = vrot.lane.b32.xlu0 %v4665, 48
      %v5440 = vpop.permute.xlu0 %5439
      %5441 = vrot.lane.b32.xlu0 %v4666, 48
      %v5442 = vpop.permute.xlu0 %5441
      %5443 = vrot.lane.b32.xlu0 %v4667, 48
      %v5444 = vpop.permute.xlu0 %5443
      %5445 = vrot.lane.b32.xlu0 %v4668, 48
      %v5446 = vpop.permute.xlu0 %5445
      %5447 = vrot.lane.b32.xlu0 %v4669, 48
      %v5448 = vpop.permute.xlu0 %5447
      %5449 = vrot.lane.b32.xlu0 %v4670, 48
      %v5450 = vpop.permute.xlu0 %5449
      %5451 = vrot.lane.b32.xlu0 %v4671, 48
      %v5452 = vpop.permute.xlu0 %5451
      %5453 = vrot.lane.b32.xlu0 %v4672, 48
      %v5454 = vpop.permute.xlu0 %5453
      %5455 = vrot.lane.b32.xlu0 %v4673, 48
      %v5456 = vpop.permute.xlu0 %5455
      %5457 = vrot.lane.b32.xlu0 %v4674, 48
      %v5458 = vpop.permute.xlu0 %5457
      %5459 = vrot.lane.b32.xlu0 %v4675, 48
      %v5460 = vpop.permute.xlu0 %5459
      %5461 = vrot.lane.b32.xlu0 %v4676, 48
      %v5462 = vpop.permute.xlu0 %5461
      %5463 = vrot.lane.b32.xlu0 %v4677, 48
      %v5464 = vpop.permute.xlu0 %5463
      %5465 = vrot.lane.b32.xlu0 %v4678, 48
      %v5466 = vpop.permute.xlu0 %5465
      %5467 = vrot.lane.b32.xlu0 %v4679, 48
      %v5468 = vpop.permute.xlu0 %5467
      %5469 = vrot.lane.b32.xlu0 %v4680, 48
      %v5470 = vpop.permute.xlu0 %5469
      %5471 = vrot.lane.b32.xlu0 %v4681, 48
      %v5472 = vpop.permute.xlu0 %5471
      %5473 = vrot.lane.b32.xlu0 %v4682, 48
      %v5474 = vpop.permute.xlu0 %5473
      %5475 = vrot.lane.b32.xlu0 %v4683, 48
      %v5476 = vpop.permute.xlu0 %5475
      %5477 = vrot.lane.b32.xlu0 %v4684, 48
      %v5478 = vpop.permute.xlu0 %5477
      %5479 = vrot.lane.b32.xlu0 %v4685, 48
      %v5480 = vpop.permute.xlu0 %5479
      %5481 = vrot.lane.b32.xlu0 %v4686, 48
      %v5482 = vpop.permute.xlu0 %5481
      %5483 = vrot.lane.b32.xlu0 %v4687, 48
      %v5484 = vpop.permute.xlu0 %5483
      %5485 = vrot.lane.b32.xlu0 %v4688, 48
      %v5486 = vpop.permute.xlu0 %5485
      %5487 = vrot.lane.b32.xlu0 %v4689, 48
      %v5488 = vpop.permute.xlu0 %5487
      %5489 = vrot.lane.b32.xlu0 %v4690, 48
      %v5490 = vpop.permute.xlu0 %5489
      %5555 = vrot.lane.b32.xlu0 %v4691, 56
      %v5556 = vpop.permute.xlu0 %5555
      %5557 = vrot.lane.b32.xlu0 %v4692, 56
      %v5558 = vpop.permute.xlu0 %5557
      %5559 = vrot.lane.b32.xlu0 %v4693, 56
      %v5560 = vpop.permute.xlu0 %5559
      %5561 = vrot.lane.b32.xlu0 %v4694, 56
      %v5562 = vpop.permute.xlu0 %5561
      %5563 = vrot.lane.b32.xlu0 %v4695, 56
      %v5564 = vpop.permute.xlu0 %5563
      %5565 = vrot.lane.b32.xlu0 %v4696, 56
      %v5566 = vpop.permute.xlu0 %5565
      %5567 = vrot.lane.b32.xlu0 %v4697, 56
      %v5568 = vpop.permute.xlu0 %5567
      %5569 = vrot.lane.b32.xlu0 %v4698, 56
      %v5570 = vpop.permute.xlu0 %5569
      %5571 = vrot.lane.b32.xlu0 %v4699, 56
      %v5572 = vpop.permute.xlu0 %5571
      %5573 = vrot.lane.b32.xlu0 %v4700, 56
      %v5574 = vpop.permute.xlu0 %5573
      %5575 = vrot.lane.b32.xlu0 %v4701, 56
      %v5576 = vpop.permute.xlu0 %5575
      %5577 = vrot.lane.b32.xlu0 %v4702, 56
      %v5578 = vpop.permute.xlu0 %5577
      %5579 = vrot.lane.b32.xlu0 %v4703, 56
      %v5580 = vpop.permute.xlu0 %5579
      %5581 = vrot.lane.b32.xlu0 %v4704, 56
      %v5582 = vpop.permute.xlu0 %5581
      %5583 = vrot.lane.b32.xlu0 %v4705, 56
      %v5584 = vpop.permute.xlu0 %5583
      %5585 = vrot.lane.b32.xlu0 %v4706, 56
      %v5586 = vpop.permute.xlu0 %5585
      %5587 = vrot.lane.b32.xlu0 %v4707, 56
      %v5588 = vpop.permute.xlu0 %5587
      %5589 = vrot.lane.b32.xlu0 %v4708, 56
      %v5590 = vpop.permute.xlu0 %5589
      %5591 = vrot.lane.b32.xlu0 %v4709, 56
      %v5592 = vpop.permute.xlu0 %5591
      %5593 = vrot.lane.b32.xlu0 %v4710, 56
      %v5594 = vpop.permute.xlu0 %5593
      %5595 = vrot.lane.b32.xlu0 %v4711, 56
      %v5596 = vpop.permute.xlu0 %5595
      %5597 = vrot.lane.b32.xlu0 %v4712, 56
      %v5598 = vpop.permute.xlu0 %5597
      %5599 = vrot.lane.b32.xlu0 %v4713, 56
      %v5600 = vpop.permute.xlu0 %5599
      %5601 = vrot.lane.b32.xlu0 %v4714, 56
      %v5602 = vpop.permute.xlu0 %5601
      %5603 = vrot.lane.b32.xlu0 %v4715, 56
      %v5604 = vpop.permute.xlu0 %5603
      %5605 = vrot.lane.b32.xlu0 %v4716, 56
      %v5606 = vpop.permute.xlu0 %5605
      %5607 = vrot.lane.b32.xlu0 %v4717, 56
      %v5608 = vpop.permute.xlu0 %5607
      %5609 = vrot.lane.b32.xlu0 %v4718, 56
      %v5610 = vpop.permute.xlu0 %5609
      %5611 = vrot.lane.b32.xlu0 %v4719, 56
      %v5612 = vpop.permute.xlu0 %5611
      %5613 = vrot.lane.b32.xlu0 %v4720, 56
      %v5614 = vpop.permute.xlu0 %5613
      %5615 = vrot.lane.b32.xlu0 %v4721, 56
      %v5616 = vpop.permute.xlu0 %5615
      %5617 = vrot.lane.b32.xlu0 %v4722, 56
      %v5618 = vpop.permute.xlu0 %5617
      %5683 = vrot.lane.b32.xlu0 %v4723, 64
      %v5684 = vpop.permute.xlu0 %5683
      %5685 = vrot.lane.b32.xlu0 %v4724, 64
      %v5686 = vpop.permute.xlu0 %5685
      %5687 = vrot.lane.b32.xlu0 %v4725, 64
      %v5688 = vpop.permute.xlu0 %5687
      %5689 = vrot.lane.b32.xlu0 %v4726, 64
      %v5690 = vpop.permute.xlu0 %5689
      %5691 = vrot.lane.b32.xlu0 %v4727, 64
      %v5692 = vpop.permute.xlu0 %5691
      %5693 = vrot.lane.b32.xlu0 %v4728, 64
      %v5694 = vpop.permute.xlu0 %5693
      %5695 = vrot.lane.b32.xlu0 %v4729, 64
      %v5696 = vpop.permute.xlu0 %5695
      %5697 = vrot.lane.b32.xlu0 %v4730, 64
      %v5698 = vpop.permute.xlu0 %5697
      %5699 = vrot.lane.b32.xlu0 %v4731, 64
      %v5700 = vpop.permute.xlu0 %5699
      %5701 = vrot.lane.b32.xlu0 %v4732, 64
      %v5702 = vpop.permute.xlu0 %5701
      %5703 = vrot.lane.b32.xlu0 %v4733, 64
      %v5704 = vpop.permute.xlu0 %5703
      %5705 = vrot.lane.b32.xlu0 %v4734, 64
      %v5706 = vpop.permute.xlu0 %5705
      %5707 = vrot.lane.b32.xlu0 %v4735, 64
      %v5708 = vpop.permute.xlu0 %5707
      %5709 = vrot.lane.b32.xlu0 %v4736, 64
      %v5710 = vpop.permute.xlu0 %5709
      %5711 = vrot.lane.b32.xlu0 %v4737, 64
      %v5712 = vpop.permute.xlu0 %5711
      %5713 = vrot.lane.b32.xlu0 %v4738, 64
      %v5714 = vpop.permute.xlu0 %5713
      %5715 = vrot.lane.b32.xlu0 %v4739, 64
      %v5716 = vpop.permute.xlu0 %5715
      %5717 = vrot.lane.b32.xlu0 %v4740, 64
      %v5718 = vpop.permute.xlu0 %5717
      %5719 = vrot.lane.b32.xlu0 %v4741, 64
      %v5720 = vpop.permute.xlu0 %5719
      %5721 = vrot.lane.b32.xlu0 %v4742, 64
      %v5722 = vpop.permute.xlu0 %5721
      %5723 = vrot.lane.b32.xlu0 %v4743, 64
      %v5724 = vpop.permute.xlu0 %5723
      %5725 = vrot.lane.b32.xlu0 %v4744, 64
      %v5726 = vpop.permute.xlu0 %5725
      %5727 = vrot.lane.b32.xlu0 %v4745, 64
      %v5728 = vpop.permute.xlu0 %5727
      %5729 = vrot.lane.b32.xlu0 %v4746, 64
      %v5730 = vpop.permute.xlu0 %5729
      %5731 = vrot.lane.b32.xlu0 %v4747, 64
      %v5732 = vpop.permute.xlu0 %5731
      %5733 = vrot.lane.b32.xlu0 %v4748, 64
      %v5734 = vpop.permute.xlu0 %5733
      %5735 = vrot.lane.b32.xlu0 %v4749, 64
      %v5736 = vpop.permute.xlu0 %5735
      %5737 = vrot.lane.b32.xlu0 %v4750, 64
      %v5738 = vpop.permute.xlu0 %5737
      %5739 = vrot.lane.b32.xlu0 %v4751, 64
      %v5740 = vpop.permute.xlu0 %5739
      %5741 = vrot.lane.b32.xlu0 %v4752, 64
      %v5742 = vpop.permute.xlu0 %5741
      %5743 = vrot.lane.b32.xlu0 %v4753, 64
      %v5744 = vpop.permute.xlu0 %5743
      %5745 = vrot.lane.b32.xlu0 %v4754, 64
      %v5746 = vpop.permute.xlu0 %5745
      %v5779 = vsel %vm441, %v4467, %v4788
      %v5780 = vsel %vm441, %v4468, %v4790
      %v5781 = vsel %vm441, %v4469, %v4792
      %v5782 = vsel %vm441, %v4470, %v4794
      %v5783 = vsel %vm441, %v4471, %v4796
      %v5784 = vsel %vm441, %v4472, %v4798
      %v5785 = vsel %vm441, %v4473, %v4800
      %v5786 = vsel %vm441, %v4474, %v4802
      %v5787 = vsel %vm441, %v4475, %v4804
      %v5788 = vsel %vm441, %v4476, %v4806
      %v5789 = vsel %vm441, %v4477, %v4808
      %v5790 = vsel %vm441, %v4478, %v4810
      %v5791 = vsel %vm441, %v4479, %v4812
      %v5792 = vsel %vm441, %v4480, %v4814
      %v5793 = vsel %vm441, %v4481, %v4816
      %v5794 = vsel %vm441, %v4482, %v4818
      %v5795 = vsel %vm441, %v4483, %v4820
      %v5796 = vsel %vm441, %v4484, %v4822
      %v5797 = vsel %vm441, %v4485, %v4824
      %v5798 = vsel %vm441, %v4486, %v4826
      %v5799 = vsel %vm441, %v4487, %v4828
      %v5800 = vsel %vm441, %v4488, %v4830
      %v5801 = vsel %vm441, %v4489, %v4832
      %v5802 = vsel %vm441, %v4490, %v4834
      %v5803 = vsel %vm441, %v4491, %v4836
      %v5804 = vsel %vm441, %v4492, %v4838
      %v5805 = vsel %vm441, %v4493, %v4840
      %v5806 = vsel %vm441, %v4494, %v4842
      %v5807 = vsel %vm441, %v4495, %v4844
      %v5808 = vsel %vm441, %v4496, %v4846
      %v5809 = vsel %vm441, %v4497, %v4848
      %v5810 = vsel %vm441, %v4498, %v4850
      %v5811 = vsel %vm1897, %v5779, %v4916
      %v5812 = vsel %vm1897, %v5780, %v4918
      %v5813 = vsel %vm1897, %v5781, %v4920
      %v5814 = vsel %vm1897, %v5782, %v4922
      %v5815 = vsel %vm1897, %v5783, %v4924
      %v5816 = vsel %vm1897, %v5784, %v4926
      %v5817 = vsel %vm1897, %v5785, %v4928
      %v5818 = vsel %vm1897, %v5786, %v4930
      %v5819 = vsel %vm1897, %v5787, %v4932
      %v5820 = vsel %vm1897, %v5788, %v4934
      %v5821 = vsel %vm1897, %v5789, %v4936
      %v5822 = vsel %vm1897, %v5790, %v4938
      %v5823 = vsel %vm1897, %v5791, %v4940
      %v5824 = vsel %vm1897, %v5792, %v4942
      %v5825 = vsel %vm1897, %v5793, %v4944
      %v5826 = vsel %vm1897, %v5794, %v4946
      %v5827 = vsel %vm1897, %v5795, %v4948
      %v5828 = vsel %vm1897, %v5796, %v4950
      %v5829 = vsel %vm1897, %v5797, %v4952
      %v5830 = vsel %vm1897, %v5798, %v4954
      %v5831 = vsel %vm1897, %v5799, %v4956
      %v5832 = vsel %vm1897, %v5800, %v4958
      %v5833 = vsel %vm1897, %v5801, %v4960
      %v5834 = vsel %vm1897, %v5802, %v4962
      %v5835 = vsel %vm1897, %v5803, %v4964
      %v5836 = vsel %vm1897, %v5804, %v4966
      %v5837 = vsel %vm1897, %v5805, %v4968
      %v5838 = vsel %vm1897, %v5806, %v4970
      %v5839 = vsel %vm1897, %v5807, %v4972
      %v5840 = vsel %vm1897, %v5808, %v4974
      %v5841 = vsel %vm1897, %v5809, %v4976
      %v5842 = vsel %vm1897, %v5810, %v4978
      %v5843 = vsel %vm1930, %v5811, %v5044
      %v5844 = vsel %vm1930, %v5812, %v5046
      %v5845 = vsel %vm1930, %v5813, %v5048
      %v5846 = vsel %vm1930, %v5814, %v5050
      %v5847 = vsel %vm1930, %v5815, %v5052
      %v5848 = vsel %vm1930, %v5816, %v5054
      %v5849 = vsel %vm1930, %v5817, %v5056
      %v5850 = vsel %vm1930, %v5818, %v5058
      %v5851 = vsel %vm1930, %v5819, %v5060
      %v5852 = vsel %vm1930, %v5820, %v5062
      %v5853 = vsel %vm1930, %v5821, %v5064
      %v5854 = vsel %vm1930, %v5822, %v5066
      %v5855 = vsel %vm1930, %v5823, %v5068
      %v5856 = vsel %vm1930, %v5824, %v5070
      %v5857 = vsel %vm1930, %v5825, %v5072
      %v5858 = vsel %vm1930, %v5826, %v5074
      %v5859 = vsel %vm1930, %v5827, %v5076
      %v5860 = vsel %vm1930, %v5828, %v5078
      %v5861 = vsel %vm1930, %v5829, %v5080
      %v5862 = vsel %vm1930, %v5830, %v5082
      %v5863 = vsel %vm1930, %v5831, %v5084
      %v5864 = vsel %vm1930, %v5832, %v5086
      %v5865 = vsel %vm1930, %v5833, %v5088
      %v5866 = vsel %vm1930, %v5834, %v5090
      %v5867 = vsel %vm1930, %v5835, %v5092
      %v5868 = vsel %vm1930, %v5836, %v5094
      %v5869 = vsel %vm1930, %v5837, %v5096
      %v5870 = vsel %vm1930, %v5838, %v5098
      %v5871 = vsel %vm1930, %v5839, %v5100
      %v5872 = vsel %vm1930, %v5840, %v5102
      %v5873 = vsel %vm1930, %v5841, %v5104
      %v5874 = vsel %vm1930, %v5842, %v5106
      %v5875 = vsel %vm1963, %v5843, %v5172
      %v5876 = vsel %vm1963, %v5844, %v5174
      %v5877 = vsel %vm1963, %v5845, %v5176
      %v5878 = vsel %vm1963, %v5846, %v5178
      %v5879 = vsel %vm1963, %v5847, %v5180
      %v5880 = vsel %vm1963, %v5848, %v5182
      %v5881 = vsel %vm1963, %v5849, %v5184
      %v5882 = vsel %vm1963, %v5850, %v5186
      %v5883 = vsel %vm1963, %v5851, %v5188
      %v5884 = vsel %vm1963, %v5852, %v5190
      %v5885 = vsel %vm1963, %v5853, %v5192
      %v5886 = vsel %vm1963, %v5854, %v5194
      %v5887 = vsel %vm1963, %v5855, %v5196
      %v5888 = vsel %vm1963, %v5856, %v5198
      %v5889 = vsel %vm1963, %v5857, %v5200
      %v5890 = vsel %vm1963, %v5858, %v5202
      %v5891 = vsel %vm1963, %v5859, %v5204
      %v5892 = vsel %vm1963, %v5860, %v5206
      %v5893 = vsel %vm1963, %v5861, %v5208
      %v5894 = vsel %vm1963, %v5862, %v5210
      %v5895 = vsel %vm1963, %v5863, %v5212
      %v5896 = vsel %vm1963, %v5864, %v5214
      %v5897 = vsel %vm1963, %v5865, %v5216
      %v5898 = vsel %vm1963, %v5866, %v5218
      %v5899 = vsel %vm1963, %v5867, %v5220
      %v5900 = vsel %vm1963, %v5868, %v5222
      %v5901 = vsel %vm1963, %v5869, %v5224
      %v5902 = vsel %vm1963, %v5870, %v5226
      %v5903 = vsel %vm1963, %v5871, %v5228
      %v5904 = vsel %vm1963, %v5872, %v5230
      %v5905 = vsel %vm1963, %v5873, %v5232
      %v5906 = vsel %vm1963, %v5874, %v5234
      %v5907 = vsel %vm1996, %v5875, %v5300
      %v5908 = vsel %vm1996, %v5876, %v5302
      %v5909 = vsel %vm1996, %v5877, %v5304
      %v5910 = vsel %vm1996, %v5878, %v5306
      %v5911 = vsel %vm1996, %v5879, %v5308
      %v5912 = vsel %vm1996, %v5880, %v5310
      %v5913 = vsel %vm1996, %v5881, %v5312
      %v5914 = vsel %vm1996, %v5882, %v5314
      %v5915 = vsel %vm1996, %v5883, %v5316
      %v5916 = vsel %vm1996, %v5884, %v5318
      %v5917 = vsel %vm1996, %v5885, %v5320
      %v5918 = vsel %vm1996, %v5886, %v5322
      %v5919 = vsel %vm1996, %v5887, %v5324
      %v5920 = vsel %vm1996, %v5888, %v5326
      %v5921 = vsel %vm1996, %v5889, %v5328
      %v5922 = vsel %vm1996, %v5890, %v5330
      %v5923 = vsel %vm1996, %v5891, %v5332
      %v5924 = vsel %vm1996, %v5892, %v5334
      %v5925 = vsel %vm1996, %v5893, %v5336
      %v5926 = vsel %vm1996, %v5894, %v5338
      %v5927 = vsel %vm1996, %v5895, %v5340
      %v5928 = vsel %vm1996, %v5896, %v5342
      %v5929 = vsel %vm1996, %v5897, %v5344
      %v5930 = vsel %vm1996, %v5898, %v5346
      %v5931 = vsel %vm1996, %v5899, %v5348
      %v5932 = vsel %vm1996, %v5900, %v5350
      %v5933 = vsel %vm1996, %v5901, %v5352
      %v5934 = vsel %vm1996, %v5902, %v5354
      %v5935 = vsel %vm1996, %v5903, %v5356
      %v5936 = vsel %vm1996, %v5904, %v5358
      %v5937 = vsel %vm1996, %v5905, %v5360
      %v5938 = vsel %vm1996, %v5906, %v5362
      %v5939 = vsel %vm2029, %v5907, %v5428
      %v5940 = vsel %vm2029, %v5908, %v5430
      %v5941 = vsel %vm2029, %v5909, %v5432
      %v5942 = vsel %vm2029, %v5910, %v5434
      %v5943 = vsel %vm2029, %v5911, %v5436
      %v5944 = vsel %vm2029, %v5912, %v5438
      %v5945 = vsel %vm2029, %v5913, %v5440
      %v5946 = vsel %vm2029, %v5914, %v5442
      %v5947 = vsel %vm2029, %v5915, %v5444
      %v5948 = vsel %vm2029, %v5916, %v5446
      %v5949 = vsel %vm2029, %v5917, %v5448
      %v5950 = vsel %vm2029, %v5918, %v5450
      %v5951 = vsel %vm2029, %v5919, %v5452
      %v5952 = vsel %vm2029, %v5920, %v5454
      %v5953 = vsel %vm2029, %v5921, %v5456
      %v5954 = vsel %vm2029, %v5922, %v5458
      %v5955 = vsel %vm2029, %v5923, %v5460
      %v5956 = vsel %vm2029, %v5924, %v5462
      %v5957 = vsel %vm2029, %v5925, %v5464
      %v5958 = vsel %vm2029, %v5926, %v5466
      %v5959 = vsel %vm2029, %v5927, %v5468
      %v5960 = vsel %vm2029, %v5928, %v5470
      %v5961 = vsel %vm2029, %v5929, %v5472
      %v5962 = vsel %vm2029, %v5930, %v5474
      %v5963 = vsel %vm2029, %v5931, %v5476
      %v5964 = vsel %vm2029, %v5932, %v5478
      %v5965 = vsel %vm2029, %v5933, %v5480
      %v5966 = vsel %vm2029, %v5934, %v5482
      %v5967 = vsel %vm2029, %v5935, %v5484
      %v5968 = vsel %vm2029, %v5936, %v5486
      %v5969 = vsel %vm2029, %v5937, %v5488
      %v5970 = vsel %vm2029, %v5938, %v5490
      %v5971 = vsel %vm2062, %v5939, %v5556
      %v5972 = vsel %vm2062, %v5940, %v5558
      %v5973 = vsel %vm2062, %v5941, %v5560
      %v5974 = vsel %vm2062, %v5942, %v5562
      %v5975 = vsel %vm2062, %v5943, %v5564
      %v5976 = vsel %vm2062, %v5944, %v5566
      %v5977 = vsel %vm2062, %v5945, %v5568
      %v5978 = vsel %vm2062, %v5946, %v5570
      %v5979 = vsel %vm2062, %v5947, %v5572
      %v5980 = vsel %vm2062, %v5948, %v5574
      %v5981 = vsel %vm2062, %v5949, %v5576
      %v5982 = vsel %vm2062, %v5950, %v5578
      %v5983 = vsel %vm2062, %v5951, %v5580
      %v5984 = vsel %vm2062, %v5952, %v5582
      %v5985 = vsel %vm2062, %v5953, %v5584
      %v5986 = vsel %vm2062, %v5954, %v5586
      %v5987 = vsel %vm2062, %v5955, %v5588
      %v5988 = vsel %vm2062, %v5956, %v5590
      %v5989 = vsel %vm2062, %v5957, %v5592
      %v5990 = vsel %vm2062, %v5958, %v5594
      %v5991 = vsel %vm2062, %v5959, %v5596
      %v5992 = vsel %vm2062, %v5960, %v5598
      %v5993 = vsel %vm2062, %v5961, %v5600
      %v5994 = vsel %vm2062, %v5962, %v5602
      %v5995 = vsel %vm2062, %v5963, %v5604
      %v5996 = vsel %vm2062, %v5964, %v5606
      %v5997 = vsel %vm2062, %v5965, %v5608
      %v5998 = vsel %vm2062, %v5966, %v5610
      %v5999 = vsel %vm2062, %v5967, %v5612
      %v6000 = vsel %vm2062, %v5968, %v5614
      %v6001 = vsel %vm2062, %v5969, %v5616
      %v6002 = vsel %vm2062, %v5970, %v5618
      %v6003 = vsel %vm2095, %v5971, %v5684
      %v6004 = vsel %vm2095, %v5972, %v5686
      %v6005 = vsel %vm2095, %v5973, %v5688
      %v6006 = vsel %vm2095, %v5974, %v5690
      %v6007 = vsel %vm2095, %v5975, %v5692
      %v6008 = vsel %vm2095, %v5976, %v5694
      %v6009 = vsel %vm2095, %v5977, %v5696
      %v6010 = vsel %vm2095, %v5978, %v5698
      %v6011 = vsel %vm2095, %v5979, %v5700
      %v6012 = vsel %vm2095, %v5980, %v5702
      %v6013 = vsel %vm2095, %v5981, %v5704
      %v6014 = vsel %vm2095, %v5982, %v5706
      %v6015 = vsel %vm2095, %v5983, %v5708
      %v6016 = vsel %vm2095, %v5984, %v5710
      %v6017 = vsel %vm2095, %v5985, %v5712
      %v6018 = vsel %vm2095, %v5986, %v5714
      %v6019 = vsel %vm2095, %v5987, %v5716
      %v6020 = vsel %vm2095, %v5988, %v5718
      %v6021 = vsel %vm2095, %v5989, %v5720
      %v6022 = vsel %vm2095, %v5990, %v5722
      %v6023 = vsel %vm2095, %v5991, %v5724
      %v6024 = vsel %vm2095, %v5992, %v5726
      %v6025 = vsel %vm2095, %v5993, %v5728
      %v6026 = vsel %vm2095, %v5994, %v5730
      %v6027 = vsel %vm2095, %v5995, %v5732
      %v6028 = vsel %vm2095, %v5996, %v5734
      %v6029 = vsel %vm2095, %v5997, %v5736
      %v6030 = vsel %vm2095, %v5998, %v5738
      %v6031 = vsel %vm2095, %v5999, %v5740
      %v6032 = vsel %vm2095, %v6000, %v5742
      %v6033 = vsel %vm2095, %v6001, %v5744
      %v6034 = vsel %vm2095, %v6002, %v5746
      %v6035 = vld [vmem:[%s5] sm:$0xff]
      %v6036 = vld [vmem:[%s5 + $0x8] sm:$0xff]
      %v6037 = vld [vmem:[%s5 + $0x10] sm:$0xff]
      %v6038 = vld [vmem:[%s5 + $0x18] sm:$0xff]
      %v6039 = vld [vmem:[%s5 + $0x20] sm:$0xff]
      %v6040 = vld [vmem:[%s5 + $0x28] sm:$0xff]
      %v6041 = vld [vmem:[%s5 + $0x30] sm:$0xff]
      %v6042 = vld [vmem:[%s5 + $0x38] sm:$0xff]
      %v6043 = vld [vmem:[%s5 + $0x40] sm:$0xff]
      %v6044 = vld [vmem:[%s6] sm:$0x1]
      %v6046 = vlaneseq
      %v6047 = vshrl.u32 %v6046, 7
      %v6048 = vsub.s32 0, %v6047
      %v6049 = vrot.slane %v6044, %v6048
      %v6052 = vsel %vm2144, %v6003, 0
      %v6055 = vsel %vm2144, %v6004, 0
      %v6058 = vsel %vm2144, %v6005, 0
      %v6061 = vsel %vm2144, %v6006, 0
      %v6064 = vsel %vm2144, %v6007, 0
      %v6067 = vsel %vm2144, %v6008, 0
      %v6070 = vsel %vm2144, %v6009, 0
      %v6073 = vsel %vm2144, %v6010, 0
      %v6076 = vsel %vm2144, %v6011, 0
      %v6079 = vsel %vm2144, %v6012, 0
      %v6082 = vsel %vm2144, %v6013, 0
      %v6085 = vsel %vm2144, %v6014, 0
      %v6088 = vsel %vm2144, %v6015, 0
      %v6091 = vsel %vm2144, %v6016, 0
      %v6094 = vsel %vm2144, %v6017, 0
      %v6097 = vsel %vm2144, %v6018, 0
      %v6100 = vsel %vm2144, %v6019, 0
      %v6103 = vsel %vm2144, %v6020, 0
      %v6106 = vsel %vm2144, %v6021, 0
      %v6109 = vsel %vm2144, %v6022, 0
      %v6112 = vsel %vm2144, %v6023, 0
      %v6115 = vsel %vm2144, %v6024, 0
      %v6118 = vsel %vm2144, %v6025, 0
      %v6121 = vsel %vm2144, %v6026, 0
      %v6124 = vsel %vm2144, %v6027, 0
      %v6127 = vsel %vm2144, %v6028, 0
      %v6130 = vsel %vm2144, %v6029, 0
      %v6133 = vsel %vm2144, %v6030, 0
      %v6136 = vsel %vm2144, %v6031, 0
      %v6139 = vsel %vm2144, %v6032, 0
      %v6142 = vsel %vm2144, %v6033, 0
      %v6145 = vsel %vm2144, %v6034, 0
      %6147 = vmatprep.subr.mxu0 0.0
      %6148 = vmatpush1.msra.mxu0 %v6035
      %6149 = vmatprep.subr.mxu0 0.0
      %6150 = vmatpush1.msra.mxu0 %v6036
      %6151 = vmatprep.subr.mxu0 0.0
      %6152 = vmatpush1.msra.mxu0 %v6037
      %6153 = vmatprep.subr.mxu0 0.0
      %6154 = vmatpush1.msra.mxu0 %v6038
      %6155 = vmatprep.subr.mxu0 0.0
      %6156 = vmatpush1.msra.mxu0 %v6039
      %6157 = vmatprep.subr.mxu0 0.0
      %6158 = vmatpush1.msra.mxu0 %v6040
      %6159 = vmatprep.subr.mxu0 0.0
      %6160 = vmatpush1.msra.mxu0 %v6041
      %6161 = vmatprep.subr.mxu0 0.0
      %6162 = vmatpush1.msra.mxu0 %v6042
      %6163 = vmatprep.subr.mxu0 0.0
      %6164 = vmatpush1.msra.mxu0 %v6043
      %6165 = vmatprep.subr.mxu0 0.0
      %6166 = vmatpush1.msra.mxu0 0.0
      %6167 = vmatprep.subr.mxu0 0.0
      %6168 = vmatpush1.msra.mxu0 0.0
      %6169 = vmatprep.subr.mxu0 0.0
      %6170 = vmatpush1.msra.mxu0 0.0
      %6171 = vmatprep.subr.mxu0 0.0
      %6172 = vmatpush1.msra.mxu0 0.0
      %6173 = vmatprep.subr.mxu0 0.0
      %6174 = vmatpush1.msra.mxu0 0.0
      %6175 = vmatprep.subr.mxu0 0.0
      %6176 = vmatpush1.msra.mxu0 0.0
      %6177 = vmatprep.subr.mxu0 0.0
      %6178 = vmatpush1.msra.mxu0 0.0
      %6179 = vmatprep.subr.mxu0 0.0
      %6180 = vmatpush1.msra.mxu0 0.0
      %6181 = vmatprep.subr.mxu0 0.0
      %6182 = vmatpush1.msra.mxu0 0.0
      %6183 = vmatprep.subr.mxu0 0.0
      %6184 = vmatpush1.msra.mxu0 0.0
      %6185 = vmatprep.subr.mxu0 0.0
      %6186 = vmatpush1.msra.mxu0 0.0
      %6187 = vmatprep.subr.mxu0 0.0
      %6188 = vmatpush1.msra.mxu0 0.0
      %6189 = vmatprep.subr.mxu0 0.0
      %6190 = vmatpush1.msra.mxu0 0.0
      %6191 = vmatprep.subr.mxu0 0.0
      %6192 = vmatpush1.msra.mxu0 0.0
      %6193 = vmatprep.subr.mxu0 0.0
      %6194 = vmatpush1.msra.mxu0 0.0
      %6195 = vmatprep.subr.mxu0 0.0
      %6196 = vmatpush1.msra.mxu0 0.0
      %6197 = vmatprep.subr.mxu0 0.0
      %6198 = vmatpush1.msra.mxu0 0.0
      %6199 = vmatprep.subr.mxu0 0.0
      %6200 = vmatpush1.msra.mxu0 0.0
      %6201 = vmatprep.subr.mxu0 0.0
      %6202 = vmatpush1.msra.mxu0 0.0
      %6203 = vmatprep.subr.mxu0 0.0
      %6204 = vmatpush1.msra.mxu0 0.0
      %6205 = vmatprep.subr.mxu0 0.0
      %6206 = vmatpush1.msra.mxu0 0.0
      %6207 = vmatprep.subr.mxu0 0.0
      %6208 = vmatpush1.msra.mxu0 0.0
      %6209 = vmatprep.subr.mxu0 0.0
      %6210 = vmatpush1.msra.mxu0 0.0
      %6211 = vmatprep.mubr.f32.mxu0 0.0
      %6212 = vmatmul.mubr.f32.gmra.mrb[0].mxu0 %v6052
      %v6213 = vpop.f32.mrb[0].mxu0
      %v6214 = vadd.f32 %v6049, %v6213
      %v6215 = vpop.f32.mrb[0].mxu0
      %6216 = vmatprep.mubr.f32.mxu0 0.0
      %6217 = vmatmul.mubr.f32.gmra.mrb[0].mxu0 %v6055
      %v6218 = vpop.f32.mrb[0].mxu0
      %v6219 = vadd.f32 %v6049, %v6218
      %v6220 = vpop.f32.mrb[0].mxu0
      %6221 = vmatprep.mubr.f32.mxu0 0.0
      %6222 = vmatmul.mubr.f32.gmra.mrb[0].mxu0 %v6058
      %v6223 = vpop.f32.mrb[0].mxu0
      %v6224 = vadd.f32 %v6049, %v6223
      %v6225 = vpop.f32.mrb[0].mxu0
      %6226 = vmatprep.mubr.f32.mxu0 0.0
      %6227 = vmatmul.mubr.f32.gmra.mrb[0].mxu0 %v6061
      %v6228 = vpop.f32.mrb[0].mxu0
      %v6229 = vadd.f32 %v6049, %v6228
      %v6230 = vpop.f32.mrb[0].mxu0
      %6231 = vmatprep.mubr.f32.mxu0 0.0
      %6232 = vmatmul.mubr.f32.gmra.mrb[0].mxu0 %v6064
      %v6233 = vpop.f32.mrb[0].mxu0
      %v6234 = vadd.f32 %v6049, %v6233
      %v6235 = vpop.f32.mrb[0].mxu0
      %6236 = vmatprep.mubr.f32.mxu0 0.0
      %6237 = vmatmul.mubr.f32.gmra.mrb[0].mxu0 %v6067
      %v6238 = vpop.f32.mrb[0].mxu0
      %v6239 = vadd.f32 %v6049, %v6238
      %v6240 = vpop.f32.mrb[0].mxu0
      %6241 = vmatprep.mubr.f32.mxu0 0.0
      %6242 = vmatmul.mubr.f32.gmra.mrb[0].mxu0 %v6070
      %v6243 = vpop.f32.mrb[0].mxu0
      %v6244 = vadd.f32 %v6049, %v6243
      %v6245 = vpop.f32.mrb[0].mxu0
      %6246 = vmatprep.mubr.f32.mxu0 0.0
      %6247 = vmatmul.mubr.f32.gmra.mrb[0].mxu0 %v6073
      %v6248 = vpop.f32.mrb[0].mxu0
      %v6249 = vadd.f32 %v6049, %v6248
      %v6250 = vpop.f32.mrb[0].mxu0
      %6251 = vmatprep.mubr.f32.mxu0 0.0
      %6252 = vmatmul.mubr.f32.gmra.mrb[0].mxu0 %v6076
      %v6253 = vpop.f32.mrb[0].mxu0
      %v6254 = vadd.f32 %v6049, %v6253
      %v6255 = vpop.f32.mrb[0].mxu0
      %6256 = vmatprep.mubr.f32.mxu0 0.0
      %6257 = vmatmul.mubr.f32.gmra.mrb[0].mxu0 %v6079
      %v6258 = vpop.f32.mrb[0].mxu0
      %v6259 = vadd.f32 %v6049, %v6258
      %v6260 = vpop.f32.mrb[0].mxu0
      %6261 = vmatprep.mubr.f32.mxu0 0.0
      %6262 = vmatmul.mubr.f32.gmra.mrb[0].mxu0 %v6082
      %v6263 = vpop.f32.mrb[0].mxu0
      %v6264 = vadd.f32 %v6049, %v6263
      %v6265 = vpop.f32.mrb[0].mxu0
      %6266 = vmatprep.mubr.f32.mxu0 0.0
      %6267 = vmatmul.mubr.f32.gmra.mrb[0].mxu0 %v6085
      %v6268 = vpop.f32.mrb[0].mxu0
      %v6269 = vadd.f32 %v6049, %v6268
      %v6270 = vpop.f32.mrb[0].mxu0
      %6271 = vmatprep.mubr.f32.mxu0 0.0
      %6272 = vmatmul.mubr.f32.gmra.mrb[0].mxu0 %v6088
      %v6273 = vpop.f32.mrb[0].mxu0
      %v6274 = vadd.f32 %v6049, %v6273
      %v6275 = vpop.f32.mrb[0].mxu0
      %6276 = vmatprep.mubr.f32.mxu0 0.0
      %6277 = vmatmul.mubr.f32.gmra.mrb[0].mxu0 %v6091
      %v6278 = vpop.f32.mrb[0].mxu0
      %v6279 = vadd.f32 %v6049, %v6278
      %v6280 = vpop.f32.mrb[0].mxu0
      %6281 = vmatprep.mubr.f32.mxu0 0.0
      %6282 = vmatmul.mubr.f32.gmra.mrb[0].mxu0 %v6094
      %v6283 = vpop.f32.mrb[0].mxu0
      %v6284 = vadd.f32 %v6049, %v6283
      %v6285 = vpop.f32.mrb[0].mxu0
      %6286 = vmatprep.mubr.f32.mxu0 0.0
      %6287 = vmatmul.mubr.f32.gmra.mrb[0].mxu0 %v6097
      %v6288 = vpop.f32.mrb[0].mxu0
      %v6289 = vadd.f32 %v6049, %v6288
      %v6290 = vpop.f32.mrb[0].mxu0
      %6291 = vmatprep.mubr.f32.mxu0 0.0
      %6292 = vmatmul.mubr.f32.gmra.mrb[0].mxu0 %v6100
      %v6293 = vpop.f32.mrb[0].mxu0
      %v6294 = vadd.f32 %v6049, %v6293
      %v6295 = vpop.f32.mrb[0].mxu0
      %6296 = vmatprep.mubr.f32.mxu0 0.0
      %6297 = vmatmul.mubr.f32.gmra.mrb[0].mxu0 %v6103
      %v6298 = vpop.f32.mrb[0].mxu0
      %v6299 = vadd.f32 %v6049, %v6298
      %v6300 = vpop.f32.mrb[0].mxu0
      %6301 = vmatprep.mubr.f32.mxu0 0.0
      %6302 = vmatmul.mubr.f32.gmra.mrb[0].mxu0 %v6106
      %v6303 = vpop.f32.mrb[0].mxu0
      %v6304 = vadd.f32 %v6049, %v6303
      %v6305 = vpop.f32.mrb[0].mxu0
      %6306 = vmatprep.mubr.f32.mxu0 0.0
      %6307 = vmatmul.mubr.f32.gmra.mrb[0].mxu0 %v6109
      %v6308 = vpop.f32.mrb[0].mxu0
      %v6309 = vadd.f32 %v6049, %v6308
      %v6310 = vpop.f32.mrb[0].mxu0
      %6311 = vmatprep.mubr.f32.mxu0 0.0
      %6312 = vmatmul.mubr.f32.gmra.mrb[0].mxu0 %v6112
      %v6313 = vpop.f32.mrb[0].mxu0
      %v6314 = vadd.f32 %v6049, %v6313
      %v6315 = vpop.f32.mrb[0].mxu0
      %6316 = vmatprep.mubr.f32.mxu0 0.0
      %6317 = vmatmul.mubr.f32.gmra.mrb[0].mxu0 %v6115
      %v6318 = vpop.f32.mrb[0].mxu0
      %v6319 = vadd.f32 %v6049, %v6318
      %v6320 = vpop.f32.mrb[0].mxu0
      %6321 = vmatprep.mubr.f32.mxu0 0.0
      %6322 = vmatmul.mubr.f32.gmra.mrb[0].mxu0 %v6118
      %v6323 = vpop.f32.mrb[0].mxu0
      %v6324 = vadd.f32 %v6049, %v6323
      %v6325 = vpop.f32.mrb[0].mxu0
      %6326 = vmatprep.mubr.f32.mxu0 0.0
      %6327 = vmatmul.mubr.f32.gmra.mrb[0].mxu0 %v6121
      %v6328 = vpop.f32.mrb[0].mxu0
      %v6329 = vadd.f32 %v6049, %v6328
      %v6330 = vpop.f32.mrb[0].mxu0
      %6331 = vmatprep.mubr.f32.mxu0 0.0
      %6332 = vmatmul.mubr.f32.gmra.mrb[0].mxu0 %v6124
      %v6333 = vpop.f32.mrb[0].mxu0
      %v6334 = vadd.f32 %v6049, %v6333
      %v6335 = vpop.f32.mrb[0].mxu0
      %6336 = vmatprep.mubr.f32.mxu0 0.0
      %6337 = vmatmul.mubr.f32.gmra.mrb[0].mxu0 %v6127
      %v6338 = vpop.f32.mrb[0].mxu0
      %v6339 = vadd.f32 %v6049, %v6338
      %v6340 = vpop.f32.mrb[0].mxu0
      %6341 = vmatprep.mubr.f32.mxu0 0.0
      %6342 = vmatmul.mubr.f32.gmra.mrb[0].mxu0 %v6130
      %v6343 = vpop.f32.mrb[0].mxu0
      %v6344 = vadd.f32 %v6049, %v6343
      %v6345 = vpop.f32.mrb[0].mxu0
      %6346 = vmatprep.mubr.f32.mxu0 0.0
      %6347 = vmatmul.mubr.f32.gmra.mrb[0].mxu0 %v6133
      %v6348 = vpop.f32.mrb[0].mxu0
      %v6349 = vadd.f32 %v6049, %v6348
      %v6350 = vpop.f32.mrb[0].mxu0
      %6351 = vmatprep.mubr.f32.mxu0 0.0
      %6352 = vmatmul.mubr.f32.gmra.mrb[0].mxu0 %v6136
      %v6353 = vpop.f32.mrb[0].mxu0
      %v6354 = vadd.f32 %v6049, %v6353
      %v6355 = vpop.f32.mrb[0].mxu0
      %6356 = vmatprep.mubr.f32.mxu0 0.0
      %6357 = vmatmul.mubr.f32.gmra.mrb[0].mxu0 %v6139
      %v6358 = vpop.f32.mrb[0].mxu0
      %v6359 = vadd.f32 %v6049, %v6358
      %v6360 = vpop.f32.mrb[0].mxu0
      %6361 = vmatprep.mubr.f32.mxu0 0.0
      %6362 = vmatmul.mubr.f32.gmra.mrb[0].mxu0 %v6142
      %v6363 = vpop.f32.mrb[0].mxu0
      %v6364 = vadd.f32 %v6049, %v6363
      %v6365 = vpop.f32.mrb[0].mxu0
      %6366 = vmatprep.mubr.f32.mxu0 0.0
      %6367 = vmatmul.mubr.f32.gmra.mrb[0].mxu0 %v6145
      %v6368 = vpop.f32.mrb[0].mxu0
      %v6369 = vadd.f32 %v6049, %v6368
      %v6370 = vpop.f32.mrb[0].mxu0
      %6371 = vdwg.mxu0
      %v6372 = vsel %vm441, %v6214, 0.0
      %v6373 = vsel %vm441, %v6219, 0.0
      %v6374 = vadd.f32 %v6372, %v6373
      %v6375 = vsel %vm441, %v6224, 0.0
      %v6376 = vadd.f32 %v6374, %v6375
      %v6377 = vsel %vm441, %v6229, 0.0
      %v6378 = vadd.f32 %v6376, %v6377
      %v6379 = vsel %vm441, %v6234, 0.0
      %v6380 = vadd.f32 %v6378, %v6379
      %v6381 = vsel %vm441, %v6239, 0.0
      %v6382 = vadd.f32 %v6380, %v6381
      %v6383 = vsel %vm441, %v6244, 0.0
      %v6384 = vadd.f32 %v6382, %v6383
      %v6385 = vsel %vm441, %v6249, 0.0
      %v6386 = vadd.f32 %v6384, %v6385
      %v6387 = vsel %vm441, %v6254, 0.0
      %v6388 = vadd.f32 %v6386, %v6387
      %v6389 = vsel %vm441, %v6259, 0.0
      %v6390 = vadd.f32 %v6388, %v6389
      %v6391 = vsel %vm441, %v6264, 0.0
      %v6392 = vadd.f32 %v6390, %v6391
      %v6393 = vsel %vm441, %v6269, 0.0
      %v6394 = vadd.f32 %v6392, %v6393
      %v6395 = vsel %vm441, %v6274, 0.0
      %v6396 = vadd.f32 %v6394, %v6395
      %v6397 = vsel %vm441, %v6279, 0.0
      %v6398 = vadd.f32 %v6396, %v6397
      %v6399 = vsel %vm441, %v6284, 0.0
      %v6400 = vadd.f32 %v6398, %v6399
      %v6401 = vsel %vm441, %v6289, 0.0
      %v6402 = vadd.f32 %v6400, %v6401
      %v6403 = vsel %vm441, %v6294, 0.0
      %v6404 = vadd.f32 %v6402, %v6403
      %v6405 = vsel %vm441, %v6299, 0.0
      %v6406 = vadd.f32 %v6404, %v6405
      %v6407 = vsel %vm441, %v6304, 0.0
      %v6408 = vadd.f32 %v6406, %v6407
      %v6409 = vsel %vm441, %v6309, 0.0
      %v6410 = vadd.f32 %v6408, %v6409
      %v6411 = vsel %vm441, %v6314, 0.0
      %v6412 = vadd.f32 %v6410, %v6411
      %v6413 = vsel %vm441, %v6319, 0.0
      %v6414 = vadd.f32 %v6412, %v6413
      %v6415 = vsel %vm441, %v6324, 0.0
      %v6416 = vadd.f32 %v6414, %v6415
      %v6417 = vsel %vm441, %v6329, 0.0
      %v6418 = vadd.f32 %v6416, %v6417
      %v6419 = vsel %vm441, %v6334, 0.0
      %v6420 = vadd.f32 %v6418, %v6419
      %v6421 = vsel %vm441, %v6339, 0.0
      %v6422 = vadd.f32 %v6420, %v6421
      %v6423 = vsel %vm441, %v6344, 0.0
      %v6424 = vadd.f32 %v6422, %v6423
      %v6425 = vsel %vm441, %v6349, 0.0
      %v6426 = vadd.f32 %v6424, %v6425
      %v6427 = vsel %vm441, %v6354, 0.0
      %v6428 = vadd.f32 %v6426, %v6427
      %v6429 = vsel %vm441, %v6359, 0.0
      %v6430 = vadd.f32 %v6428, %v6429
      %v6431 = vsel %vm441, %v6364, 0.0
      %v6432 = vadd.f32 %v6430, %v6431
      %v6433 = vsel %vm441, %v6369, 0.0
      %v6434 = vadd.f32 %v6432, %v6433
      %v6435 = vrot.slane %v6434, 4
      %v6436 = vadd.f32 %v6434, %v6435
      %v6437 = vrot.slane %v6436, 2
      %v6438 = vadd.f32 %v6436, %v6437
      %v6439 = vrot.slane %v6438, 1
      %v6440 = vadd.f32 %v6438, %v6439
      %v6441 = vmul.f32 %v6440, 0.00390625
      %v6442 = vld [vmem:[%s7] sm:$0x3]
      %v6443 = vmul.f32 %v6442, %v6441
      %v6444 = vsel %vm444, %v6443, 0.0
      %6445 = vadd.xlane.f32.xlu0 %v6444
      %v6446 = vpop.xlane.xlu0 %6445
      %v6447 = vld [vmem:[%s8] sm:$0x3]
      %v6448 = vadd.f32 %v6446, %v6447
      %v6449 = vmax.f32 %v6448, 0.0
      %v6450 = vld [vmem:[%s9] sm:$0x3]
      %6452 = vset.pattern.permute.xlu0 0
      %6453 = vperm.xlu0 %6452, %v6449
      %v6454 = vpop.permute.xlu0 %6453
      %v6456 = vmul.f32 %v6454, %v6450
      %v6457 = vsel %vm444, %v6456, 0.0
      %v6458 = vrot.slane %v6457, 4
      %v6459 = vadd.f32 %v6457, %v6458
      %v6460 = vrot.slane %v6459, 2
      %v6461 = vadd.f32 %v6459, %v6460
      %v6462 = vrot.slane %v6461, 1
      %v6463 = vadd.f32 %v6461, %v6462
      %v6464 = vld [vmem:[%s10] sm:$0x1]
      %v6465 = vadd.f32 %v6463, %v6464
      %v6466 = vsub.f32 0.0, %v6465
      %v6467 = vmul.f32 %v6466, 1.442695
      %v6468 = vpow.pop %v6467
      %v6469 = vadd.f32 %v6468, 1.0
      %v6470 = vrcp.pop %v6469
      %v6471 = vmul.f32 1.0, %v6470
      %v6472 = vmul.f32 %v6471, %v6441
      %v6473 = vlaneseq
      %v6474 = vshrl.u32 %v6473, 7
      %v6475 = vsub.s32 0, %v6474
      %v6476 = vrot.slane %v6472, %v6475
      %v6477 = vadd.f32 %v2308, %v6476
      %v6478 = vadd.f32 %v2313, %v6476
      %v6479 = vadd.f32 %v2318, %v6476
      %v6480 = vadd.f32 %v2323, %v6476
      %v6481 = vadd.f32 %v2328, %v6476
      %v6482 = vadd.f32 %v2333, %v6476
      %v6483 = vadd.f32 %v2338, %v6476
      %v6484 = vadd.f32 %v2343, %v6476
      %v6485 = vadd.f32 %v2348, %v6476
      %v6486 = vadd.f32 %v2353, %v6476
      %v6487 = vadd.f32 %v2358, %v6476
      %v6488 = vadd.f32 %v2363, %v6476
      %v6489 = vadd.f32 %v2368, %v6476
      %v6490 = vadd.f32 %v2373, %v6476
      %v6491 = vadd.f32 %v2378, %v6476
      %v6492 = vadd.f32 %v2383, %v6476
      %v6493 = vadd.f32 %v2388, %v6476
      %v6494 = vadd.f32 %v2393, %v6476
      %v6495 = vadd.f32 %v2398, %v6476
      %v6496 = vadd.f32 %v2403, %v6476
      %v6497 = vadd.f32 %v2408, %v6476
      %v6498 = vadd.f32 %v2413, %v6476
      %v6499 = vadd.f32 %v2418, %v6476
      %v6500 = vadd.f32 %v2423, %v6476
      %v6501 = vadd.f32 %v2428, %v6476
      %v6502 = vadd.f32 %v2433, %v6476
      %v6503 = vadd.f32 %v2438, %v6476
      %v6504 = vadd.f32 %v2443, %v6476
      %v6505 = vadd.f32 %v2448, %v6476
      %v6506 = vadd.f32 %v2453, %v6476
      %v6507 = vadd.f32 %v2458, %v6476
      %v6508 = vadd.f32 %v2463, %v6476
      %6509 = vst.msk [vmem:[%s519 + $0x1] sm:$0xff] %vm441, %v6477
      %6510 = vst.msk [vmem:[%s519 + $0x9] sm:$0xff] %vm441, %v6478
      %6511 = vst.msk [vmem:[%s519 + $0x19] sm:$0xff] %vm441, %v6479
      %6512 = vst.msk [vmem:[%s519 + $0x21] sm:$0xff] %vm441, %v6480
      %6513 = vst.msk [vmem:[%s519 + $0x31] sm:$0xff] %vm441, %v6481
      %6514 = vst.msk [vmem:[%s519 + $0x39] sm:$0xff] %vm441, %v6482
      %6515 = vst.msk [vmem:[%s519 + $0x49] sm:$0xff] %vm441, %v6483
      %6516 = vst.msk [vmem:[%s519 + $0x51] sm:$0xff] %vm441, %v6484
      %6517 = vst.msk [vmem:[%s519 + $0x61] sm:$0xff] %vm441, %v6485
      %6518 = vst.msk [vmem:[%s519 + $0x69] sm:$0xff] %vm441, %v6486
      %6519 = vst.msk [vmem:[%s519 + $0x79] sm:$0xff] %vm441, %v6487
      %6520 = vst.msk [vmem:[%s519 + $0x81] sm:$0xff] %vm441, %v6488
      %6521 = vst.msk [vmem:[%s519 + $0x91] sm:$0xff] %vm441, %v6489
      %6522 = vst.msk [vmem:[%s519 + $0x99] sm:$0xff] %vm441, %v6490
      %6523 = vst.msk [vmem:[%s519 + $0xa9] sm:$0xff] %vm441, %v6491
      %6524 = vst.msk [vmem:[%s519 + $0xb1] sm:$0xff] %vm441, %v6492
      %6525 = vst.msk [vmem:[%s519 + $0xc1] sm:$0xff] %vm441, %v6493
      %6526 = vst.msk [vmem:[%s519 + $0xc9] sm:$0xff] %vm441, %v6494
      %6527 = vst.msk [vmem:[%s519 + $0xd9] sm:$0xff] %vm441, %v6495
      %6528 = vst.msk [vmem:[%s519 + $0xe1] sm:$0xff] %vm441, %v6496
      %6529 = vst.msk [vmem:[%s519 + $0xf1] sm:$0xff] %vm441, %v6497
      %6530 = vst.msk [vmem:[%s519 + $0xf9] sm:$0xff] %vm441, %v6498
      %6531 = vst.msk [vmem:[%s519 + $0x109] sm:$0xff] %vm441, %v6499
      %6532 = vst.msk [vmem:[%s519 + $0x111] sm:$0xff] %vm441, %v6500
      %6533 = vst.msk [vmem:[%s519 + $0x121] sm:$0xff] %vm441, %v6501
      %6534 = vst.msk [vmem:[%s519 + $0x129] sm:$0xff] %vm441, %v6502
      %6535 = vst.msk [vmem:[%s519 + $0x139] sm:$0xff] %vm441, %v6503
      %6536 = vst.msk [vmem:[%s519 + $0x141] sm:$0xff] %vm441, %v6504
      %6537 = vst.msk [vmem:[%s519 + $0x151] sm:$0xff] %vm441, %v6505
      %6538 = vst.msk [vmem:[%s519 + $0x159] sm:$0xff] %vm441, %v6506
      %6539 = vst.msk [vmem:[%s519 + $0x169] sm:$0xff] %vm441, %v6507
      %6540 = vst.msk [vmem:[%s519 + $0x171] sm:$0xff] %vm441, %v6508
      %v6541 = vld [vmem:[#allocation2] sm:$0xff]
      %v6542 = vld [vmem:[#allocation2 + $0x8] sm:$0xff]
      %v6543 = vld [vmem:[#allocation2 + $0x18] sm:$0xff]
      %v6544 = vld [vmem:[#allocation2 + $0x20] sm:$0xff]
      %v6545 = vld [vmem:[#allocation2 + $0x30] sm:$0xff]
      %v6546 = vld [vmem:[#allocation2 + $0x38] sm:$0xff]
      %v6547 = vld [vmem:[#allocation2 + $0x48] sm:$0xff]
      %v6548 = vld [vmem:[#allocation2 + $0x50] sm:$0xff]
      %v6549 = vld [vmem:[#allocation2 + $0x60] sm:$0xff]
      %v6550 = vld [vmem:[#allocation2 + $0x68] sm:$0xff]
      %v6551 = vld [vmem:[#allocation2 + $0x78] sm:$0xff]
      %v6552 = vld [vmem:[#allocation2 + $0x80] sm:$0xff]
      %v6553 = vld [vmem:[#allocation2 + $0x90] sm:$0xff]
      %v6554 = vld [vmem:[#allocation2 + $0x98] sm:$0xff]
      %v6555 = vld [vmem:[#allocation2 + $0xa8] sm:$0xff]
      %v6556 = vld [vmem:[#allocation2 + $0xb0] sm:$0xff]
      %v6557 = vld [vmem:[#allocation2 + $0xc0] sm:$0xff]
      %v6558 = vld [vmem:[#allocation2 + $0xc8] sm:$0xff]
      %v6559 = vld [vmem:[#allocation2 + $0xd8] sm:$0xff]
      %v6560 = vld [vmem:[#allocation2 + $0xe0] sm:$0xff]
      %v6561 = vld [vmem:[#allocation2 + $0xf0] sm:$0xff]
      %v6562 = vld [vmem:[#allocation2 + $0xf8] sm:$0xff]
      %v6563 = vld [vmem:[#allocation2 + $0x108] sm:$0xff]
      %v6564 = vld [vmem:[#allocation2 + $0x110] sm:$0xff]
      %v6565 = vld [vmem:[#allocation2 + $0x120] sm:$0xff]
      %v6566 = vld [vmem:[#allocation2 + $0x128] sm:$0xff]
      %v6567 = vld [vmem:[#allocation2 + $0x138] sm:$0xff]
      %v6568 = vld [vmem:[#allocation2 + $0x140] sm:$0xff]
      %v6569 = vld [vmem:[#allocation2 + $0x150] sm:$0xff]
      %v6570 = vld [vmem:[#allocation2 + $0x158] sm:$0xff]
      %v6571 = vld [vmem:[#allocation2 + $0x168] sm:$0xff]
      %v6572 = vld [vmem:[#allocation2 + $0x170] sm:$0xff]
      %v6573 = vld [vmem:[#allocation2 + $0x1] sm:$0xff]
      %v6574 = vld [vmem:[#allocation2 + $0x9] sm:$0xff]
      %v6575 = vld [vmem:[#allocation2 + $0x19] sm:$0xff]
      %v6576 = vld [vmem:[#allocation2 + $0x21] sm:$0xff]
      %v6577 = vld [vmem:[#allocation2 + $0x31] sm:$0xff]
      %v6578 = vld [vmem:[#allocation2 + $0x39] sm:$0xff]
      %v6579 = vld [vmem:[#allocation2 + $0x49] sm:$0xff]
      %v6580 = vld [vmem:[#allocation2 + $0x51] sm:$0xff]
      %v6581 = vld [vmem:[#allocation2 + $0x61] sm:$0xff]
      %v6582 = vld [vmem:[#allocation2 + $0x69] sm:$0xff]
      %v6583 = vld [vmem:[#allocation2 + $0x79] sm:$0xff]
      %v6584 = vld [vmem:[#allocation2 + $0x81] sm:$0xff]
      %v6585 = vld [vmem:[#allocation2 + $0x91] sm:$0xff]
      %v6586 = vld [vmem:[#allocation2 + $0x99] sm:$0xff]
      %v6587 = vld [vmem:[#allocation2 + $0xa9] sm:$0xff]
      %v6588 = vld [vmem:[#allocation2 + $0xb1] sm:$0xff]
      %v6589 = vld [vmem:[#allocation2 + $0xc1] sm:$0xff]
      %v6590 = vld [vmem:[#allocation2 + $0xc9] sm:$0xff]
      %v6591 = vld [vmem:[#allocation2 + $0xd9] sm:$0xff]
      %v6592 = vld [vmem:[#allocation2 + $0xe1] sm:$0xff]
      %v6593 = vld [vmem:[#allocation2 + $0xf1] sm:$0xff]
      %v6594 = vld [vmem:[#allocation2 + $0xf9] sm:$0xff]
      %v6595 = vld [vmem:[#allocation2 + $0x109] sm:$0xff]
      %v6596 = vld [vmem:[#allocation2 + $0x111] sm:$0xff]
      %v6597 = vld [vmem:[#allocation2 + $0x121] sm:$0xff]
      %v6598 = vld [vmem:[#allocation2 + $0x129] sm:$0xff]
      %v6599 = vld [vmem:[#allocation2 + $0x139] sm:$0xff]
      %v6600 = vld [vmem:[#allocation2 + $0x141] sm:$0xff]
      %v6601 = vld [vmem:[#allocation2 + $0x151] sm:$0xff]
      %v6602 = vld [vmem:[#allocation2 + $0x159] sm:$0xff]
      %v6603 = vld [vmem:[#allocation2 + $0x169] sm:$0xff]
      %v6604 = vld [vmem:[#allocation2 + $0x171] sm:$0xff]
      %v6605 = vld [vmem:[#allocation2 + $0x2] sm:$0xff]
      %v6606 = vld [vmem:[#allocation2 + $0xa] sm:$0xff]
      %v6607 = vld [vmem:[#allocation2 + $0x1a] sm:$0xff]
      %v6608 = vld [vmem:[#allocation2 + $0x22] sm:$0xff]
      %v6609 = vld [vmem:[#allocation2 + $0x32] sm:$0xff]
      %v6610 = vld [vmem:[#allocation2 + $0x3a] sm:$0xff]
      %v6611 = vld [vmem:[#allocation2 + $0x4a] sm:$0xff]
      %v6612 = vld [vmem:[#allocation2 + $0x52] sm:$0xff]
      %v6613 = vld [vmem:[#allocation2 + $0x62] sm:$0xff]
      %v6614 = vld [vmem:[#allocation2 + $0x6a] sm:$0xff]
      %v6615 = vld [vmem:[#allocation2 + $0x7a] sm:$0xff]
      %v6616 = vld [vmem:[#allocation2 + $0x82] sm:$0xff]
      %v6617 = vld [vmem:[#allocation2 + $0x92] sm:$0xff]
      %v6618 = vld [vmem:[#allocation2 + $0x9a] sm:$0xff]
      %v6619 = vld [vmem:[#allocation2 + $0xaa] sm:$0xff]
      %v6620 = vld [vmem:[#allocation2 + $0xb2] sm:$0xff]
      %v6621 = vld [vmem:[#allocation2 + $0xc2] sm:$0xff]
      %v6622 = vld [vmem:[#allocation2 + $0xca] sm:$0xff]
      %v6623 = vld [vmem:[#allocation2 + $0xda] sm:$0xff]
      %v6624 = vld [vmem:[#allocation2 + $0xe2] sm:$0xff]
      %v6625 = vld [vmem:[#allocation2 + $0xf2] sm:$0xff]
      %v6626 = vld [vmem:[#allocation2 + $0xfa] sm:$0xff]
      %v6627 = vld [vmem:[#allocation2 + $0x10a] sm:$0xff]
      %v6628 = vld [vmem:[#allocation2 + $0x112] sm:$0xff]
      %v6629 = vld [vmem:[#allocation2 + $0x122] sm:$0xff]
      %v6630 = vld [vmem:[#allocation2 + $0x12a] sm:$0xff]
      %v6631 = vld [vmem:[#allocation2 + $0x13a] sm:$0xff]
      %v6632 = vld [vmem:[#allocation2 + $0x142] sm:$0xff]
      %v6633 = vld [vmem:[#allocation2 + $0x152] sm:$0xff]
      %v6634 = vld [vmem:[#allocation2 + $0x15a] sm:$0xff]
      %v6635 = vld [vmem:[#allocation2 + $0x16a] sm:$0xff]
      %v6636 = vld [vmem:[#allocation2 + $0x172] sm:$0xff]
      %v6637 = vld [vmem:[%s519] sm:$0xff]
      %v6638 = vld [vmem:[%s519 + $0x8] sm:$0xff]
      %v6639 = vld [vmem:[%s519 + $0x18] sm:$0xff]
      %v6640 = vld [vmem:[%s519 + $0x20] sm:$0xff]
      %v6641 = vld [vmem:[%s519 + $0x30] sm:$0xff]
      %v6642 = vld [vmem:[%s519 + $0x38] sm:$0xff]
      %v6643 = vld [vmem:[%s519 + $0x48] sm:$0xff]
      %v6644 = vld [vmem:[%s519 + $0x50] sm:$0xff]
      %v6645 = vld [vmem:[%s519 + $0x60] sm:$0xff]
      %v6646 = vld [vmem:[%s519 + $0x68] sm:$0xff]
      %v6647 = vld [vmem:[%s519 + $0x78] sm:$0xff]
      %v6648 = vld [vmem:[%s519 + $0x80] sm:$0xff]
      %v6649 = vld [vmem:[%s519 + $0x90] sm:$0xff]
      %v6650 = vld [vmem:[%s519 + $0x98] sm:$0xff]
      %v6651 = vld [vmem:[%s519 + $0xa8] sm:$0xff]
      %v6652 = vld [vmem:[%s519 + $0xb0] sm:$0xff]
      %v6653 = vld [vmem:[%s519 + $0xc0] sm:$0xff]
      %v6654 = vld [vmem:[%s519 + $0xc8] sm:$0xff]
      %v6655 = vld [vmem:[%s519 + $0xd8] sm:$0xff]
      %v6656 = vld [vmem:[%s519 + $0xe0] sm:$0xff]
      %v6657 = vld [vmem:[%s519 + $0xf0] sm:$0xff]
      %v6658 = vld [vmem:[%s519 + $0xf8] sm:$0xff]
      %v6659 = vld [vmem:[%s519 + $0x108] sm:$0xff]
      %v6660 = vld [vmem:[%s519 + $0x110] sm:$0xff]
      %v6661 = vld [vmem:[%s519 + $0x120] sm:$0xff]
      %v6662 = vld [vmem:[%s519 + $0x128] sm:$0xff]
      %v6663 = vld [vmem:[%s519 + $0x138] sm:$0xff]
      %v6664 = vld [vmem:[%s519 + $0x140] sm:$0xff]
      %v6665 = vld [vmem:[%s519 + $0x150] sm:$0xff]
      %v6666 = vld [vmem:[%s519 + $0x158] sm:$0xff]
      %v6667 = vld [vmem:[%s519 + $0x168] sm:$0xff]
      %v6668 = vld [vmem:[%s519 + $0x170] sm:$0xff]
      %v6669 = vld [vmem:[%s519 + $0x1] sm:$0xff]
      %v6670 = vld [vmem:[%s519 + $0x9] sm:$0xff]
      %v6671 = vld [vmem:[%s519 + $0x19] sm:$0xff]
      %v6672 = vld [vmem:[%s519 + $0x21] sm:$0xff]
      %v6673 = vld [vmem:[%s519 + $0x31] sm:$0xff]
      %v6674 = vld [vmem:[%s519 + $0x39] sm:$0xff]
      %v6675 = vld [vmem:[%s519 + $0x49] sm:$0xff]
      %v6676 = vld [vmem:[%s519 + $0x51] sm:$0xff]
      %v6677 = vld [vmem:[%s519 + $0x61] sm:$0xff]
      %v6678 = vld [vmem:[%s519 + $0x69] sm:$0xff]
      %v6679 = vld [vmem:[%s519 + $0x79] sm:$0xff]
      %v6680 = vld [vmem:[%s519 + $0x81] sm:$0xff]
      %v6681 = vld [vmem:[%s519 + $0x91] sm:$0xff]
      %v6682 = vld [vmem:[%s519 + $0x99] sm:$0xff]
      %v6683 = vld [vmem:[%s519 + $0xa9] sm:$0xff]
      %v6684 = vld [vmem:[%s519 + $0xb1] sm:$0xff]
      %v6685 = vld [vmem:[%s519 + $0xc1] sm:$0xff]
      %v6686 = vld [vmem:[%s519 + $0xc9] sm:$0xff]
      %v6687 = vld [vmem:[%s519 + $0xd9] sm:$0xff]
      %v6688 = vld [vmem:[%s519 + $0xe1] sm:$0xff]
      %v6689 = vld [vmem:[%s519 + $0xf1] sm:$0xff]
      %v6690 = vld [vmem:[%s519 + $0xf9] sm:$0xff]
      %v6691 = vld [vmem:[%s519 + $0x109] sm:$0xff]
      %v6692 = vld [vmem:[%s519 + $0x111] sm:$0xff]
      %v6693 = vld [vmem:[%s519 + $0x121] sm:$0xff]
      %v6694 = vld [vmem:[%s519 + $0x129] sm:$0xff]
      %v6695 = vld [vmem:[%s519 + $0x139] sm:$0xff]
      %v6696 = vld [vmem:[%s519 + $0x141] sm:$0xff]
      %v6697 = vld [vmem:[%s519 + $0x151] sm:$0xff]
      %v6698 = vld [vmem:[%s519 + $0x159] sm:$0xff]
      %v6699 = vld [vmem:[%s519 + $0x169] sm:$0xff]
      %v6700 = vld [vmem:[%s519 + $0x171] sm:$0xff]
      %v6701 = vld [vmem:[%s519 + $0x2] sm:$0xff]
      %v6702 = vld [vmem:[%s519 + $0xa] sm:$0xff]
      %v6703 = vld [vmem:[%s519 + $0x1a] sm:$0xff]
      %v6704 = vld [vmem:[%s519 + $0x22] sm:$0xff]
      %v6705 = vld [vmem:[%s519 + $0x32] sm:$0xff]
      %v6706 = vld [vmem:[%s519 + $0x3a] sm:$0xff]
      %v6707 = vld [vmem:[%s519 + $0x4a] sm:$0xff]
      %v6708 = vld [vmem:[%s519 + $0x52] sm:$0xff]
      %v6709 = vld [vmem:[%s519 + $0x62] sm:$0xff]
      %v6710 = vld [vmem:[%s519 + $0x6a] sm:$0xff]
      %v6711 = vld [vmem:[%s519 + $0x7a] sm:$0xff]
      %v6712 = vld [vmem:[%s519 + $0x82] sm:$0xff]
      %v6713 = vld [vmem:[%s519 + $0x92] sm:$0xff]
      %v6714 = vld [vmem:[%s519 + $0x9a] sm:$0xff]
      %v6715 = vld [vmem:[%s519 + $0xaa] sm:$0xff]
      %v6716 = vld [vmem:[%s519 + $0xb2] sm:$0xff]
      %v6717 = vld [vmem:[%s519 + $0xc2] sm:$0xff]
      %v6718 = vld [vmem:[%s519 + $0xca] sm:$0xff]
      %v6719 = vld [vmem:[%s519 + $0xda] sm:$0xff]
      %v6720 = vld [vmem:[%s519 + $0xe2] sm:$0xff]
      %v6721 = vld [vmem:[%s519 + $0xf2] sm:$0xff]
      %v6722 = vld [vmem:[%s519 + $0xfa] sm:$0xff]
      %v6723 = vld [vmem:[%s519 + $0x10a] sm:$0xff]
      %v6724 = vld [vmem:[%s519 + $0x112] sm:$0xff]
      %v6725 = vld [vmem:[%s519 + $0x122] sm:$0xff]
      %v6726 = vld [vmem:[%s519 + $0x12a] sm:$0xff]
      %v6727 = vld [vmem:[%s519 + $0x13a] sm:$0xff]
      %v6728 = vld [vmem:[%s519 + $0x142] sm:$0xff]
      %v6729 = vld [vmem:[%s519 + $0x152] sm:$0xff]
      %v6730 = vld [vmem:[%s519 + $0x15a] sm:$0xff]
      %v6731 = vld [vmem:[%s519 + $0x16a] sm:$0xff]
      %v6732 = vld [vmem:[%s519 + $0x172] sm:$0xff]
      %v6733 = vld [vmem:[%s744] sm:$0xff]
      %v6734 = vld [vmem:[%s744 + $0x8] sm:$0xff]
      %v6735 = vld [vmem:[%s744 + $0x18] sm:$0xff]
      %v6736 = vld [vmem:[%s744 + $0x20] sm:$0xff]
      %v6737 = vld [vmem:[%s744 + $0x30] sm:$0xff]
      %v6738 = vld [vmem:[%s744 + $0x38] sm:$0xff]
      %v6739 = vld [vmem:[%s744 + $0x48] sm:$0xff]
      %v6740 = vld [vmem:[%s744 + $0x50] sm:$0xff]
      %v6741 = vld [vmem:[%s744 + $0x60] sm:$0xff]
      %v6742 = vld [vmem:[%s744 + $0x68] sm:$0xff]
      %v6743 = vld [vmem:[%s744 + $0x78] sm:$0xff]
      %v6744 = vld [vmem:[%s744 + $0x80] sm:$0xff]
      %v6745 = vld [vmem:[%s744 + $0x90] sm:$0xff]
      %v6746 = vld [vmem:[%s744 + $0x98] sm:$0xff]
      %v6747 = vld [vmem:[%s744 + $0xa8] sm:$0xff]
      %v6748 = vld [vmem:[%s744 + $0xb0] sm:$0xff]
      %v6749 = vld [vmem:[%s744 + $0xc0] sm:$0xff]
      %v6750 = vld [vmem:[%s744 + $0xc8] sm:$0xff]
      %v6751 = vld [vmem:[%s744 + $0xd8] sm:$0xff]
      %v6752 = vld [vmem:[%s744 + $0xe0] sm:$0xff]
      %v6753 = vld [vmem:[%s744 + $0xf0] sm:$0xff]
      %v6754 = vld [vmem:[%s744 + $0xf8] sm:$0xff]
      %v6755 = vld [vmem:[%s744 + $0x108] sm:$0xff]
      %v6756 = vld [vmem:[%s744 + $0x110] sm:$0xff]
      %v6757 = vld [vmem:[%s744 + $0x120] sm:$0xff]
      %v6758 = vld [vmem:[%s744 + $0x128] sm:$0xff]
      %v6759 = vld [vmem:[%s744 + $0x138] sm:$0xff]
      %v6760 = vld [vmem:[%s744 + $0x140] sm:$0xff]
      %v6761 = vld [vmem:[%s744 + $0x150] sm:$0xff]
      %v6762 = vld [vmem:[%s744 + $0x158] sm:$0xff]
      %v6763 = vld [vmem:[%s744 + $0x168] sm:$0xff]
      %v6764 = vld [vmem:[%s744 + $0x170] sm:$0xff]
      %v6765 = vld [vmem:[%s744 + $0x1] sm:$0xff]
      %v6766 = vld [vmem:[%s744 + $0x9] sm:$0xff]
      %v6767 = vld [vmem:[%s744 + $0x19] sm:$0xff]
      %v6768 = vld [vmem:[%s744 + $0x21] sm:$0xff]
      %v6769 = vld [vmem:[%s744 + $0x31] sm:$0xff]
      %v6770 = vld [vmem:[%s744 + $0x39] sm:$0xff]
      %v6771 = vld [vmem:[%s744 + $0x49] sm:$0xff]
      %v6772 = vld [vmem:[%s744 + $0x51] sm:$0xff]
      %v6773 = vld [vmem:[%s744 + $0x61] sm:$0xff]
      %v6774 = vld [vmem:[%s744 + $0x69] sm:$0xff]
      %v6775 = vld [vmem:[%s744 + $0x79] sm:$0xff]
      %v6776 = vld [vmem:[%s744 + $0x81] sm:$0xff]
      %v6777 = vld [vmem:[%s744 + $0x91] sm:$0xff]
      %v6778 = vld [vmem:[%s744 + $0x99] sm:$0xff]
      %v6779 = vld [vmem:[%s744 + $0xa9] sm:$0xff]
      %v6780 = vld [vmem:[%s744 + $0xb1] sm:$0xff]
      %v6781 = vld [vmem:[%s744 + $0xc1] sm:$0xff]
      %v6782 = vld [vmem:[%s744 + $0xc9] sm:$0xff]
      %v6783 = vld [vmem:[%s744 + $0xd9] sm:$0xff]
      %v6784 = vld [vmem:[%s744 + $0xe1] sm:$0xff]
      %v6785 = vld [vmem:[%s744 + $0xf1] sm:$0xff]
      %v6786 = vld [vmem:[%s744 + $0xf9] sm:$0xff]
      %v6787 = vld [vmem:[%s744 + $0x109] sm:$0xff]
      %v6788 = vld [vmem:[%s744 + $0x111] sm:$0xff]
      %v6789 = vld [vmem:[%s744 + $0x121] sm:$0xff]
      %v6790 = vld [vmem:[%s744 + $0x129] sm:$0xff]
      %v6791 = vld [vmem:[%s744 + $0x139] sm:$0xff]
      %v6792 = vld [vmem:[%s744 + $0x141] sm:$0xff]
      %v6793 = vld [vmem:[%s744 + $0x151] sm:$0xff]
      %v6794 = vld [vmem:[%s744 + $0x159] sm:$0xff]
      %v6795 = vld [vmem:[%s744 + $0x169] sm:$0xff]
      %v6796 = vld [vmem:[%s744 + $0x171] sm:$0xff]
      %v6797 = vld [vmem:[%s744 + $0x2] sm:$0xff]
      %v6798 = vld [vmem:[%s744 + $0xa] sm:$0xff]
      %v6799 = vld [vmem:[%s744 + $0x1a] sm:$0xff]
      %v6800 = vld [vmem:[%s744 + $0x22] sm:$0xff]
      %v6801 = vld [vmem:[%s744 + $0x32] sm:$0xff]
      %v6802 = vld [vmem:[%s744 + $0x3a] sm:$0xff]
      %v6803 = vld [vmem:[%s744 + $0x4a] sm:$0xff]
      %v6804 = vld [vmem:[%s744 + $0x52] sm:$0xff]
      %v6805 = vld [vmem:[%s744 + $0x62] sm:$0xff]
      %v6806 = vld [vmem:[%s744 + $0x6a] sm:$0xff]
      %v6807 = vld [vmem:[%s744 + $0x7a] sm:$0xff]
      %v6808 = vld [vmem:[%s744 + $0x82] sm:$0xff]
      %v6809 = vld [vmem:[%s744 + $0x92] sm:$0xff]
      %v6810 = vld [vmem:[%s744 + $0x9a] sm:$0xff]
      %v6811 = vld [vmem:[%s744 + $0xaa] sm:$0xff]
      %v6812 = vld [vmem:[%s744 + $0xb2] sm:$0xff]
      %v6813 = vld [vmem:[%s744 + $0xc2] sm:$0xff]
      %v6814 = vld [vmem:[%s744 + $0xca] sm:$0xff]
      %v6815 = vld [vmem:[%s744 + $0xda] sm:$0xff]
      %v6816 = vld [vmem:[%s744 + $0xe2] sm:$0xff]
      %v6817 = vld [vmem:[%s744 + $0xf2] sm:$0xff]
      %v6818 = vld [vmem:[%s744 + $0xfa] sm:$0xff]
      %v6819 = vld [vmem:[%s744 + $0x10a] sm:$0xff]
      %v6820 = vld [vmem:[%s744 + $0x112] sm:$0xff]
      %v6821 = vld [vmem:[%s744 + $0x122] sm:$0xff]
      %v6822 = vld [vmem:[%s744 + $0x12a] sm:$0xff]
      %v6823 = vld [vmem:[%s744 + $0x13a] sm:$0xff]
      %v6824 = vld [vmem:[%s744 + $0x142] sm:$0xff]
      %v6825 = vld [vmem:[%s744 + $0x152] sm:$0xff]
      %v6826 = vld [vmem:[%s744 + $0x15a] sm:$0xff]
      %v6827 = vld [vmem:[%s744 + $0x16a] sm:$0xff]
      %v6828 = vld [vmem:[%s744 + $0x172] sm:$0xff]
      %6861 = vrot.lane.b32.xlu0 %v6573, 8
      %v6862 = vpop.permute.xlu0 %6861
      %6863 = vrot.lane.b32.xlu0 %v6574, 8
      %v6864 = vpop.permute.xlu0 %6863
      %6865 = vrot.lane.b32.xlu0 %v6575, 8
      %v6866 = vpop.permute.xlu0 %6865
      %6867 = vrot.lane.b32.xlu0 %v6576, 8
      %v6868 = vpop.permute.xlu0 %6867
      %6869 = vrot.lane.b32.xlu0 %v6577, 8
      %v6870 = vpop.permute.xlu0 %6869
      %6871 = vrot.lane.b32.xlu0 %v6578, 8
      %v6872 = vpop.permute.xlu0 %6871
      %6873 = vrot.lane.b32.xlu0 %v6579, 8
      %v6874 = vpop.permute.xlu0 %6873
      %6875 = vrot.lane.b32.xlu0 %v6580, 8
      %v6876 = vpop.permute.xlu0 %6875
      %6877 = vrot.lane.b32.xlu0 %v6581, 8
      %v6878 = vpop.permute.xlu0 %6877
      %6879 = vrot.lane.b32.xlu0 %v6582, 8
      %v6880 = vpop.permute.xlu0 %6879
      %6881 = vrot.lane.b32.xlu0 %v6583, 8
      %v6882 = vpop.permute.xlu0 %6881
      %6883 = vrot.lane.b32.xlu0 %v6584, 8
      %v6884 = vpop.permute.xlu0 %6883
      %6885 = vrot.lane.b32.xlu0 %v6585, 8
      %v6886 = vpop.permute.xlu0 %6885
      %6887 = vrot.lane.b32.xlu0 %v6586, 8
      %v6888 = vpop.permute.xlu0 %6887
      %6889 = vrot.lane.b32.xlu0 %v6587, 8
      %v6890 = vpop.permute.xlu0 %6889
      %6891 = vrot.lane.b32.xlu0 %v6588, 8
      %v6892 = vpop.permute.xlu0 %6891
      %6893 = vrot.lane.b32.xlu0 %v6589, 8
      %v6894 = vpop.permute.xlu0 %6893
      %6895 = vrot.lane.b32.xlu0 %v6590, 8
      %v6896 = vpop.permute.xlu0 %6895
      %6897 = vrot.lane.b32.xlu0 %v6591, 8
      %v6898 = vpop.permute.xlu0 %6897
      %6899 = vrot.lane.b32.xlu0 %v6592, 8
      %v6900 = vpop.permute.xlu0 %6899
      %6901 = vrot.lane.b32.xlu0 %v6593, 8
      %v6902 = vpop.permute.xlu0 %6901
      %6903 = vrot.lane.b32.xlu0 %v6594, 8
      %v6904 = vpop.permute.xlu0 %6903
      %6905 = vrot.lane.b32.xlu0 %v6595, 8
      %v6906 = vpop.permute.xlu0 %6905
      %6907 = vrot.lane.b32.xlu0 %v6596, 8
      %v6908 = vpop.permute.xlu0 %6907
      %6909 = vrot.lane.b32.xlu0 %v6597, 8
      %v6910 = vpop.permute.xlu0 %6909
      %6911 = vrot.lane.b32.xlu0 %v6598, 8
      %v6912 = vpop.permute.xlu0 %6911
      %6913 = vrot.lane.b32.xlu0 %v6599, 8
      %v6914 = vpop.permute.xlu0 %6913
      %6915 = vrot.lane.b32.xlu0 %v6600, 8
      %v6916 = vpop.permute.xlu0 %6915
      %6917 = vrot.lane.b32.xlu0 %v6601, 8
      %v6918 = vpop.permute.xlu0 %6917
      %6919 = vrot.lane.b32.xlu0 %v6602, 8
      %v6920 = vpop.permute.xlu0 %6919
      %6921 = vrot.lane.b32.xlu0 %v6603, 8
      %v6922 = vpop.permute.xlu0 %6921
      %6923 = vrot.lane.b32.xlu0 %v6604, 8
      %v6924 = vpop.permute.xlu0 %6923
      %6989 = vrot.lane.b32.xlu0 %v6605, 16
      %v6990 = vpop.permute.xlu0 %6989
      %6991 = vrot.lane.b32.xlu0 %v6606, 16
      %v6992 = vpop.permute.xlu0 %6991
      %6993 = vrot.lane.b32.xlu0 %v6607, 16
      %v6994 = vpop.permute.xlu0 %6993
      %6995 = vrot.lane.b32.xlu0 %v6608, 16
      %v6996 = vpop.permute.xlu0 %6995
      %6997 = vrot.lane.b32.xlu0 %v6609, 16
      %v6998 = vpop.permute.xlu0 %6997
      %6999 = vrot.lane.b32.xlu0 %v6610, 16
      %v7000 = vpop.permute.xlu0 %6999
      %7001 = vrot.lane.b32.xlu0 %v6611, 16
      %v7002 = vpop.permute.xlu0 %7001
      %7003 = vrot.lane.b32.xlu0 %v6612, 16
      %v7004 = vpop.permute.xlu0 %7003
      %7005 = vrot.lane.b32.xlu0 %v6613, 16
      %v7006 = vpop.permute.xlu0 %7005
      %7007 = vrot.lane.b32.xlu0 %v6614, 16
      %v7008 = vpop.permute.xlu0 %7007
      %7009 = vrot.lane.b32.xlu0 %v6615, 16
      %v7010 = vpop.permute.xlu0 %7009
      %7011 = vrot.lane.b32.xlu0 %v6616, 16
      %v7012 = vpop.permute.xlu0 %7011
      %7013 = vrot.lane.b32.xlu0 %v6617, 16
      %v7014 = vpop.permute.xlu0 %7013
      %7015 = vrot.lane.b32.xlu0 %v6618, 16
      %v7016 = vpop.permute.xlu0 %7015
      %7017 = vrot.lane.b32.xlu0 %v6619, 16
      %v7018 = vpop.permute.xlu0 %7017
      %7019 = vrot.lane.b32.xlu0 %v6620, 16
      %v7020 = vpop.permute.xlu0 %7019
      %7021 = vrot.lane.b32.xlu0 %v6621, 16
      %v7022 = vpop.permute.xlu0 %7021
      %7023 = vrot.lane.b32.xlu0 %v6622, 16
      %v7024 = vpop.permute.xlu0 %7023
      %7025 = vrot.lane.b32.xlu0 %v6623, 16
      %v7026 = vpop.permute.xlu0 %7025
      %7027 = vrot.lane.b32.xlu0 %v6624, 16
      %v7028 = vpop.permute.xlu0 %7027
      %7029 = vrot.lane.b32.xlu0 %v6625, 16
      %v7030 = vpop.permute.xlu0 %7029
      %7031 = vrot.lane.b32.xlu0 %v6626, 16
      %v7032 = vpop.permute.xlu0 %7031
      %7033 = vrot.lane.b32.xlu0 %v6627, 16
      %v7034 = vpop.permute.xlu0 %7033
      %7035 = vrot.lane.b32.xlu0 %v6628, 16
      %v7036 = vpop.permute.xlu0 %7035
      %7037 = vrot.lane.b32.xlu0 %v6629, 16
      %v7038 = vpop.permute.xlu0 %7037
      %7039 = vrot.lane.b32.xlu0 %v6630, 16
      %v7040 = vpop.permute.xlu0 %7039
      %7041 = vrot.lane.b32.xlu0 %v6631, 16
      %v7042 = vpop.permute.xlu0 %7041
      %7043 = vrot.lane.b32.xlu0 %v6632, 16
      %v7044 = vpop.permute.xlu0 %7043
      %7045 = vrot.lane.b32.xlu0 %v6633, 16
      %v7046 = vpop.permute.xlu0 %7045
      %7047 = vrot.lane.b32.xlu0 %v6634, 16
      %v7048 = vpop.permute.xlu0 %7047
      %7049 = vrot.lane.b32.xlu0 %v6635, 16
      %v7050 = vpop.permute.xlu0 %7049
      %7051 = vrot.lane.b32.xlu0 %v6636, 16
      %v7052 = vpop.permute.xlu0 %7051
      %7117 = vrot.lane.b32.xlu0 %v6637, 24
      %v7118 = vpop.permute.xlu0 %7117
      %7119 = vrot.lane.b32.xlu0 %v6638, 24
      %v7120 = vpop.permute.xlu0 %7119
      %7121 = vrot.lane.b32.xlu0 %v6639, 24
      %v7122 = vpop.permute.xlu0 %7121
      %7123 = vrot.lane.b32.xlu0 %v6640, 24
      %v7124 = vpop.permute.xlu0 %7123
      %7125 = vrot.lane.b32.xlu0 %v6641, 24
      %v7126 = vpop.permute.xlu0 %7125
      %7127 = vrot.lane.b32.xlu0 %v6642, 24
      %v7128 = vpop.permute.xlu0 %7127
      %7129 = vrot.lane.b32.xlu0 %v6643, 24
      %v7130 = vpop.permute.xlu0 %7129
      %7131 = vrot.lane.b32.xlu0 %v6644, 24
      %v7132 = vpop.permute.xlu0 %7131
      %7133 = vrot.lane.b32.xlu0 %v6645, 24
      %v7134 = vpop.permute.xlu0 %7133
      %7135 = vrot.lane.b32.xlu0 %v6646, 24
      %v7136 = vpop.permute.xlu0 %7135
      %7137 = vrot.lane.b32.xlu0 %v6647, 24
      %v7138 = vpop.permute.xlu0 %7137
      %7139 = vrot.lane.b32.xlu0 %v6648, 24
      %v7140 = vpop.permute.xlu0 %7139
      %7141 = vrot.lane.b32.xlu0 %v6649, 24
      %v7142 = vpop.permute.xlu0 %7141
      %7143 = vrot.lane.b32.xlu0 %v6650, 24
      %v7144 = vpop.permute.xlu0 %7143
      %7145 = vrot.lane.b32.xlu0 %v6651, 24
      %v7146 = vpop.permute.xlu0 %7145
      %7147 = vrot.lane.b32.xlu0 %v6652, 24
      %v7148 = vpop.permute.xlu0 %7147
      %7149 = vrot.lane.b32.xlu0 %v6653, 24
      %v7150 = vpop.permute.xlu0 %7149
      %7151 = vrot.lane.b32.xlu0 %v6654, 24
      %v7152 = vpop.permute.xlu0 %7151
      %7153 = vrot.lane.b32.xlu0 %v6655, 24
      %v7154 = vpop.permute.xlu0 %7153
      %7155 = vrot.lane.b32.xlu0 %v6656, 24
      %v7156 = vpop.permute.xlu0 %7155
      %7157 = vrot.lane.b32.xlu0 %v6657, 24
      %v7158 = vpop.permute.xlu0 %7157
      %7159 = vrot.lane.b32.xlu0 %v6658, 24
      %v7160 = vpop.permute.xlu0 %7159
      %7161 = vrot.lane.b32.xlu0 %v6659, 24
      %v7162 = vpop.permute.xlu0 %7161
      %7163 = vrot.lane.b32.xlu0 %v6660, 24
      %v7164 = vpop.permute.xlu0 %7163
      %7165 = vrot.lane.b32.xlu0 %v6661, 24
      %v7166 = vpop.permute.xlu0 %7165
      %7167 = vrot.lane.b32.xlu0 %v6662, 24
      %v7168 = vpop.permute.xlu0 %7167
      %7169 = vrot.lane.b32.xlu0 %v6663, 24
      %v7170 = vpop.permute.xlu0 %7169
      %7171 = vrot.lane.b32.xlu0 %v6664, 24
      %v7172 = vpop.permute.xlu0 %7171
      %7173 = vrot.lane.b32.xlu0 %v6665, 24
      %v7174 = vpop.permute.xlu0 %7173
      %7175 = vrot.lane.b32.xlu0 %v6666, 24
      %v7176 = vpop.permute.xlu0 %7175
      %7177 = vrot.lane.b32.xlu0 %v6667, 24
      %v7178 = vpop.permute.xlu0 %7177
      %7179 = vrot.lane.b32.xlu0 %v6668, 24
      %v7180 = vpop.permute.xlu0 %7179
      %7245 = vrot.lane.b32.xlu0 %v6669, 32
      %v7246 = vpop.permute.xlu0 %7245
      %7247 = vrot.lane.b32.xlu0 %v6670, 32
      %v7248 = vpop.permute.xlu0 %7247
      %7249 = vrot.lane.b32.xlu0 %v6671, 32
      %v7250 = vpop.permute.xlu0 %7249
      %7251 = vrot.lane.b32.xlu0 %v6672, 32
      %v7252 = vpop.permute.xlu0 %7251
      %7253 = vrot.lane.b32.xlu0 %v6673, 32
      %v7254 = vpop.permute.xlu0 %7253
      %7255 = vrot.lane.b32.xlu0 %v6674, 32
      %v7256 = vpop.permute.xlu0 %7255
      %7257 = vrot.lane.b32.xlu0 %v6675, 32
      %v7258 = vpop.permute.xlu0 %7257
      %7259 = vrot.lane.b32.xlu0 %v6676, 32
      %v7260 = vpop.permute.xlu0 %7259
      %7261 = vrot.lane.b32.xlu0 %v6677, 32
      %v7262 = vpop.permute.xlu0 %7261
      %7263 = vrot.lane.b32.xlu0 %v6678, 32
      %v7264 = vpop.permute.xlu0 %7263
      %7265 = vrot.lane.b32.xlu0 %v6679, 32
      %v7266 = vpop.permute.xlu0 %7265
      %7267 = vrot.lane.b32.xlu0 %v6680, 32
      %v7268 = vpop.permute.xlu0 %7267
      %7269 = vrot.lane.b32.xlu0 %v6681, 32
      %v7270 = vpop.permute.xlu0 %7269
      %7271 = vrot.lane.b32.xlu0 %v6682, 32
      %v7272 = vpop.permute.xlu0 %7271
      %7273 = vrot.lane.b32.xlu0 %v6683, 32
      %v7274 = vpop.permute.xlu0 %7273
      %7275 = vrot.lane.b32.xlu0 %v6684, 32
      %v7276 = vpop.permute.xlu0 %7275
      %7277 = vrot.lane.b32.xlu0 %v6685, 32
      %v7278 = vpop.permute.xlu0 %7277
      %7279 = vrot.lane.b32.xlu0 %v6686, 32
      %v7280 = vpop.permute.xlu0 %7279
      %7281 = vrot.lane.b32.xlu0 %v6687, 32
      %v7282 = vpop.permute.xlu0 %7281
      %7283 = vrot.lane.b32.xlu0 %v6688, 32
      %v7284 = vpop.permute.xlu0 %7283
      %7285 = vrot.lane.b32.xlu0 %v6689, 32
      %v7286 = vpop.permute.xlu0 %7285
      %7287 = vrot.lane.b32.xlu0 %v6690, 32
      %v7288 = vpop.permute.xlu0 %7287
      %7289 = vrot.lane.b32.xlu0 %v6691, 32
      %v7290 = vpop.permute.xlu0 %7289
      %7291 = vrot.lane.b32.xlu0 %v6692, 32
      %v7292 = vpop.permute.xlu0 %7291
      %7293 = vrot.lane.b32.xlu0 %v6693, 32
      %v7294 = vpop.permute.xlu0 %7293
      %7295 = vrot.lane.b32.xlu0 %v6694, 32
      %v7296 = vpop.permute.xlu0 %7295
      %7297 = vrot.lane.b32.xlu0 %v6695, 32
      %v7298 = vpop.permute.xlu0 %7297
      %7299 = vrot.lane.b32.xlu0 %v6696, 32
      %v7300 = vpop.permute.xlu0 %7299
      %7301 = vrot.lane.b32.xlu0 %v6697, 32
      %v7302 = vpop.permute.xlu0 %7301
      %7303 = vrot.lane.b32.xlu0 %v6698, 32
      %v7304 = vpop.permute.xlu0 %7303
      %7305 = vrot.lane.b32.xlu0 %v6699, 32
      %v7306 = vpop.permute.xlu0 %7305
      %7307 = vrot.lane.b32.xlu0 %v6700, 32
      %v7308 = vpop.permute.xlu0 %7307
      %7373 = vrot.lane.b32.xlu0 %v6701, 40
      %v7374 = vpop.permute.xlu0 %7373
      %7375 = vrot.lane.b32.xlu0 %v6702, 40
      %v7376 = vpop.permute.xlu0 %7375
      %7377 = vrot.lane.b32.xlu0 %v6703, 40
      %v7378 = vpop.permute.xlu0 %7377
      %7379 = vrot.lane.b32.xlu0 %v6704, 40
      %v7380 = vpop.permute.xlu0 %7379
      %7381 = vrot.lane.b32.xlu0 %v6705, 40
      %v7382 = vpop.permute.xlu0 %7381
      %7383 = vrot.lane.b32.xlu0 %v6706, 40
      %v7384 = vpop.permute.xlu0 %7383
      %7385 = vrot.lane.b32.xlu0 %v6707, 40
      %v7386 = vpop.permute.xlu0 %7385
      %7387 = vrot.lane.b32.xlu0 %v6708, 40
      %v7388 = vpop.permute.xlu0 %7387
      %7389 = vrot.lane.b32.xlu0 %v6709, 40
      %v7390 = vpop.permute.xlu0 %7389
      %7391 = vrot.lane.b32.xlu0 %v6710, 40
      %v7392 = vpop.permute.xlu0 %7391
      %7393 = vrot.lane.b32.xlu0 %v6711, 40
      %v7394 = vpop.permute.xlu0 %7393
      %7395 = vrot.lane.b32.xlu0 %v6712, 40
      %v7396 = vpop.permute.xlu0 %7395
      %7397 = vrot.lane.b32.xlu0 %v6713, 40
      %v7398 = vpop.permute.xlu0 %7397
      %7399 = vrot.lane.b32.xlu0 %v6714, 40
      %v7400 = vpop.permute.xlu0 %7399
      %7401 = vrot.lane.b32.xlu0 %v6715, 40
      %v7402 = vpop.permute.xlu0 %7401
      %7403 = vrot.lane.b32.xlu0 %v6716, 40
      %v7404 = vpop.permute.xlu0 %7403
      %7405 = vrot.lane.b32.xlu0 %v6717, 40
      %v7406 = vpop.permute.xlu0 %7405
      %7407 = vrot.lane.b32.xlu0 %v6718, 40
      %v7408 = vpop.permute.xlu0 %7407
      %7409 = vrot.lane.b32.xlu0 %v6719, 40
      %v7410 = vpop.permute.xlu0 %7409
      %7411 = vrot.lane.b32.xlu0 %v6720, 40
      %v7412 = vpop.permute.xlu0 %7411
      %7413 = vrot.lane.b32.xlu0 %v6721, 40
      %v7414 = vpop.permute.xlu0 %7413
      %7415 = vrot.lane.b32.xlu0 %v6722, 40
      %v7416 = vpop.permute.xlu0 %7415
      %7417 = vrot.lane.b32.xlu0 %v6723, 40
      %v7418 = vpop.permute.xlu0 %7417
      %7419 = vrot.lane.b32.xlu0 %v6724, 40
      %v7420 = vpop.permute.xlu0 %7419
      %7421 = vrot.lane.b32.xlu0 %v6725, 40
      %v7422 = vpop.permute.xlu0 %7421
      %7423 = vrot.lane.b32.xlu0 %v6726, 40
      %v7424 = vpop.permute.xlu0 %7423
      %7425 = vrot.lane.b32.xlu0 %v6727, 40
      %v7426 = vpop.permute.xlu0 %7425
      %7427 = vrot.lane.b32.xlu0 %v6728, 40
      %v7428 = vpop.permute.xlu0 %7427
      %7429 = vrot.lane.b32.xlu0 %v6729, 40
      %v7430 = vpop.permute.xlu0 %7429
      %7431 = vrot.lane.b32.xlu0 %v6730, 40
      %v7432 = vpop.permute.xlu0 %7431
      %7433 = vrot.lane.b32.xlu0 %v6731, 40
      %v7434 = vpop.permute.xlu0 %7433
      %7435 = vrot.lane.b32.xlu0 %v6732, 40
      %v7436 = vpop.permute.xlu0 %7435
      %7501 = vrot.lane.b32.xlu0 %v6733, 48
      %v7502 = vpop.permute.xlu0 %7501
      %7503 = vrot.lane.b32.xlu0 %v6734, 48
      %v7504 = vpop.permute.xlu0 %7503
      %7505 = vrot.lane.b32.xlu0 %v6735, 48
      %v7506 = vpop.permute.xlu0 %7505
      %7507 = vrot.lane.b32.xlu0 %v6736, 48
      %v7508 = vpop.permute.xlu0 %7507
      %7509 = vrot.lane.b32.xlu0 %v6737, 48
      %v7510 = vpop.permute.xlu0 %7509
      %7511 = vrot.lane.b32.xlu0 %v6738, 48
      %v7512 = vpop.permute.xlu0 %7511
      %7513 = vrot.lane.b32.xlu0 %v6739, 48
      %v7514 = vpop.permute.xlu0 %7513
      %7515 = vrot.lane.b32.xlu0 %v6740, 48
      %v7516 = vpop.permute.xlu0 %7515
      %7517 = vrot.lane.b32.xlu0 %v6741, 48
      %v7518 = vpop.permute.xlu0 %7517
      %7519 = vrot.lane.b32.xlu0 %v6742, 48
      %v7520 = vpop.permute.xlu0 %7519
      %7521 = vrot.lane.b32.xlu0 %v6743, 48
      %v7522 = vpop.permute.xlu0 %7521
      %7523 = vrot.lane.b32.xlu0 %v6744, 48
      %v7524 = vpop.permute.xlu0 %7523
      %7525 = vrot.lane.b32.xlu0 %v6745, 48
      %v7526 = vpop.permute.xlu0 %7525
      %7527 = vrot.lane.b32.xlu0 %v6746, 48
      %v7528 = vpop.permute.xlu0 %7527
      %7529 = vrot.lane.b32.xlu0 %v6747, 48
      %v7530 = vpop.permute.xlu0 %7529
      %7531 = vrot.lane.b32.xlu0 %v6748, 48
      %v7532 = vpop.permute.xlu0 %7531
      %7533 = vrot.lane.b32.xlu0 %v6749, 48
      %v7534 = vpop.permute.xlu0 %7533
      %7535 = vrot.lane.b32.xlu0 %v6750, 48
      %v7536 = vpop.permute.xlu0 %7535
      %7537 = vrot.lane.b32.xlu0 %v6751, 48
      %v7538 = vpop.permute.xlu0 %7537
      %7539 = vrot.lane.b32.xlu0 %v6752, 48
      %v7540 = vpop.permute.xlu0 %7539
      %7541 = vrot.lane.b32.xlu0 %v6753, 48
      %v7542 = vpop.permute.xlu0 %7541
      %7543 = vrot.lane.b32.xlu0 %v6754, 48
      %v7544 = vpop.permute.xlu0 %7543
      %7545 = vrot.lane.b32.xlu0 %v6755, 48
      %v7546 = vpop.permute.xlu0 %7545
      %7547 = vrot.lane.b32.xlu0 %v6756, 48
      %v7548 = vpop.permute.xlu0 %7547
      %7549 = vrot.lane.b32.xlu0 %v6757, 48
      %v7550 = vpop.permute.xlu0 %7549
      %7551 = vrot.lane.b32.xlu0 %v6758, 48
      %v7552 = vpop.permute.xlu0 %7551
      %7553 = vrot.lane.b32.xlu0 %v6759, 48
      %v7554 = vpop.permute.xlu0 %7553
      %7555 = vrot.lane.b32.xlu0 %v6760, 48
      %v7556 = vpop.permute.xlu0 %7555
      %7557 = vrot.lane.b32.xlu0 %v6761, 48
      %v7558 = vpop.permute.xlu0 %7557
      %7559 = vrot.lane.b32.xlu0 %v6762, 48
      %v7560 = vpop.permute.xlu0 %7559
      %7561 = vrot.lane.b32.xlu0 %v6763, 48
      %v7562 = vpop.permute.xlu0 %7561
      %7563 = vrot.lane.b32.xlu0 %v6764, 48
      %v7564 = vpop.permute.xlu0 %7563
      %7629 = vrot.lane.b32.xlu0 %v6765, 56
      %v7630 = vpop.permute.xlu0 %7629
      %7631 = vrot.lane.b32.xlu0 %v6766, 56
      %v7632 = vpop.permute.xlu0 %7631
      %7633 = vrot.lane.b32.xlu0 %v6767, 56
      %v7634 = vpop.permute.xlu0 %7633
      %7635 = vrot.lane.b32.xlu0 %v6768, 56
      %v7636 = vpop.permute.xlu0 %7635
      %7637 = vrot.lane.b32.xlu0 %v6769, 56
      %v7638 = vpop.permute.xlu0 %7637
      %7639 = vrot.lane.b32.xlu0 %v6770, 56
      %v7640 = vpop.permute.xlu0 %7639
      %7641 = vrot.lane.b32.xlu0 %v6771, 56
      %v7642 = vpop.permute.xlu0 %7641
      %7643 = vrot.lane.b32.xlu0 %v6772, 56
      %v7644 = vpop.permute.xlu0 %7643
      %7645 = vrot.lane.b32.xlu0 %v6773, 56
      %v7646 = vpop.permute.xlu0 %7645
      %7647 = vrot.lane.b32.xlu0 %v6774, 56
      %v7648 = vpop.permute.xlu0 %7647
      %7649 = vrot.lane.b32.xlu0 %v6775, 56
      %v7650 = vpop.permute.xlu0 %7649
      %7651 = vrot.lane.b32.xlu0 %v6776, 56
      %v7652 = vpop.permute.xlu0 %7651
      %7653 = vrot.lane.b32.xlu0 %v6777, 56
      %v7654 = vpop.permute.xlu0 %7653
      %7655 = vrot.lane.b32.xlu0 %v6778, 56
      %v7656 = vpop.permute.xlu0 %7655
      %7657 = vrot.lane.b32.xlu0 %v6779, 56
      %v7658 = vpop.permute.xlu0 %7657
      %7659 = vrot.lane.b32.xlu0 %v6780, 56
      %v7660 = vpop.permute.xlu0 %7659
      %7661 = vrot.lane.b32.xlu0 %v6781, 56
      %v7662 = vpop.permute.xlu0 %7661
      %7663 = vrot.lane.b32.xlu0 %v6782, 56
      %v7664 = vpop.permute.xlu0 %7663
      %7665 = vrot.lane.b32.xlu0 %v6783, 56
      %v7666 = vpop.permute.xlu0 %7665
      %7667 = vrot.lane.b32.xlu0 %v6784, 56
      %v7668 = vpop.permute.xlu0 %7667
      %7669 = vrot.lane.b32.xlu0 %v6785, 56
      %v7670 = vpop.permute.xlu0 %7669
      %7671 = vrot.lane.b32.xlu0 %v6786, 56
      %v7672 = vpop.permute.xlu0 %7671
      %7673 = vrot.lane.b32.xlu0 %v6787, 56
      %v7674 = vpop.permute.xlu0 %7673
      %7675 = vrot.lane.b32.xlu0 %v6788, 56
      %v7676 = vpop.permute.xlu0 %7675
      %7677 = vrot.lane.b32.xlu0 %v6789, 56
      %v7678 = vpop.permute.xlu0 %7677
      %7679 = vrot.lane.b32.xlu0 %v6790, 56
      %v7680 = vpop.permute.xlu0 %7679
      %7681 = vrot.lane.b32.xlu0 %v6791, 56
      %v7682 = vpop.permute.xlu0 %7681
      %7683 = vrot.lane.b32.xlu0 %v6792, 56
      %v7684 = vpop.permute.xlu0 %7683
      %7685 = vrot.lane.b32.xlu0 %v6793, 56
      %v7686 = vpop.permute.xlu0 %7685
      %7687 = vrot.lane.b32.xlu0 %v6794, 56
      %v7688 = vpop.permute.xlu0 %7687
      %7689 = vrot.lane.b32.xlu0 %v6795, 56
      %v7690 = vpop.permute.xlu0 %7689
      %7691 = vrot.lane.b32.xlu0 %v6796, 56
      %v7692 = vpop.permute.xlu0 %7691
      %7757 = vrot.lane.b32.xlu0 %v6797, 64
      %v7758 = vpop.permute.xlu0 %7757
      %7759 = vrot.lane.b32.xlu0 %v6798, 64
      %v7760 = vpop.permute.xlu0 %7759
      %7761 = vrot.lane.b32.xlu0 %v6799, 64
      %v7762 = vpop.permute.xlu0 %7761
      %7763 = vrot.lane.b32.xlu0 %v6800, 64
      %v7764 = vpop.permute.xlu0 %7763
      %7765 = vrot.lane.b32.xlu0 %v6801, 64
      %v7766 = vpop.permute.xlu0 %7765
      %7767 = vrot.lane.b32.xlu0 %v6802, 64
      %v7768 = vpop.permute.xlu0 %7767
      %7769 = vrot.lane.b32.xlu0 %v6803, 64
      %v7770 = vpop.permute.xlu0 %7769
      %7771 = vrot.lane.b32.xlu0 %v6804, 64
      %v7772 = vpop.permute.xlu0 %7771
      %7773 = vrot.lane.b32.xlu0 %v6805, 64
      %v7774 = vpop.permute.xlu0 %7773
      %7775 = vrot.lane.b32.xlu0 %v6806, 64
      %v7776 = vpop.permute.xlu0 %7775
      %7777 = vrot.lane.b32.xlu0 %v6807, 64
      %v7778 = vpop.permute.xlu0 %7777
      %7779 = vrot.lane.b32.xlu0 %v6808, 64
      %v7780 = vpop.permute.xlu0 %7779
      %7781 = vrot.lane.b32.xlu0 %v6809, 64
      %v7782 = vpop.permute.xlu0 %7781
      %7783 = vrot.lane.b32.xlu0 %v6810, 64
      %v7784 = vpop.permute.xlu0 %7783
      %7785 = vrot.lane.b32.xlu0 %v6811, 64
      %v7786 = vpop.permute.xlu0 %7785
      %7787 = vrot.lane.b32.xlu0 %v6812, 64
      %v7788 = vpop.permute.xlu0 %7787
      %7789 = vrot.lane.b32.xlu0 %v6813, 64
      %v7790 = vpop.permute.xlu0 %7789
      %7791 = vrot.lane.b32.xlu0 %v6814, 64
      %v7792 = vpop.permute.xlu0 %7791
      %7793 = vrot.lane.b32.xlu0 %v6815, 64
      %v7794 = vpop.permute.xlu0 %7793
      %7795 = vrot.lane.b32.xlu0 %v6816, 64
      %v7796 = vpop.permute.xlu0 %7795
      %7797 = vrot.lane.b32.xlu0 %v6817, 64
      %v7798 = vpop.permute.xlu0 %7797
      %7799 = vrot.lane.b32.xlu0 %v6818, 64
      %v7800 = vpop.permute.xlu0 %7799
      %7801 = vrot.lane.b32.xlu0 %v6819, 64
      %v7802 = vpop.permute.xlu0 %7801
      %7803 = vrot.lane.b32.xlu0 %v6820, 64
      %v7804 = vpop.permute.xlu0 %7803
      %7805 = vrot.lane.b32.xlu0 %v6821, 64
      %v7806 = vpop.permute.xlu0 %7805
      %7807 = vrot.lane.b32.xlu0 %v6822, 64
      %v7808 = vpop.permute.xlu0 %7807
      %7809 = vrot.lane.b32.xlu0 %v6823, 64
      %v7810 = vpop.permute.xlu0 %7809
      %7811 = vrot.lane.b32.xlu0 %v6824, 64
      %v7812 = vpop.permute.xlu0 %7811
      %7813 = vrot.lane.b32.xlu0 %v6825, 64
      %v7814 = vpop.permute.xlu0 %7813
      %7815 = vrot.lane.b32.xlu0 %v6826, 64
      %v7816 = vpop.permute.xlu0 %7815
      %7817 = vrot.lane.b32.xlu0 %v6827, 64
      %v7818 = vpop.permute.xlu0 %7817
      %7819 = vrot.lane.b32.xlu0 %v6828, 64
      %v7820 = vpop.permute.xlu0 %7819
      %v7853 = vsel %vm441, %v6541, %v6862
      %v7854 = vsel %vm441, %v6542, %v6864
      %v7855 = vsel %vm441, %v6543, %v6866
      %v7856 = vsel %vm441, %v6544, %v6868
      %v7857 = vsel %vm441, %v6545, %v6870
      %v7858 = vsel %vm441, %v6546, %v6872
      %v7859 = vsel %vm441, %v6547, %v6874
      %v7860 = vsel %vm441, %v6548, %v6876
      %v7861 = vsel %vm441, %v6549, %v6878
      %v7862 = vsel %vm441, %v6550, %v6880
      %v7863 = vsel %vm441, %v6551, %v6882
      %v7864 = vsel %vm441, %v6552, %v6884
      %v7865 = vsel %vm441, %v6553, %v6886
      %v7866 = vsel %vm441, %v6554, %v6888
      %v7867 = vsel %vm441, %v6555, %v6890
      %v7868 = vsel %vm441, %v6556, %v6892
      %v7869 = vsel %vm441, %v6557, %v6894
      %v7870 = vsel %vm441, %v6558, %v6896
      %v7871 = vsel %vm441, %v6559, %v6898
      %v7872 = vsel %vm441, %v6560, %v6900
      %v7873 = vsel %vm441, %v6561, %v6902
      %v7874 = vsel %vm441, %v6562, %v6904
      %v7875 = vsel %vm441, %v6563, %v6906
      %v7876 = vsel %vm441, %v6564, %v6908
      %v7877 = vsel %vm441, %v6565, %v6910
      %v7878 = vsel %vm441, %v6566, %v6912
      %v7879 = vsel %vm441, %v6567, %v6914
      %v7880 = vsel %vm441, %v6568, %v6916
      %v7881 = vsel %vm441, %v6569, %v6918
      %v7882 = vsel %vm441, %v6570, %v6920
      %v7883 = vsel %vm441, %v6571, %v6922
      %v7884 = vsel %vm441, %v6572, %v6924
      %v7885 = vsel %vm1897, %v7853, %v6990
      %v7886 = vsel %vm1897, %v7854, %v6992
      %v7887 = vsel %vm1897, %v7855, %v6994
      %v7888 = vsel %vm1897, %v7856, %v6996
      %v7889 = vsel %vm1897, %v7857, %v6998
      %v7890 = vsel %vm1897, %v7858, %v7000
      %v7891 = vsel %vm1897, %v7859, %v7002
      %v7892 = vsel %vm1897, %v7860, %v7004
      %v7893 = vsel %vm1897, %v7861, %v7006
      %v7894 = vsel %vm1897, %v7862, %v7008
      %v7895 = vsel %vm1897, %v7863, %v7010
      %v7896 = vsel %vm1897, %v7864, %v7012
      %v7897 = vsel %vm1897, %v7865, %v7014
      %v7898 = vsel %vm1897, %v7866, %v7016
      %v7899 = vsel %vm1897, %v7867, %v7018
      %v7900 = vsel %vm1897, %v7868, %v7020
      %v7901 = vsel %vm1897, %v7869, %v7022
      %v7902 = vsel %vm1897, %v7870, %v7024
      %v7903 = vsel %vm1897, %v7871, %v7026
      %v7904 = vsel %vm1897, %v7872, %v7028
      %v7905 = vsel %vm1897, %v7873, %v7030
      %v7906 = vsel %vm1897, %v7874, %v7032
      %v7907 = vsel %vm1897, %v7875, %v7034
      %v7908 = vsel %vm1897, %v7876, %v7036
      %v7909 = vsel %vm1897, %v7877, %v7038
      %v7910 = vsel %vm1897, %v7878, %v7040
      %v7911 = vsel %vm1897, %v7879, %v7042
      %v7912 = vsel %vm1897, %v7880, %v7044
      %v7913 = vsel %vm1897, %v7881, %v7046
      %v7914 = vsel %vm1897, %v7882, %v7048
      %v7915 = vsel %vm1897, %v7883, %v7050
      %v7916 = vsel %vm1897, %v7884, %v7052
      %v7917 = vsel %vm1930, %v7885, %v7118
      %v7918 = vsel %vm1930, %v7886, %v7120
      %v7919 = vsel %vm1930, %v7887, %v7122
      %v7920 = vsel %vm1930, %v7888, %v7124
      %v7921 = vsel %vm1930, %v7889, %v7126
      %v7922 = vsel %vm1930, %v7890, %v7128
      %v7923 = vsel %vm1930, %v7891, %v7130
      %v7924 = vsel %vm1930, %v7892, %v7132
      %v7925 = vsel %vm1930, %v7893, %v7134
      %v7926 = vsel %vm1930, %v7894, %v7136
      %v7927 = vsel %vm1930, %v7895, %v7138
      %v7928 = vsel %vm1930, %v7896, %v7140
      %v7929 = vsel %vm1930, %v7897, %v7142
      %v7930 = vsel %vm1930, %v7898, %v7144
      %v7931 = vsel %vm1930, %v7899, %v7146
      %v7932 = vsel %vm1930, %v7900, %v7148
      %v7933 = vsel %vm1930, %v7901, %v7150
      %v7934 = vsel %vm1930, %v7902, %v7152
      %v7935 = vsel %vm1930, %v7903, %v7154
      %v7936 = vsel %vm1930, %v7904, %v7156
      %v7937 = vsel %vm1930, %v7905, %v7158
      %v7938 = vsel %vm1930, %v7906, %v7160
      %v7939 = vsel %vm1930, %v7907, %v7162
      %v7940 = vsel %vm1930, %v7908, %v7164
      %v7941 = vsel %vm1930, %v7909, %v7166
      %v7942 = vsel %vm1930, %v7910, %v7168
      %v7943 = vsel %vm1930, %v7911, %v7170
      %v7944 = vsel %vm1930, %v7912, %v7172
      %v7945 = vsel %vm1930, %v7913, %v7174
      %v7946 = vsel %vm1930, %v7914, %v7176
      %v7947 = vsel %vm1930, %v7915, %v7178
      %v7948 = vsel %vm1930, %v7916, %v7180
      %v7949 = vsel %vm1963, %v7917, %v7246
      %v7950 = vsel %vm1963, %v7918, %v7248
      %v7951 = vsel %vm1963, %v7919, %v7250
      %v7952 = vsel %vm1963, %v7920, %v7252
      %v7953 = vsel %vm1963, %v7921, %v7254
      %v7954 = vsel %vm1963, %v7922, %v7256
      %v7955 = vsel %vm1963, %v7923, %v7258
      %v7956 = vsel %vm1963, %v7924, %v7260
      %v7957 = vsel %vm1963, %v7925, %v7262
      %v7958 = vsel %vm1963, %v7926, %v7264
      %v7959 = vsel %vm1963, %v7927, %v7266
      %v7960 = vsel %vm1963, %v7928, %v7268
      %v7961 = vsel %vm1963, %v7929, %v7270
      %v7962 = vsel %vm1963, %v7930, %v7272
      %v7963 = vsel %vm1963, %v7931, %v7274
      %v7964 = vsel %vm1963, %v7932, %v7276
      %v7965 = vsel %vm1963, %v7933, %v7278
      %v7966 = vsel %vm1963, %v7934, %v7280
      %v7967 = vsel %vm1963, %v7935, %v7282
      %v7968 = vsel %vm1963, %v7936, %v7284
      %v7969 = vsel %vm1963, %v7937, %v7286
      %v7970 = vsel %vm1963, %v7938, %v7288
      %v7971 = vsel %vm1963, %v7939, %v7290
      %v7972 = vsel %vm1963, %v7940, %v7292
      %v7973 = vsel %vm1963, %v7941, %v7294
      %v7974 = vsel %vm1963, %v7942, %v7296
      %v7975 = vsel %vm1963, %v7943, %v7298
      %v7976 = vsel %vm1963, %v7944, %v7300
      %v7977 = vsel %vm1963, %v7945, %v7302
      %v7978 = vsel %vm1963, %v7946, %v7304
      %v7979 = vsel %vm1963, %v7947, %v7306
      %v7980 = vsel %vm1963, %v7948, %v7308
      %v7981 = vsel %vm1996, %v7949, %v7374
      %v7982 = vsel %vm1996, %v7950, %v7376
      %v7983 = vsel %vm1996, %v7951, %v7378
      %v7984 = vsel %vm1996, %v7952, %v7380
      %v7985 = vsel %vm1996, %v7953, %v7382
      %v7986 = vsel %vm1996, %v7954, %v7384
      %v7987 = vsel %vm1996, %v7955, %v7386
      %v7988 = vsel %vm1996, %v7956, %v7388
      %v7989 = vsel %vm1996, %v7957, %v7390
      %v7990 = vsel %vm1996, %v7958, %v7392
      %v7991 = vsel %vm1996, %v7959, %v7394
      %v7992 = vsel %vm1996, %v7960, %v7396
      %v7993 = vsel %vm1996, %v7961, %v7398
      %v7994 = vsel %vm1996, %v7962, %v7400
      %v7995 = vsel %vm1996, %v7963, %v7402
      %v7996 = vsel %vm1996, %v7964, %v7404
      %v7997 = vsel %vm1996, %v7965, %v7406
      %v7998 = vsel %vm1996, %v7966, %v7408
      %v7999 = vsel %vm1996, %v7967, %v7410
      %v8000 = vsel %vm1996, %v7968, %v7412
      %v8001 = vsel %vm1996, %v7969, %v7414
      %v8002 = vsel %vm1996, %v7970, %v7416
      %v8003 = vsel %vm1996, %v7971, %v7418
      %v8004 = vsel %vm1996, %v7972, %v7420
      %v8005 = vsel %vm1996, %v7973, %v7422
      %v8006 = vsel %vm1996, %v7974, %v7424
      %v8007 = vsel %vm1996, %v7975, %v7426
      %v8008 = vsel %vm1996, %v7976, %v7428
      %v8009 = vsel %vm1996, %v7977, %v7430
      %v8010 = vsel %vm1996, %v7978, %v7432
      %v8011 = vsel %vm1996, %v7979, %v7434
      %v8012 = vsel %vm1996, %v7980, %v7436
      %v8013 = vsel %vm2029, %v7981, %v7502
      %v8014 = vsel %vm2029, %v7982, %v7504
      %v8015 = vsel %vm2029, %v7983, %v7506
      %v8016 = vsel %vm2029, %v7984, %v7508
      %v8017 = vsel %vm2029, %v7985, %v7510
      %v8018 = vsel %vm2029, %v7986, %v7512
      %v8019 = vsel %vm2029, %v7987, %v7514
      %v8020 = vsel %vm2029, %v7988, %v7516
      %v8021 = vsel %vm2029, %v7989, %v7518
      %v8022 = vsel %vm2029, %v7990, %v7520
      %v8023 = vsel %vm2029, %v7991, %v7522
      %v8024 = vsel %vm2029, %v7992, %v7524
      %v8025 = vsel %vm2029, %v7993, %v7526
      %v8026 = vsel %vm2029, %v7994, %v7528
      %v8027 = vsel %vm2029, %v7995, %v7530
      %v8028 = vsel %vm2029, %v7996, %v7532
      %v8029 = vsel %vm2029, %v7997, %v7534
      %v8030 = vsel %vm2029, %v7998, %v7536
      %v8031 = vsel %vm2029, %v7999, %v7538
      %v8032 = vsel %vm2029, %v8000, %v7540
      %v8033 = vsel %vm2029, %v8001, %v7542
      %v8034 = vsel %vm2029, %v8002, %v7544
      %v8035 = vsel %vm2029, %v8003, %v7546
      %v8036 = vsel %vm2029, %v8004, %v7548
      %v8037 = vsel %vm2029, %v8005, %v7550
      %v8038 = vsel %vm2029, %v8006, %v7552
      %v8039 = vsel %vm2029, %v8007, %v7554
      %v8040 = vsel %vm2029, %v8008, %v7556
      %v8041 = vsel %vm2029, %v8009, %v7558
      %v8042 = vsel %vm2029, %v8010, %v7560
      %v8043 = vsel %vm2029, %v8011, %v7562
      %v8044 = vsel %vm2029, %v8012, %v7564
      %v8045 = vsel %vm2062, %v8013, %v7630
      %v8046 = vsel %vm2062, %v8014, %v7632
      %v8047 = vsel %vm2062, %v8015, %v7634
      %v8048 = vsel %vm2062, %v8016, %v7636
      %v8049 = vsel %vm2062, %v8017, %v7638
      %v8050 = vsel %vm2062, %v8018, %v7640
      %v8051 = vsel %vm2062, %v8019, %v7642
      %v8052 = vsel %vm2062, %v8020, %v7644
      %v8053 = vsel %vm2062, %v8021, %v7646
      %v8054 = vsel %vm2062, %v8022, %v7648
      %v8055 = vsel %vm2062, %v8023, %v7650
      %v8056 = vsel %vm2062, %v8024, %v7652
      %v8057 = vsel %vm2062, %v8025, %v7654
      %v8058 = vsel %vm2062, %v8026, %v7656
      %v8059 = vsel %vm2062, %v8027, %v7658
      %v8060 = vsel %vm2062, %v8028, %v7660
      %v8061 = vsel %vm2062, %v8029, %v7662
      %v8062 = vsel %vm2062, %v8030, %v7664
      %v8063 = vsel %vm2062, %v8031, %v7666
      %v8064 = vsel %vm2062, %v8032, %v7668
      %v8065 = vsel %vm2062, %v8033, %v7670
      %v8066 = vsel %vm2062, %v8034, %v7672
      %v8067 = vsel %vm2062, %v8035, %v7674
      %v8068 = vsel %vm2062, %v8036, %v7676
      %v8069 = vsel %vm2062, %v8037, %v7678
      %v8070 = vsel %vm2062, %v8038, %v7680
      %v8071 = vsel %vm2062, %v8039, %v7682
      %v8072 = vsel %vm2062, %v8040, %v7684
      %v8073 = vsel %vm2062, %v8041, %v7686
      %v8074 = vsel %vm2062, %v8042, %v7688
      %v8075 = vsel %vm2062, %v8043, %v7690
      %v8076 = vsel %vm2062, %v8044, %v7692
      %v8077 = vsel %vm2095, %v8045, %v7758
      %v8078 = vsel %vm2095, %v8046, %v7760
      %v8079 = vsel %vm2095, %v8047, %v7762
      %v8080 = vsel %vm2095, %v8048, %v7764
      %v8081 = vsel %vm2095, %v8049, %v7766
      %v8082 = vsel %vm2095, %v8050, %v7768
      %v8083 = vsel %vm2095, %v8051, %v7770
      %v8084 = vsel %vm2095, %v8052, %v7772
      %v8085 = vsel %vm2095, %v8053, %v7774
      %v8086 = vsel %vm2095, %v8054, %v7776
      %v8087 = vsel %vm2095, %v8055, %v7778
      %v8088 = vsel %vm2095, %v8056, %v7780
      %v8089 = vsel %vm2095, %v8057, %v7782
      %v8090 = vsel %vm2095, %v8058, %v7784
      %v8091 = vsel %vm2095, %v8059, %v7786
      %v8092 = vsel %vm2095, %v8060, %v7788
      %v8093 = vsel %vm2095, %v8061, %v7790
      %v8094 = vsel %vm2095, %v8062, %v7792
      %v8095 = vsel %vm2095, %v8063, %v7794
      %v8096 = vsel %vm2095, %v8064, %v7796
      %v8097 = vsel %vm2095, %v8065, %v7798
      %v8098 = vsel %vm2095, %v8066, %v7800
      %v8099 = vsel %vm2095, %v8067, %v7802
      %v8100 = vsel %vm2095, %v8068, %v7804
      %v8101 = vsel %vm2095, %v8069, %v7806
      %v8102 = vsel %vm2095, %v8070, %v7808
      %v8103 = vsel %vm2095, %v8071, %v7810
      %v8104 = vsel %vm2095, %v8072, %v7812
      %v8105 = vsel %vm2095, %v8073, %v7814
      %v8106 = vsel %vm2095, %v8074, %v7816
      %v8107 = vsel %vm2095, %v8075, %v7818
      %v8108 = vsel %vm2095, %v8076, %v7820
      %v8109 = vld [vmem:[%s11] sm:$0xff]
      %v8110 = vld [vmem:[%s11 + $0x8] sm:$0xff]
      %v8111 = vld [vmem:[%s11 + $0x10] sm:$0xff]
      %v8112 = vld [vmem:[%s11 + $0x18] sm:$0xff]
      %v8113 = vld [vmem:[%s11 + $0x20] sm:$0xff]
      %v8114 = vld [vmem:[%s11 + $0x28] sm:$0xff]
      %v8115 = vld [vmem:[%s11 + $0x30] sm:$0xff]
      %v8116 = vld [vmem:[%s11 + $0x38] sm:$0xff]
      %v8117 = vld [vmem:[%s11 + $0x40] sm:$0xff]
      %v8118 = vld [vmem:[%s12] sm:$0x1]
      %v8120 = vlaneseq
      %v8121 = vshrl.u32 %v8120, 7
      %v8122 = vsub.s32 0, %v8121
      %v8123 = vrot.slane %v8118, %v8122
      %v8126 = vsel %vm2144, %v8077, 0
      %v8129 = vsel %vm2144, %v8078, 0
      %v8132 = vsel %vm2144, %v8079, 0
      %v8135 = vsel %vm2144, %v8080, 0
      %v8138 = vsel %vm2144, %v8081, 0
      %v8141 = vsel %vm2144, %v8082, 0
      %v8144 = vsel %vm2144, %v8083, 0
      %v8147 = vsel %vm2144, %v8084, 0
      %v8150 = vsel %vm2144, %v8085, 0
      %v8153 = vsel %vm2144, %v8086, 0
      %v8156 = vsel %vm2144, %v8087, 0
      %v8159 = vsel %vm2144, %v8088, 0
      %v8162 = vsel %vm2144, %v8089, 0
      %v8165 = vsel %vm2144, %v8090, 0
      %v8168 = vsel %vm2144, %v8091, 0
      %v8171 = vsel %vm2144, %v8092, 0
      %v8174 = vsel %vm2144, %v8093, 0
      %v8177 = vsel %vm2144, %v8094, 0
      %v8180 = vsel %vm2144, %v8095, 0
      %v8183 = vsel %vm2144, %v8096, 0
      %v8186 = vsel %vm2144, %v8097, 0
      %v8189 = vsel %vm2144, %v8098, 0
      %v8192 = vsel %vm2144, %v8099, 0
      %v8195 = vsel %vm2144, %v8100, 0
      %v8198 = vsel %vm2144, %v8101, 0
      %v8201 = vsel %vm2144, %v8102, 0
      %v8204 = vsel %vm2144, %v8103, 0
      %v8207 = vsel %vm2144, %v8104, 0
      %v8210 = vsel %vm2144, %v8105, 0
      %v8213 = vsel %vm2144, %v8106, 0
      %v8216 = vsel %vm2144, %v8107, 0
      %v8219 = vsel %vm2144, %v8108, 0
      %8221 = vmatprep.subr.mxu0 0.0
      %8222 = vmatpush1.msra.mxu0 %v8109
      %8223 = vmatprep.subr.mxu0 0.0
      %8224 = vmatpush1.msra.mxu0 %v8110
      %8225 = vmatprep.subr.mxu0 0.0
      %8226 = vmatpush1.msra.mxu0 %v8111
      %8227 = vmatprep.subr.mxu0 0.0
      %8228 = vmatpush1.msra.mxu0 %v8112
      %8229 = vmatprep.subr.mxu0 0.0
      %8230 = vmatpush1.msra.mxu0 %v8113
      %8231 = vmatprep.subr.mxu0 0.0
      %8232 = vmatpush1.msra.mxu0 %v8114
      %8233 = vmatprep.subr.mxu0 0.0
      %8234 = vmatpush1.msra.mxu0 %v8115
      %8235 = vmatprep.subr.mxu0 0.0
      %8236 = vmatpush1.msra.mxu0 %v8116
      %8237 = vmatprep.subr.mxu0 0.0
      %8238 = vmatpush1.msra.mxu0 %v8117
      %8239 = vmatprep.subr.mxu0 0.0
      %8240 = vmatpush1.msra.mxu0 0.0
      %8241 = vmatprep.subr.mxu0 0.0
      %8242 = vmatpush1.msra.mxu0 0.0
      %8243 = vmatprep.subr.mxu0 0.0
      %8244 = vmatpush1.msra.mxu0 0.0
      %8245 = vmatprep.subr.mxu0 0.0
      %8246 = vmatpush1.msra.mxu0 0.0
      %8247 = vmatprep.subr.mxu0 0.0
      %8248 = vmatpush1.msra.mxu0 0.0
      %8249 = vmatprep.subr.mxu0 0.0
      %8250 = vmatpush1.msra.mxu0 0.0
      %8251 = vmatprep.subr.mxu0 0.0
      %8252 = vmatpush1.msra.mxu0 0.0
      %8253 = vmatprep.subr.mxu0 0.0
      %8254 = vmatpush1.msra.mxu0 0.0
      %8255 = vmatprep.subr.mxu0 0.0
      %8256 = vmatpush1.msra.mxu0 0.0
      %8257 = vmatprep.subr.mxu0 0.0
      %8258 = vmatpush1.msra.mxu0 0.0
      %8259 = vmatprep.subr.mxu0 0.0
      %8260 = vmatpush1.msra.mxu0 0.0
      %8261 = vmatprep.subr.mxu0 0.0
      %8262 = vmatpush1.msra.mxu0 0.0
      %8263 = vmatprep.subr.mxu0 0.0
      %8264 = vmatpush1.msra.mxu0 0.0
      %8265 = vmatprep.subr.mxu0 0.0
      %8266 = vmatpush1.msra.mxu0 0.0
      %8267 = vmatprep.subr.mxu0 0.0
      %8268 = vmatpush1.msra.mxu0 0.0
      %8269 = vmatprep.subr.mxu0 0.0
      %8270 = vmatpush1.msra.mxu0 0.0
      %8271 = vmatprep.subr.mxu0 0.0
      %8272 = vmatpush1.msra.mxu0 0.0
      %8273 = vmatprep.subr.mxu0 0.0
      %8274 = vmatpush1.msra.mxu0 0.0
      %8275 = vmatprep.subr.mxu0 0.0
      %8276 = vmatpush1.msra.mxu0 0.0
      %8277 = vmatprep.subr.mxu0 0.0
      %8278 = vmatpush1.msra.mxu0 0.0
      %8279 = vmatprep.subr.mxu0 0.0
      %8280 = vmatpush1.msra.mxu0 0.0
      %8281 = vmatprep.subr.mxu0 0.0
      %8282 = vmatpush1.msra.mxu0 0.0
      %8283 = vmatprep.subr.mxu0 0.0
      %8284 = vmatpush1.msra.mxu0 0.0
      %8285 = vmatprep.mubr.f32.mxu0 0.0
      %8286 = vmatmul.mubr.f32.gmra.mrb[0].mxu0 %v8126
      %v8287 = vpop.f32.mrb[0].mxu0
      %v8288 = vadd.f32 %v8123, %v8287
      %v8289 = vpop.f32.mrb[0].mxu0
      %8290 = vmatprep.mubr.f32.mxu0 0.0
      %8291 = vmatmul.mubr.f32.gmra.mrb[0].mxu0 %v8129
      %v8292 = vpop.f32.mrb[0].mxu0
      %v8293 = vadd.f32 %v8123, %v8292
      %v8294 = vpop.f32.mrb[0].mxu0
      %8295 = vmatprep.mubr.f32.mxu0 0.0
      %8296 = vmatmul.mubr.f32.gmra.mrb[0].mxu0 %v8132
      %v8297 = vpop.f32.mrb[0].mxu0
      %v8298 = vadd.f32 %v8123, %v8297
      %v8299 = vpop.f32.mrb[0].mxu0
      %8300 = vmatprep.mubr.f32.mxu0 0.0
      %8301 = vmatmul.mubr.f32.gmra.mrb[0].mxu0 %v8135
      %v8302 = vpop.f32.mrb[0].mxu0
      %v8303 = vadd.f32 %v8123, %v8302
      %v8304 = vpop.f32.mrb[0].mxu0
      %8305 = vmatprep.mubr.f32.mxu0 0.0
      %8306 = vmatmul.mubr.f32.gmra.mrb[0].mxu0 %v8138
      %v8307 = vpop.f32.mrb[0].mxu0
      %v8308 = vadd.f32 %v8123, %v8307
      %v8309 = vpop.f32.mrb[0].mxu0
      %8310 = vmatprep.mubr.f32.mxu0 0.0
      %8311 = vmatmul.mubr.f32.gmra.mrb[0].mxu0 %v8141
      %v8312 = vpop.f32.mrb[0].mxu0
      %v8313 = vadd.f32 %v8123, %v8312
      %v8314 = vpop.f32.mrb[0].mxu0
      %8315 = vmatprep.mubr.f32.mxu0 0.0
      %8316 = vmatmul.mubr.f32.gmra.mrb[0].mxu0 %v8144
      %v8317 = vpop.f32.mrb[0].mxu0
      %v8318 = vadd.f32 %v8123, %v8317
      %v8319 = vpop.f32.mrb[0].mxu0
      %8320 = vmatprep.mubr.f32.mxu0 0.0
      %8321 = vmatmul.mubr.f32.gmra.mrb[0].mxu0 %v8147
      %v8322 = vpop.f32.mrb[0].mxu0
      %v8323 = vadd.f32 %v8123, %v8322
      %v8324 = vpop.f32.mrb[0].mxu0
      %8325 = vmatprep.mubr.f32.mxu0 0.0
      %8326 = vmatmul.mubr.f32.gmra.mrb[0].mxu0 %v8150
      %v8327 = vpop.f32.mrb[0].mxu0
      %v8328 = vadd.f32 %v8123, %v8327
      %v8329 = vpop.f32.mrb[0].mxu0
      %8330 = vmatprep.mubr.f32.mxu0 0.0
      %8331 = vmatmul.mubr.f32.gmra.mrb[0].mxu0 %v8153
      %v8332 = vpop.f32.mrb[0].mxu0
      %v8333 = vadd.f32 %v8123, %v8332
      %v8334 = vpop.f32.mrb[0].mxu0
      %8335 = vmatprep.mubr.f32.mxu0 0.0
      %8336 = vmatmul.mubr.f32.gmra.mrb[0].mxu0 %v8156
      %v8337 = vpop.f32.mrb[0].mxu0
      %v8338 = vadd.f32 %v8123, %v8337
      %v8339 = vpop.f32.mrb[0].mxu0
      %8340 = vmatprep.mubr.f32.mxu0 0.0
      %8341 = vmatmul.mubr.f32.gmra.mrb[0].mxu0 %v8159
      %v8342 = vpop.f32.mrb[0].mxu0
      %v8343 = vadd.f32 %v8123, %v8342
      %v8344 = vpop.f32.mrb[0].mxu0
      %8345 = vmatprep.mubr.f32.mxu0 0.0
      %8346 = vmatmul.mubr.f32.gmra.mrb[0].mxu0 %v8162
      %v8347 = vpop.f32.mrb[0].mxu0
      %v8348 = vadd.f32 %v8123, %v8347
      %v8349 = vpop.f32.mrb[0].mxu0
      %8350 = vmatprep.mubr.f32.mxu0 0.0
      %8351 = vmatmul.mubr.f32.gmra.mrb[0].mxu0 %v8165
      %v8352 = vpop.f32.mrb[0].mxu0
      %v8353 = vadd.f32 %v8123, %v8352
      %v8354 = vpop.f32.mrb[0].mxu0
      %8355 = vmatprep.mubr.f32.mxu0 0.0
      %8356 = vmatmul.mubr.f32.gmra.mrb[0].mxu0 %v8168
      %v8357 = vpop.f32.mrb[0].mxu0
      %v8358 = vadd.f32 %v8123, %v8357
      %v8359 = vpop.f32.mrb[0].mxu0
      %8360 = vmatprep.mubr.f32.mxu0 0.0
      %8361 = vmatmul.mubr.f32.gmra.mrb[0].mxu0 %v8171
      %v8362 = vpop.f32.mrb[0].mxu0
      %v8363 = vadd.f32 %v8123, %v8362
      %v8364 = vpop.f32.mrb[0].mxu0
      %8365 = vmatprep.mubr.f32.mxu0 0.0
      %8366 = vmatmul.mubr.f32.gmra.mrb[0].mxu0 %v8174
      %v8367 = vpop.f32.mrb[0].mxu0
      %v8368 = vadd.f32 %v8123, %v8367
      %v8369 = vpop.f32.mrb[0].mxu0
      %8370 = vmatprep.mubr.f32.mxu0 0.0
      %8371 = vmatmul.mubr.f32.gmra.mrb[0].mxu0 %v8177
      %v8372 = vpop.f32.mrb[0].mxu0
      %v8373 = vadd.f32 %v8123, %v8372
      %v8374 = vpop.f32.mrb[0].mxu0
      %8375 = vmatprep.mubr.f32.mxu0 0.0
      %8376 = vmatmul.mubr.f32.gmra.mrb[0].mxu0 %v8180
      %v8377 = vpop.f32.mrb[0].mxu0
      %v8378 = vadd.f32 %v8123, %v8377
      %v8379 = vpop.f32.mrb[0].mxu0
      %8380 = vmatprep.mubr.f32.mxu0 0.0
      %8381 = vmatmul.mubr.f32.gmra.mrb[0].mxu0 %v8183
      %v8382 = vpop.f32.mrb[0].mxu0
      %v8383 = vadd.f32 %v8123, %v8382
      %v8384 = vpop.f32.mrb[0].mxu0
      %8385 = vmatprep.mubr.f32.mxu0 0.0
      %8386 = vmatmul.mubr.f32.gmra.mrb[0].mxu0 %v8186
      %v8387 = vpop.f32.mrb[0].mxu0
      %v8388 = vadd.f32 %v8123, %v8387
      %v8389 = vpop.f32.mrb[0].mxu0
      %8390 = vmatprep.mubr.f32.mxu0 0.0
      %8391 = vmatmul.mubr.f32.gmra.mrb[0].mxu0 %v8189
      %v8392 = vpop.f32.mrb[0].mxu0
      %v8393 = vadd.f32 %v8123, %v8392
      %v8394 = vpop.f32.mrb[0].mxu0
      %8395 = vmatprep.mubr.f32.mxu0 0.0
      %8396 = vmatmul.mubr.f32.gmra.mrb[0].mxu0 %v8192
      %v8397 = vpop.f32.mrb[0].mxu0
      %v8398 = vadd.f32 %v8123, %v8397
      %v8399 = vpop.f32.mrb[0].mxu0
      %8400 = vmatprep.mubr.f32.mxu0 0.0
      %8401 = vmatmul.mubr.f32.gmra.mrb[0].mxu0 %v8195
      %v8402 = vpop.f32.mrb[0].mxu0
      %v8403 = vadd.f32 %v8123, %v8402
      %v8404 = vpop.f32.mrb[0].mxu0
      %8405 = vmatprep.mubr.f32.mxu0 0.0
      %8406 = vmatmul.mubr.f32.gmra.mrb[0].mxu0 %v8198
      %v8407 = vpop.f32.mrb[0].mxu0
      %v8408 = vadd.f32 %v8123, %v8407
      %v8409 = vpop.f32.mrb[0].mxu0
      %8410 = vmatprep.mubr.f32.mxu0 0.0
      %8411 = vmatmul.mubr.f32.gmra.mrb[0].mxu0 %v8201
      %v8412 = vpop.f32.mrb[0].mxu0
      %v8413 = vadd.f32 %v8123, %v8412
      %v8414 = vpop.f32.mrb[0].mxu0
      %8415 = vmatprep.mubr.f32.mxu0 0.0
      %8416 = vmatmul.mubr.f32.gmra.mrb[0].mxu0 %v8204
      %v8417 = vpop.f32.mrb[0].mxu0
      %v8418 = vadd.f32 %v8123, %v8417
      %v8419 = vpop.f32.mrb[0].mxu0
      %8420 = vmatprep.mubr.f32.mxu0 0.0
      %8421 = vmatmul.mubr.f32.gmra.mrb[0].mxu0 %v8207
      %v8422 = vpop.f32.mrb[0].mxu0
      %v8423 = vadd.f32 %v8123, %v8422
      %v8424 = vpop.f32.mrb[0].mxu0
      %8425 = vmatprep.mubr.f32.mxu0 0.0
      %8426 = vmatmul.mubr.f32.gmra.mrb[0].mxu0 %v8210
      %v8427 = vpop.f32.mrb[0].mxu0
      %v8428 = vadd.f32 %v8123, %v8427
      %v8429 = vpop.f32.mrb[0].mxu0
      %8430 = vmatprep.mubr.f32.mxu0 0.0
      %8431 = vmatmul.mubr.f32.gmra.mrb[0].mxu0 %v8213
      %v8432 = vpop.f32.mrb[0].mxu0
      %v8433 = vadd.f32 %v8123, %v8432
      %v8434 = vpop.f32.mrb[0].mxu0
      %8435 = vmatprep.mubr.f32.mxu0 0.0
      %8436 = vmatmul.mubr.f32.gmra.mrb[0].mxu0 %v8216
      %v8437 = vpop.f32.mrb[0].mxu0
      %v8438 = vadd.f32 %v8123, %v8437
      %v8439 = vpop.f32.mrb[0].mxu0
      %8440 = vmatprep.mubr.f32.mxu0 0.0
      %8441 = vmatmul.mubr.f32.gmra.mrb[0].mxu0 %v8219
      %v8442 = vpop.f32.mrb[0].mxu0
      %v8443 = vadd.f32 %v8123, %v8442
      %v8444 = vpop.f32.mrb[0].mxu0
      %8445 = vdwg.mxu0
      %vm8446 = vcmask 31744
      %8447 = vst.msk [vmem:[%s440] sm:$0xff] %vm8446, %v8288
      %8448 = vst.msk [vmem:[%s440 + $0x8] sm:$0xff] %vm8446, %v8293
      %8449 = vst.msk [vmem:[%s440 + $0x10] sm:$0xff] %vm8446, %v8298
      %8450 = vst.msk [vmem:[%s440 + $0x18] sm:$0xff] %vm8446, %v8303
      %8451 = vst.msk [vmem:[%s440 + $0x20] sm:$0xff] %vm8446, %v8308
      %8452 = vst.msk [vmem:[%s440 + $0x28] sm:$0xff] %vm8446, %v8313
      %8453 = vst.msk [vmem:[%s440 + $0x30] sm:$0xff] %vm8446, %v8318
      %8454 = vst.msk [vmem:[%s440 + $0x38] sm:$0xff] %vm8446, %v8323
      %8455 = vst.msk [vmem:[%s440 + $0x40] sm:$0xff] %vm8446, %v8328
      %8456 = vst.msk [vmem:[%s440 + $0x48] sm:$0xff] %vm8446, %v8333
      %8457 = vst.msk [vmem:[%s440 + $0x50] sm:$0xff] %vm8446, %v8338
      %8458 = vst.msk [vmem:[%s440 + $0x58] sm:$0xff] %vm8446, %v8343
      %8459 = vst.msk [vmem:[%s440 + $0x60] sm:$0xff] %vm8446, %v8348
      %8460 = vst.msk [vmem:[%s440 + $0x68] sm:$0xff] %vm8446, %v8353
      %8461 = vst.msk [vmem:[%s440 + $0x70] sm:$0xff] %vm8446, %v8358
      %8462 = vst.msk [vmem:[%s440 + $0x78] sm:$0xff] %vm8446, %v8363
      %8463 = vst.msk [vmem:[%s440 + $0x80] sm:$0xff] %vm8446, %v8368
      %8464 = vst.msk [vmem:[%s440 + $0x88] sm:$0xff] %vm8446, %v8373
      %8465 = vst.msk [vmem:[%s440 + $0x90] sm:$0xff] %vm8446, %v8378
      %8466 = vst.msk [vmem:[%s440 + $0x98] sm:$0xff] %vm8446, %v8383
      %8467 = vst.msk [vmem:[%s440 + $0xa0] sm:$0xff] %vm8446, %v8388
      %8468 = vst.msk [vmem:[%s440 + $0xa8] sm:$0xff] %vm8446, %v8393
      %8469 = vst.msk [vmem:[%s440 + $0xb0] sm:$0xff] %vm8446, %v8398
      %8470 = vst.msk [vmem:[%s440 + $0xb8] sm:$0xff] %vm8446, %v8403
      %8471 = vst.msk [vmem:[%s440 + $0xc0] sm:$0xff] %vm8446, %v8408
      %8472 = vst.msk [vmem:[%s440 + $0xc8] sm:$0xff] %vm8446, %v8413
      %8473 = vst.msk [vmem:[%s440 + $0xd0] sm:$0xff] %vm8446, %v8418
      %8474 = vst.msk [vmem:[%s440 + $0xd8] sm:$0xff] %vm8446, %v8423
      %8475 = vst.msk [vmem:[%s440 + $0xe0] sm:$0xff] %vm8446, %v8428
      %8476 = vst.msk [vmem:[%s440 + $0xe8] sm:$0xff] %vm8446, %v8433
      %8477 = vst.msk [vmem:[%s440 + $0xf0] sm:$0xff] %vm8446, %v8438
      %8478 = vst.msk [vmem:[%s440 + $0xf8] sm:$0xff] %vm8446, %v8443
      %p8479 = scmp.lt.s32.totalorder %s24, 1
      %s8480 = scalar_select %p8479, %s24, 1
      %s8481 = smul.addr %s8480, 32
      %s8482 = smul.addr %s8481, 8
      %s8483 = scalar_lea.vmem %s13, %s8482
      // Predicated region
      $region73: #{tpu_custom_call.1} parent=71 // pred_check
        %p8484 = pneg %p320
      $region74: #{tpu_custom_call.1} parent=71 // pred_check_branch
        %8486 = sbr.rel (%p8484) target = $region76
      $region75: #{tpu_custom_call.1} parent=71 // pred_region
        _
      $region76: #{tpu_custom_call.1} parent=71 // pred_fallthru
        _
    $region72: #{tpu_custom_call.1} parent=5 // pred_fallthru
      _
    %p8487 = scmp.le.s32.totalorder 2, %s19
    // Predicated region
    $region77: #{tpu_custom_call.1} parent=5 // pred_check
      %p8488 = pneg %p8487
    $region78: #{tpu_custom_call.1} parent=5 // pred_check_branch
      %8490 = sbr.rel (%p8488) target = $region80
    $region79: #{tpu_custom_call.1} parent=5 // pred_region
      %s8491 = ssub.s32 %s19, 2
      // Predicated region
      $region81: #{tpu_custom_call.1} parent=79 // pred_check
        %p8492 = pneg %p326
      $region82: #{tpu_custom_call.1} parent=79 // pred_check_branch
        %8494 = sbr.rel (%p8492) target = $region84
      $region83: #{tpu_custom_call.1} parent=79 // pred_region
        %p8495 = scmp.lt.s32.totalorder %s25, 1
        %s8496 = scalar_select %p8495, %s25, 1
        %s8497 = smul.addr %s8496, 32
        %s8498 = smul.addr %s8497, 8
        %s8499 = scalar_lea.vmem %s13, %s8498
      $region84: #{tpu_custom_call.1} parent=79 // pred_fallthru
        _
    $region80: #{tpu_custom_call.1} parent=5 // pred_fallthru
      _
  $region6: #{tpu_custom_call.1} parent=0 // loop_footer
    %s23 = sadd.s32 1, %s19
  $region7: #{tpu_custom_call.1} parent=0 // loop_footer_branch
    %18 = sbr.rel target = $region3
  $region8: #{tpu_custom_call.1} parent=0 // loop_exit
    _

</llo_original>
